<compile_context>
chip_gen: v6e
topology: v6e:2x2x1
jax: 0.10.0
libtpu: 0.0.40
codegen_flags: <defaults>
</compile_context>

<pallas_src>
import functools

import jax
import jax.numpy as jnp
from jax.experimental import pallas as pl
from jax.experimental.pallas import tpu as pltpu

CONCAT_DIM = 1568
H1, H2, OUT_DIM = 1024, 512, 256


def _round_up(x, m):
    return -(-x // m) * m


def _pick_tm(nrows):
    """Batch-tile size: big enough to fill the MXU, small enough to keep
    >=2 grid steps for megacore sharding when the batch allows it."""
    b8 = max(8, _round_up(nrows, 8))
    if b8 <= 128:
        return b8          # tiny batch: one tile covering everything
    if b8 <= 256:
        return 128         # 2 grid steps -> both v7x TensorCores busy
    return 256


def _make_mlp_kernel(n_feats):
    """Kernel: fused concat (split-K over feature chunks) + 3-layer ReLU MLP."""

    def kernel(*refs):
        feat_refs = refs[:n_feats]
        w1_refs = refs[n_feats:2 * n_feats]
        b1_ref, w2_ref, b2_ref, w3_ref, b3_ref, o_ref = refs[2 * n_feats:]

        # Layer 1: sum of per-feature partial matmuls == concat @ W1.
        h = None
        for f_ref, w_ref in zip(feat_refs, w1_refs):
            part = jnp.dot(f_ref[...].astype(jnp.bfloat16), w_ref[...],
                           preferred_element_type=jnp.float32)
            h = part if h is None else h + part
        h = jnp.maximum(h + b1_ref[...], 0.0)

        # Layer 2.
        h = jnp.dot(h.astype(jnp.bfloat16), w2_ref[...],
                    preferred_element_type=jnp.float32) + b2_ref[...]
        h = jnp.maximum(h, 0.0)

        # Layer 3.
        y = jnp.dot(h.astype(jnp.bfloat16), w3_ref[...],
                    preferred_element_type=jnp.float32) + b3_ref[...]
        o_ref[...] = jnp.maximum(y, 0.0).astype(o_ref.dtype)

    return kernel


@functools.partial(jax.jit, static_argnames=("tm",))
def _fused_mlp(feats, w1, b1, w2, b2, w3, b3, *, tm):
    """feats: tuple of 2-D [rows, d_i] arrays with sum(d_i) == w1.shape[0]."""
    n_feats = len(feats)
    feat_dims = tuple(int(f.shape[-1]) for f in feats)
    nrows = feats[0].shape[0]
    h1, h2, out_dim = w2.shape[0], w3.shape[0], w3.shape[1]

    # Split W1 along its input dim (static slices) so the concat stays fused.
    w1_bf = w1.astype(jnp.bfloat16)
    w1_chunks, off = [], 0
    for d in feat_dims:
        w1_chunks.append(w1_bf[off:off + d])
        off += d

    grid = (pl.cdiv(nrows, tm),)

    def row_spec(d):
        return pl.BlockSpec((tm, d), lambda i: (i, 0))

    def full(shape):
        return pl.BlockSpec(shape, lambda i: (0, 0))

    in_specs = (
        [row_spec(d) for d in feat_dims]            # feature row tiles
        + [full((d, h1)) for d in feat_dims]        # W1 chunks (VMEM resident)
        + [full((1, h1)), full((h1, h2)), full((1, h2)),
           full((h2, out_dim)), full((1, out_dim))]
    )

    return pl.pallas_call(
        _make_mlp_kernel(n_feats),
        out_shape=jax.ShapeDtypeStruct((nrows, out_dim), jnp.float32),
        grid_spec=pltpu.PrefetchScalarGridSpec(
            num_scalar_prefetch=0,
            grid=grid,
            in_specs=in_specs,
            out_specs=pl.BlockSpec((tm, out_dim), lambda i: (i, 0)),
        ),
        compiler_params=pltpu.CompilerParams(
            dimension_semantics=("parallel",),
            vmem_limit_bytes=48 << 20,   # < 64 MiB physical VMEM on v7x
        ),
    )(*feats, *w1_chunks,
      b1.reshape(1, -1), w2.astype(jnp.bfloat16),
      b2.reshape(1, -1), w3.astype(jnp.bfloat16),
      b3.reshape(1, -1))


def concat_fusion_forward(feature_tuple, params):
    """JAX/Pallas equivalent of ConcatFusion.forward. Returns (y, None)."""
    w1, b1, w2, b2, w3, b3 = params
    feats = [jnp.asarray(f) for f in feature_tuple]
    lead_shape = feats[0].shape[:-1]
    assert all(f.shape[:-1] == lead_shape for f in feats), "leading dims must match"
    feats2d = tuple(f.reshape(-1, f.shape[-1]) for f in feats)
    assert sum(f.shape[-1] for f in feats2d) == w1.shape[0], \
        "sum of feature dims must equal concat_dim"

    nrows = feats2d[0].shape[0]
    tm = _pick_tm(nrows)
    y = _fused_mlp(feats2d, w1, b1, w2, b2, w3, b3, tm=tm)
    return y.reshape(*lead_shape, w3.shape[1]), None


def init_params(key):
    """Deterministic init mimicking nn.Linear (uniform(-1/sqrt(fan_in), ...))."""
    def linear(k, fan_in, fan_out):
        kw, kb = jax.random.split(k)
        bound = 1.0 / jnp.sqrt(fan_in)
        w = jax.random.uniform(kw, (fan_in, fan_out), jnp.float32, -bound, bound)
        b = jax.random.uniform(kb, (fan_out,), jnp.float32, -bound, bound)
        return w, b

    k1, k2, k3 = jax.random.split(key, 3)
    w1, b1 = linear(k1, CONCAT_DIM, H1)
    w2, b2 = linear(k2, H1, H2)
    w3, b3 = linear(k3, H2, OUT_DIM)
    return (w1, b1, w2, b2, w3, b3)


def _reference_forward(feature_tuple, params):
    w1, b1, w2, b2, w3, b3 = params
    x = jnp.concatenate(list(feature_tuple), axis=-1).astype(jnp.float32)
    h = jnp.maximum(x @ w1 + b1, 0.0)
    h = jnp.maximum(h @ w2 + b2, 0.0)
    return jnp.maximum(h @ w3 + b3, 0.0)


if __name__ == "__main__":
    key = jax.random.PRNGKey(0)
    kp, ka, kb_, kc1, kc2, kc3 = jax.random.split(key, 6)

    params = init_params(kp)

    # Case 1: batch=2, two modality features concatenating to 1568 dims.
    batch = 2
    feat_a = jax.random.normal(ka, (batch, 784), dtype=jnp.float32)
    feat_b = jax.random.normal(kb_, (batch, 784), dtype=jnp.float32)

    y, none_out = concat_fusion_forward((feat_a, feat_b), params)
    y = jax.block_until_ready(y)
    assert y.shape == (batch, OUT_DIM), y.shape
    assert none_out is None

    y_ref = _reference_forward((feat_a, feat_b), params)
    err = float(jnp.max(jnp.abs(y - y_ref)))
    assert err < 5e-2, f"max abs error {err}"   # bf16 matmuls, f32 accumulation

    # Case 2: three uneven-width features, ragged batch (exercises the generic
    # split-W1 path and the masked partial last block).
    b2sz = 10
    f1 = jax.random.normal(kc1, (b2sz, 512), dtype=jnp.float32)
    f2 = jax.random.normal(kc2, (b2sz, 512), dtype=jnp.float32)
    f3 = jax.random.normal(kc3, (b2sz, 544), dtype=jnp.float32)

    y2, _ = concat_fusion_forward((f1, f2, f3), params)
    y2 = jax.block_until_ready(y2)
    y2_ref = _reference_forward((f1, f2, f3), params)
    err2 = float(jnp.max(jnp.abs(y2 - y2_ref)))
    assert y2.shape == (b2sz, OUT_DIM), y2.shape
    assert err2 < 5e-2, f"max abs error {err2}"

    print("KERNEL_OK")
</pallas_src>

<mosaic_0001>
module attributes {stable_mosaic.version = 11 : i64} {
  func.func @kernel(%arg0: i32, %arg1: memref<8x784xf32, #tpu.memory_space<vmem>>, %arg2: memref<8x784xf32, #tpu.memory_space<vmem>>, %arg3: memref<784x1024xbf16, #tpu.memory_space<vmem>>, %arg4: memref<784x1024xbf16, #tpu.memory_space<vmem>>, %arg5: memref<1x1024xf32, #tpu.memory_space<vmem>>, %arg6: memref<1024x512xbf16, #tpu.memory_space<vmem>>, %arg7: memref<1x512xf32, #tpu.memory_space<vmem>>, %arg8: memref<512x256xbf16, #tpu.memory_space<vmem>>, %arg9: memref<1x256xf32, #tpu.memory_space<vmem>>, %arg10: memref<8x256xf32, #tpu.memory_space<vmem>>) attributes {dimension_semantics = [#tpu.dimension_semantics<parallel>], iteration_bounds = array<i64: 1>, scalar_prefetch = 0 : i64, scratch_operands = 0 : i64, tpu.core_type = #tpu.core_type<tc>, window_params = [{transform_indices = @transform_0, window_bounds = array<i64: 8, 784>}, {transform_indices = @transform_1, window_bounds = array<i64: 8, 784>}, {pipeline_mode = #tpu.pipeline_mode<synchronous>, transform_indices = @transform_2, window_bounds = array<i64: 784, 1024>}, {pipeline_mode = #tpu.pipeline_mode<synchronous>, transform_indices = @transform_3, window_bounds = array<i64: 784, 1024>}, {pipeline_mode = #tpu.pipeline_mode<synchronous>, transform_indices = @transform_4, window_bounds = array<i64: 1, 1024>}, {pipeline_mode = #tpu.pipeline_mode<synchronous>, transform_indices = @transform_5, window_bounds = array<i64: 1024, 512>}, {pipeline_mode = #tpu.pipeline_mode<synchronous>, transform_indices = @transform_6, window_bounds = array<i64: 1, 512>}, {pipeline_mode = #tpu.pipeline_mode<synchronous>, transform_indices = @transform_7, window_bounds = array<i64: 512, 256>}, {pipeline_mode = #tpu.pipeline_mode<synchronous>, transform_indices = @transform_8, window_bounds = array<i64: 1, 256>}, {transform_indices = @transform_9, window_bounds = array<i64: 8, 256>}]} {
    %c0 = arith.constant 0 : index
    %c0_0 = arith.constant 0 : index
    %0 = vector.load %arg1[%c0, %c0_0] : memref<8x784xf32, #tpu.memory_space<vmem>>, vector<8x784xf32>
    %1 = arith.truncf %0 : vector<8x784xf32> to vector<8x784xbf16>
    %c0_1 = arith.constant 0 : index
    %c0_2 = arith.constant 0 : index
    %2 = vector.load %arg3[%c0_1, %c0_2] : memref<784x1024xbf16, #tpu.memory_space<vmem>>, vector<784x1024xbf16>
    %cst = arith.constant dense<0.000000e+00> : vector<8x1024xf32>
    %3 = tpu.matmul %1, %2, %cst {dimension_numbers = #tpu.dot_dimension_numbers<[1], [0], [0], [1], [0, 0, 1, 1], [], []>} : vector<8x784xbf16>, vector<784x1024xbf16>, vector<8x1024xf32> -> vector<8x1024xf32>
    %c0_3 = arith.constant 0 : index
    %c0_4 = arith.constant 0 : index
    %4 = vector.load %arg2[%c0_3, %c0_4] : memref<8x784xf32, #tpu.memory_space<vmem>>, vector<8x784xf32>
    %5 = arith.truncf %4 : vector<8x784xf32> to vector<8x784xbf16>
    %c0_5 = arith.constant 0 : index
    %c0_6 = arith.constant 0 : index
    %6 = vector.load %arg4[%c0_5, %c0_6] : memref<784x1024xbf16, #tpu.memory_space<vmem>>, vector<784x1024xbf16>
    %cst_7 = arith.constant dense<0.000000e+00> : vector<8x1024xf32>
    %7 = tpu.matmul %5, %6, %cst_7 {dimension_numbers = #tpu.dot_dimension_numbers<[1], [0], [0], [1], [0, 0, 1, 1], [], []>} : vector<8x784xbf16>, vector<784x1024xbf16>, vector<8x1024xf32> -> vector<8x1024xf32>
    %8 = arith.addf %3, %7 : vector<8x1024xf32>
    %c0_8 = arith.constant 0 : index
    %c0_9 = arith.constant 0 : index
    %9 = vector.load %arg5[%c0_8, %c0_9] : memref<1x1024xf32, #tpu.memory_space<vmem>>, vector<1x1024xf32>
    %10 = vector.broadcast %9 : vector<1x1024xf32> to vector<8x1024xf32>
    %11 = arith.addf %8, %10 : vector<8x1024xf32>
    %cst_10 = arith.constant 0.000000e+00 : f32
    %12 = vector.broadcast %cst_10 : f32 to vector<8x1024xf32>
    %13 = arith.maximumf %11, %12 : vector<8x1024xf32>
    %14 = arith.truncf %13 : vector<8x1024xf32> to vector<8x1024xbf16>
    %c0_11 = arith.constant 0 : index
    %c0_12 = arith.constant 0 : index
    %15 = vector.load %arg6[%c0_11, %c0_12] : memref<1024x512xbf16, #tpu.memory_space<vmem>>, vector<1024x512xbf16>
    %cst_13 = arith.constant dense<0.000000e+00> : vector<8x512xf32>
    %16 = tpu.matmul %14, %15, %cst_13 {dimension_numbers = #tpu.dot_dimension_numbers<[1], [0], [0], [1], [0, 0, 1, 1], [], []>} : vector<8x1024xbf16>, vector<1024x512xbf16>, vector<8x512xf32> -> vector<8x512xf32>
    %c0_14 = arith.constant 0 : index
    %c0_15 = arith.constant 0 : index
    %17 = vector.load %arg7[%c0_14, %c0_15] : memref<1x512xf32, #tpu.memory_space<vmem>>, vector<1x512xf32>
    %18 = vector.broadcast %17 : vector<1x512xf32> to vector<8x512xf32>
    %19 = arith.addf %16, %18 : vector<8x512xf32>
    %cst_16 = arith.constant 0.000000e+00 : f32
    %20 = vector.broadcast %cst_16 : f32 to vector<8x512xf32>
    %21 = arith.maximumf %19, %20 : vector<8x512xf32>
    %22 = arith.truncf %21 : vector<8x512xf32> to vector<8x512xbf16>
    %c0_17 = arith.constant 0 : index
    %c0_18 = arith.constant 0 : index
    %23 = vector.load %arg8[%c0_17, %c0_18] : memref<512x256xbf16, #tpu.memory_space<vmem>>, vector<512x256xbf16>
    %cst_19 = arith.constant dense<0.000000e+00> : vector<8x256xf32>
    %24 = tpu.matmul %22, %23, %cst_19 {dimension_numbers = #tpu.dot_dimension_numbers<[1], [0], [0], [1], [0, 0, 1, 1], [], []>} : vector<8x512xbf16>, vector<512x256xbf16>, vector<8x256xf32> -> vector<8x256xf32>
    %c0_20 = arith.constant 0 : index
    %c0_21 = arith.constant 0 : index
    %25 = vector.load %arg9[%c0_20, %c0_21] : memref<1x256xf32, #tpu.memory_space<vmem>>, vector<1x256xf32>
    %26 = vector.broadcast %25 : vector<1x256xf32> to vector<8x256xf32>
    %27 = arith.addf %24, %26 : vector<8x256xf32>
    %cst_22 = arith.constant 0.000000e+00 : f32
    %28 = vector.broadcast %cst_22 : f32 to vector<8x256xf32>
    %29 = arith.maximumf %27, %28 : vector<8x256xf32>
    %c0_23 = arith.constant 0 : index
    %c0_24 = arith.constant 0 : index
    %30 = vector.load %arg10[%c0_23, %c0_24] : memref<8x256xf32, #tpu.memory_space<vmem>>, vector<8x256xf32>
    tpu.vector_store %arg10[%c0_23, %c0_24], %29 {strides = array<i32>} : memref<8x256xf32, #tpu.memory_space<vmem>>, vector<8x256xf32>,
    return
  }
  func.func @transform_0(%arg0: i32) -> (i32, i32) {
    %c0_i32 = arith.constant 0 : i32
    %c0_i32_0 = arith.constant 0 : i32
    return %arg0, %c0_i32 : i32, i32
  }
  func.func @transform_1(%arg0: i32) -> (i32, i32) {
    %c0_i32 = arith.constant 0 : i32
    %c0_i32_0 = arith.constant 0 : i32
    return %arg0, %c0_i32 : i32, i32
  }
  func.func @transform_2(%arg0: i32) -> (i32, i32) {
    %c0_i32 = arith.constant 0 : i32
    %c0_i32_0 = arith.constant 0 : i32
    %c0_i32_1 = arith.constant 0 : i32
    return %c0_i32, %c0_i32_0 : i32, i32
  }
  func.func @transform_3(%arg0: i32) -> (i32, i32) {
    %c0_i32 = arith.constant 0 : i32
    %c0_i32_0 = arith.constant 0 : i32
    %c0_i32_1 = arith.constant 0 : i32
    return %c0_i32, %c0_i32_0 : i32, i32
  }
  func.func @transform_4(%arg0: i32) -> (i32, i32) {
    %c0_i32 = arith.constant 0 : i32
    %c0_i32_0 = arith.constant 0 : i32
    %c0_i32_1 = arith.constant 0 : i32
    return %c0_i32, %c0_i32_0 : i32, i32
  }
  func.func @transform_5(%arg0: i32) -> (i32, i32) {
    %c0_i32 = arith.constant 0 : i32
    %c0_i32_0 = arith.constant 0 : i32
    %c0_i32_1 = arith.constant 0 : i32
    return %c0_i32, %c0_i32_0 : i32, i32
  }
  func.func @transform_6(%arg0: i32) -> (i32, i32) {
    %c0_i32 = arith.constant 0 : i32
    %c0_i32_0 = arith.constant 0 : i32
    %c0_i32_1 = arith.constant 0 : i32
    return %c0_i32, %c0_i32_0 : i32, i32
  }
  func.func @transform_7(%arg0: i32) -> (i32, i32) {
    %c0_i32 = arith.constant 0 : i32
    %c0_i32_0 = arith.constant 0 : i32
    %c0_i32_1 = arith.constant 0 : i32
    return %c0_i32, %c0_i32_0 : i32, i32
  }
  func.func @transform_8(%arg0: i32) -> (i32, i32) {
    %c0_i32 = arith.constant 0 : i32
    %c0_i32_0 = arith.constant 0 : i32
    %c0_i32_1 = arith.constant 0 : i32
    return %c0_i32, %c0_i32_0 : i32, i32
  }
  func.func @transform_9(%arg0: i32) -> (i32, i32) {
    %c0_i32 = arith.constant 0 : i32
    %c0_i32_0 = arith.constant 0 : i32
    return %arg0, %c0_i32 : i32, i32
  }
}

</mosaic_0001>

<llo_original>
// kernel: _fused_mlp.1
$region0: #{_fused_mlp.1}
  #allocation0 [shape = 'u32[]', space=smem, size = 0x4, offset = 0x4, fixed_abs, tag = 'smem constant byte address 0x4 - core index']
  #allocation1 [shape = 'u32[144,128]{1,0:T(1,128)}', space=vmem, size = 0x12000, scoped, tag = 'internal scratch']
  %s0 = inlined_call_operand.vmem [shape: f32[2,784], index: 0, kind: input, shape index: {}]
  %s1 = inlined_call_operand.vmem [shape: f32[2,784], index: 1, kind: input, shape index: {}]
  %s2 = inlined_call_operand.vmem [shape: bf16[784,1024], index: 2, kind: input, shape index: {}]
  %s3 = inlined_call_operand.vmem [shape: bf16[784,1024], index: 3, kind: input, shape index: {}]
  %s4 = inlined_call_operand.vmem [shape: f32[1,1024], index: 4, kind: input, shape index: {}]
  %s5 = inlined_call_operand.vmem [shape: bf16[1024,512], index: 5, kind: input, shape index: {}]
  %s6 = inlined_call_operand.vmem [shape: f32[1,512], index: 6, kind: input, shape index: {}]
  %s7 = inlined_call_operand.vmem [shape: bf16[512,256], index: 7, kind: input, shape index: {}]
  %s8 = inlined_call_operand.vmem [shape: f32[1,256], index: 8, kind: input, shape index: {}]
  %s9 = inlined_call_operand.hbm [shape: f32[2,256], index: 9, kind: output, shape index: {}]
  %s10 = sld [smem:[#allocation0]]
  $region46: #{_fused_mlp.1} parent=0
    _
  %s12 = ssub.s32 1, %s10
  %s13 = scalar_select 0, %s12, %s10
  $region1: #{_fused_mlp.1} parent=0
    #allocation2 [shape = 'u8[8192]{0}', space=vmem, size = 0x2000, scoped, tag = 'output window, operand 0, single buffered']
    #allocation3 [shape = 's32[1]{0}', space=sflag, size = 0x4, scoped, tag = 'scoped memory for _fused_mlp.1']
    %14 = vsyncpa [#allocation3], 0
    // Predicated region
    $region2: #{_fused_mlp.1} parent=1 // pred_check
      _
    $region3: #{_fused_mlp.1} parent=1 // pred_check_branch
      %16 = sbr.rel (0) target = $region5
    $region4: #{_fused_mlp.1} parent=1 // pred_region
      _
    $region5: #{_fused_mlp.1} parent=1 // pred_fallthru
      _
    // Predicated region
    $region6: #{_fused_mlp.1} parent=1 // pred_check
      _
    $region7: #{_fused_mlp.1} parent=1 // pred_check_branch
      %18 = sbr.rel (0) target = $region9
    $region8: #{_fused_mlp.1} parent=1 // pred_region
      _
    $region9: #{_fused_mlp.1} parent=1 // pred_fallthru
      _
    // Predicated region
    $region10: #{_fused_mlp.1} parent=1 // pred_check
      _
    $region11: #{_fused_mlp.1} parent=1 // pred_check_branch
      %20 = sbr.rel (0) target = $region13
    $region12: #{_fused_mlp.1} parent=1 // pred_region
      _
    $region13: #{_fused_mlp.1} parent=1 // pred_fallthru
      _
    // Predicated region
    $region14: #{_fused_mlp.1} parent=1 // pred_check
      _
    $region15: #{_fused_mlp.1} parent=1 // pred_check_branch
      %22 = sbr.rel (0) target = $region17
    $region16: #{_fused_mlp.1} parent=1 // pred_region
      _
    $region17: #{_fused_mlp.1} parent=1 // pred_fallthru
      _
    // Predicated region
    $region18: #{_fused_mlp.1} parent=1 // pred_check
      _
    $region19: #{_fused_mlp.1} parent=1 // pred_check_branch
      %24 = sbr.rel (0) target = $region21
    $region20: #{_fused_mlp.1} parent=1 // pred_region
      _
    $region21: #{_fused_mlp.1} parent=1 // pred_fallthru
      _
    // Predicated region
    $region22: #{_fused_mlp.1} parent=1 // pred_check
      _
    $region23: #{_fused_mlp.1} parent=1 // pred_check_branch
      %26 = sbr.rel (0) target = $region25
    $region24: #{_fused_mlp.1} parent=1 // pred_region
      _
    $region25: #{_fused_mlp.1} parent=1 // pred_fallthru
      _
    // Predicated region
    $region26: #{_fused_mlp.1} parent=1 // pred_check
      _
    $region27: #{_fused_mlp.1} parent=1 // pred_check_branch
      %28 = sbr.rel (0) target = $region29
    $region28: #{_fused_mlp.1} parent=1 // pred_region
      _
    $region29: #{_fused_mlp.1} parent=1 // pred_fallthru
      _
    // Predicated region
    $region30: #{_fused_mlp.1} parent=1 // pred_check
      _
    $region31: #{_fused_mlp.1} parent=1 // pred_check_branch
      %30 = sbr.rel (0) target = $region33
    $region32: #{_fused_mlp.1} parent=1 // pred_region
      _
    $region33: #{_fused_mlp.1} parent=1 // pred_fallthru
      _
    // Predicated region
    $region34: #{_fused_mlp.1} parent=1 // pred_check
      _
    $region35: #{_fused_mlp.1} parent=1 // pred_check_branch
      %32 = sbr.rel (0) target = $region37
    $region36: #{_fused_mlp.1} parent=1 // pred_region
      _
    $region37: #{_fused_mlp.1} parent=1 // pred_fallthru
      _
    %v34 = vld [vmem:[%s0] sm:$0xff]
    %v35 = vld [vmem:[%s0 + $0x8] sm:$0x3f]
    %v36 = vld [vmem:[%s0 + $0xe] sm:$0xff]
    %v37 = vld [vmem:[%s0 + $0x16] sm:$0x3f]
    %v38 = vld [vmem:[%s0 + $0x1c] sm:$0xff]
    %v39 = vld [vmem:[%s0 + $0x24] sm:$0x3f]
    %v40 = vld [vmem:[%s0 + $0x2a] sm:$0xff]
    %v41 = vld [vmem:[%s0 + $0x32] sm:$0x3f]
    %v50 = vcombine.low %v34, %v36
    %v51 = vcombine.high %v34, %v36
    %v52 = vcombine.low %v38, %v40
    %v53 = vcombine.high %v38, %v40
    %v55 = vunpack.c.l.s4 1983009808
    %v56 = vunpack.c.0.s8 %v55
    %v57 = vlaneseq
    %v58 = vshrl.u32 %v57, 7
    %v59 = vsub.s32 %v56, %v58
    %v60 = vrot.slane %v50, %v59
    %v62 = vunpack.c.l.s4 1983009808
    %v63 = vunpack.c.0.s8 %v62
    %v64 = vlaneseq
    %v65 = vshrl.u32 %v64, 7
    %v66 = vsub.s32 %v63, %v65
    %v67 = vrot.slane %v51, %v66
    %v69 = vunpack.c.l.s4 1983009808
    %v70 = vunpack.c.0.s8 %v69
    %v71 = vlaneseq
    %v72 = vshrl.u32 %v71, 7
    %v73 = vsub.s32 %v70, %v72
    %v74 = vrot.slane %v52, %v73
    %v76 = vunpack.c.l.s4 1983009808
    %v77 = vunpack.c.0.s8 %v76
    %v78 = vlaneseq
    %v79 = vshrl.u32 %v78, 7
    %v80 = vsub.s32 %v77, %v79
    %v81 = vrot.slane %v53, %v80
    %v82 = vcombine.low %v60, %v74
    %v83 = vcombine.high %v60, %v74
    %v84 = vcombine.low %v67, %v81
    %v85 = vcombine.high %v67, %v81
    %v86 = vcombine.low %v35, %v37
    %v87 = vcombine.high %v35, %v37
    %v88 = vcombine.low %v39, %v41
    %v89 = vcombine.high %v39, %v41
    %v91 = vunpack.c.l.s4 1983009808
    %v92 = vunpack.c.0.s8 %v91
    %v93 = vlaneseq
    %v94 = vshrl.u32 %v93, 7
    %v95 = vsub.s32 %v92, %v94
    %v96 = vrot.slane %v86, %v95
    %v98 = vunpack.c.l.s4 1983009808
    %v99 = vunpack.c.0.s8 %v98
    %v100 = vlaneseq
    %v101 = vshrl.u32 %v100, 7
    %v102 = vsub.s32 %v99, %v101
    %v103 = vrot.slane %v87, %v102
    %v105 = vunpack.c.l.s4 1983009808
    %v106 = vunpack.c.0.s8 %v105
    %v107 = vlaneseq
    %v108 = vshrl.u32 %v107, 7
    %v109 = vsub.s32 %v106, %v108
    %v110 = vrot.slane %v88, %v109
    %v112 = vunpack.c.l.s4 1983009808
    %v113 = vunpack.c.0.s8 %v112
    %v114 = vlaneseq
    %v115 = vshrl.u32 %v114, 7
    %v116 = vsub.s32 %v113, %v115
    %v117 = vrot.slane %v89, %v116
    %v118 = vcombine.low %v96, %v110
    %v119 = vcombine.high %v96, %v110
    %v120 = vcombine.low %v103, %v117
    %v128 = vpack.c.bf16 %v82, %v82
    %v129 = vpack.c.bf16 %v83, %v83
    %v130 = vpack.c.bf16 %v84, %v84
    %v131 = vpack.c.bf16 %v85, %v85
    %v132 = vpack.c.bf16 %v118, %v118
    %v133 = vpack.c.bf16 %v119, %v119
    %v134 = vpack.c.bf16 %v120, %v120
    %v135 = vld [vmem:[%s2] sm:$0xff]
    %v136 = vld [vmem:[%s2 + $0x8] sm:$0xff]
    %v137 = vld [vmem:[%s2 + $0x10] sm:$0xff]
    %v138 = vld [vmem:[%s2 + $0x18] sm:$0xff]
    %v139 = vld [vmem:[%s2 + $0x20] sm:$0xff]
    %v140 = vld [vmem:[%s2 + $0x28] sm:$0xff]
    %v141 = vld [vmem:[%s2 + $0x30] sm:$0xff]
    %v142 = vld [vmem:[%s2 + $0x38] sm:$0xff]
    %v143 = vld [vmem:[%s2 + $0x40] sm:$0xff]
    %v144 = vld [vmem:[%s2 + $0x48] sm:$0xff]
    %v145 = vld [vmem:[%s2 + $0x50] sm:$0xff]
    %v146 = vld [vmem:[%s2 + $0x58] sm:$0xff]
    %v147 = vld [vmem:[%s2 + $0x60] sm:$0xff]
    %v148 = vld [vmem:[%s2 + $0x68] sm:$0xff]
    %v149 = vld [vmem:[%s2 + $0x70] sm:$0xff]
    %v150 = vld [vmem:[%s2 + $0x78] sm:$0xff]
    %v151 = vld [vmem:[%s2 + $0x80] sm:$0xff]
    %v152 = vld [vmem:[%s2 + $0x88] sm:$0xff]
    %v153 = vld [vmem:[%s2 + $0x90] sm:$0xff]
    %v154 = vld [vmem:[%s2 + $0x98] sm:$0xff]
    %v155 = vld [vmem:[%s2 + $0xa0] sm:$0xff]
    %v156 = vld [vmem:[%s2 + $0xa8] sm:$0xff]
    %v157 = vld [vmem:[%s2 + $0xb0] sm:$0xff]
    %v158 = vld [vmem:[%s2 + $0xb8] sm:$0xff]
    %v159 = vld [vmem:[%s2 + $0xc0] sm:$0xff]
    %v160 = vld [vmem:[%s2 + $0xc8] sm:$0xff]
    %v161 = vld [vmem:[%s2 + $0xd0] sm:$0xff]
    %v162 = vld [vmem:[%s2 + $0xd8] sm:$0xff]
    %v163 = vld [vmem:[%s2 + $0xe0] sm:$0xff]
    %v164 = vld [vmem:[%s2 + $0xe8] sm:$0xff]
    %v165 = vld [vmem:[%s2 + $0xf0] sm:$0xff]
    %v166 = vld [vmem:[%s2 + $0xf8] sm:$0xff]
    %v167 = vld [vmem:[%s2 + $0x100] sm:$0xff]
    %v168 = vld [vmem:[%s2 + $0x108] sm:$0xff]
    %v169 = vld [vmem:[%s2 + $0x110] sm:$0xff]
    %v170 = vld [vmem:[%s2 + $0x118] sm:$0xff]
    %v171 = vld [vmem:[%s2 + $0x120] sm:$0xff]
    %v172 = vld [vmem:[%s2 + $0x128] sm:$0xff]
    %v173 = vld [vmem:[%s2 + $0x130] sm:$0xff]
    %v174 = vld [vmem:[%s2 + $0x138] sm:$0xff]
    %v175 = vld [vmem:[%s2 + $0x140] sm:$0xff]
    %v176 = vld [vmem:[%s2 + $0x148] sm:$0xff]
    %v177 = vld [vmem:[%s2 + $0x150] sm:$0xff]
    %v178 = vld [vmem:[%s2 + $0x158] sm:$0xff]
    %v179 = vld [vmem:[%s2 + $0x160] sm:$0xff]
    %v180 = vld [vmem:[%s2 + $0x168] sm:$0xff]
    %v181 = vld [vmem:[%s2 + $0x170] sm:$0xff]
    %v182 = vld [vmem:[%s2 + $0x178] sm:$0xff]
    %v183 = vld [vmem:[%s2 + $0x180] sm:$0xff]
    %v184 = vld [vmem:[%s2 + $0x188] sm:$0xff]
    %v185 = vld [vmem:[%s2 + $0x190] sm:$0xff]
    %v186 = vld [vmem:[%s2 + $0x198] sm:$0xff]
    %v187 = vld [vmem:[%s2 + $0x1a0] sm:$0xff]
    %v188 = vld [vmem:[%s2 + $0x1a8] sm:$0xff]
    %v189 = vld [vmem:[%s2 + $0x1b0] sm:$0xff]
    %v190 = vld [vmem:[%s2 + $0x1b8] sm:$0xff]
    %v191 = vld [vmem:[%s2 + $0x1c0] sm:$0xff]
    %v192 = vld [vmem:[%s2 + $0x1c8] sm:$0xff]
    %v193 = vld [vmem:[%s2 + $0x1d0] sm:$0xff]
    %v194 = vld [vmem:[%s2 + $0x1d8] sm:$0xff]
    %v195 = vld [vmem:[%s2 + $0x1e0] sm:$0xff]
    %v196 = vld [vmem:[%s2 + $0x1e8] sm:$0xff]
    %v197 = vld [vmem:[%s2 + $0x1f0] sm:$0xff]
    %v198 = vld [vmem:[%s2 + $0x1f8] sm:$0xff]
    %v199 = vld [vmem:[%s2 + $0x200] sm:$0xff]
    %v200 = vld [vmem:[%s2 + $0x208] sm:$0xff]
    %v201 = vld [vmem:[%s2 + $0x210] sm:$0xff]
    %v202 = vld [vmem:[%s2 + $0x218] sm:$0xff]
    %v203 = vld [vmem:[%s2 + $0x220] sm:$0xff]
    %v204 = vld [vmem:[%s2 + $0x228] sm:$0xff]
    %v205 = vld [vmem:[%s2 + $0x230] sm:$0xff]
    %v206 = vld [vmem:[%s2 + $0x238] sm:$0xff]
    %v207 = vld [vmem:[%s2 + $0x240] sm:$0xff]
    %v208 = vld [vmem:[%s2 + $0x248] sm:$0xff]
    %v209 = vld [vmem:[%s2 + $0x250] sm:$0xff]
    %v210 = vld [vmem:[%s2 + $0x258] sm:$0xff]
    %v211 = vld [vmem:[%s2 + $0x260] sm:$0xff]
    %v212 = vld [vmem:[%s2 + $0x268] sm:$0xff]
    %v213 = vld [vmem:[%s2 + $0x270] sm:$0xff]
    %v214 = vld [vmem:[%s2 + $0x278] sm:$0xff]
    %v215 = vld [vmem:[%s2 + $0x280] sm:$0xff]
    %v216 = vld [vmem:[%s2 + $0x288] sm:$0xff]
    %v217 = vld [vmem:[%s2 + $0x290] sm:$0xff]
    %v218 = vld [vmem:[%s2 + $0x298] sm:$0xff]
    %v219 = vld [vmem:[%s2 + $0x2a0] sm:$0xff]
    %v220 = vld [vmem:[%s2 + $0x2a8] sm:$0xff]
    %v221 = vld [vmem:[%s2 + $0x2b0] sm:$0xff]
    %v222 = vld [vmem:[%s2 + $0x2b8] sm:$0xff]
    %v223 = vld [vmem:[%s2 + $0x2c0] sm:$0xff]
    %v224 = vld [vmem:[%s2 + $0x2c8] sm:$0xff]
    %v225 = vld [vmem:[%s2 + $0x2d0] sm:$0xff]
    %v226 = vld [vmem:[%s2 + $0x2d8] sm:$0xff]
    %v227 = vld [vmem:[%s2 + $0x2e0] sm:$0xff]
    %v228 = vld [vmem:[%s2 + $0x2e8] sm:$0xff]
    %v229 = vld [vmem:[%s2 + $0x2f0] sm:$0xff]
    %v230 = vld [vmem:[%s2 + $0x2f8] sm:$0xff]
    %v231 = vld [vmem:[%s2 + $0x300] sm:$0xff]
    %v232 = vld [vmem:[%s2 + $0x308] sm:$0xff]
    %v233 = vld [vmem:[%s2 + $0x310] sm:$0xff]
    %v234 = vld [vmem:[%s2 + $0x318] sm:$0xff]
    %v235 = vld [vmem:[%s2 + $0x320] sm:$0xff]
    %v236 = vld [vmem:[%s2 + $0x328] sm:$0xff]
    %v237 = vld [vmem:[%s2 + $0x330] sm:$0xff]
    %v238 = vld [vmem:[%s2 + $0x338] sm:$0xff]
    %v239 = vld [vmem:[%s2 + $0x340] sm:$0xff]
    %v240 = vld [vmem:[%s2 + $0x348] sm:$0xff]
    %v241 = vld [vmem:[%s2 + $0x350] sm:$0xff]
    %v242 = vld [vmem:[%s2 + $0x358] sm:$0xff]
    %v243 = vld [vmem:[%s2 + $0x360] sm:$0xff]
    %v244 = vld [vmem:[%s2 + $0x368] sm:$0xff]
    %v245 = vld [vmem:[%s2 + $0x370] sm:$0xff]
    %v246 = vld [vmem:[%s2 + $0x378] sm:$0xff]
    %v247 = vld [vmem:[%s2 + $0x380] sm:$0xff]
    %v248 = vld [vmem:[%s2 + $0x388] sm:$0xff]
    %v249 = vld [vmem:[%s2 + $0x390] sm:$0xff]
    %v250 = vld [vmem:[%s2 + $0x398] sm:$0xff]
    %v251 = vld [vmem:[%s2 + $0x3a0] sm:$0xff]
    %v252 = vld [vmem:[%s2 + $0x3a8] sm:$0xff]
    %v253 = vld [vmem:[%s2 + $0x3b0] sm:$0xff]
    %v254 = vld [vmem:[%s2 + $0x3b8] sm:$0xff]
    %v255 = vld [vmem:[%s2 + $0x3c0] sm:$0xff]
    %v256 = vld [vmem:[%s2 + $0x3c8] sm:$0xff]
    %v257 = vld [vmem:[%s2 + $0x3d0] sm:$0xff]
    %v258 = vld [vmem:[%s2 + $0x3d8] sm:$0xff]
    %v259 = vld [vmem:[%s2 + $0x3e0] sm:$0xff]
    %v260 = vld [vmem:[%s2 + $0x3e8] sm:$0xff]
    %v261 = vld [vmem:[%s2 + $0x3f0] sm:$0xff]
    %v262 = vld [vmem:[%s2 + $0x3f8] sm:$0xff]
    %v263 = vld [vmem:[%s2 + $0x400] sm:$0xff]
    %v264 = vld [vmem:[%s2 + $0x408] sm:$0xff]
    %v265 = vld [vmem:[%s2 + $0x410] sm:$0xff]
    %v266 = vld [vmem:[%s2 + $0x418] sm:$0xff]
    %v267 = vld [vmem:[%s2 + $0x420] sm:$0xff]
    %v268 = vld [vmem:[%s2 + $0x428] sm:$0xff]
    %v269 = vld [vmem:[%s2 + $0x430] sm:$0xff]
    %v270 = vld [vmem:[%s2 + $0x438] sm:$0xff]
    %v271 = vld [vmem:[%s2 + $0x440] sm:$0xff]
    %v272 = vld [vmem:[%s2 + $0x448] sm:$0xff]
    %v273 = vld [vmem:[%s2 + $0x450] sm:$0xff]
    %v274 = vld [vmem:[%s2 + $0x458] sm:$0xff]
    %v275 = vld [vmem:[%s2 + $0x460] sm:$0xff]
    %v276 = vld [vmem:[%s2 + $0x468] sm:$0xff]
    %v277 = vld [vmem:[%s2 + $0x470] sm:$0xff]
    %v278 = vld [vmem:[%s2 + $0x478] sm:$0xff]
    %v279 = vld [vmem:[%s2 + $0x480] sm:$0xff]
    %v280 = vld [vmem:[%s2 + $0x488] sm:$0xff]
    %v281 = vld [vmem:[%s2 + $0x490] sm:$0xff]
    %v282 = vld [vmem:[%s2 + $0x498] sm:$0xff]
    %v283 = vld [vmem:[%s2 + $0x4a0] sm:$0xff]
    %v284 = vld [vmem:[%s2 + $0x4a8] sm:$0xff]
    %v285 = vld [vmem:[%s2 + $0x4b0] sm:$0xff]
    %v286 = vld [vmem:[%s2 + $0x4b8] sm:$0xff]
    %v287 = vld [vmem:[%s2 + $0x4c0] sm:$0xff]
    %v288 = vld [vmem:[%s2 + $0x4c8] sm:$0xff]
    %v289 = vld [vmem:[%s2 + $0x4d0] sm:$0xff]
    %v290 = vld [vmem:[%s2 + $0x4d8] sm:$0xff]
    %v291 = vld [vmem:[%s2 + $0x4e0] sm:$0xff]
    %v292 = vld [vmem:[%s2 + $0x4e8] sm:$0xff]
    %v293 = vld [vmem:[%s2 + $0x4f0] sm:$0xff]
    %v294 = vld [vmem:[%s2 + $0x4f8] sm:$0xff]
    %v295 = vld [vmem:[%s2 + $0x500] sm:$0xff]
    %v296 = vld [vmem:[%s2 + $0x508] sm:$0xff]
    %v297 = vld [vmem:[%s2 + $0x510] sm:$0xff]
    %v298 = vld [vmem:[%s2 + $0x518] sm:$0xff]
    %v299 = vld [vmem:[%s2 + $0x520] sm:$0xff]
    %v300 = vld [vmem:[%s2 + $0x528] sm:$0xff]
    %v301 = vld [vmem:[%s2 + $0x530] sm:$0xff]
    %v302 = vld [vmem:[%s2 + $0x538] sm:$0xff]
    %v303 = vld [vmem:[%s2 + $0x540] sm:$0xff]
    %v304 = vld [vmem:[%s2 + $0x548] sm:$0xff]
    %v305 = vld [vmem:[%s2 + $0x550] sm:$0xff]
    %v306 = vld [vmem:[%s2 + $0x558] sm:$0xff]
    %v307 = vld [vmem:[%s2 + $0x560] sm:$0xff]
    %v308 = vld [vmem:[%s2 + $0x568] sm:$0xff]
    %v309 = vld [vmem:[%s2 + $0x570] sm:$0xff]
    %v310 = vld [vmem:[%s2 + $0x578] sm:$0xff]
    %v311 = vld [vmem:[%s2 + $0x580] sm:$0xff]
    %v312 = vld [vmem:[%s2 + $0x588] sm:$0xff]
    %v313 = vld [vmem:[%s2 + $0x590] sm:$0xff]
    %v314 = vld [vmem:[%s2 + $0x598] sm:$0xff]
    %v315 = vld [vmem:[%s2 + $0x5a0] sm:$0xff]
    %v316 = vld [vmem:[%s2 + $0x5a8] sm:$0xff]
    %v317 = vld [vmem:[%s2 + $0x5b0] sm:$0xff]
    %v318 = vld [vmem:[%s2 + $0x5b8] sm:$0xff]
    %v319 = vld [vmem:[%s2 + $0x5c0] sm:$0xff]
    %v320 = vld [vmem:[%s2 + $0x5c8] sm:$0xff]
    %v321 = vld [vmem:[%s2 + $0x5d0] sm:$0xff]
    %v322 = vld [vmem:[%s2 + $0x5d8] sm:$0xff]
    %v323 = vld [vmem:[%s2 + $0x5e0] sm:$0xff]
    %v324 = vld [vmem:[%s2 + $0x5e8] sm:$0xff]
    %v325 = vld [vmem:[%s2 + $0x5f0] sm:$0xff]
    %v326 = vld [vmem:[%s2 + $0x5f8] sm:$0xff]
    %v327 = vld [vmem:[%s2 + $0x600] sm:$0xff]
    %v328 = vld [vmem:[%s2 + $0x608] sm:$0xff]
    %v329 = vld [vmem:[%s2 + $0x610] sm:$0xff]
    %v330 = vld [vmem:[%s2 + $0x618] sm:$0xff]
    %v331 = vld [vmem:[%s2 + $0x620] sm:$0xff]
    %v332 = vld [vmem:[%s2 + $0x628] sm:$0xff]
    %v333 = vld [vmem:[%s2 + $0x630] sm:$0xff]
    %v334 = vld [vmem:[%s2 + $0x638] sm:$0xff]
    %v335 = vld [vmem:[%s2 + $0x640] sm:$0xff]
    %v336 = vld [vmem:[%s2 + $0x648] sm:$0xff]
    %v337 = vld [vmem:[%s2 + $0x650] sm:$0xff]
    %v338 = vld [vmem:[%s2 + $0x658] sm:$0xff]
    %v339 = vld [vmem:[%s2 + $0x660] sm:$0xff]
    %v340 = vld [vmem:[%s2 + $0x668] sm:$0xff]
    %v341 = vld [vmem:[%s2 + $0x670] sm:$0xff]
    %v342 = vld [vmem:[%s2 + $0x678] sm:$0xff]
    %v343 = vld [vmem:[%s2 + $0x680] sm:$0xff]
    %v344 = vld [vmem:[%s2 + $0x688] sm:$0xff]
    %v345 = vld [vmem:[%s2 + $0x690] sm:$0xff]
    %v346 = vld [vmem:[%s2 + $0x698] sm:$0xff]
    %v347 = vld [vmem:[%s2 + $0x6a0] sm:$0xff]
    %v348 = vld [vmem:[%s2 + $0x6a8] sm:$0xff]
    %v349 = vld [vmem:[%s2 + $0x6b0] sm:$0xff]
    %v350 = vld [vmem:[%s2 + $0x6b8] sm:$0xff]
    %v351 = vld [vmem:[%s2 + $0x6c0] sm:$0xff]
    %v352 = vld [vmem:[%s2 + $0x6c8] sm:$0xff]
    %v353 = vld [vmem:[%s2 + $0x6d0] sm:$0xff]
    %v354 = vld [vmem:[%s2 + $0x6d8] sm:$0xff]
    %v355 = vld [vmem:[%s2 + $0x6e0] sm:$0xff]
    %v356 = vld [vmem:[%s2 + $0x6e8] sm:$0xff]
    %v357 = vld [vmem:[%s2 + $0x6f0] sm:$0xff]
    %v358 = vld [vmem:[%s2 + $0x6f8] sm:$0xff]
    %v359 = vld [vmem:[%s2 + $0x700] sm:$0xff]
    %v360 = vld [vmem:[%s2 + $0x708] sm:$0xff]
    %v361 = vld [vmem:[%s2 + $0x710] sm:$0xff]
    %v362 = vld [vmem:[%s2 + $0x718] sm:$0xff]
    %v363 = vld [vmem:[%s2 + $0x720] sm:$0xff]
    %v364 = vld [vmem:[%s2 + $0x728] sm:$0xff]
    %v365 = vld [vmem:[%s2 + $0x730] sm:$0xff]
    %v366 = vld [vmem:[%s2 + $0x738] sm:$0xff]
    %v367 = vld [vmem:[%s2 + $0x740] sm:$0xff]
    %v368 = vld [vmem:[%s2 + $0x748] sm:$0xff]
    %v369 = vld [vmem:[%s2 + $0x750] sm:$0xff]
    %v370 = vld [vmem:[%s2 + $0x758] sm:$0xff]
    %v371 = vld [vmem:[%s2 + $0x760] sm:$0xff]
    %v372 = vld [vmem:[%s2 + $0x768] sm:$0xff]
    %v373 = vld [vmem:[%s2 + $0x770] sm:$0xff]
    %v374 = vld [vmem:[%s2 + $0x778] sm:$0xff]
    %v375 = vld [vmem:[%s2 + $0x780] sm:$0xff]
    %v376 = vld [vmem:[%s2 + $0x788] sm:$0xff]
    %v377 = vld [vmem:[%s2 + $0x790] sm:$0xff]
    %v378 = vld [vmem:[%s2 + $0x798] sm:$0xff]
    %v379 = vld [vmem:[%s2 + $0x7a0] sm:$0xff]
    %v380 = vld [vmem:[%s2 + $0x7a8] sm:$0xff]
    %v381 = vld [vmem:[%s2 + $0x7b0] sm:$0xff]
    %v382 = vld [vmem:[%s2 + $0x7b8] sm:$0xff]
    %v383 = vld [vmem:[%s2 + $0x7c0] sm:$0xff]
    %v384 = vld [vmem:[%s2 + $0x7c8] sm:$0xff]
    %v385 = vld [vmem:[%s2 + $0x7d0] sm:$0xff]
    %v386 = vld [vmem:[%s2 + $0x7d8] sm:$0xff]
    %v387 = vld [vmem:[%s2 + $0x7e0] sm:$0xff]
    %v388 = vld [vmem:[%s2 + $0x7e8] sm:$0xff]
    %v389 = vld [vmem:[%s2 + $0x7f0] sm:$0xff]
    %v390 = vld [vmem:[%s2 + $0x7f8] sm:$0xff]
    %v391 = vld [vmem:[%s2 + $0x800] sm:$0xff]
    %v392 = vld [vmem:[%s2 + $0x808] sm:$0xff]
    %v393 = vld [vmem:[%s2 + $0x810] sm:$0xff]
    %v394 = vld [vmem:[%s2 + $0x818] sm:$0xff]
    %v395 = vld [vmem:[%s2 + $0x820] sm:$0xff]
    %v396 = vld [vmem:[%s2 + $0x828] sm:$0xff]
    %v397 = vld [vmem:[%s2 + $0x830] sm:$0xff]
    %v398 = vld [vmem:[%s2 + $0x838] sm:$0xff]
    %v399 = vld [vmem:[%s2 + $0x840] sm:$0xff]
    %v400 = vld [vmem:[%s2 + $0x848] sm:$0xff]
    %v401 = vld [vmem:[%s2 + $0x850] sm:$0xff]
    %v402 = vld [vmem:[%s2 + $0x858] sm:$0xff]
    %v403 = vld [vmem:[%s2 + $0x860] sm:$0xff]
    %v404 = vld [vmem:[%s2 + $0x868] sm:$0xff]
    %v405 = vld [vmem:[%s2 + $0x870] sm:$0xff]
    %v406 = vld [vmem:[%s2 + $0x878] sm:$0xff]
    %v407 = vld [vmem:[%s2 + $0x880] sm:$0xff]
    %v408 = vld [vmem:[%s2 + $0x888] sm:$0xff]
    %v409 = vld [vmem:[%s2 + $0x890] sm:$0xff]
    %v410 = vld [vmem:[%s2 + $0x898] sm:$0xff]
    %v411 = vld [vmem:[%s2 + $0x8a0] sm:$0xff]
    %v412 = vld [vmem:[%s2 + $0x8a8] sm:$0xff]
    %v413 = vld [vmem:[%s2 + $0x8b0] sm:$0xff]
    %v414 = vld [vmem:[%s2 + $0x8b8] sm:$0xff]
    %v415 = vld [vmem:[%s2 + $0x8c0] sm:$0xff]
    %v416 = vld [vmem:[%s2 + $0x8c8] sm:$0xff]
    %v417 = vld [vmem:[%s2 + $0x8d0] sm:$0xff]
    %v418 = vld [vmem:[%s2 + $0x8d8] sm:$0xff]
    %v419 = vld [vmem:[%s2 + $0x8e0] sm:$0xff]
    %v420 = vld [vmem:[%s2 + $0x8e8] sm:$0xff]
    %v421 = vld [vmem:[%s2 + $0x8f0] sm:$0xff]
    %v422 = vld [vmem:[%s2 + $0x8f8] sm:$0xff]
    %v423 = vld [vmem:[%s2 + $0x900] sm:$0xff]
    %v424 = vld [vmem:[%s2 + $0x908] sm:$0xff]
    %v425 = vld [vmem:[%s2 + $0x910] sm:$0xff]
    %v426 = vld [vmem:[%s2 + $0x918] sm:$0xff]
    %v427 = vld [vmem:[%s2 + $0x920] sm:$0xff]
    %v428 = vld [vmem:[%s2 + $0x928] sm:$0xff]
    %v429 = vld [vmem:[%s2 + $0x930] sm:$0xff]
    %v430 = vld [vmem:[%s2 + $0x938] sm:$0xff]
    %v431 = vld [vmem:[%s2 + $0x940] sm:$0xff]
    %v432 = vld [vmem:[%s2 + $0x948] sm:$0xff]
    %v433 = vld [vmem:[%s2 + $0x950] sm:$0xff]
    %v434 = vld [vmem:[%s2 + $0x958] sm:$0xff]
    %v435 = vld [vmem:[%s2 + $0x960] sm:$0xff]
    %v436 = vld [vmem:[%s2 + $0x968] sm:$0xff]
    %v437 = vld [vmem:[%s2 + $0x970] sm:$0xff]
    %v438 = vld [vmem:[%s2 + $0x978] sm:$0xff]
    %v439 = vld [vmem:[%s2 + $0x980] sm:$0xff]
    %v440 = vld [vmem:[%s2 + $0x988] sm:$0xff]
    %v441 = vld [vmem:[%s2 + $0x990] sm:$0xff]
    %v442 = vld [vmem:[%s2 + $0x998] sm:$0xff]
    %v443 = vld [vmem:[%s2 + $0x9a0] sm:$0xff]
    %v444 = vld [vmem:[%s2 + $0x9a8] sm:$0xff]
    %v445 = vld [vmem:[%s2 + $0x9b0] sm:$0xff]
    %v446 = vld [vmem:[%s2 + $0x9b8] sm:$0xff]
    %v447 = vld [vmem:[%s2 + $0x9c0] sm:$0xff]
    %v448 = vld [vmem:[%s2 + $0x9c8] sm:$0xff]
    %v449 = vld [vmem:[%s2 + $0x9d0] sm:$0xff]
    %v450 = vld [vmem:[%s2 + $0x9d8] sm:$0xff]
    %v451 = vld [vmem:[%s2 + $0x9e0] sm:$0xff]
    %v452 = vld [vmem:[%s2 + $0x9e8] sm:$0xff]
    %v453 = vld [vmem:[%s2 + $0x9f0] sm:$0xff]
    %v454 = vld [vmem:[%s2 + $0x9f8] sm:$0xff]
    %v455 = vld [vmem:[%s2 + $0xa00] sm:$0xff]
    %v456 = vld [vmem:[%s2 + $0xa08] sm:$0xff]
    %v457 = vld [vmem:[%s2 + $0xa10] sm:$0xff]
    %v458 = vld [vmem:[%s2 + $0xa18] sm:$0xff]
    %v459 = vld [vmem:[%s2 + $0xa20] sm:$0xff]
    %v460 = vld [vmem:[%s2 + $0xa28] sm:$0xff]
    %v461 = vld [vmem:[%s2 + $0xa30] sm:$0xff]
    %v462 = vld [vmem:[%s2 + $0xa38] sm:$0xff]
    %v463 = vld [vmem:[%s2 + $0xa40] sm:$0xff]
    %v464 = vld [vmem:[%s2 + $0xa48] sm:$0xff]
    %v465 = vld [vmem:[%s2 + $0xa50] sm:$0xff]
    %v466 = vld [vmem:[%s2 + $0xa58] sm:$0xff]
    %v467 = vld [vmem:[%s2 + $0xa60] sm:$0xff]
    %v468 = vld [vmem:[%s2 + $0xa68] sm:$0xff]
    %v469 = vld [vmem:[%s2 + $0xa70] sm:$0xff]
    %v470 = vld [vmem:[%s2 + $0xa78] sm:$0xff]
    %v471 = vld [vmem:[%s2 + $0xa80] sm:$0xff]
    %v472 = vld [vmem:[%s2 + $0xa88] sm:$0xff]
    %v473 = vld [vmem:[%s2 + $0xa90] sm:$0xff]
    %v474 = vld [vmem:[%s2 + $0xa98] sm:$0xff]
    %v475 = vld [vmem:[%s2 + $0xaa0] sm:$0xff]
    %v476 = vld [vmem:[%s2 + $0xaa8] sm:$0xff]
    %v477 = vld [vmem:[%s2 + $0xab0] sm:$0xff]
    %v478 = vld [vmem:[%s2 + $0xab8] sm:$0xff]
    %v479 = vld [vmem:[%s2 + $0xac0] sm:$0xff]
    %v480 = vld [vmem:[%s2 + $0xac8] sm:$0xff]
    %v481 = vld [vmem:[%s2 + $0xad0] sm:$0xff]
    %v482 = vld [vmem:[%s2 + $0xad8] sm:$0xff]
    %v483 = vld [vmem:[%s2 + $0xae0] sm:$0xff]
    %v484 = vld [vmem:[%s2 + $0xae8] sm:$0xff]
    %v485 = vld [vmem:[%s2 + $0xaf0] sm:$0xff]
    %v486 = vld [vmem:[%s2 + $0xaf8] sm:$0xff]
    %v487 = vld [vmem:[%s2 + $0xb00] sm:$0xff]
    %v488 = vld [vmem:[%s2 + $0xb08] sm:$0xff]
    %v489 = vld [vmem:[%s2 + $0xb10] sm:$0xff]
    %v490 = vld [vmem:[%s2 + $0xb18] sm:$0xff]
    %v491 = vld [vmem:[%s2 + $0xb20] sm:$0xff]
    %v492 = vld [vmem:[%s2 + $0xb28] sm:$0xff]
    %v493 = vld [vmem:[%s2 + $0xb30] sm:$0xff]
    %v494 = vld [vmem:[%s2 + $0xb38] sm:$0xff]
    %v495 = vld [vmem:[%s2 + $0xb40] sm:$0xff]
    %v496 = vld [vmem:[%s2 + $0xb48] sm:$0xff]
    %v497 = vld [vmem:[%s2 + $0xb50] sm:$0xff]
    %v498 = vld [vmem:[%s2 + $0xb58] sm:$0xff]
    %v499 = vld [vmem:[%s2 + $0xb60] sm:$0xff]
    %v500 = vld [vmem:[%s2 + $0xb68] sm:$0xff]
    %v501 = vld [vmem:[%s2 + $0xb70] sm:$0xff]
    %v502 = vld [vmem:[%s2 + $0xb78] sm:$0xff]
    %v503 = vld [vmem:[%s2 + $0xb80] sm:$0xff]
    %v504 = vld [vmem:[%s2 + $0xb88] sm:$0xff]
    %v505 = vld [vmem:[%s2 + $0xb90] sm:$0xff]
    %v506 = vld [vmem:[%s2 + $0xb98] sm:$0xff]
    %v507 = vld [vmem:[%s2 + $0xba0] sm:$0xff]
    %v508 = vld [vmem:[%s2 + $0xba8] sm:$0xff]
    %v509 = vld [vmem:[%s2 + $0xbb0] sm:$0xff]
    %v510 = vld [vmem:[%s2 + $0xbb8] sm:$0xff]
    %v511 = vld [vmem:[%s2 + $0xbc0] sm:$0xff]
    %v512 = vld [vmem:[%s2 + $0xbc8] sm:$0xff]
    %v513 = vld [vmem:[%s2 + $0xbd0] sm:$0xff]
    %v514 = vld [vmem:[%s2 + $0xbd8] sm:$0xff]
    %v515 = vld [vmem:[%s2 + $0xbe0] sm:$0xff]
    %v516 = vld [vmem:[%s2 + $0xbe8] sm:$0xff]
    %v517 = vld [vmem:[%s2 + $0xbf0] sm:$0xff]
    %v518 = vld [vmem:[%s2 + $0xbf8] sm:$0xff]
    %v519 = vld [vmem:[%s2 + $0xc00] sm:$0xff]
    %v520 = vld [vmem:[%s2 + $0xc08] sm:$0xff]
    %v521 = vld [vmem:[%s2 + $0xc10] sm:$0xff]
    %v522 = vld [vmem:[%s2 + $0xc18] sm:$0xff]
    %v523 = vld [vmem:[%s2 + $0xc20] sm:$0xff]
    %v524 = vld [vmem:[%s2 + $0xc28] sm:$0xff]
    %v525 = vld [vmem:[%s2 + $0xc30] sm:$0xff]
    %v526 = vld [vmem:[%s2 + $0xc38] sm:$0xff]
    %v527 = vld [vmem:[%s1] sm:$0xff]
    %v528 = vld [vmem:[%s1 + $0x8] sm:$0x3f]
    %v529 = vld [vmem:[%s1 + $0xe] sm:$0xff]
    %v530 = vld [vmem:[%s1 + $0x16] sm:$0x3f]
    %v531 = vld [vmem:[%s1 + $0x1c] sm:$0xff]
    %v532 = vld [vmem:[%s1 + $0x24] sm:$0x3f]
    %v533 = vld [vmem:[%s1 + $0x2a] sm:$0xff]
    %v534 = vld [vmem:[%s1 + $0x32] sm:$0x3f]
    %v543 = vcombine.low %v527, %v529
    %v544 = vcombine.high %v527, %v529
    %v545 = vcombine.low %v531, %v533
    %v546 = vcombine.high %v531, %v533
    %v548 = vunpack.c.l.s4 1983009808
    %v549 = vunpack.c.0.s8 %v548
    %v550 = vlaneseq
    %v551 = vshrl.u32 %v550, 7
    %v552 = vsub.s32 %v549, %v551
    %v553 = vrot.slane %v543, %v552
    %v555 = vunpack.c.l.s4 1983009808
    %v556 = vunpack.c.0.s8 %v555
    %v557 = vlaneseq
    %v558 = vshrl.u32 %v557, 7
    %v559 = vsub.s32 %v556, %v558
    %v560 = vrot.slane %v544, %v559
    %v562 = vunpack.c.l.s4 1983009808
    %v563 = vunpack.c.0.s8 %v562
    %v564 = vlaneseq
    %v565 = vshrl.u32 %v564, 7
    %v566 = vsub.s32 %v563, %v565
    %v567 = vrot.slane %v545, %v566
    %v569 = vunpack.c.l.s4 1983009808
    %v570 = vunpack.c.0.s8 %v569
    %v571 = vlaneseq
    %v572 = vshrl.u32 %v571, 7
    %v573 = vsub.s32 %v570, %v572
    %v574 = vrot.slane %v546, %v573
    %v575 = vcombine.low %v553, %v567
    %v576 = vcombine.high %v553, %v567
    %v577 = vcombine.low %v560, %v574
    %v578 = vcombine.high %v560, %v574
    %v579 = vcombine.low %v528, %v530
    %v580 = vcombine.high %v528, %v530
    %v581 = vcombine.low %v532, %v534
    %v582 = vcombine.high %v532, %v534
    %v584 = vunpack.c.l.s4 1983009808
    %v585 = vunpack.c.0.s8 %v584
    %v586 = vlaneseq
    %v587 = vshrl.u32 %v586, 7
    %v588 = vsub.s32 %v585, %v587
    %v589 = vrot.slane %v579, %v588
    %v591 = vunpack.c.l.s4 1983009808
    %v592 = vunpack.c.0.s8 %v591
    %v593 = vlaneseq
    %v594 = vshrl.u32 %v593, 7
    %v595 = vsub.s32 %v592, %v594
    %v596 = vrot.slane %v580, %v595
    %v598 = vunpack.c.l.s4 1983009808
    %v599 = vunpack.c.0.s8 %v598
    %v600 = vlaneseq
    %v601 = vshrl.u32 %v600, 7
    %v602 = vsub.s32 %v599, %v601
    %v603 = vrot.slane %v581, %v602
    %v605 = vunpack.c.l.s4 1983009808
    %v606 = vunpack.c.0.s8 %v605
    %v607 = vlaneseq
    %v608 = vshrl.u32 %v607, 7
    %v609 = vsub.s32 %v606, %v608
    %v610 = vrot.slane %v582, %v609
    %v611 = vcombine.low %v589, %v603
    %v612 = vcombine.high %v589, %v603
    %v613 = vcombine.low %v596, %v610
    %v621 = vpack.c.bf16 %v575, %v575
    %v622 = vpack.c.bf16 %v576, %v576
    %v623 = vpack.c.bf16 %v577, %v577
    %v624 = vpack.c.bf16 %v578, %v578
    %v625 = vpack.c.bf16 %v611, %v611
    %v626 = vpack.c.bf16 %v612, %v612
    %v627 = vpack.c.bf16 %v613, %v613
    %v628 = vld [vmem:[%s3] sm:$0xff]
    %v629 = vld [vmem:[%s3 + $0x8] sm:$0xff]
    %v630 = vld [vmem:[%s3 + $0x10] sm:$0xff]
    %v631 = vld [vmem:[%s3 + $0x18] sm:$0xff]
    %v632 = vld [vmem:[%s3 + $0x20] sm:$0xff]
    %v633 = vld [vmem:[%s3 + $0x28] sm:$0xff]
    %v634 = vld [vmem:[%s3 + $0x30] sm:$0xff]
    %v635 = vld [vmem:[%s3 + $0x38] sm:$0xff]
    %v636 = vld [vmem:[%s3 + $0x40] sm:$0xff]
    %v637 = vld [vmem:[%s3 + $0x48] sm:$0xff]
    %v638 = vld [vmem:[%s3 + $0x50] sm:$0xff]
    %v639 = vld [vmem:[%s3 + $0x58] sm:$0xff]
    %v640 = vld [vmem:[%s3 + $0x60] sm:$0xff]
    %v641 = vld [vmem:[%s3 + $0x68] sm:$0xff]
    %v642 = vld [vmem:[%s3 + $0x70] sm:$0xff]
    %v643 = vld [vmem:[%s3 + $0x78] sm:$0xff]
    %v644 = vld [vmem:[%s3 + $0x80] sm:$0xff]
    %v645 = vld [vmem:[%s3 + $0x88] sm:$0xff]
    %v646 = vld [vmem:[%s3 + $0x90] sm:$0xff]
    %v647 = vld [vmem:[%s3 + $0x98] sm:$0xff]
    %v648 = vld [vmem:[%s3 + $0xa0] sm:$0xff]
    %v649 = vld [vmem:[%s3 + $0xa8] sm:$0xff]
    %v650 = vld [vmem:[%s3 + $0xb0] sm:$0xff]
    %v651 = vld [vmem:[%s3 + $0xb8] sm:$0xff]
    %v652 = vld [vmem:[%s3 + $0xc0] sm:$0xff]
    %v653 = vld [vmem:[%s3 + $0xc8] sm:$0xff]
    %v654 = vld [vmem:[%s3 + $0xd0] sm:$0xff]
    %v655 = vld [vmem:[%s3 + $0xd8] sm:$0xff]
    %v656 = vld [vmem:[%s3 + $0xe0] sm:$0xff]
    %v657 = vld [vmem:[%s3 + $0xe8] sm:$0xff]
    %v658 = vld [vmem:[%s3 + $0xf0] sm:$0xff]
    %v659 = vld [vmem:[%s3 + $0xf8] sm:$0xff]
    %v660 = vld [vmem:[%s3 + $0x100] sm:$0xff]
    %v661 = vld [vmem:[%s3 + $0x108] sm:$0xff]
    %v662 = vld [vmem:[%s3 + $0x110] sm:$0xff]
    %v663 = vld [vmem:[%s3 + $0x118] sm:$0xff]
    %v664 = vld [vmem:[%s3 + $0x120] sm:$0xff]
    %v665 = vld [vmem:[%s3 + $0x128] sm:$0xff]
    %v666 = vld [vmem:[%s3 + $0x130] sm:$0xff]
    %v667 = vld [vmem:[%s3 + $0x138] sm:$0xff]
    %v668 = vld [vmem:[%s3 + $0x140] sm:$0xff]
    %v669 = vld [vmem:[%s3 + $0x148] sm:$0xff]
    %v670 = vld [vmem:[%s3 + $0x150] sm:$0xff]
    %v671 = vld [vmem:[%s3 + $0x158] sm:$0xff]
    %v672 = vld [vmem:[%s3 + $0x160] sm:$0xff]
    %v673 = vld [vmem:[%s3 + $0x168] sm:$0xff]
    %v674 = vld [vmem:[%s3 + $0x170] sm:$0xff]
    %v675 = vld [vmem:[%s3 + $0x178] sm:$0xff]
    %v676 = vld [vmem:[%s3 + $0x180] sm:$0xff]
    %v677 = vld [vmem:[%s3 + $0x188] sm:$0xff]
    %v678 = vld [vmem:[%s3 + $0x190] sm:$0xff]
    %v679 = vld [vmem:[%s3 + $0x198] sm:$0xff]
    %v680 = vld [vmem:[%s3 + $0x1a0] sm:$0xff]
    %v681 = vld [vmem:[%s3 + $0x1a8] sm:$0xff]
    %v682 = vld [vmem:[%s3 + $0x1b0] sm:$0xff]
    %v683 = vld [vmem:[%s3 + $0x1b8] sm:$0xff]
    %v684 = vld [vmem:[%s3 + $0x1c0] sm:$0xff]
    %v685 = vld [vmem:[%s3 + $0x1c8] sm:$0xff]
    %v686 = vld [vmem:[%s3 + $0x1d0] sm:$0xff]
    %v687 = vld [vmem:[%s3 + $0x1d8] sm:$0xff]
    %v688 = vld [vmem:[%s3 + $0x1e0] sm:$0xff]
    %v689 = vld [vmem:[%s3 + $0x1e8] sm:$0xff]
    %v690 = vld [vmem:[%s3 + $0x1f0] sm:$0xff]
    %v691 = vld [vmem:[%s3 + $0x1f8] sm:$0xff]
    %v692 = vld [vmem:[%s3 + $0x200] sm:$0xff]
    %v693 = vld [vmem:[%s3 + $0x208] sm:$0xff]
    %v694 = vld [vmem:[%s3 + $0x210] sm:$0xff]
    %v695 = vld [vmem:[%s3 + $0x218] sm:$0xff]
    %v696 = vld [vmem:[%s3 + $0x220] sm:$0xff]
    %v697 = vld [vmem:[%s3 + $0x228] sm:$0xff]
    %v698 = vld [vmem:[%s3 + $0x230] sm:$0xff]
    %v699 = vld [vmem:[%s3 + $0x238] sm:$0xff]
    %v700 = vld [vmem:[%s3 + $0x240] sm:$0xff]
    %v701 = vld [vmem:[%s3 + $0x248] sm:$0xff]
    %v702 = vld [vmem:[%s3 + $0x250] sm:$0xff]
    %v703 = vld [vmem:[%s3 + $0x258] sm:$0xff]
    %v704 = vld [vmem:[%s3 + $0x260] sm:$0xff]
    %v705 = vld [vmem:[%s3 + $0x268] sm:$0xff]
    %v706 = vld [vmem:[%s3 + $0x270] sm:$0xff]
    %v707 = vld [vmem:[%s3 + $0x278] sm:$0xff]
    %v708 = vld [vmem:[%s3 + $0x280] sm:$0xff]
    %v709 = vld [vmem:[%s3 + $0x288] sm:$0xff]
    %v710 = vld [vmem:[%s3 + $0x290] sm:$0xff]
    %v711 = vld [vmem:[%s3 + $0x298] sm:$0xff]
    %v712 = vld [vmem:[%s3 + $0x2a0] sm:$0xff]
    %v713 = vld [vmem:[%s3 + $0x2a8] sm:$0xff]
    %v714 = vld [vmem:[%s3 + $0x2b0] sm:$0xff]
    %v715 = vld [vmem:[%s3 + $0x2b8] sm:$0xff]
    %v716 = vld [vmem:[%s3 + $0x2c0] sm:$0xff]
    %v717 = vld [vmem:[%s3 + $0x2c8] sm:$0xff]
    %v718 = vld [vmem:[%s3 + $0x2d0] sm:$0xff]
    %v719 = vld [vmem:[%s3 + $0x2d8] sm:$0xff]
    %v720 = vld [vmem:[%s3 + $0x2e0] sm:$0xff]
    %v721 = vld [vmem:[%s3 + $0x2e8] sm:$0xff]
    %v722 = vld [vmem:[%s3 + $0x2f0] sm:$0xff]
    %v723 = vld [vmem:[%s3 + $0x2f8] sm:$0xff]
    %v724 = vld [vmem:[%s3 + $0x300] sm:$0xff]
    %v725 = vld [vmem:[%s3 + $0x308] sm:$0xff]
    %v726 = vld [vmem:[%s3 + $0x310] sm:$0xff]
    %v727 = vld [vmem:[%s3 + $0x318] sm:$0xff]
    %v728 = vld [vmem:[%s3 + $0x320] sm:$0xff]
    %v729 = vld [vmem:[%s3 + $0x328] sm:$0xff]
    %v730 = vld [vmem:[%s3 + $0x330] sm:$0xff]
    %v731 = vld [vmem:[%s3 + $0x338] sm:$0xff]
    %v732 = vld [vmem:[%s3 + $0x340] sm:$0xff]
    %v733 = vld [vmem:[%s3 + $0x348] sm:$0xff]
    %v734 = vld [vmem:[%s3 + $0x350] sm:$0xff]
    %v735 = vld [vmem:[%s3 + $0x358] sm:$0xff]
    %v736 = vld [vmem:[%s3 + $0x360] sm:$0xff]
    %v737 = vld [vmem:[%s3 + $0x368] sm:$0xff]
    %v738 = vld [vmem:[%s3 + $0x370] sm:$0xff]
    %v739 = vld [vmem:[%s3 + $0x378] sm:$0xff]
    %v740 = vld [vmem:[%s3 + $0x380] sm:$0xff]
    %v741 = vld [vmem:[%s3 + $0x388] sm:$0xff]
    %v742 = vld [vmem:[%s3 + $0x390] sm:$0xff]
    %v743 = vld [vmem:[%s3 + $0x398] sm:$0xff]
    %v744 = vld [vmem:[%s3 + $0x3a0] sm:$0xff]
    %v745 = vld [vmem:[%s3 + $0x3a8] sm:$0xff]
    %v746 = vld [vmem:[%s3 + $0x3b0] sm:$0xff]
    %v747 = vld [vmem:[%s3 + $0x3b8] sm:$0xff]
    %v748 = vld [vmem:[%s3 + $0x3c0] sm:$0xff]
    %v749 = vld [vmem:[%s3 + $0x3c8] sm:$0xff]
    %v750 = vld [vmem:[%s3 + $0x3d0] sm:$0xff]
    %v751 = vld [vmem:[%s3 + $0x3d8] sm:$0xff]
    %v752 = vld [vmem:[%s3 + $0x3e0] sm:$0xff]
    %v753 = vld [vmem:[%s3 + $0x3e8] sm:$0xff]
    %v754 = vld [vmem:[%s3 + $0x3f0] sm:$0xff]
    %v755 = vld [vmem:[%s3 + $0x3f8] sm:$0xff]
    %v756 = vld [vmem:[%s3 + $0x400] sm:$0xff]
    %v757 = vld [vmem:[%s3 + $0x408] sm:$0xff]
    %v758 = vld [vmem:[%s3 + $0x410] sm:$0xff]
    %v759 = vld [vmem:[%s3 + $0x418] sm:$0xff]
    %v760 = vld [vmem:[%s3 + $0x420] sm:$0xff]
    %v761 = vld [vmem:[%s3 + $0x428] sm:$0xff]
    %v762 = vld [vmem:[%s3 + $0x430] sm:$0xff]
    %v763 = vld [vmem:[%s3 + $0x438] sm:$0xff]
    %v764 = vld [vmem:[%s3 + $0x440] sm:$0xff]
    %v765 = vld [vmem:[%s3 + $0x448] sm:$0xff]
    %v766 = vld [vmem:[%s3 + $0x450] sm:$0xff]
    %v767 = vld [vmem:[%s3 + $0x458] sm:$0xff]
    %v768 = vld [vmem:[%s3 + $0x460] sm:$0xff]
    %v769 = vld [vmem:[%s3 + $0x468] sm:$0xff]
    %v770 = vld [vmem:[%s3 + $0x470] sm:$0xff]
    %v771 = vld [vmem:[%s3 + $0x478] sm:$0xff]
    %v772 = vld [vmem:[%s3 + $0x480] sm:$0xff]
    %v773 = vld [vmem:[%s3 + $0x488] sm:$0xff]
    %v774 = vld [vmem:[%s3 + $0x490] sm:$0xff]
    %v775 = vld [vmem:[%s3 + $0x498] sm:$0xff]
    %v776 = vld [vmem:[%s3 + $0x4a0] sm:$0xff]
    %v777 = vld [vmem:[%s3 + $0x4a8] sm:$0xff]
    %v778 = vld [vmem:[%s3 + $0x4b0] sm:$0xff]
    %v779 = vld [vmem:[%s3 + $0x4b8] sm:$0xff]
    %v780 = vld [vmem:[%s3 + $0x4c0] sm:$0xff]
    %v781 = vld [vmem:[%s3 + $0x4c8] sm:$0xff]
    %v782 = vld [vmem:[%s3 + $0x4d0] sm:$0xff]
    %v783 = vld [vmem:[%s3 + $0x4d8] sm:$0xff]
    %v784 = vld [vmem:[%s3 + $0x4e0] sm:$0xff]
    %v785 = vld [vmem:[%s3 + $0x4e8] sm:$0xff]
    %v786 = vld [vmem:[%s3 + $0x4f0] sm:$0xff]
    %v787 = vld [vmem:[%s3 + $0x4f8] sm:$0xff]
    %v788 = vld [vmem:[%s3 + $0x500] sm:$0xff]
    %v789 = vld [vmem:[%s3 + $0x508] sm:$0xff]
    %v790 = vld [vmem:[%s3 + $0x510] sm:$0xff]
    %v791 = vld [vmem:[%s3 + $0x518] sm:$0xff]
    %v792 = vld [vmem:[%s3 + $0x520] sm:$0xff]
    %v793 = vld [vmem:[%s3 + $0x528] sm:$0xff]
    %v794 = vld [vmem:[%s3 + $0x530] sm:$0xff]
    %v795 = vld [vmem:[%s3 + $0x538] sm:$0xff]
    %v796 = vld [vmem:[%s3 + $0x540] sm:$0xff]
    %v797 = vld [vmem:[%s3 + $0x548] sm:$0xff]
    %v798 = vld [vmem:[%s3 + $0x550] sm:$0xff]
    %v799 = vld [vmem:[%s3 + $0x558] sm:$0xff]
    %v800 = vld [vmem:[%s3 + $0x560] sm:$0xff]
    %v801 = vld [vmem:[%s3 + $0x568] sm:$0xff]
    %v802 = vld [vmem:[%s3 + $0x570] sm:$0xff]
    %v803 = vld [vmem:[%s3 + $0x578] sm:$0xff]
    %v804 = vld [vmem:[%s3 + $0x580] sm:$0xff]
    %v805 = vld [vmem:[%s3 + $0x588] sm:$0xff]
    %v806 = vld [vmem:[%s3 + $0x590] sm:$0xff]
    %v807 = vld [vmem:[%s3 + $0x598] sm:$0xff]
    %v808 = vld [vmem:[%s3 + $0x5a0] sm:$0xff]
    %v809 = vld [vmem:[%s3 + $0x5a8] sm:$0xff]
    %v810 = vld [vmem:[%s3 + $0x5b0] sm:$0xff]
    %v811 = vld [vmem:[%s3 + $0x5b8] sm:$0xff]
    %v812 = vld [vmem:[%s3 + $0x5c0] sm:$0xff]
    %v813 = vld [vmem:[%s3 + $0x5c8] sm:$0xff]
    %v814 = vld [vmem:[%s3 + $0x5d0] sm:$0xff]
    %v815 = vld [vmem:[%s3 + $0x5d8] sm:$0xff]
    %v816 = vld [vmem:[%s3 + $0x5e0] sm:$0xff]
    %v817 = vld [vmem:[%s3 + $0x5e8] sm:$0xff]
    %v818 = vld [vmem:[%s3 + $0x5f0] sm:$0xff]
    %v819 = vld [vmem:[%s3 + $0x5f8] sm:$0xff]
    %v820 = vld [vmem:[%s3 + $0x600] sm:$0xff]
    %v821 = vld [vmem:[%s3 + $0x608] sm:$0xff]
    %v822 = vld [vmem:[%s3 + $0x610] sm:$0xff]
    %v823 = vld [vmem:[%s3 + $0x618] sm:$0xff]
    %v824 = vld [vmem:[%s3 + $0x620] sm:$0xff]
    %v825 = vld [vmem:[%s3 + $0x628] sm:$0xff]
    %v826 = vld [vmem:[%s3 + $0x630] sm:$0xff]
    %v827 = vld [vmem:[%s3 + $0x638] sm:$0xff]
    %v828 = vld [vmem:[%s3 + $0x640] sm:$0xff]
    %v829 = vld [vmem:[%s3 + $0x648] sm:$0xff]
    %v830 = vld [vmem:[%s3 + $0x650] sm:$0xff]
    %v831 = vld [vmem:[%s3 + $0x658] sm:$0xff]
    %v832 = vld [vmem:[%s3 + $0x660] sm:$0xff]
    %v833 = vld [vmem:[%s3 + $0x668] sm:$0xff]
    %v834 = vld [vmem:[%s3 + $0x670] sm:$0xff]
    %v835 = vld [vmem:[%s3 + $0x678] sm:$0xff]
    %v836 = vld [vmem:[%s3 + $0x680] sm:$0xff]
    %v837 = vld [vmem:[%s3 + $0x688] sm:$0xff]
    %v838 = vld [vmem:[%s3 + $0x690] sm:$0xff]
    %v839 = vld [vmem:[%s3 + $0x698] sm:$0xff]
    %v840 = vld [vmem:[%s3 + $0x6a0] sm:$0xff]
    %v841 = vld [vmem:[%s3 + $0x6a8] sm:$0xff]
    %v842 = vld [vmem:[%s3 + $0x6b0] sm:$0xff]
    %v843 = vld [vmem:[%s3 + $0x6b8] sm:$0xff]
    %v844 = vld [vmem:[%s3 + $0x6c0] sm:$0xff]
    %v845 = vld [vmem:[%s3 + $0x6c8] sm:$0xff]
    %v846 = vld [vmem:[%s3 + $0x6d0] sm:$0xff]
    %v847 = vld [vmem:[%s3 + $0x6d8] sm:$0xff]
    %v848 = vld [vmem:[%s3 + $0x6e0] sm:$0xff]
    %v849 = vld [vmem:[%s3 + $0x6e8] sm:$0xff]
    %v850 = vld [vmem:[%s3 + $0x6f0] sm:$0xff]
    %v851 = vld [vmem:[%s3 + $0x6f8] sm:$0xff]
    %v852 = vld [vmem:[%s3 + $0x700] sm:$0xff]
    %v853 = vld [vmem:[%s3 + $0x708] sm:$0xff]
    %v854 = vld [vmem:[%s3 + $0x710] sm:$0xff]
    %v855 = vld [vmem:[%s3 + $0x718] sm:$0xff]
    %v856 = vld [vmem:[%s3 + $0x720] sm:$0xff]
    %v857 = vld [vmem:[%s3 + $0x728] sm:$0xff]
    %v858 = vld [vmem:[%s3 + $0x730] sm:$0xff]
    %v859 = vld [vmem:[%s3 + $0x738] sm:$0xff]
    %v860 = vld [vmem:[%s3 + $0x740] sm:$0xff]
    %v861 = vld [vmem:[%s3 + $0x748] sm:$0xff]
    %v862 = vld [vmem:[%s3 + $0x750] sm:$0xff]
    %v863 = vld [vmem:[%s3 + $0x758] sm:$0xff]
    %v864 = vld [vmem:[%s3 + $0x760] sm:$0xff]
    %v865 = vld [vmem:[%s3 + $0x768] sm:$0xff]
    %v866 = vld [vmem:[%s3 + $0x770] sm:$0xff]
    %v867 = vld [vmem:[%s3 + $0x778] sm:$0xff]
    %v868 = vld [vmem:[%s3 + $0x780] sm:$0xff]
    %v869 = vld [vmem:[%s3 + $0x788] sm:$0xff]
    %v870 = vld [vmem:[%s3 + $0x790] sm:$0xff]
    %v871 = vld [vmem:[%s3 + $0x798] sm:$0xff]
    %v872 = vld [vmem:[%s3 + $0x7a0] sm:$0xff]
    %v873 = vld [vmem:[%s3 + $0x7a8] sm:$0xff]
    %v874 = vld [vmem:[%s3 + $0x7b0] sm:$0xff]
    %v875 = vld [vmem:[%s3 + $0x7b8] sm:$0xff]
    %v876 = vld [vmem:[%s3 + $0x7c0] sm:$0xff]
    %v877 = vld [vmem:[%s3 + $0x7c8] sm:$0xff]
    %v878 = vld [vmem:[%s3 + $0x7d0] sm:$0xff]
    %v879 = vld [vmem:[%s3 + $0x7d8] sm:$0xff]
    %v880 = vld [vmem:[%s3 + $0x7e0] sm:$0xff]
    %v881 = vld [vmem:[%s3 + $0x7e8] sm:$0xff]
    %v882 = vld [vmem:[%s3 + $0x7f0] sm:$0xff]
    %v883 = vld [vmem:[%s3 + $0x7f8] sm:$0xff]
    %v884 = vld [vmem:[%s3 + $0x800] sm:$0xff]
    %v885 = vld [vmem:[%s3 + $0x808] sm:$0xff]
    %v886 = vld [vmem:[%s3 + $0x810] sm:$0xff]
    %v887 = vld [vmem:[%s3 + $0x818] sm:$0xff]
    %v888 = vld [vmem:[%s3 + $0x820] sm:$0xff]
    %v889 = vld [vmem:[%s3 + $0x828] sm:$0xff]
    %v890 = vld [vmem:[%s3 + $0x830] sm:$0xff]
    %v891 = vld [vmem:[%s3 + $0x838] sm:$0xff]
    %v892 = vld [vmem:[%s3 + $0x840] sm:$0xff]
    %v893 = vld [vmem:[%s3 + $0x848] sm:$0xff]
    %v894 = vld [vmem:[%s3 + $0x850] sm:$0xff]
    %v895 = vld [vmem:[%s3 + $0x858] sm:$0xff]
    %v896 = vld [vmem:[%s3 + $0x860] sm:$0xff]
    %v897 = vld [vmem:[%s3 + $0x868] sm:$0xff]
    %v898 = vld [vmem:[%s3 + $0x870] sm:$0xff]
    %v899 = vld [vmem:[%s3 + $0x878] sm:$0xff]
    %v900 = vld [vmem:[%s3 + $0x880] sm:$0xff]
    %v901 = vld [vmem:[%s3 + $0x888] sm:$0xff]
    %v902 = vld [vmem:[%s3 + $0x890] sm:$0xff]
    %v903 = vld [vmem:[%s3 + $0x898] sm:$0xff]
    %v904 = vld [vmem:[%s3 + $0x8a0] sm:$0xff]
    %v905 = vld [vmem:[%s3 + $0x8a8] sm:$0xff]
    %v906 = vld [vmem:[%s3 + $0x8b0] sm:$0xff]
    %v907 = vld [vmem:[%s3 + $0x8b8] sm:$0xff]
    %v908 = vld [vmem:[%s3 + $0x8c0] sm:$0xff]
    %v909 = vld [vmem:[%s3 + $0x8c8] sm:$0xff]
    %v910 = vld [vmem:[%s3 + $0x8d0] sm:$0xff]
    %v911 = vld [vmem:[%s3 + $0x8d8] sm:$0xff]
    %v912 = vld [vmem:[%s3 + $0x8e0] sm:$0xff]
    %v913 = vld [vmem:[%s3 + $0x8e8] sm:$0xff]
    %v914 = vld [vmem:[%s3 + $0x8f0] sm:$0xff]
    %v915 = vld [vmem:[%s3 + $0x8f8] sm:$0xff]
    %v916 = vld [vmem:[%s3 + $0x900] sm:$0xff]
    %v917 = vld [vmem:[%s3 + $0x908] sm:$0xff]
    %v918 = vld [vmem:[%s3 + $0x910] sm:$0xff]
    %v919 = vld [vmem:[%s3 + $0x918] sm:$0xff]
    %v920 = vld [vmem:[%s3 + $0x920] sm:$0xff]
    %v921 = vld [vmem:[%s3 + $0x928] sm:$0xff]
    %v922 = vld [vmem:[%s3 + $0x930] sm:$0xff]
    %v923 = vld [vmem:[%s3 + $0x938] sm:$0xff]
    %v924 = vld [vmem:[%s3 + $0x940] sm:$0xff]
    %v925 = vld [vmem:[%s3 + $0x948] sm:$0xff]
    %v926 = vld [vmem:[%s3 + $0x950] sm:$0xff]
    %v927 = vld [vmem:[%s3 + $0x958] sm:$0xff]
    %v928 = vld [vmem:[%s3 + $0x960] sm:$0xff]
    %v929 = vld [vmem:[%s3 + $0x968] sm:$0xff]
    %v930 = vld [vmem:[%s3 + $0x970] sm:$0xff]
    %v931 = vld [vmem:[%s3 + $0x978] sm:$0xff]
    %v932 = vld [vmem:[%s3 + $0x980] sm:$0xff]
    %v933 = vld [vmem:[%s3 + $0x988] sm:$0xff]
    %v934 = vld [vmem:[%s3 + $0x990] sm:$0xff]
    %v935 = vld [vmem:[%s3 + $0x998] sm:$0xff]
    %v936 = vld [vmem:[%s3 + $0x9a0] sm:$0xff]
    %v937 = vld [vmem:[%s3 + $0x9a8] sm:$0xff]
    %v938 = vld [vmem:[%s3 + $0x9b0] sm:$0xff]
    %v939 = vld [vmem:[%s3 + $0x9b8] sm:$0xff]
    %v940 = vld [vmem:[%s3 + $0x9c0] sm:$0xff]
    %v941 = vld [vmem:[%s3 + $0x9c8] sm:$0xff]
    %v942 = vld [vmem:[%s3 + $0x9d0] sm:$0xff]
    %v943 = vld [vmem:[%s3 + $0x9d8] sm:$0xff]
    %v944 = vld [vmem:[%s3 + $0x9e0] sm:$0xff]
    %v945 = vld [vmem:[%s3 + $0x9e8] sm:$0xff]
    %v946 = vld [vmem:[%s3 + $0x9f0] sm:$0xff]
    %v947 = vld [vmem:[%s3 + $0x9f8] sm:$0xff]
    %v948 = vld [vmem:[%s3 + $0xa00] sm:$0xff]
    %v949 = vld [vmem:[%s3 + $0xa08] sm:$0xff]
    %v950 = vld [vmem:[%s3 + $0xa10] sm:$0xff]
    %v951 = vld [vmem:[%s3 + $0xa18] sm:$0xff]
    %v952 = vld [vmem:[%s3 + $0xa20] sm:$0xff]
    %v953 = vld [vmem:[%s3 + $0xa28] sm:$0xff]
    %v954 = vld [vmem:[%s3 + $0xa30] sm:$0xff]
    %v955 = vld [vmem:[%s3 + $0xa38] sm:$0xff]
    %v956 = vld [vmem:[%s3 + $0xa40] sm:$0xff]
    %v957 = vld [vmem:[%s3 + $0xa48] sm:$0xff]
    %v958 = vld [vmem:[%s3 + $0xa50] sm:$0xff]
    %v959 = vld [vmem:[%s3 + $0xa58] sm:$0xff]
    %v960 = vld [vmem:[%s3 + $0xa60] sm:$0xff]
    %v961 = vld [vmem:[%s3 + $0xa68] sm:$0xff]
    %v962 = vld [vmem:[%s3 + $0xa70] sm:$0xff]
    %v963 = vld [vmem:[%s3 + $0xa78] sm:$0xff]
    %v964 = vld [vmem:[%s3 + $0xa80] sm:$0xff]
    %v965 = vld [vmem:[%s3 + $0xa88] sm:$0xff]
    %v966 = vld [vmem:[%s3 + $0xa90] sm:$0xff]
    %v967 = vld [vmem:[%s3 + $0xa98] sm:$0xff]
    %v968 = vld [vmem:[%s3 + $0xaa0] sm:$0xff]
    %v969 = vld [vmem:[%s3 + $0xaa8] sm:$0xff]
    %v970 = vld [vmem:[%s3 + $0xab0] sm:$0xff]
    %v971 = vld [vmem:[%s3 + $0xab8] sm:$0xff]
    %v972 = vld [vmem:[%s3 + $0xac0] sm:$0xff]
    %v973 = vld [vmem:[%s3 + $0xac8] sm:$0xff]
    %v974 = vld [vmem:[%s3 + $0xad0] sm:$0xff]
    %v975 = vld [vmem:[%s3 + $0xad8] sm:$0xff]
    %v976 = vld [vmem:[%s3 + $0xae0] sm:$0xff]
    %v977 = vld [vmem:[%s3 + $0xae8] sm:$0xff]
    %v978 = vld [vmem:[%s3 + $0xaf0] sm:$0xff]
    %v979 = vld [vmem:[%s3 + $0xaf8] sm:$0xff]
    %v980 = vld [vmem:[%s3 + $0xb00] sm:$0xff]
    %v981 = vld [vmem:[%s3 + $0xb08] sm:$0xff]
    %v982 = vld [vmem:[%s3 + $0xb10] sm:$0xff]
    %v983 = vld [vmem:[%s3 + $0xb18] sm:$0xff]
    %v984 = vld [vmem:[%s3 + $0xb20] sm:$0xff]
    %v985 = vld [vmem:[%s3 + $0xb28] sm:$0xff]
    %v986 = vld [vmem:[%s3 + $0xb30] sm:$0xff]
    %v987 = vld [vmem:[%s3 + $0xb38] sm:$0xff]
    %v988 = vld [vmem:[%s3 + $0xb40] sm:$0xff]
    %v989 = vld [vmem:[%s3 + $0xb48] sm:$0xff]
    %v990 = vld [vmem:[%s3 + $0xb50] sm:$0xff]
    %v991 = vld [vmem:[%s3 + $0xb58] sm:$0xff]
    %v992 = vld [vmem:[%s3 + $0xb60] sm:$0xff]
    %v993 = vld [vmem:[%s3 + $0xb68] sm:$0xff]
    %v994 = vld [vmem:[%s3 + $0xb70] sm:$0xff]
    %v995 = vld [vmem:[%s3 + $0xb78] sm:$0xff]
    %v996 = vld [vmem:[%s3 + $0xb80] sm:$0xff]
    %v997 = vld [vmem:[%s3 + $0xb88] sm:$0xff]
    %v998 = vld [vmem:[%s3 + $0xb90] sm:$0xff]
    %v999 = vld [vmem:[%s3 + $0xb98] sm:$0xff]
    %v1000 = vld [vmem:[%s3 + $0xba0] sm:$0xff]
    %v1001 = vld [vmem:[%s3 + $0xba8] sm:$0xff]
    %v1002 = vld [vmem:[%s3 + $0xbb0] sm:$0xff]
    %v1003 = vld [vmem:[%s3 + $0xbb8] sm:$0xff]
    %v1004 = vld [vmem:[%s3 + $0xbc0] sm:$0xff]
    %v1005 = vld [vmem:[%s3 + $0xbc8] sm:$0xff]
    %v1006 = vld [vmem:[%s3 + $0xbd0] sm:$0xff]
    %v1007 = vld [vmem:[%s3 + $0xbd8] sm:$0xff]
    %v1008 = vld [vmem:[%s3 + $0xbe0] sm:$0xff]
    %v1009 = vld [vmem:[%s3 + $0xbe8] sm:$0xff]
    %v1010 = vld [vmem:[%s3 + $0xbf0] sm:$0xff]
    %v1011 = vld [vmem:[%s3 + $0xbf8] sm:$0xff]
    %v1012 = vld [vmem:[%s3 + $0xc00] sm:$0xff]
    %v1013 = vld [vmem:[%s3 + $0xc08] sm:$0xff]
    %v1014 = vld [vmem:[%s3 + $0xc10] sm:$0xff]
    %v1015 = vld [vmem:[%s3 + $0xc18] sm:$0xff]
    %v1016 = vld [vmem:[%s3 + $0xc20] sm:$0xff]
    %v1017 = vld [vmem:[%s3 + $0xc28] sm:$0xff]
    %v1018 = vld [vmem:[%s3 + $0xc30] sm:$0xff]
    %v1019 = vld [vmem:[%s3 + $0xc38] sm:$0xff]
    %v1412 = vunpack.c.l.b16 %v628
    %v1413 = vunpack.c.h.b16 %v628
    %v1414 = vunpack.c.l.b16 %v629
    %v1415 = vunpack.c.h.b16 %v629
    %v1416 = vunpack.c.l.b16 %v630
    %v1417 = vunpack.c.h.b16 %v630
    %v1418 = vunpack.c.l.b16 %v631
    %v1419 = vunpack.c.h.b16 %v631
    %v1420 = vunpack.c.l.b16 %v632
    %v1421 = vunpack.c.h.b16 %v632
    %v1422 = vunpack.c.l.b16 %v633
    %v1423 = vunpack.c.h.b16 %v633
    %v1424 = vunpack.c.l.b16 %v634
    %v1425 = vunpack.c.h.b16 %v634
    %v1426 = vunpack.c.l.b16 %v635
    %v1427 = vunpack.c.h.b16 %v635
    %v1428 = vunpack.c.l.b16 %v636
    %v1429 = vunpack.c.h.b16 %v636
    %v1430 = vunpack.c.l.b16 %v637
    %v1431 = vunpack.c.h.b16 %v637
    %v1432 = vunpack.c.l.b16 %v638
    %v1433 = vunpack.c.h.b16 %v638
    %v1434 = vunpack.c.l.b16 %v639
    %v1435 = vunpack.c.h.b16 %v639
    %v1436 = vunpack.c.l.b16 %v640
    %v1437 = vunpack.c.h.b16 %v640
    %v1438 = vunpack.c.l.b16 %v641
    %v1439 = vunpack.c.h.b16 %v641
    %v1440 = vunpack.c.l.b16 %v642
    %v1441 = vunpack.c.h.b16 %v642
    %v1442 = vunpack.c.l.b16 %v643
    %v1443 = vunpack.c.h.b16 %v643
    %v1444 = vunpack.c.l.b16 %v644
    %v1445 = vunpack.c.h.b16 %v644
    %v1446 = vunpack.c.l.b16 %v645
    %v1447 = vunpack.c.h.b16 %v645
    %v1448 = vunpack.c.l.b16 %v646
    %v1449 = vunpack.c.h.b16 %v646
    %v1450 = vunpack.c.l.b16 %v647
    %v1451 = vunpack.c.h.b16 %v647
    %v1452 = vunpack.c.l.b16 %v648
    %v1453 = vunpack.c.h.b16 %v648
    %v1454 = vunpack.c.l.b16 %v649
    %v1455 = vunpack.c.h.b16 %v649
    %v1456 = vunpack.c.l.b16 %v650
    %v1457 = vunpack.c.h.b16 %v650
    %v1458 = vunpack.c.l.b16 %v651
    %v1459 = vunpack.c.h.b16 %v651
    %v1460 = vunpack.c.l.b16 %v652
    %v1461 = vunpack.c.h.b16 %v652
    %v1462 = vunpack.c.l.b16 %v653
    %v1463 = vunpack.c.h.b16 %v653
    %v1464 = vunpack.c.l.b16 %v654
    %v1465 = vunpack.c.h.b16 %v654
    %v1466 = vunpack.c.l.b16 %v655
    %v1467 = vunpack.c.h.b16 %v655
    %v1468 = vunpack.c.l.b16 %v656
    %v1469 = vunpack.c.h.b16 %v656
    %v1470 = vunpack.c.l.b16 %v657
    %v1471 = vunpack.c.h.b16 %v657
    %v1472 = vunpack.c.l.b16 %v658
    %v1473 = vunpack.c.h.b16 %v658
    %v1474 = vunpack.c.l.b16 %v659
    %v1475 = vunpack.c.h.b16 %v659
    %v1476 = vunpack.c.l.b16 %v660
    %v1477 = vunpack.c.h.b16 %v660
    %v1478 = vunpack.c.l.b16 %v661
    %v1479 = vunpack.c.h.b16 %v661
    %v1480 = vunpack.c.l.b16 %v662
    %v1481 = vunpack.c.h.b16 %v662
    %v1482 = vunpack.c.l.b16 %v663
    %v1483 = vunpack.c.h.b16 %v663
    %v1484 = vunpack.c.l.b16 %v664
    %v1485 = vunpack.c.h.b16 %v664
    %v1486 = vunpack.c.l.b16 %v665
    %v1487 = vunpack.c.h.b16 %v665
    %v1488 = vunpack.c.l.b16 %v666
    %v1489 = vunpack.c.h.b16 %v666
    %v1490 = vunpack.c.l.b16 %v667
    %v1491 = vunpack.c.h.b16 %v667
    %v1492 = vunpack.c.l.b16 %v668
    %v1493 = vunpack.c.h.b16 %v668
    %v1494 = vunpack.c.l.b16 %v669
    %v1495 = vunpack.c.h.b16 %v669
    %v1496 = vunpack.c.l.b16 %v670
    %v1497 = vunpack.c.h.b16 %v670
    %v1498 = vunpack.c.l.b16 %v671
    %v1499 = vunpack.c.h.b16 %v671
    %v1500 = vunpack.c.l.b16 %v672
    %v1501 = vunpack.c.h.b16 %v672
    %v1502 = vunpack.c.l.b16 %v673
    %v1503 = vunpack.c.h.b16 %v673
    %v1504 = vunpack.c.l.b16 %v674
    %v1505 = vunpack.c.h.b16 %v674
    %v1506 = vunpack.c.l.b16 %v675
    %v1507 = vunpack.c.h.b16 %v675
    %v1508 = vunpack.c.l.b16 %v676
    %v1509 = vunpack.c.h.b16 %v676
    %v1510 = vunpack.c.l.b16 %v677
    %v1511 = vunpack.c.h.b16 %v677
    %v1512 = vunpack.c.l.b16 %v678
    %v1513 = vunpack.c.h.b16 %v678
    %v1514 = vunpack.c.l.b16 %v679
    %v1515 = vunpack.c.h.b16 %v679
    %v1516 = vunpack.c.l.b16 %v680
    %v1517 = vunpack.c.h.b16 %v680
    %v1518 = vunpack.c.l.b16 %v681
    %v1519 = vunpack.c.h.b16 %v681
    %v1520 = vunpack.c.l.b16 %v682
    %v1521 = vunpack.c.h.b16 %v682
    %v1522 = vunpack.c.l.b16 %v683
    %v1523 = vunpack.c.h.b16 %v683
    %v1524 = vunpack.c.l.b16 %v684
    %v1525 = vunpack.c.h.b16 %v684
    %v1526 = vunpack.c.l.b16 %v685
    %v1527 = vunpack.c.h.b16 %v685
    %v1528 = vunpack.c.l.b16 %v686
    %v1529 = vunpack.c.h.b16 %v686
    %v1530 = vunpack.c.l.b16 %v687
    %v1531 = vunpack.c.h.b16 %v687
    %v1532 = vunpack.c.l.b16 %v688
    %v1533 = vunpack.c.h.b16 %v688
    %v1534 = vunpack.c.l.b16 %v689
    %v1535 = vunpack.c.h.b16 %v689
    %v1536 = vunpack.c.l.b16 %v690
    %v1537 = vunpack.c.h.b16 %v690
    %v1538 = vunpack.c.l.b16 %v691
    %v1539 = vunpack.c.h.b16 %v691
    %v1540 = vunpack.c.l.b16 %v692
    %v1541 = vunpack.c.h.b16 %v692
    %v1542 = vunpack.c.l.b16 %v693
    %v1543 = vunpack.c.h.b16 %v693
    %v1544 = vunpack.c.l.b16 %v694
    %v1545 = vunpack.c.h.b16 %v694
    %v1546 = vunpack.c.l.b16 %v695
    %v1547 = vunpack.c.h.b16 %v695
    %v1548 = vunpack.c.l.b16 %v696
    %v1549 = vunpack.c.h.b16 %v696
    %v1550 = vunpack.c.l.b16 %v697
    %v1551 = vunpack.c.h.b16 %v697
    %v1552 = vunpack.c.l.b16 %v698
    %v1553 = vunpack.c.h.b16 %v698
    %v1554 = vunpack.c.l.b16 %v699
    %v1555 = vunpack.c.h.b16 %v699
    %v1556 = vunpack.c.l.b16 %v700
    %v1557 = vunpack.c.h.b16 %v700
    %v1558 = vunpack.c.l.b16 %v701
    %v1559 = vunpack.c.h.b16 %v701
    %v1560 = vunpack.c.l.b16 %v702
    %v1561 = vunpack.c.h.b16 %v702
    %v1562 = vunpack.c.l.b16 %v703
    %v1563 = vunpack.c.h.b16 %v703
    %v1564 = vunpack.c.l.b16 %v704
    %v1565 = vunpack.c.h.b16 %v704
    %v1566 = vunpack.c.l.b16 %v705
    %v1567 = vunpack.c.h.b16 %v705
    %v1568 = vunpack.c.l.b16 %v706
    %v1569 = vunpack.c.h.b16 %v706
    %v1570 = vunpack.c.l.b16 %v707
    %v1571 = vunpack.c.h.b16 %v707
    %v1572 = vunpack.c.l.b16 %v708
    %v1573 = vunpack.c.h.b16 %v708
    %v1574 = vunpack.c.l.b16 %v709
    %v1575 = vunpack.c.h.b16 %v709
    %v1576 = vunpack.c.l.b16 %v710
    %v1577 = vunpack.c.h.b16 %v710
    %v1578 = vunpack.c.l.b16 %v711
    %v1579 = vunpack.c.h.b16 %v711
    %v1580 = vunpack.c.l.b16 %v712
    %v1581 = vunpack.c.h.b16 %v712
    %v1582 = vunpack.c.l.b16 %v713
    %v1583 = vunpack.c.h.b16 %v713
    %v1584 = vunpack.c.l.b16 %v714
    %v1585 = vunpack.c.h.b16 %v714
    %v1586 = vunpack.c.l.b16 %v715
    %v1587 = vunpack.c.h.b16 %v715
    %v1588 = vunpack.c.l.b16 %v716
    %v1589 = vunpack.c.h.b16 %v716
    %v1590 = vunpack.c.l.b16 %v717
    %v1591 = vunpack.c.h.b16 %v717
    %v1592 = vunpack.c.l.b16 %v718
    %v1593 = vunpack.c.h.b16 %v718
    %v1594 = vunpack.c.l.b16 %v719
    %v1595 = vunpack.c.h.b16 %v719
    %v1596 = vunpack.c.l.b16 %v720
    %v1597 = vunpack.c.h.b16 %v720
    %v1598 = vunpack.c.l.b16 %v721
    %v1599 = vunpack.c.h.b16 %v721
    %v1600 = vunpack.c.l.b16 %v722
    %v1601 = vunpack.c.h.b16 %v722
    %v1602 = vunpack.c.l.b16 %v723
    %v1603 = vunpack.c.h.b16 %v723
    %v1604 = vunpack.c.l.b16 %v724
    %v1605 = vunpack.c.h.b16 %v724
    %v1606 = vunpack.c.l.b16 %v725
    %v1607 = vunpack.c.h.b16 %v725
    %v1608 = vunpack.c.l.b16 %v726
    %v1609 = vunpack.c.h.b16 %v726
    %v1610 = vunpack.c.l.b16 %v727
    %v1611 = vunpack.c.h.b16 %v727
    %v1612 = vunpack.c.l.b16 %v728
    %v1613 = vunpack.c.h.b16 %v728
    %v1614 = vunpack.c.l.b16 %v729
    %v1615 = vunpack.c.h.b16 %v729
    %v1616 = vunpack.c.l.b16 %v730
    %v1617 = vunpack.c.h.b16 %v730
    %v1618 = vunpack.c.l.b16 %v731
    %v1619 = vunpack.c.h.b16 %v731
    %v1620 = vunpack.c.l.b16 %v732
    %v1621 = vunpack.c.h.b16 %v732
    %v1622 = vunpack.c.l.b16 %v733
    %v1623 = vunpack.c.h.b16 %v733
    %v1624 = vunpack.c.l.b16 %v734
    %v1625 = vunpack.c.h.b16 %v734
    %v1626 = vunpack.c.l.b16 %v735
    %v1627 = vunpack.c.h.b16 %v735
    %v1628 = vunpack.c.l.b16 %v736
    %v1629 = vunpack.c.h.b16 %v736
    %v1630 = vunpack.c.l.b16 %v737
    %v1631 = vunpack.c.h.b16 %v737
    %v1632 = vunpack.c.l.b16 %v738
    %v1633 = vunpack.c.h.b16 %v738
    %v1634 = vunpack.c.l.b16 %v739
    %v1635 = vunpack.c.h.b16 %v739
    %v1636 = vunpack.c.l.b16 %v740
    %v1637 = vunpack.c.h.b16 %v740
    %v1638 = vunpack.c.l.b16 %v741
    %v1639 = vunpack.c.h.b16 %v741
    %v1640 = vunpack.c.l.b16 %v742
    %v1641 = vunpack.c.h.b16 %v742
    %v1642 = vunpack.c.l.b16 %v743
    %v1643 = vunpack.c.h.b16 %v743
    %v1644 = vunpack.c.l.b16 %v744
    %v1645 = vunpack.c.h.b16 %v744
    %v1646 = vunpack.c.l.b16 %v745
    %v1647 = vunpack.c.h.b16 %v745
    %v1648 = vunpack.c.l.b16 %v746
    %v1649 = vunpack.c.h.b16 %v746
    %v1650 = vunpack.c.l.b16 %v747
    %v1651 = vunpack.c.h.b16 %v747
    %v1652 = vunpack.c.l.b16 %v748
    %v1653 = vunpack.c.h.b16 %v748
    %v1654 = vunpack.c.l.b16 %v749
    %v1655 = vunpack.c.h.b16 %v749
    %v1656 = vunpack.c.l.b16 %v750
    %v1657 = vunpack.c.h.b16 %v750
    %v1658 = vunpack.c.l.b16 %v751
    %v1659 = vunpack.c.h.b16 %v751
    %v1660 = vunpack.c.l.b16 %v752
    %v1661 = vunpack.c.h.b16 %v752
    %v1662 = vunpack.c.l.b16 %v753
    %v1663 = vunpack.c.h.b16 %v753
    %v1664 = vunpack.c.l.b16 %v754
    %v1665 = vunpack.c.h.b16 %v754
    %v1666 = vunpack.c.l.b16 %v755
    %v1667 = vunpack.c.h.b16 %v755
    %v1668 = vunpack.c.l.b16 %v756
    %v1669 = vunpack.c.h.b16 %v756
    %v1670 = vunpack.c.l.b16 %v757
    %v1671 = vunpack.c.h.b16 %v757
    %v1672 = vunpack.c.l.b16 %v758
    %v1673 = vunpack.c.h.b16 %v758
    %v1674 = vunpack.c.l.b16 %v759
    %v1675 = vunpack.c.h.b16 %v759
    %v1676 = vunpack.c.l.b16 %v760
    %v1677 = vunpack.c.h.b16 %v760
    %v1678 = vunpack.c.l.b16 %v761
    %v1679 = vunpack.c.h.b16 %v761
    %v1680 = vunpack.c.l.b16 %v762
    %v1681 = vunpack.c.h.b16 %v762
    %v1682 = vunpack.c.l.b16 %v763
    %v1683 = vunpack.c.h.b16 %v763
    %v1684 = vunpack.c.l.b16 %v764
    %v1685 = vunpack.c.h.b16 %v764
    %v1686 = vunpack.c.l.b16 %v765
    %v1687 = vunpack.c.h.b16 %v765
    %v1688 = vunpack.c.l.b16 %v766
    %v1689 = vunpack.c.h.b16 %v766
    %v1690 = vunpack.c.l.b16 %v767
    %v1691 = vunpack.c.h.b16 %v767
    %v1692 = vunpack.c.l.b16 %v768
    %v1693 = vunpack.c.h.b16 %v768
    %v1694 = vunpack.c.l.b16 %v769
    %v1695 = vunpack.c.h.b16 %v769
    %v1696 = vunpack.c.l.b16 %v770
    %v1697 = vunpack.c.h.b16 %v770
    %v1698 = vunpack.c.l.b16 %v771
    %v1699 = vunpack.c.h.b16 %v771
    %v1700 = vunpack.c.l.b16 %v772
    %v1701 = vunpack.c.h.b16 %v772
    %v1702 = vunpack.c.l.b16 %v773
    %v1703 = vunpack.c.h.b16 %v773
    %v1704 = vunpack.c.l.b16 %v774
    %v1705 = vunpack.c.h.b16 %v774
    %v1706 = vunpack.c.l.b16 %v775
    %v1707 = vunpack.c.h.b16 %v775
    %v1708 = vunpack.c.l.b16 %v776
    %v1709 = vunpack.c.h.b16 %v776
    %v1710 = vunpack.c.l.b16 %v777
    %v1711 = vunpack.c.h.b16 %v777
    %v1712 = vunpack.c.l.b16 %v778
    %v1713 = vunpack.c.h.b16 %v778
    %v1714 = vunpack.c.l.b16 %v779
    %v1715 = vunpack.c.h.b16 %v779
    %v1716 = vunpack.c.l.b16 %v780
    %v1717 = vunpack.c.h.b16 %v780
    %v1718 = vunpack.c.l.b16 %v781
    %v1719 = vunpack.c.h.b16 %v781
    %v1720 = vunpack.c.l.b16 %v782
    %v1721 = vunpack.c.h.b16 %v782
    %v1722 = vunpack.c.l.b16 %v783
    %v1723 = vunpack.c.h.b16 %v783
    %v1724 = vunpack.c.l.b16 %v784
    %v1725 = vunpack.c.h.b16 %v784
    %v1726 = vunpack.c.l.b16 %v785
    %v1727 = vunpack.c.h.b16 %v785
    %v1728 = vunpack.c.l.b16 %v786
    %v1729 = vunpack.c.h.b16 %v786
    %v1730 = vunpack.c.l.b16 %v787
    %v1731 = vunpack.c.h.b16 %v787
    %v1732 = vunpack.c.l.b16 %v788
    %v1733 = vunpack.c.h.b16 %v788
    %v1734 = vunpack.c.l.b16 %v789
    %v1735 = vunpack.c.h.b16 %v789
    %v1736 = vunpack.c.l.b16 %v790
    %v1737 = vunpack.c.h.b16 %v790
    %v1738 = vunpack.c.l.b16 %v791
    %v1739 = vunpack.c.h.b16 %v791
    %v1740 = vunpack.c.l.b16 %v792
    %v1741 = vunpack.c.h.b16 %v792
    %v1742 = vunpack.c.l.b16 %v793
    %v1743 = vunpack.c.h.b16 %v793
    %v1744 = vunpack.c.l.b16 %v794
    %v1745 = vunpack.c.h.b16 %v794
    %v1746 = vunpack.c.l.b16 %v795
    %v1747 = vunpack.c.h.b16 %v795
    %v1748 = vunpack.c.l.b16 %v796
    %v1749 = vunpack.c.h.b16 %v796
    %v1750 = vunpack.c.l.b16 %v797
    %v1751 = vunpack.c.h.b16 %v797
    %v1752 = vunpack.c.l.b16 %v798
    %v1753 = vunpack.c.h.b16 %v798
    %v1754 = vunpack.c.l.b16 %v799
    %v1755 = vunpack.c.h.b16 %v799
    %v1756 = vunpack.c.l.b16 %v800
    %v1757 = vunpack.c.h.b16 %v800
    %v1758 = vunpack.c.l.b16 %v801
    %v1759 = vunpack.c.h.b16 %v801
    %v1760 = vunpack.c.l.b16 %v802
    %v1761 = vunpack.c.h.b16 %v802
    %v1762 = vunpack.c.l.b16 %v803
    %v1763 = vunpack.c.h.b16 %v803
    %v1764 = vunpack.c.l.b16 %v804
    %v1765 = vunpack.c.h.b16 %v804
    %v1766 = vunpack.c.l.b16 %v805
    %v1767 = vunpack.c.h.b16 %v805
    %v1768 = vunpack.c.l.b16 %v806
    %v1769 = vunpack.c.h.b16 %v806
    %v1770 = vunpack.c.l.b16 %v807
    %v1771 = vunpack.c.h.b16 %v807
    %v1772 = vunpack.c.l.b16 %v808
    %v1773 = vunpack.c.h.b16 %v808
    %v1774 = vunpack.c.l.b16 %v809
    %v1775 = vunpack.c.h.b16 %v809
    %v1776 = vunpack.c.l.b16 %v810
    %v1777 = vunpack.c.h.b16 %v810
    %v1778 = vunpack.c.l.b16 %v811
    %v1779 = vunpack.c.h.b16 %v811
    %v1780 = vunpack.c.l.b16 %v812
    %v1781 = vunpack.c.h.b16 %v812
    %v1782 = vunpack.c.l.b16 %v813
    %v1783 = vunpack.c.h.b16 %v813
    %v1784 = vunpack.c.l.b16 %v814
    %v1785 = vunpack.c.h.b16 %v814
    %v1786 = vunpack.c.l.b16 %v815
    %v1787 = vunpack.c.h.b16 %v815
    %v1788 = vunpack.c.l.b16 %v816
    %v1789 = vunpack.c.h.b16 %v816
    %v1790 = vunpack.c.l.b16 %v817
    %v1791 = vunpack.c.h.b16 %v817
    %v1792 = vunpack.c.l.b16 %v818
    %v1793 = vunpack.c.h.b16 %v818
    %v1794 = vunpack.c.l.b16 %v819
    %v1795 = vunpack.c.h.b16 %v819
    %v1796 = vunpack.c.l.b16 %v820
    %v1797 = vunpack.c.h.b16 %v820
    %v1798 = vunpack.c.l.b16 %v821
    %v1799 = vunpack.c.h.b16 %v821
    %v1800 = vunpack.c.l.b16 %v822
    %v1801 = vunpack.c.h.b16 %v822
    %v1802 = vunpack.c.l.b16 %v823
    %v1803 = vunpack.c.h.b16 %v823
    %v1804 = vunpack.c.l.b16 %v824
    %v1805 = vunpack.c.h.b16 %v824
    %v1806 = vunpack.c.l.b16 %v825
    %v1807 = vunpack.c.h.b16 %v825
    %v1808 = vunpack.c.l.b16 %v826
    %v1809 = vunpack.c.h.b16 %v826
    %v1810 = vunpack.c.l.b16 %v827
    %v1811 = vunpack.c.h.b16 %v827
    %v1812 = vunpack.c.l.b16 %v828
    %v1813 = vunpack.c.h.b16 %v828
    %v1814 = vunpack.c.l.b16 %v829
    %v1815 = vunpack.c.h.b16 %v829
    %v1816 = vunpack.c.l.b16 %v830
    %v1817 = vunpack.c.h.b16 %v830
    %v1818 = vunpack.c.l.b16 %v831
    %v1819 = vunpack.c.h.b16 %v831
    %v1820 = vunpack.c.l.b16 %v832
    %v1821 = vunpack.c.h.b16 %v832
    %v1822 = vunpack.c.l.b16 %v833
    %v1823 = vunpack.c.h.b16 %v833
    %v1824 = vunpack.c.l.b16 %v834
    %v1825 = vunpack.c.h.b16 %v834
    %v1826 = vunpack.c.l.b16 %v835
    %v1827 = vunpack.c.h.b16 %v835
    %v1828 = vunpack.c.l.b16 %v836
    %v1829 = vunpack.c.h.b16 %v836
    %v1830 = vunpack.c.l.b16 %v837
    %v1831 = vunpack.c.h.b16 %v837
    %v1832 = vunpack.c.l.b16 %v838
    %v1833 = vunpack.c.h.b16 %v838
    %v1834 = vunpack.c.l.b16 %v839
    %v1835 = vunpack.c.h.b16 %v839
    %v1836 = vunpack.c.l.b16 %v840
    %v1837 = vunpack.c.h.b16 %v840
    %v1838 = vunpack.c.l.b16 %v841
    %v1839 = vunpack.c.h.b16 %v841
    %v1840 = vunpack.c.l.b16 %v842
    %v1841 = vunpack.c.h.b16 %v842
    %v1842 = vunpack.c.l.b16 %v843
    %v1843 = vunpack.c.h.b16 %v843
    %v1844 = vunpack.c.l.b16 %v844
    %v1845 = vunpack.c.h.b16 %v844
    %v1846 = vunpack.c.l.b16 %v845
    %v1847 = vunpack.c.h.b16 %v845
    %v1848 = vunpack.c.l.b16 %v846
    %v1849 = vunpack.c.h.b16 %v846
    %v1850 = vunpack.c.l.b16 %v847
    %v1851 = vunpack.c.h.b16 %v847
    %v1852 = vunpack.c.l.b16 %v848
    %v1853 = vunpack.c.h.b16 %v848
    %v1854 = vunpack.c.l.b16 %v849
    %v1855 = vunpack.c.h.b16 %v849
    %v1856 = vunpack.c.l.b16 %v850
    %v1857 = vunpack.c.h.b16 %v850
    %v1858 = vunpack.c.l.b16 %v851
    %v1859 = vunpack.c.h.b16 %v851
    %v1860 = vunpack.c.l.b16 %v852
    %v1861 = vunpack.c.h.b16 %v852
    %v1862 = vunpack.c.l.b16 %v853
    %v1863 = vunpack.c.h.b16 %v853
    %v1864 = vunpack.c.l.b16 %v854
    %v1865 = vunpack.c.h.b16 %v854
    %v1866 = vunpack.c.l.b16 %v855
    %v1867 = vunpack.c.h.b16 %v855
    %v1868 = vunpack.c.l.b16 %v856
    %v1869 = vunpack.c.h.b16 %v856
    %v1870 = vunpack.c.l.b16 %v857
    %v1871 = vunpack.c.h.b16 %v857
    %v1872 = vunpack.c.l.b16 %v858
    %v1873 = vunpack.c.h.b16 %v858
    %v1874 = vunpack.c.l.b16 %v859
    %v1875 = vunpack.c.h.b16 %v859
    %v1876 = vunpack.c.l.b16 %v860
    %v1877 = vunpack.c.h.b16 %v860
    %v1878 = vunpack.c.l.b16 %v861
    %v1879 = vunpack.c.h.b16 %v861
    %v1880 = vunpack.c.l.b16 %v862
    %v1881 = vunpack.c.h.b16 %v862
    %v1882 = vunpack.c.l.b16 %v863
    %v1883 = vunpack.c.h.b16 %v863
    %v1884 = vunpack.c.l.b16 %v864
    %v1885 = vunpack.c.h.b16 %v864
    %v1886 = vunpack.c.l.b16 %v865
    %v1887 = vunpack.c.h.b16 %v865
    %v1888 = vunpack.c.l.b16 %v866
    %v1889 = vunpack.c.h.b16 %v866
    %v1890 = vunpack.c.l.b16 %v867
    %v1891 = vunpack.c.h.b16 %v867
    %v1892 = vunpack.c.l.b16 %v868
    %v1893 = vunpack.c.h.b16 %v868
    %v1894 = vunpack.c.l.b16 %v869
    %v1895 = vunpack.c.h.b16 %v869
    %v1896 = vunpack.c.l.b16 %v870
    %v1897 = vunpack.c.h.b16 %v870
    %v1898 = vunpack.c.l.b16 %v871
    %v1899 = vunpack.c.h.b16 %v871
    %v1900 = vunpack.c.l.b16 %v872
    %v1901 = vunpack.c.h.b16 %v872
    %v1902 = vunpack.c.l.b16 %v873
    %v1903 = vunpack.c.h.b16 %v873
    %v1904 = vunpack.c.l.b16 %v874
    %v1905 = vunpack.c.h.b16 %v874
    %v1906 = vunpack.c.l.b16 %v875
    %v1907 = vunpack.c.h.b16 %v875
    %v1908 = vunpack.c.l.b16 %v876
    %v1909 = vunpack.c.h.b16 %v876
    %v1910 = vunpack.c.l.b16 %v877
    %v1911 = vunpack.c.h.b16 %v877
    %v1912 = vunpack.c.l.b16 %v878
    %v1913 = vunpack.c.h.b16 %v878
    %v1914 = vunpack.c.l.b16 %v879
    %v1915 = vunpack.c.h.b16 %v879
    %v1916 = vunpack.c.l.b16 %v880
    %v1917 = vunpack.c.h.b16 %v880
    %v1918 = vunpack.c.l.b16 %v881
    %v1919 = vunpack.c.h.b16 %v881
    %v1920 = vunpack.c.l.b16 %v882
    %v1921 = vunpack.c.h.b16 %v882
    %v1922 = vunpack.c.l.b16 %v883
    %v1923 = vunpack.c.h.b16 %v883
    %v1924 = vunpack.c.l.b16 %v884
    %v1925 = vunpack.c.h.b16 %v884
    %v1926 = vunpack.c.l.b16 %v885
    %v1927 = vunpack.c.h.b16 %v885
    %v1928 = vunpack.c.l.b16 %v886
    %v1929 = vunpack.c.h.b16 %v886
    %v1930 = vunpack.c.l.b16 %v887
    %v1931 = vunpack.c.h.b16 %v887
    %v1932 = vunpack.c.l.b16 %v888
    %v1933 = vunpack.c.h.b16 %v888
    %v1934 = vunpack.c.l.b16 %v889
    %v1935 = vunpack.c.h.b16 %v889
    %v1936 = vunpack.c.l.b16 %v890
    %v1937 = vunpack.c.h.b16 %v890
    %v1938 = vunpack.c.l.b16 %v891
    %v1939 = vunpack.c.h.b16 %v891
    %v1940 = vunpack.c.l.b16 %v892
    %v1941 = vunpack.c.h.b16 %v892
    %v1942 = vunpack.c.l.b16 %v893
    %v1943 = vunpack.c.h.b16 %v893
    %v1944 = vunpack.c.l.b16 %v894
    %v1945 = vunpack.c.h.b16 %v894
    %v1946 = vunpack.c.l.b16 %v895
    %v1947 = vunpack.c.h.b16 %v895
    %v1948 = vunpack.c.l.b16 %v896
    %v1949 = vunpack.c.h.b16 %v896
    %v1950 = vunpack.c.l.b16 %v897
    %v1951 = vunpack.c.h.b16 %v897
    %v1952 = vunpack.c.l.b16 %v898
    %v1953 = vunpack.c.h.b16 %v898
    %v1954 = vunpack.c.l.b16 %v899
    %v1955 = vunpack.c.h.b16 %v899
    %v1956 = vunpack.c.l.b16 %v900
    %v1957 = vunpack.c.h.b16 %v900
    %v1958 = vunpack.c.l.b16 %v901
    %v1959 = vunpack.c.h.b16 %v901
    %v1960 = vunpack.c.l.b16 %v902
    %v1961 = vunpack.c.h.b16 %v902
    %v1962 = vunpack.c.l.b16 %v903
    %v1963 = vunpack.c.h.b16 %v903
    %v1964 = vunpack.c.l.b16 %v904
    %v1965 = vunpack.c.h.b16 %v904
    %v1966 = vunpack.c.l.b16 %v905
    %v1967 = vunpack.c.h.b16 %v905
    %v1968 = vunpack.c.l.b16 %v906
    %v1969 = vunpack.c.h.b16 %v906
    %v1970 = vunpack.c.l.b16 %v907
    %v1971 = vunpack.c.h.b16 %v907
    %v1972 = vunpack.c.l.b16 %v908
    %v1973 = vunpack.c.h.b16 %v908
    %v1974 = vunpack.c.l.b16 %v909
    %v1975 = vunpack.c.h.b16 %v909
    %v1976 = vunpack.c.l.b16 %v910
    %v1977 = vunpack.c.h.b16 %v910
    %v1978 = vunpack.c.l.b16 %v911
    %v1979 = vunpack.c.h.b16 %v911
    %v1980 = vunpack.c.l.b16 %v912
    %v1981 = vunpack.c.h.b16 %v912
    %v1982 = vunpack.c.l.b16 %v913
    %v1983 = vunpack.c.h.b16 %v913
    %v1984 = vunpack.c.l.b16 %v914
    %v1985 = vunpack.c.h.b16 %v914
    %v1986 = vunpack.c.l.b16 %v915
    %v1987 = vunpack.c.h.b16 %v915
    %v1988 = vunpack.c.l.b16 %v916
    %v1989 = vunpack.c.h.b16 %v916
    %v1990 = vunpack.c.l.b16 %v917
    %v1991 = vunpack.c.h.b16 %v917
    %v1992 = vunpack.c.l.b16 %v918
    %v1993 = vunpack.c.h.b16 %v918
    %v1994 = vunpack.c.l.b16 %v919
    %v1995 = vunpack.c.h.b16 %v919
    %v1996 = vunpack.c.l.b16 %v920
    %v1997 = vunpack.c.h.b16 %v920
    %v1998 = vunpack.c.l.b16 %v921
    %v1999 = vunpack.c.h.b16 %v921
    %v2000 = vunpack.c.l.b16 %v922
    %v2001 = vunpack.c.h.b16 %v922
    %v2002 = vunpack.c.l.b16 %v923
    %v2003 = vunpack.c.h.b16 %v923
    %v2004 = vunpack.c.l.b16 %v924
    %v2005 = vunpack.c.h.b16 %v924
    %v2006 = vunpack.c.l.b16 %v925
    %v2007 = vunpack.c.h.b16 %v925
    %v2008 = vunpack.c.l.b16 %v926
    %v2009 = vunpack.c.h.b16 %v926
    %v2010 = vunpack.c.l.b16 %v927
    %v2011 = vunpack.c.h.b16 %v927
    %v2012 = vunpack.c.l.b16 %v928
    %v2013 = vunpack.c.h.b16 %v928
    %v2014 = vunpack.c.l.b16 %v929
    %v2015 = vunpack.c.h.b16 %v929
    %v2016 = vunpack.c.l.b16 %v930
    %v2017 = vunpack.c.h.b16 %v930
    %v2018 = vunpack.c.l.b16 %v931
    %v2019 = vunpack.c.h.b16 %v931
    %v2020 = vunpack.c.l.b16 %v932
    %v2021 = vunpack.c.h.b16 %v932
    %v2022 = vunpack.c.l.b16 %v933
    %v2023 = vunpack.c.h.b16 %v933
    %v2024 = vunpack.c.l.b16 %v934
    %v2025 = vunpack.c.h.b16 %v934
    %v2026 = vunpack.c.l.b16 %v935
    %v2027 = vunpack.c.h.b16 %v935
    %v2028 = vunpack.c.l.b16 %v936
    %v2029 = vunpack.c.h.b16 %v936
    %v2030 = vunpack.c.l.b16 %v937
    %v2031 = vunpack.c.h.b16 %v937
    %v2032 = vunpack.c.l.b16 %v938
    %v2033 = vunpack.c.h.b16 %v938
    %v2034 = vunpack.c.l.b16 %v939
    %v2035 = vunpack.c.h.b16 %v939
    %v2036 = vunpack.c.l.b16 %v940
    %v2037 = vunpack.c.h.b16 %v940
    %v2038 = vunpack.c.l.b16 %v941
    %v2039 = vunpack.c.h.b16 %v941
    %v2040 = vunpack.c.l.b16 %v942
    %v2041 = vunpack.c.h.b16 %v942
    %v2042 = vunpack.c.l.b16 %v943
    %v2043 = vunpack.c.h.b16 %v943
    %v2044 = vunpack.c.l.b16 %v944
    %v2045 = vunpack.c.h.b16 %v944
    %v2046 = vunpack.c.l.b16 %v945
    %v2047 = vunpack.c.h.b16 %v945
    %v2048 = vunpack.c.l.b16 %v946
    %v2049 = vunpack.c.h.b16 %v946
    %v2050 = vunpack.c.l.b16 %v947
    %v2051 = vunpack.c.h.b16 %v947
    %v2052 = vunpack.c.l.b16 %v948
    %v2053 = vunpack.c.h.b16 %v948
    %v2054 = vunpack.c.l.b16 %v949
    %v2055 = vunpack.c.h.b16 %v949
    %v2056 = vunpack.c.l.b16 %v950
    %v2057 = vunpack.c.h.b16 %v950
    %v2058 = vunpack.c.l.b16 %v951
    %v2059 = vunpack.c.h.b16 %v951
    %v2060 = vunpack.c.l.b16 %v952
    %v2061 = vunpack.c.h.b16 %v952
    %v2062 = vunpack.c.l.b16 %v953
    %v2063 = vunpack.c.h.b16 %v953
    %v2064 = vunpack.c.l.b16 %v954
    %v2065 = vunpack.c.h.b16 %v954
    %v2066 = vunpack.c.l.b16 %v955
    %v2067 = vunpack.c.h.b16 %v955
    %v2068 = vunpack.c.l.b16 %v956
    %v2069 = vunpack.c.h.b16 %v956
    %v2070 = vunpack.c.l.b16 %v957
    %v2071 = vunpack.c.h.b16 %v957
    %v2072 = vunpack.c.l.b16 %v958
    %v2073 = vunpack.c.h.b16 %v958
    %v2074 = vunpack.c.l.b16 %v959
    %v2075 = vunpack.c.h.b16 %v959
    %v2076 = vunpack.c.l.b16 %v960
    %v2077 = vunpack.c.h.b16 %v960
    %v2078 = vunpack.c.l.b16 %v961
    %v2079 = vunpack.c.h.b16 %v961
    %v2080 = vunpack.c.l.b16 %v962
    %v2081 = vunpack.c.h.b16 %v962
    %v2082 = vunpack.c.l.b16 %v963
    %v2083 = vunpack.c.h.b16 %v963
    %v2084 = vunpack.c.l.b16 %v964
    %v2085 = vunpack.c.h.b16 %v964
    %v2086 = vunpack.c.l.b16 %v965
    %v2087 = vunpack.c.h.b16 %v965
    %v2088 = vunpack.c.l.b16 %v966
    %v2089 = vunpack.c.h.b16 %v966
    %v2090 = vunpack.c.l.b16 %v967
    %v2091 = vunpack.c.h.b16 %v967
    %v2092 = vunpack.c.l.b16 %v968
    %v2093 = vunpack.c.h.b16 %v968
    %v2094 = vunpack.c.l.b16 %v969
    %v2095 = vunpack.c.h.b16 %v969
    %v2096 = vunpack.c.l.b16 %v970
    %v2097 = vunpack.c.h.b16 %v970
    %v2098 = vunpack.c.l.b16 %v971
    %v2099 = vunpack.c.h.b16 %v971
    %v2100 = vunpack.c.l.b16 %v972
    %v2101 = vunpack.c.h.b16 %v972
    %v2102 = vunpack.c.l.b16 %v973
    %v2103 = vunpack.c.h.b16 %v973
    %v2104 = vunpack.c.l.b16 %v974
    %v2105 = vunpack.c.h.b16 %v974
    %v2106 = vunpack.c.l.b16 %v975
    %v2107 = vunpack.c.h.b16 %v975
    %v2108 = vunpack.c.l.b16 %v976
    %v2109 = vunpack.c.h.b16 %v976
    %v2110 = vunpack.c.l.b16 %v977
    %v2111 = vunpack.c.h.b16 %v977
    %v2112 = vunpack.c.l.b16 %v978
    %v2113 = vunpack.c.h.b16 %v978
    %v2114 = vunpack.c.l.b16 %v979
    %v2115 = vunpack.c.h.b16 %v979
    %v2116 = vunpack.c.l.b16 %v980
    %v2117 = vunpack.c.h.b16 %v980
    %v2118 = vunpack.c.l.b16 %v981
    %v2119 = vunpack.c.h.b16 %v981
    %v2120 = vunpack.c.l.b16 %v982
    %v2121 = vunpack.c.h.b16 %v982
    %v2122 = vunpack.c.l.b16 %v983
    %v2123 = vunpack.c.h.b16 %v983
    %v2124 = vunpack.c.l.b16 %v984
    %v2125 = vunpack.c.h.b16 %v984
    %v2126 = vunpack.c.l.b16 %v985
    %v2127 = vunpack.c.h.b16 %v985
    %v2128 = vunpack.c.l.b16 %v986
    %v2129 = vunpack.c.h.b16 %v986
    %v2130 = vunpack.c.l.b16 %v987
    %v2131 = vunpack.c.h.b16 %v987
    %v2132 = vunpack.c.l.b16 %v988
    %v2133 = vunpack.c.h.b16 %v988
    %v2134 = vunpack.c.l.b16 %v989
    %v2135 = vunpack.c.h.b16 %v989
    %v2136 = vunpack.c.l.b16 %v990
    %v2137 = vunpack.c.h.b16 %v990
    %v2138 = vunpack.c.l.b16 %v991
    %v2139 = vunpack.c.h.b16 %v991
    %v2140 = vunpack.c.l.b16 %v992
    %v2141 = vunpack.c.h.b16 %v992
    %v2142 = vunpack.c.l.b16 %v993
    %v2143 = vunpack.c.h.b16 %v993
    %v2144 = vunpack.c.l.b16 %v994
    %v2145 = vunpack.c.h.b16 %v994
    %v2146 = vunpack.c.l.b16 %v995
    %v2147 = vunpack.c.h.b16 %v995
    %v2148 = vunpack.c.l.b16 %v996
    %v2149 = vunpack.c.h.b16 %v996
    %v2150 = vunpack.c.l.b16 %v997
    %v2151 = vunpack.c.h.b16 %v997
    %v2152 = vunpack.c.l.b16 %v998
    %v2153 = vunpack.c.h.b16 %v998
    %v2154 = vunpack.c.l.b16 %v999
    %v2155 = vunpack.c.h.b16 %v999
    %v2156 = vunpack.c.l.b16 %v1000
    %v2157 = vunpack.c.h.b16 %v1000
    %v2158 = vunpack.c.l.b16 %v1001
    %v2159 = vunpack.c.h.b16 %v1001
    %v2160 = vunpack.c.l.b16 %v1002
    %v2161 = vunpack.c.h.b16 %v1002
    %v2162 = vunpack.c.l.b16 %v1003
    %v2163 = vunpack.c.h.b16 %v1003
    %v2164 = vunpack.c.l.b16 %v1004
    %v2165 = vunpack.c.h.b16 %v1004
    %v2166 = vunpack.c.l.b16 %v1005
    %v2167 = vunpack.c.h.b16 %v1005
    %v2168 = vunpack.c.l.b16 %v1006
    %v2169 = vunpack.c.h.b16 %v1006
    %v2170 = vunpack.c.l.b16 %v1007
    %v2171 = vunpack.c.h.b16 %v1007
    %v2172 = vunpack.c.l.b16 %v1008
    %v2173 = vunpack.c.h.b16 %v1008
    %v2174 = vunpack.c.l.b16 %v1009
    %v2175 = vunpack.c.h.b16 %v1009
    %v2176 = vunpack.c.l.b16 %v1010
    %v2177 = vunpack.c.h.b16 %v1010
    %v2178 = vunpack.c.l.b16 %v1011
    %v2179 = vunpack.c.h.b16 %v1011
    %v2180 = vunpack.c.l.b16 %v1012
    %v2181 = vunpack.c.h.b16 %v1012
    %v2182 = vunpack.c.l.b16 %v1013
    %v2183 = vunpack.c.h.b16 %v1013
    %v2184 = vunpack.c.l.b16 %v1014
    %v2185 = vunpack.c.h.b16 %v1014
    %v2186 = vunpack.c.l.b16 %v1015
    %v2187 = vunpack.c.h.b16 %v1015
    %v2188 = vunpack.c.l.b16 %v1016
    %v2189 = vunpack.c.h.b16 %v1016
    %v2190 = vunpack.c.l.b16 %v1017
    %v2191 = vunpack.c.h.b16 %v1017
    %v2192 = vunpack.c.l.b16 %v1018
    %v2193 = vunpack.c.h.b16 %v1018
    %v2194 = vunpack.c.l.b16 %v1019
    %v2195 = vunpack.c.h.b16 %v1019
    %v2196 = vpack.c.b16 %v1420, %v1412
    %v2197 = vpack.c.b16 %v1421, %v1413
    %v2198 = vpack.c.b16 %v1422, %v1414
    %v2199 = vpack.c.b16 %v1423, %v1415
    %v2200 = vpack.c.b16 %v1424, %v1416
    %v2201 = vpack.c.b16 %v1425, %v1417
    %v2202 = vpack.c.b16 %v1426, %v1418
    %v2203 = vpack.c.b16 %v1427, %v1419
    %v2204 = vpack.c.b16 %v1436, %v1428
    %v2205 = vpack.c.b16 %v1437, %v1429
    %v2206 = vpack.c.b16 %v1438, %v1430
    %v2207 = vpack.c.b16 %v1439, %v1431
    %v2208 = vpack.c.b16 %v1440, %v1432
    %v2209 = vpack.c.b16 %v1441, %v1433
    %v2210 = vpack.c.b16 %v1442, %v1434
    %v2211 = vpack.c.b16 %v1443, %v1435
    %v2212 = vpack.c.b16 %v1452, %v1444
    %v2213 = vpack.c.b16 %v1453, %v1445
    %v2214 = vpack.c.b16 %v1454, %v1446
    %v2215 = vpack.c.b16 %v1455, %v1447
    %v2216 = vpack.c.b16 %v1456, %v1448
    %v2217 = vpack.c.b16 %v1457, %v1449
    %v2218 = vpack.c.b16 %v1458, %v1450
    %v2219 = vpack.c.b16 %v1459, %v1451
    %v2220 = vpack.c.b16 %v1468, %v1460
    %v2221 = vpack.c.b16 %v1469, %v1461
    %v2222 = vpack.c.b16 %v1470, %v1462
    %v2223 = vpack.c.b16 %v1471, %v1463
    %v2224 = vpack.c.b16 %v1472, %v1464
    %v2225 = vpack.c.b16 %v1473, %v1465
    %v2226 = vpack.c.b16 %v1474, %v1466
    %v2227 = vpack.c.b16 %v1475, %v1467
    %v2228 = vpack.c.b16 %v1484, %v1476
    %v2229 = vpack.c.b16 %v1485, %v1477
    %v2230 = vpack.c.b16 %v1486, %v1478
    %v2231 = vpack.c.b16 %v1487, %v1479
    %v2232 = vpack.c.b16 %v1488, %v1480
    %v2233 = vpack.c.b16 %v1489, %v1481
    %v2234 = vpack.c.b16 %v1490, %v1482
    %v2235 = vpack.c.b16 %v1491, %v1483
    %v2236 = vpack.c.b16 %v1500, %v1492
    %v2237 = vpack.c.b16 %v1501, %v1493
    %v2238 = vpack.c.b16 %v1502, %v1494
    %v2239 = vpack.c.b16 %v1503, %v1495
    %v2240 = vpack.c.b16 %v1504, %v1496
    %v2241 = vpack.c.b16 %v1505, %v1497
    %v2242 = vpack.c.b16 %v1506, %v1498
    %v2243 = vpack.c.b16 %v1507, %v1499
    %v2244 = vpack.c.b16 %v1516, %v1508
    %v2245 = vpack.c.b16 %v1517, %v1509
    %v2246 = vpack.c.b16 %v1518, %v1510
    %v2247 = vpack.c.b16 %v1519, %v1511
    %v2248 = vpack.c.b16 %v1520, %v1512
    %v2249 = vpack.c.b16 %v1521, %v1513
    %v2250 = vpack.c.b16 %v1522, %v1514
    %v2251 = vpack.c.b16 %v1523, %v1515
    %v2252 = vpack.c.b16 %v1532, %v1524
    %v2253 = vpack.c.b16 %v1533, %v1525
    %v2254 = vpack.c.b16 %v1534, %v1526
    %v2255 = vpack.c.b16 %v1535, %v1527
    %v2256 = vpack.c.b16 %v1536, %v1528
    %v2257 = vpack.c.b16 %v1537, %v1529
    %v2258 = vpack.c.b16 %v1538, %v1530
    %v2259 = vpack.c.b16 %v1539, %v1531
    %v2260 = vpack.c.b16 %v1548, %v1540
    %v2261 = vpack.c.b16 %v1549, %v1541
    %v2262 = vpack.c.b16 %v1550, %v1542
    %v2263 = vpack.c.b16 %v1551, %v1543
    %v2264 = vpack.c.b16 %v1552, %v1544
    %v2265 = vpack.c.b16 %v1553, %v1545
    %v2266 = vpack.c.b16 %v1554, %v1546
    %v2267 = vpack.c.b16 %v1555, %v1547
    %v2268 = vpack.c.b16 %v1564, %v1556
    %v2269 = vpack.c.b16 %v1565, %v1557
    %v2270 = vpack.c.b16 %v1566, %v1558
    %v2271 = vpack.c.b16 %v1567, %v1559
    %v2272 = vpack.c.b16 %v1568, %v1560
    %v2273 = vpack.c.b16 %v1569, %v1561
    %v2274 = vpack.c.b16 %v1570, %v1562
    %v2275 = vpack.c.b16 %v1571, %v1563
    %v2276 = vpack.c.b16 %v1580, %v1572
    %v2277 = vpack.c.b16 %v1581, %v1573
    %v2278 = vpack.c.b16 %v1582, %v1574
    %v2279 = vpack.c.b16 %v1583, %v1575
    %v2280 = vpack.c.b16 %v1584, %v1576
    %v2281 = vpack.c.b16 %v1585, %v1577
    %v2282 = vpack.c.b16 %v1586, %v1578
    %v2283 = vpack.c.b16 %v1587, %v1579
    %v2284 = vpack.c.b16 %v1596, %v1588
    %v2285 = vpack.c.b16 %v1597, %v1589
    %v2286 = vpack.c.b16 %v1598, %v1590
    %v2287 = vpack.c.b16 %v1599, %v1591
    %v2288 = vpack.c.b16 %v1600, %v1592
    %v2289 = vpack.c.b16 %v1601, %v1593
    %v2290 = vpack.c.b16 %v1602, %v1594
    %v2291 = vpack.c.b16 %v1603, %v1595
    %v2292 = vpack.c.b16 %v1612, %v1604
    %v2293 = vpack.c.b16 %v1613, %v1605
    %v2294 = vpack.c.b16 %v1614, %v1606
    %v2295 = vpack.c.b16 %v1615, %v1607
    %v2296 = vpack.c.b16 %v1616, %v1608
    %v2297 = vpack.c.b16 %v1617, %v1609
    %v2298 = vpack.c.b16 %v1618, %v1610
    %v2299 = vpack.c.b16 %v1619, %v1611
    %v2300 = vpack.c.b16 %v1628, %v1620
    %v2301 = vpack.c.b16 %v1629, %v1621
    %v2302 = vpack.c.b16 %v1630, %v1622
    %v2303 = vpack.c.b16 %v1631, %v1623
    %v2304 = vpack.c.b16 %v1632, %v1624
    %v2305 = vpack.c.b16 %v1633, %v1625
    %v2306 = vpack.c.b16 %v1634, %v1626
    %v2307 = vpack.c.b16 %v1635, %v1627
    %v2308 = vpack.c.b16 %v1644, %v1636
    %v2309 = vpack.c.b16 %v1645, %v1637
    %v2310 = vpack.c.b16 %v1646, %v1638
    %v2311 = vpack.c.b16 %v1647, %v1639
    %v2312 = vpack.c.b16 %v1648, %v1640
    %v2313 = vpack.c.b16 %v1649, %v1641
    %v2314 = vpack.c.b16 %v1650, %v1642
    %v2315 = vpack.c.b16 %v1651, %v1643
    %v2316 = vpack.c.b16 %v1660, %v1652
    %v2317 = vpack.c.b16 %v1661, %v1653
    %v2318 = vpack.c.b16 %v1662, %v1654
    %v2319 = vpack.c.b16 %v1663, %v1655
    %v2320 = vpack.c.b16 %v1664, %v1656
    %v2321 = vpack.c.b16 %v1665, %v1657
    %v2322 = vpack.c.b16 %v1666, %v1658
    %v2323 = vpack.c.b16 %v1667, %v1659
    %v2324 = vpack.c.b16 %v1676, %v1668
    %v2325 = vpack.c.b16 %v1677, %v1669
    %v2326 = vpack.c.b16 %v1678, %v1670
    %v2327 = vpack.c.b16 %v1679, %v1671
    %v2328 = vpack.c.b16 %v1680, %v1672
    %v2329 = vpack.c.b16 %v1681, %v1673
    %v2330 = vpack.c.b16 %v1682, %v1674
    %v2331 = vpack.c.b16 %v1683, %v1675
    %v2332 = vpack.c.b16 %v1692, %v1684
    %v2333 = vpack.c.b16 %v1693, %v1685
    %v2334 = vpack.c.b16 %v1694, %v1686
    %v2335 = vpack.c.b16 %v1695, %v1687
    %v2336 = vpack.c.b16 %v1696, %v1688
    %v2337 = vpack.c.b16 %v1697, %v1689
    %v2338 = vpack.c.b16 %v1698, %v1690
    %v2339 = vpack.c.b16 %v1699, %v1691
    %v2340 = vpack.c.b16 %v1708, %v1700
    %v2341 = vpack.c.b16 %v1709, %v1701
    %v2342 = vpack.c.b16 %v1710, %v1702
    %v2343 = vpack.c.b16 %v1711, %v1703
    %v2344 = vpack.c.b16 %v1712, %v1704
    %v2345 = vpack.c.b16 %v1713, %v1705
    %v2346 = vpack.c.b16 %v1714, %v1706
    %v2347 = vpack.c.b16 %v1715, %v1707
    %v2348 = vpack.c.b16 %v1724, %v1716
    %v2349 = vpack.c.b16 %v1725, %v1717
    %v2350 = vpack.c.b16 %v1726, %v1718
    %v2351 = vpack.c.b16 %v1727, %v1719
    %v2352 = vpack.c.b16 %v1728, %v1720
    %v2353 = vpack.c.b16 %v1729, %v1721
    %v2354 = vpack.c.b16 %v1730, %v1722
    %v2355 = vpack.c.b16 %v1731, %v1723
    %v2356 = vpack.c.b16 %v1740, %v1732
    %v2357 = vpack.c.b16 %v1741, %v1733
    %v2358 = vpack.c.b16 %v1742, %v1734
    %v2359 = vpack.c.b16 %v1743, %v1735
    %v2360 = vpack.c.b16 %v1744, %v1736
    %v2361 = vpack.c.b16 %v1745, %v1737
    %v2362 = vpack.c.b16 %v1746, %v1738
    %v2363 = vpack.c.b16 %v1747, %v1739
    %v2364 = vpack.c.b16 %v1756, %v1748
    %v2365 = vpack.c.b16 %v1757, %v1749
    %v2366 = vpack.c.b16 %v1758, %v1750
    %v2367 = vpack.c.b16 %v1759, %v1751
    %v2368 = vpack.c.b16 %v1760, %v1752
    %v2369 = vpack.c.b16 %v1761, %v1753
    %v2370 = vpack.c.b16 %v1762, %v1754
    %v2371 = vpack.c.b16 %v1763, %v1755
    %v2372 = vpack.c.b16 %v1772, %v1764
    %v2373 = vpack.c.b16 %v1773, %v1765
    %v2374 = vpack.c.b16 %v1774, %v1766
    %v2375 = vpack.c.b16 %v1775, %v1767
    %v2376 = vpack.c.b16 %v1776, %v1768
    %v2377 = vpack.c.b16 %v1777, %v1769
    %v2378 = vpack.c.b16 %v1778, %v1770
    %v2379 = vpack.c.b16 %v1779, %v1771
    %v2380 = vpack.c.b16 %v1788, %v1780
    %v2381 = vpack.c.b16 %v1789, %v1781
    %v2382 = vpack.c.b16 %v1790, %v1782
    %v2383 = vpack.c.b16 %v1791, %v1783
    %v2384 = vpack.c.b16 %v1792, %v1784
    %v2385 = vpack.c.b16 %v1793, %v1785
    %v2386 = vpack.c.b16 %v1794, %v1786
    %v2387 = vpack.c.b16 %v1795, %v1787
    %v2388 = vpack.c.b16 %v1804, %v1796
    %v2389 = vpack.c.b16 %v1805, %v1797
    %v2390 = vpack.c.b16 %v1806, %v1798
    %v2391 = vpack.c.b16 %v1807, %v1799
    %v2392 = vpack.c.b16 %v1808, %v1800
    %v2393 = vpack.c.b16 %v1809, %v1801
    %v2394 = vpack.c.b16 %v1810, %v1802
    %v2395 = vpack.c.b16 %v1811, %v1803
    %v2396 = vpack.c.b16 %v1820, %v1812
    %v2397 = vpack.c.b16 %v1821, %v1813
    %v2398 = vpack.c.b16 %v1822, %v1814
    %v2399 = vpack.c.b16 %v1823, %v1815
    %v2400 = vpack.c.b16 %v1824, %v1816
    %v2401 = vpack.c.b16 %v1825, %v1817
    %v2402 = vpack.c.b16 %v1826, %v1818
    %v2403 = vpack.c.b16 %v1827, %v1819
    %v2404 = vpack.c.b16 %v1836, %v1828
    %v2405 = vpack.c.b16 %v1837, %v1829
    %v2406 = vpack.c.b16 %v1838, %v1830
    %v2407 = vpack.c.b16 %v1839, %v1831
    %v2408 = vpack.c.b16 %v1840, %v1832
    %v2409 = vpack.c.b16 %v1841, %v1833
    %v2410 = vpack.c.b16 %v1842, %v1834
    %v2411 = vpack.c.b16 %v1843, %v1835
    %v2412 = vpack.c.b16 %v1852, %v1844
    %v2413 = vpack.c.b16 %v1853, %v1845
    %v2414 = vpack.c.b16 %v1854, %v1846
    %v2415 = vpack.c.b16 %v1855, %v1847
    %v2416 = vpack.c.b16 %v1856, %v1848
    %v2417 = vpack.c.b16 %v1857, %v1849
    %v2418 = vpack.c.b16 %v1858, %v1850
    %v2419 = vpack.c.b16 %v1859, %v1851
    %v2420 = vpack.c.b16 %v1868, %v1860
    %v2421 = vpack.c.b16 %v1869, %v1861
    %v2422 = vpack.c.b16 %v1870, %v1862
    %v2423 = vpack.c.b16 %v1871, %v1863
    %v2424 = vpack.c.b16 %v1872, %v1864
    %v2425 = vpack.c.b16 %v1873, %v1865
    %v2426 = vpack.c.b16 %v1874, %v1866
    %v2427 = vpack.c.b16 %v1875, %v1867
    %v2428 = vpack.c.b16 %v1884, %v1876
    %v2429 = vpack.c.b16 %v1885, %v1877
    %v2430 = vpack.c.b16 %v1886, %v1878
    %v2431 = vpack.c.b16 %v1887, %v1879
    %v2432 = vpack.c.b16 %v1888, %v1880
    %v2433 = vpack.c.b16 %v1889, %v1881
    %v2434 = vpack.c.b16 %v1890, %v1882
    %v2435 = vpack.c.b16 %v1891, %v1883
    %v2436 = vpack.c.b16 %v1900, %v1892
    %v2437 = vpack.c.b16 %v1901, %v1893
    %v2438 = vpack.c.b16 %v1902, %v1894
    %v2439 = vpack.c.b16 %v1903, %v1895
    %v2440 = vpack.c.b16 %v1904, %v1896
    %v2441 = vpack.c.b16 %v1905, %v1897
    %v2442 = vpack.c.b16 %v1906, %v1898
    %v2443 = vpack.c.b16 %v1907, %v1899
    %v2444 = vpack.c.b16 %v1916, %v1908
    %v2445 = vpack.c.b16 %v1917, %v1909
    %v2446 = vpack.c.b16 %v1918, %v1910
    %v2447 = vpack.c.b16 %v1919, %v1911
    %v2448 = vpack.c.b16 %v1920, %v1912
    %v2449 = vpack.c.b16 %v1921, %v1913
    %v2450 = vpack.c.b16 %v1922, %v1914
    %v2451 = vpack.c.b16 %v1923, %v1915
    %v2452 = vpack.c.b16 %v1932, %v1924
    %v2453 = vpack.c.b16 %v1933, %v1925
    %v2454 = vpack.c.b16 %v1934, %v1926
    %v2455 = vpack.c.b16 %v1935, %v1927
    %v2456 = vpack.c.b16 %v1936, %v1928
    %v2457 = vpack.c.b16 %v1937, %v1929
    %v2458 = vpack.c.b16 %v1938, %v1930
    %v2459 = vpack.c.b16 %v1939, %v1931
    %v2460 = vpack.c.b16 %v1948, %v1940
    %v2461 = vpack.c.b16 %v1949, %v1941
    %v2462 = vpack.c.b16 %v1950, %v1942
    %v2463 = vpack.c.b16 %v1951, %v1943
    %v2464 = vpack.c.b16 %v1952, %v1944
    %v2465 = vpack.c.b16 %v1953, %v1945
    %v2466 = vpack.c.b16 %v1954, %v1946
    %v2467 = vpack.c.b16 %v1955, %v1947
    %v2468 = vpack.c.b16 %v1964, %v1956
    %v2469 = vpack.c.b16 %v1965, %v1957
    %v2470 = vpack.c.b16 %v1966, %v1958
    %v2471 = vpack.c.b16 %v1967, %v1959
    %v2472 = vpack.c.b16 %v1968, %v1960
    %v2473 = vpack.c.b16 %v1969, %v1961
    %v2474 = vpack.c.b16 %v1970, %v1962
    %v2475 = vpack.c.b16 %v1971, %v1963
    %v2476 = vpack.c.b16 %v1980, %v1972
    %v2477 = vpack.c.b16 %v1981, %v1973
    %v2478 = vpack.c.b16 %v1982, %v1974
    %v2479 = vpack.c.b16 %v1983, %v1975
    %v2480 = vpack.c.b16 %v1984, %v1976
    %v2481 = vpack.c.b16 %v1985, %v1977
    %v2482 = vpack.c.b16 %v1986, %v1978
    %v2483 = vpack.c.b16 %v1987, %v1979
    %v2484 = vpack.c.b16 %v1996, %v1988
    %v2485 = vpack.c.b16 %v1997, %v1989
    %v2486 = vpack.c.b16 %v1998, %v1990
    %v2487 = vpack.c.b16 %v1999, %v1991
    %v2488 = vpack.c.b16 %v2000, %v1992
    %v2489 = vpack.c.b16 %v2001, %v1993
    %v2490 = vpack.c.b16 %v2002, %v1994
    %v2491 = vpack.c.b16 %v2003, %v1995
    %v2492 = vpack.c.b16 %v2012, %v2004
    %v2493 = vpack.c.b16 %v2013, %v2005
    %v2494 = vpack.c.b16 %v2014, %v2006
    %v2495 = vpack.c.b16 %v2015, %v2007
    %v2496 = vpack.c.b16 %v2016, %v2008
    %v2497 = vpack.c.b16 %v2017, %v2009
    %v2498 = vpack.c.b16 %v2018, %v2010
    %v2499 = vpack.c.b16 %v2019, %v2011
    %v2500 = vpack.c.b16 %v2028, %v2020
    %v2501 = vpack.c.b16 %v2029, %v2021
    %v2502 = vpack.c.b16 %v2030, %v2022
    %v2503 = vpack.c.b16 %v2031, %v2023
    %v2504 = vpack.c.b16 %v2032, %v2024
    %v2505 = vpack.c.b16 %v2033, %v2025
    %v2506 = vpack.c.b16 %v2034, %v2026
    %v2507 = vpack.c.b16 %v2035, %v2027
    %v2508 = vpack.c.b16 %v2044, %v2036
    %v2509 = vpack.c.b16 %v2045, %v2037
    %v2510 = vpack.c.b16 %v2046, %v2038
    %v2511 = vpack.c.b16 %v2047, %v2039
    %v2512 = vpack.c.b16 %v2048, %v2040
    %v2513 = vpack.c.b16 %v2049, %v2041
    %v2514 = vpack.c.b16 %v2050, %v2042
    %v2515 = vpack.c.b16 %v2051, %v2043
    %v2516 = vpack.c.b16 %v2060, %v2052
    %v2517 = vpack.c.b16 %v2061, %v2053
    %v2518 = vpack.c.b16 %v2062, %v2054
    %v2519 = vpack.c.b16 %v2063, %v2055
    %v2520 = vpack.c.b16 %v2064, %v2056
    %v2521 = vpack.c.b16 %v2065, %v2057
    %v2522 = vpack.c.b16 %v2066, %v2058
    %v2523 = vpack.c.b16 %v2067, %v2059
    %v2524 = vpack.c.b16 %v2076, %v2068
    %v2525 = vpack.c.b16 %v2077, %v2069
    %v2526 = vpack.c.b16 %v2078, %v2070
    %v2527 = vpack.c.b16 %v2079, %v2071
    %v2528 = vpack.c.b16 %v2080, %v2072
    %v2529 = vpack.c.b16 %v2081, %v2073
    %v2530 = vpack.c.b16 %v2082, %v2074
    %v2531 = vpack.c.b16 %v2083, %v2075
    %v2532 = vpack.c.b16 %v2092, %v2084
    %v2533 = vpack.c.b16 %v2093, %v2085
    %v2534 = vpack.c.b16 %v2094, %v2086
    %v2535 = vpack.c.b16 %v2095, %v2087
    %v2536 = vpack.c.b16 %v2096, %v2088
    %v2537 = vpack.c.b16 %v2097, %v2089
    %v2538 = vpack.c.b16 %v2098, %v2090
    %v2539 = vpack.c.b16 %v2099, %v2091
    %v2540 = vpack.c.b16 %v2108, %v2100
    %v2541 = vpack.c.b16 %v2109, %v2101
    %v2542 = vpack.c.b16 %v2110, %v2102
    %v2543 = vpack.c.b16 %v2111, %v2103
    %v2544 = vpack.c.b16 %v2112, %v2104
    %v2545 = vpack.c.b16 %v2113, %v2105
    %v2546 = vpack.c.b16 %v2114, %v2106
    %v2547 = vpack.c.b16 %v2115, %v2107
    %v2548 = vpack.c.b16 %v2124, %v2116
    %v2549 = vpack.c.b16 %v2125, %v2117
    %v2550 = vpack.c.b16 %v2126, %v2118
    %v2551 = vpack.c.b16 %v2127, %v2119
    %v2552 = vpack.c.b16 %v2128, %v2120
    %v2553 = vpack.c.b16 %v2129, %v2121
    %v2554 = vpack.c.b16 %v2130, %v2122
    %v2555 = vpack.c.b16 %v2131, %v2123
    %v2556 = vpack.c.b16 %v2140, %v2132
    %v2557 = vpack.c.b16 %v2141, %v2133
    %v2558 = vpack.c.b16 %v2142, %v2134
    %v2559 = vpack.c.b16 %v2143, %v2135
    %v2560 = vpack.c.b16 %v2144, %v2136
    %v2561 = vpack.c.b16 %v2145, %v2137
    %v2562 = vpack.c.b16 %v2146, %v2138
    %v2563 = vpack.c.b16 %v2147, %v2139
    %v2564 = vpack.c.b16 %v2156, %v2148
    %v2565 = vpack.c.b16 %v2157, %v2149
    %v2566 = vpack.c.b16 %v2158, %v2150
    %v2567 = vpack.c.b16 %v2159, %v2151
    %v2568 = vpack.c.b16 %v2160, %v2152
    %v2569 = vpack.c.b16 %v2161, %v2153
    %v2570 = vpack.c.b16 %v2162, %v2154
    %v2571 = vpack.c.b16 %v2163, %v2155
    %v2572 = vpack.c.b16 %v2172, %v2164
    %v2573 = vpack.c.b16 %v2173, %v2165
    %v2574 = vpack.c.b16 %v2174, %v2166
    %v2575 = vpack.c.b16 %v2175, %v2167
    %v2576 = vpack.c.b16 %v2176, %v2168
    %v2577 = vpack.c.b16 %v2177, %v2169
    %v2578 = vpack.c.b16 %v2178, %v2170
    %v2579 = vpack.c.b16 %v2179, %v2171
    %v2580 = vpack.c.b16 %v2188, %v2180
    %v2581 = vpack.c.b16 %v2189, %v2181
    %v2582 = vpack.c.b16 %v2190, %v2182
    %v2583 = vpack.c.b16 %v2191, %v2183
    %v2584 = vpack.c.b16 %v2192, %v2184
    %v2585 = vpack.c.b16 %v2193, %v2185
    %v2586 = vpack.c.b16 %v2194, %v2186
    %v2587 = vpack.c.b16 %v2195, %v2187
    %vm2980 = vcmask 130048
    %v2982 = vsel %vm2980, %v627, 0
    %2984 = vmatprep.subr.bf16.mxu0 %v2253
    %2985 = vmatpush1.bf16.msra.mxu0 %v2252
    %2986 = vmatprep.subr.bf16.mxu0 %v2245
    %2987 = vmatpush1.bf16.msra.mxu0 %v2244
    %2988 = vmatprep.subr.bf16.mxu0 %v2237
    %2989 = vmatpush1.bf16.msra.mxu0 %v2236
    %2990 = vmatprep.subr.bf16.mxu0 %v2229
    %2991 = vmatpush1.bf16.msra.mxu0 %v2228
    %2992 = vmatprep.subr.bf16.mxu0 %v2221
    %2993 = vmatpush1.bf16.msra.mxu0 %v2220
    %2994 = vmatprep.subr.bf16.mxu0 %v2213
    %2995 = vmatpush1.bf16.msra.mxu0 %v2212
    %2996 = vmatprep.subr.bf16.mxu0 %v2205
    %2997 = vmatpush1.bf16.msra.mxu0 %v2204
    %2998 = vmatprep.subr.bf16.mxu0 %v2197
    %2999 = vmatpush1.bf16.msra.mxu0 %v2196
    %3000 = vmatprep.subr.bf16.mxu0 %v2317
    %3001 = vmatpush2.bf16.msra.mxu0 %v2316
    %3002 = vmatprep.subr.bf16.mxu0 %v2309
    %3003 = vmatpush2.bf16.msra.mxu0 %v2308
    %3004 = vmatprep.subr.bf16.mxu0 %v2301
    %3005 = vmatpush2.bf16.msra.mxu0 %v2300
    %3006 = vmatprep.subr.bf16.mxu0 %v2293
    %3007 = vmatpush2.bf16.msra.mxu0 %v2292
    %3008 = vmatprep.subr.bf16.mxu0 %v2285
    %3009 = vmatpush2.bf16.msra.mxu0 %v2284
    %3010 = vmatprep.subr.bf16.mxu0 %v2277
    %3011 = vmatpush2.bf16.msra.mxu0 %v2276
    %3012 = vmatprep.subr.bf16.mxu0 %v2269
    %3013 = vmatpush2.bf16.msra.mxu0 %v2268
    %3014 = vmatprep.subr.bf16.mxu0 %v2261
    %3015 = vmatpush2.bf16.msra.mxu0 %v2260
    %3016 = vmatprep.mubr.bf16.mxu0 %v622
    %3017 = vmatmul.mubr.bf16.gmra.mxu0 %v621
    %v3018 = vpop.f32.mrf.mxu0
    %v3019 = vadd.f32 0.0, %v3018
    %v3020 = vpop.f32.mrf.mxu0
    %v3021 = vadd.f32 0.0, %v3020
    %v3022 = vpop.f32.mrf.mxu0
    %v3023 = vpop.f32.mrf.mxu0
    %3024 = vdwg.mxu0
    %3025 = vmatprep.subr.bf16.mxu0 %v2381
    %3026 = vmatpush1.bf16.msra.mxu0 %v2380
    %3027 = vmatprep.subr.bf16.mxu0 %v2373
    %3028 = vmatpush1.bf16.msra.mxu0 %v2372
    %3029 = vmatprep.subr.bf16.mxu0 %v2365
    %3030 = vmatpush1.bf16.msra.mxu0 %v2364
    %3031 = vmatprep.subr.bf16.mxu0 %v2357
    %3032 = vmatpush1.bf16.msra.mxu0 %v2356
    %3033 = vmatprep.subr.bf16.mxu0 %v2349
    %3034 = vmatpush1.bf16.msra.mxu0 %v2348
    %3035 = vmatprep.subr.bf16.mxu0 %v2341
    %3036 = vmatpush1.bf16.msra.mxu0 %v2340
    %3037 = vmatprep.subr.bf16.mxu0 %v2333
    %3038 = vmatpush1.bf16.msra.mxu0 %v2332
    %3039 = vmatprep.subr.bf16.mxu0 %v2325
    %3040 = vmatpush1.bf16.msra.mxu0 %v2324
    %3041 = vmatprep.subr.bf16.mxu0 %v2445
    %3042 = vmatpush2.bf16.msra.mxu0 %v2444
    %3043 = vmatprep.subr.bf16.mxu0 %v2437
    %3044 = vmatpush2.bf16.msra.mxu0 %v2436
    %3045 = vmatprep.subr.bf16.mxu0 %v2429
    %3046 = vmatpush2.bf16.msra.mxu0 %v2428
    %3047 = vmatprep.subr.bf16.mxu0 %v2421
    %3048 = vmatpush2.bf16.msra.mxu0 %v2420
    %3049 = vmatprep.subr.bf16.mxu0 %v2413
    %3050 = vmatpush2.bf16.msra.mxu0 %v2412
    %3051 = vmatprep.subr.bf16.mxu0 %v2405
    %3052 = vmatpush2.bf16.msra.mxu0 %v2404
    %3053 = vmatprep.subr.bf16.mxu0 %v2397
    %3054 = vmatpush2.bf16.msra.mxu0 %v2396
    %3055 = vmatprep.subr.bf16.mxu0 %v2389
    %3056 = vmatpush2.bf16.msra.mxu0 %v2388
    %3057 = vmatprep.mubr.bf16.mxu0 %v624
    %3058 = vmatmul.mubr.bf16.gmra.mxu0 %v623
    %v3059 = vpop.f32.mrf.mxu0
    %v3060 = vadd.f32 %v3019, %v3059
    %v3061 = vpop.f32.mrf.mxu0
    %v3062 = vadd.f32 %v3021, %v3061
    %v3063 = vpop.f32.mrf.mxu0
    %v3064 = vpop.f32.mrf.mxu0
    %3065 = vdwg.mxu0
    %3066 = vmatprep.subr.bf16.mxu0 %v2509
    %3067 = vmatpush1.bf16.msra.mxu0 %v2508
    %3068 = vmatprep.subr.bf16.mxu0 %v2501
    %3069 = vmatpush1.bf16.msra.mxu0 %v2500
    %3070 = vmatprep.subr.bf16.mxu0 %v2493
    %3071 = vmatpush1.bf16.msra.mxu0 %v2492
    %3072 = vmatprep.subr.bf16.mxu0 %v2485
    %3073 = vmatpush1.bf16.msra.mxu0 %v2484
    %3074 = vmatprep.subr.bf16.mxu0 %v2477
    %3075 = vmatpush1.bf16.msra.mxu0 %v2476
    %3076 = vmatprep.subr.bf16.mxu0 %v2469
    %3077 = vmatpush1.bf16.msra.mxu0 %v2468
    %3078 = vmatprep.subr.bf16.mxu0 %v2461
    %3079 = vmatpush1.bf16.msra.mxu0 %v2460
    %3080 = vmatprep.subr.bf16.mxu0 %v2453
    %3081 = vmatpush1.bf16.msra.mxu0 %v2452
    %3082 = vmatprep.subr.bf16.mxu0 %v2573
    %3083 = vmatpush2.bf16.msra.mxu0 %v2572
    %3084 = vmatprep.subr.bf16.mxu0 %v2565
    %3085 = vmatpush2.bf16.msra.mxu0 %v2564
    %3086 = vmatprep.subr.bf16.mxu0 %v2557
    %3087 = vmatpush2.bf16.msra.mxu0 %v2556
    %3088 = vmatprep.subr.bf16.mxu0 %v2549
    %3089 = vmatpush2.bf16.msra.mxu0 %v2548
    %3090 = vmatprep.subr.bf16.mxu0 %v2541
    %3091 = vmatpush2.bf16.msra.mxu0 %v2540
    %3092 = vmatprep.subr.bf16.mxu0 %v2533
    %3093 = vmatpush2.bf16.msra.mxu0 %v2532
    %3094 = vmatprep.subr.bf16.mxu0 %v2525
    %3095 = vmatpush2.bf16.msra.mxu0 %v2524
    %3096 = vmatprep.subr.bf16.mxu0 %v2517
    %3097 = vmatpush2.bf16.msra.mxu0 %v2516
    %3098 = vmatprep.mubr.bf16.mxu0 %v626
    %3099 = vmatmul.mubr.bf16.gmra.mxu0 %v625
    %v3100 = vpop.f32.mrf.mxu0
    %v3101 = vadd.f32 %v3060, %v3100
    %v3102 = vpop.f32.mrf.mxu0
    %v3103 = vadd.f32 %v3062, %v3102
    %v3104 = vpop.f32.mrf.mxu0
    %v3105 = vpop.f32.mrf.mxu0
    %3106 = vdwg.mxu0
    %3107 = vmatprep.subr.bf16.mxu0 0
    %3108 = vmatpush1.bf16.msra.mxu0 0
    %3109 = vmatprep.subr.bf16.mxu0 0
    %3110 = vmatpush1.bf16.msra.mxu0 0
    %3111 = vmatprep.subr.bf16.mxu0 0
    %3112 = vmatpush1.bf16.msra.mxu0 0
    %3113 = vmatprep.subr.bf16.mxu0 0
    %3114 = vmatpush1.bf16.msra.mxu0 0
    %3115 = vmatprep.subr.bf16.mxu0 0
    %3116 = vmatpush1.bf16.msra.mxu0 0
    %3117 = vmatprep.subr.bf16.mxu0 0
    %3118 = vmatpush1.bf16.msra.mxu0 0
    %3119 = vmatprep.subr.bf16.mxu0 0
    %3120 = vmatpush1.bf16.msra.mxu0 0
    %3121 = vmatprep.subr.bf16.mxu0 %v2581
    %3122 = vmatpush1.bf16.msra.mxu0 %v2580
    %3123 = vmatprep.subr.bf16.mxu0 0
    %3124 = vmatpush2.bf16.msra.mxu0 0
    %3125 = vmatprep.subr.bf16.mxu0 0
    %3126 = vmatpush2.bf16.msra.mxu0 0
    %3127 = vmatprep.subr.bf16.mxu0 0
    %3128 = vmatpush2.bf16.msra.mxu0 0
    %3129 = vmatprep.subr.bf16.mxu0 0
    %3130 = vmatpush2.bf16.msra.mxu0 0
    %3131 = vmatprep.subr.bf16.mxu0 0
    %3132 = vmatpush2.bf16.msra.mxu0 0
    %3133 = vmatprep.subr.bf16.mxu0 0
    %3134 = vmatpush2.bf16.msra.mxu0 0
    %3135 = vmatprep.subr.bf16.mxu0 0
    %3136 = vmatpush2.bf16.msra.mxu0 0
    %3137 = vmatprep.subr.bf16.mxu0 0
    %3138 = vmatpush2.bf16.msra.mxu0 0
    %3139 = vmatprep.mubr.bf16.mxu0 0
    %3140 = vmatmul.mubr.bf16.gmra.mxu0 %v2982
    %v3141 = vpop.f32.mrf.mxu0
    %v3142 = vadd.f32 %v3101, %v3141
    %v3143 = vpop.f32.mrf.mxu0
    %v3144 = vadd.f32 %v3103, %v3143
    %v3145 = vpop.f32.mrf.mxu0
    %v3146 = vpop.f32.mrf.mxu0
    %3147 = vdwg.mxu0
    %3148 = vmatprep.subr.bf16.mxu0 %v2255
    %3149 = vmatpush1.bf16.msra.mxu0 %v2254
    %3150 = vmatprep.subr.bf16.mxu0 %v2247
    %3151 = vmatpush1.bf16.msra.mxu0 %v2246
    %3152 = vmatprep.subr.bf16.mxu0 %v2239
    %3153 = vmatpush1.bf16.msra.mxu0 %v2238
    %3154 = vmatprep.subr.bf16.mxu0 %v2231
    %3155 = vmatpush1.bf16.msra.mxu0 %v2230
    %3156 = vmatprep.subr.bf16.mxu0 %v2223
    %3157 = vmatpush1.bf16.msra.mxu0 %v2222
    %3158 = vmatprep.subr.bf16.mxu0 %v2215
    %3159 = vmatpush1.bf16.msra.mxu0 %v2214
    %3160 = vmatprep.subr.bf16.mxu0 %v2207
    %3161 = vmatpush1.bf16.msra.mxu0 %v2206
    %3162 = vmatprep.subr.bf16.mxu0 %v2199
    %3163 = vmatpush1.bf16.msra.mxu0 %v2198
    %3164 = vmatprep.subr.bf16.mxu0 %v2319
    %3165 = vmatpush2.bf16.msra.mxu0 %v2318
    %3166 = vmatprep.subr.bf16.mxu0 %v2311
    %3167 = vmatpush2.bf16.msra.mxu0 %v2310
    %3168 = vmatprep.subr.bf16.mxu0 %v2303
    %3169 = vmatpush2.bf16.msra.mxu0 %v2302
    %3170 = vmatprep.subr.bf16.mxu0 %v2295
    %3171 = vmatpush2.bf16.msra.mxu0 %v2294
    %3172 = vmatprep.subr.bf16.mxu0 %v2287
    %3173 = vmatpush2.bf16.msra.mxu0 %v2286
    %3174 = vmatprep.subr.bf16.mxu0 %v2279
    %3175 = vmatpush2.bf16.msra.mxu0 %v2278
    %3176 = vmatprep.subr.bf16.mxu0 %v2271
    %3177 = vmatpush2.bf16.msra.mxu0 %v2270
    %3178 = vmatprep.subr.bf16.mxu0 %v2263
    %3179 = vmatpush2.bf16.msra.mxu0 %v2262
    %3180 = vmatprep.mubr.bf16.mxu0 %v622
    %3181 = vmatmul.mubr.bf16.gmra.mxu0 %v621
    %v3182 = vpop.f32.mrf.mxu0
    %v3183 = vadd.f32 0.0, %v3182
    %v3184 = vpop.f32.mrf.mxu0
    %v3185 = vadd.f32 0.0, %v3184
    %v3186 = vpop.f32.mrf.mxu0
    %v3187 = vpop.f32.mrf.mxu0
    %3188 = vdwg.mxu0
    %3189 = vmatprep.subr.bf16.mxu0 %v2383
    %3190 = vmatpush1.bf16.msra.mxu0 %v2382
    %3191 = vmatprep.subr.bf16.mxu0 %v2375
    %3192 = vmatpush1.bf16.msra.mxu0 %v2374
    %3193 = vmatprep.subr.bf16.mxu0 %v2367
    %3194 = vmatpush1.bf16.msra.mxu0 %v2366
    %3195 = vmatprep.subr.bf16.mxu0 %v2359
    %3196 = vmatpush1.bf16.msra.mxu0 %v2358
    %3197 = vmatprep.subr.bf16.mxu0 %v2351
    %3198 = vmatpush1.bf16.msra.mxu0 %v2350
    %3199 = vmatprep.subr.bf16.mxu0 %v2343
    %3200 = vmatpush1.bf16.msra.mxu0 %v2342
    %3201 = vmatprep.subr.bf16.mxu0 %v2335
    %3202 = vmatpush1.bf16.msra.mxu0 %v2334
    %3203 = vmatprep.subr.bf16.mxu0 %v2327
    %3204 = vmatpush1.bf16.msra.mxu0 %v2326
    %3205 = vmatprep.subr.bf16.mxu0 %v2447
    %3206 = vmatpush2.bf16.msra.mxu0 %v2446
    %3207 = vmatprep.subr.bf16.mxu0 %v2439
    %3208 = vmatpush2.bf16.msra.mxu0 %v2438
    %3209 = vmatprep.subr.bf16.mxu0 %v2431
    %3210 = vmatpush2.bf16.msra.mxu0 %v2430
    %3211 = vmatprep.subr.bf16.mxu0 %v2423
    %3212 = vmatpush2.bf16.msra.mxu0 %v2422
    %3213 = vmatprep.subr.bf16.mxu0 %v2415
    %3214 = vmatpush2.bf16.msra.mxu0 %v2414
    %3215 = vmatprep.subr.bf16.mxu0 %v2407
    %3216 = vmatpush2.bf16.msra.mxu0 %v2406
    %3217 = vmatprep.subr.bf16.mxu0 %v2399
    %3218 = vmatpush2.bf16.msra.mxu0 %v2398
    %3219 = vmatprep.subr.bf16.mxu0 %v2391
    %3220 = vmatpush2.bf16.msra.mxu0 %v2390
    %3221 = vmatprep.mubr.bf16.mxu0 %v624
    %3222 = vmatmul.mubr.bf16.gmra.mxu0 %v623
    %v3223 = vpop.f32.mrf.mxu0
    %v3224 = vadd.f32 %v3183, %v3223
    %v3225 = vpop.f32.mrf.mxu0
    %v3226 = vadd.f32 %v3185, %v3225
    %v3227 = vpop.f32.mrf.mxu0
    %v3228 = vpop.f32.mrf.mxu0
    %3229 = vdwg.mxu0
    %3230 = vmatprep.subr.bf16.mxu0 %v2511
    %3231 = vmatpush1.bf16.msra.mxu0 %v2510
    %3232 = vmatprep.subr.bf16.mxu0 %v2503
    %3233 = vmatpush1.bf16.msra.mxu0 %v2502
    %3234 = vmatprep.subr.bf16.mxu0 %v2495
    %3235 = vmatpush1.bf16.msra.mxu0 %v2494
    %3236 = vmatprep.subr.bf16.mxu0 %v2487
    %3237 = vmatpush1.bf16.msra.mxu0 %v2486
    %3238 = vmatprep.subr.bf16.mxu0 %v2479
    %3239 = vmatpush1.bf16.msra.mxu0 %v2478
    %3240 = vmatprep.subr.bf16.mxu0 %v2471
    %3241 = vmatpush1.bf16.msra.mxu0 %v2470
    %3242 = vmatprep.subr.bf16.mxu0 %v2463
    %3243 = vmatpush1.bf16.msra.mxu0 %v2462
    %3244 = vmatprep.subr.bf16.mxu0 %v2455
    %3245 = vmatpush1.bf16.msra.mxu0 %v2454
    %3246 = vmatprep.subr.bf16.mxu0 %v2575
    %3247 = vmatpush2.bf16.msra.mxu0 %v2574
    %3248 = vmatprep.subr.bf16.mxu0 %v2567
    %3249 = vmatpush2.bf16.msra.mxu0 %v2566
    %3250 = vmatprep.subr.bf16.mxu0 %v2559
    %3251 = vmatpush2.bf16.msra.mxu0 %v2558
    %3252 = vmatprep.subr.bf16.mxu0 %v2551
    %3253 = vmatpush2.bf16.msra.mxu0 %v2550
    %3254 = vmatprep.subr.bf16.mxu0 %v2543
    %3255 = vmatpush2.bf16.msra.mxu0 %v2542
    %3256 = vmatprep.subr.bf16.mxu0 %v2535
    %3257 = vmatpush2.bf16.msra.mxu0 %v2534
    %3258 = vmatprep.subr.bf16.mxu0 %v2527
    %3259 = vmatpush2.bf16.msra.mxu0 %v2526
    %3260 = vmatprep.subr.bf16.mxu0 %v2519
    %3261 = vmatpush2.bf16.msra.mxu0 %v2518
    %3262 = vmatprep.mubr.bf16.mxu0 %v626
    %3263 = vmatmul.mubr.bf16.gmra.mxu0 %v625
    %v3264 = vpop.f32.mrf.mxu0
    %v3265 = vadd.f32 %v3224, %v3264
    %v3266 = vpop.f32.mrf.mxu0
    %v3267 = vadd.f32 %v3226, %v3266
    %v3268 = vpop.f32.mrf.mxu0
    %v3269 = vpop.f32.mrf.mxu0
    %3270 = vdwg.mxu0
    %3271 = vmatprep.subr.bf16.mxu0 0
    %3272 = vmatpush1.bf16.msra.mxu0 0
    %3273 = vmatprep.subr.bf16.mxu0 0
    %3274 = vmatpush1.bf16.msra.mxu0 0
    %3275 = vmatprep.subr.bf16.mxu0 0
    %3276 = vmatpush1.bf16.msra.mxu0 0
    %3277 = vmatprep.subr.bf16.mxu0 0
    %3278 = vmatpush1.bf16.msra.mxu0 0
    %3279 = vmatprep.subr.bf16.mxu0 0
    %3280 = vmatpush1.bf16.msra.mxu0 0
    %3281 = vmatprep.subr.bf16.mxu0 0
    %3282 = vmatpush1.bf16.msra.mxu0 0
    %3283 = vmatprep.subr.bf16.mxu0 0
    %3284 = vmatpush1.bf16.msra.mxu0 0
    %3285 = vmatprep.subr.bf16.mxu0 %v2583
    %3286 = vmatpush1.bf16.msra.mxu0 %v2582
    %3287 = vmatprep.subr.bf16.mxu0 0
    %3288 = vmatpush2.bf16.msra.mxu0 0
    %3289 = vmatprep.subr.bf16.mxu0 0
    %3290 = vmatpush2.bf16.msra.mxu0 0
    %3291 = vmatprep.subr.bf16.mxu0 0
    %3292 = vmatpush2.bf16.msra.mxu0 0
    %3293 = vmatprep.subr.bf16.mxu0 0
    %3294 = vmatpush2.bf16.msra.mxu0 0
    %3295 = vmatprep.subr.bf16.mxu0 0
    %3296 = vmatpush2.bf16.msra.mxu0 0
    %3297 = vmatprep.subr.bf16.mxu0 0
    %3298 = vmatpush2.bf16.msra.mxu0 0
    %3299 = vmatprep.subr.bf16.mxu0 0
    %3300 = vmatpush2.bf16.msra.mxu0 0
    %3301 = vmatprep.subr.bf16.mxu0 0
    %3302 = vmatpush2.bf16.msra.mxu0 0
    %3303 = vmatprep.mubr.bf16.mxu0 0
    %3304 = vmatmul.mubr.bf16.gmra.mxu0 %v2982
    %v3305 = vpop.f32.mrf.mxu0
    %v3306 = vadd.f32 %v3265, %v3305
    %v3307 = vpop.f32.mrf.mxu0
    %v3308 = vadd.f32 %v3267, %v3307
    %v3309 = vpop.f32.mrf.mxu0
    %v3310 = vpop.f32.mrf.mxu0
    %3311 = vdwg.mxu0
    %3312 = vmatprep.subr.bf16.mxu0 %v2257
    %3313 = vmatpush1.bf16.msra.mxu0 %v2256
    %3314 = vmatprep.subr.bf16.mxu0 %v2249
    %3315 = vmatpush1.bf16.msra.mxu0 %v2248
    %3316 = vmatprep.subr.bf16.mxu0 %v2241
    %3317 = vmatpush1.bf16.msra.mxu0 %v2240
    %3318 = vmatprep.subr.bf16.mxu0 %v2233
    %3319 = vmatpush1.bf16.msra.mxu0 %v2232
    %3320 = vmatprep.subr.bf16.mxu0 %v2225
    %3321 = vmatpush1.bf16.msra.mxu0 %v2224
    %3322 = vmatprep.subr.bf16.mxu0 %v2217
    %3323 = vmatpush1.bf16.msra.mxu0 %v2216
    %3324 = vmatprep.subr.bf16.mxu0 %v2209
    %3325 = vmatpush1.bf16.msra.mxu0 %v2208
    %3326 = vmatprep.subr.bf16.mxu0 %v2201
    %3327 = vmatpush1.bf16.msra.mxu0 %v2200
    %3328 = vmatprep.subr.bf16.mxu0 %v2321
    %3329 = vmatpush2.bf16.msra.mxu0 %v2320
    %3330 = vmatprep.subr.bf16.mxu0 %v2313
    %3331 = vmatpush2.bf16.msra.mxu0 %v2312
    %3332 = vmatprep.subr.bf16.mxu0 %v2305
    %3333 = vmatpush2.bf16.msra.mxu0 %v2304
    %3334 = vmatprep.subr.bf16.mxu0 %v2297
    %3335 = vmatpush2.bf16.msra.mxu0 %v2296
    %3336 = vmatprep.subr.bf16.mxu0 %v2289
    %3337 = vmatpush2.bf16.msra.mxu0 %v2288
    %3338 = vmatprep.subr.bf16.mxu0 %v2281
    %3339 = vmatpush2.bf16.msra.mxu0 %v2280
    %3340 = vmatprep.subr.bf16.mxu0 %v2273
    %3341 = vmatpush2.bf16.msra.mxu0 %v2272
    %3342 = vmatprep.subr.bf16.mxu0 %v2265
    %3343 = vmatpush2.bf16.msra.mxu0 %v2264
    %3344 = vmatprep.mubr.bf16.mxu0 %v622
    %3345 = vmatmul.mubr.bf16.gmra.mxu0 %v621
    %v3346 = vpop.f32.mrf.mxu0
    %v3347 = vadd.f32 0.0, %v3346
    %v3348 = vpop.f32.mrf.mxu0
    %v3349 = vadd.f32 0.0, %v3348
    %v3350 = vpop.f32.mrf.mxu0
    %v3351 = vpop.f32.mrf.mxu0
    %3352 = vdwg.mxu0
    %3353 = vmatprep.subr.bf16.mxu0 %v2385
    %3354 = vmatpush1.bf16.msra.mxu0 %v2384
    %3355 = vmatprep.subr.bf16.mxu0 %v2377
    %3356 = vmatpush1.bf16.msra.mxu0 %v2376
    %3357 = vmatprep.subr.bf16.mxu0 %v2369
    %3358 = vmatpush1.bf16.msra.mxu0 %v2368
    %3359 = vmatprep.subr.bf16.mxu0 %v2361
    %3360 = vmatpush1.bf16.msra.mxu0 %v2360
    %3361 = vmatprep.subr.bf16.mxu0 %v2353
    %3362 = vmatpush1.bf16.msra.mxu0 %v2352
    %3363 = vmatprep.subr.bf16.mxu0 %v2345
    %3364 = vmatpush1.bf16.msra.mxu0 %v2344
    %3365 = vmatprep.subr.bf16.mxu0 %v2337
    %3366 = vmatpush1.bf16.msra.mxu0 %v2336
    %3367 = vmatprep.subr.bf16.mxu0 %v2329
    %3368 = vmatpush1.bf16.msra.mxu0 %v2328
    %3369 = vmatprep.subr.bf16.mxu0 %v2449
    %3370 = vmatpush2.bf16.msra.mxu0 %v2448
    %3371 = vmatprep.subr.bf16.mxu0 %v2441
    %3372 = vmatpush2.bf16.msra.mxu0 %v2440
    %3373 = vmatprep.subr.bf16.mxu0 %v2433
    %3374 = vmatpush2.bf16.msra.mxu0 %v2432
    %3375 = vmatprep.subr.bf16.mxu0 %v2425
    %3376 = vmatpush2.bf16.msra.mxu0 %v2424
    %3377 = vmatprep.subr.bf16.mxu0 %v2417
    %3378 = vmatpush2.bf16.msra.mxu0 %v2416
    %3379 = vmatprep.subr.bf16.mxu0 %v2409
    %3380 = vmatpush2.bf16.msra.mxu0 %v2408
    %3381 = vmatprep.subr.bf16.mxu0 %v2401
    %3382 = vmatpush2.bf16.msra.mxu0 %v2400
    %3383 = vmatprep.subr.bf16.mxu0 %v2393
    %3384 = vmatpush2.bf16.msra.mxu0 %v2392
    %3385 = vmatprep.mubr.bf16.mxu0 %v624
    %3386 = vmatmul.mubr.bf16.gmra.mxu0 %v623
    %v3387 = vpop.f32.mrf.mxu0
    %v3388 = vadd.f32 %v3347, %v3387
    %v3389 = vpop.f32.mrf.mxu0
    %v3390 = vadd.f32 %v3349, %v3389
    %v3391 = vpop.f32.mrf.mxu0
    %v3392 = vpop.f32.mrf.mxu0
    %3393 = vdwg.mxu0
    %3394 = vmatprep.subr.bf16.mxu0 %v2513
    %3395 = vmatpush1.bf16.msra.mxu0 %v2512
    %3396 = vmatprep.subr.bf16.mxu0 %v2505
    %3397 = vmatpush1.bf16.msra.mxu0 %v2504
    %3398 = vmatprep.subr.bf16.mxu0 %v2497
    %3399 = vmatpush1.bf16.msra.mxu0 %v2496
    %3400 = vmatprep.subr.bf16.mxu0 %v2489
    %3401 = vmatpush1.bf16.msra.mxu0 %v2488
    %3402 = vmatprep.subr.bf16.mxu0 %v2481
    %3403 = vmatpush1.bf16.msra.mxu0 %v2480
    %3404 = vmatprep.subr.bf16.mxu0 %v2473
    %3405 = vmatpush1.bf16.msra.mxu0 %v2472
    %3406 = vmatprep.subr.bf16.mxu0 %v2465
    %3407 = vmatpush1.bf16.msra.mxu0 %v2464
    %3408 = vmatprep.subr.bf16.mxu0 %v2457
    %3409 = vmatpush1.bf16.msra.mxu0 %v2456
    %3410 = vmatprep.subr.bf16.mxu0 %v2577
    %3411 = vmatpush2.bf16.msra.mxu0 %v2576
    %3412 = vmatprep.subr.bf16.mxu0 %v2569
    %3413 = vmatpush2.bf16.msra.mxu0 %v2568
    %3414 = vmatprep.subr.bf16.mxu0 %v2561
    %3415 = vmatpush2.bf16.msra.mxu0 %v2560
    %3416 = vmatprep.subr.bf16.mxu0 %v2553
    %3417 = vmatpush2.bf16.msra.mxu0 %v2552
    %3418 = vmatprep.subr.bf16.mxu0 %v2545
    %3419 = vmatpush2.bf16.msra.mxu0 %v2544
    %3420 = vmatprep.subr.bf16.mxu0 %v2537
    %3421 = vmatpush2.bf16.msra.mxu0 %v2536
    %3422 = vmatprep.subr.bf16.mxu0 %v2529
    %3423 = vmatpush2.bf16.msra.mxu0 %v2528
    %3424 = vmatprep.subr.bf16.mxu0 %v2521
    %3425 = vmatpush2.bf16.msra.mxu0 %v2520
    %3426 = vmatprep.mubr.bf16.mxu0 %v626
    %3427 = vmatmul.mubr.bf16.gmra.mxu0 %v625
    %v3428 = vpop.f32.mrf.mxu0
    %v3429 = vadd.f32 %v3388, %v3428
    %v3430 = vpop.f32.mrf.mxu0
    %v3431 = vadd.f32 %v3390, %v3430
    %v3432 = vpop.f32.mrf.mxu0
    %v3433 = vpop.f32.mrf.mxu0
    %3434 = vdwg.mxu0
    %3435 = vmatprep.subr.bf16.mxu0 0
    %3436 = vmatpush1.bf16.msra.mxu0 0
    %3437 = vmatprep.subr.bf16.mxu0 0
    %3438 = vmatpush1.bf16.msra.mxu0 0
    %3439 = vmatprep.subr.bf16.mxu0 0
    %3440 = vmatpush1.bf16.msra.mxu0 0
    %3441 = vmatprep.subr.bf16.mxu0 0
    %3442 = vmatpush1.bf16.msra.mxu0 0
    %3443 = vmatprep.subr.bf16.mxu0 0
    %3444 = vmatpush1.bf16.msra.mxu0 0
    %3445 = vmatprep.subr.bf16.mxu0 0
    %3446 = vmatpush1.bf16.msra.mxu0 0
    %3447 = vmatprep.subr.bf16.mxu0 0
    %3448 = vmatpush1.bf16.msra.mxu0 0
    %3449 = vmatprep.subr.bf16.mxu0 %v2585
    %3450 = vmatpush1.bf16.msra.mxu0 %v2584
    %3451 = vmatprep.subr.bf16.mxu0 0
    %3452 = vmatpush2.bf16.msra.mxu0 0
    %3453 = vmatprep.subr.bf16.mxu0 0
    %3454 = vmatpush2.bf16.msra.mxu0 0
    %3455 = vmatprep.subr.bf16.mxu0 0
    %3456 = vmatpush2.bf16.msra.mxu0 0
    %3457 = vmatprep.subr.bf16.mxu0 0
    %3458 = vmatpush2.bf16.msra.mxu0 0
    %3459 = vmatprep.subr.bf16.mxu0 0
    %3460 = vmatpush2.bf16.msra.mxu0 0
    %3461 = vmatprep.subr.bf16.mxu0 0
    %3462 = vmatpush2.bf16.msra.mxu0 0
    %3463 = vmatprep.subr.bf16.mxu0 0
    %3464 = vmatpush2.bf16.msra.mxu0 0
    %3465 = vmatprep.subr.bf16.mxu0 0
    %3466 = vmatpush2.bf16.msra.mxu0 0
    %3467 = vmatprep.mubr.bf16.mxu0 0
    %3468 = vmatmul.mubr.bf16.gmra.mxu0 %v2982
    %v3469 = vpop.f32.mrf.mxu0
    %v3470 = vadd.f32 %v3429, %v3469
    %v3471 = vpop.f32.mrf.mxu0
    %v3472 = vadd.f32 %v3431, %v3471
    %v3473 = vpop.f32.mrf.mxu0
    %v3474 = vpop.f32.mrf.mxu0
    %3475 = vdwg.mxu0
    %3476 = vmatprep.subr.bf16.mxu0 %v2259
    %3477 = vmatpush1.bf16.msra.mxu0 %v2258
    %3478 = vmatprep.subr.bf16.mxu0 %v2251
    %3479 = vmatpush1.bf16.msra.mxu0 %v2250
    %3480 = vmatprep.subr.bf16.mxu0 %v2243
    %3481 = vmatpush1.bf16.msra.mxu0 %v2242
    %3482 = vmatprep.subr.bf16.mxu0 %v2235
    %3483 = vmatpush1.bf16.msra.mxu0 %v2234
    %3484 = vmatprep.subr.bf16.mxu0 %v2227
    %3485 = vmatpush1.bf16.msra.mxu0 %v2226
    %3486 = vmatprep.subr.bf16.mxu0 %v2219
    %3487 = vmatpush1.bf16.msra.mxu0 %v2218
    %3488 = vmatprep.subr.bf16.mxu0 %v2211
    %3489 = vmatpush1.bf16.msra.mxu0 %v2210
    %3490 = vmatprep.subr.bf16.mxu0 %v2203
    %3491 = vmatpush1.bf16.msra.mxu0 %v2202
    %3492 = vmatprep.subr.bf16.mxu0 %v2323
    %3493 = vmatpush2.bf16.msra.mxu0 %v2322
    %3494 = vmatprep.subr.bf16.mxu0 %v2315
    %3495 = vmatpush2.bf16.msra.mxu0 %v2314
    %3496 = vmatprep.subr.bf16.mxu0 %v2307
    %3497 = vmatpush2.bf16.msra.mxu0 %v2306
    %3498 = vmatprep.subr.bf16.mxu0 %v2299
    %3499 = vmatpush2.bf16.msra.mxu0 %v2298
    %3500 = vmatprep.subr.bf16.mxu0 %v2291
    %3501 = vmatpush2.bf16.msra.mxu0 %v2290
    %3502 = vmatprep.subr.bf16.mxu0 %v2283
    %3503 = vmatpush2.bf16.msra.mxu0 %v2282
    %3504 = vmatprep.subr.bf16.mxu0 %v2275
    %3505 = vmatpush2.bf16.msra.mxu0 %v2274
    %3506 = vmatprep.subr.bf16.mxu0 %v2267
    %3507 = vmatpush2.bf16.msra.mxu0 %v2266
    %3508 = vmatprep.mubr.bf16.mxu0 %v622
    %3509 = vmatmul.mubr.bf16.gmra.mxu0 %v621
    %v3510 = vpop.f32.mrf.mxu0
    %v3511 = vadd.f32 0.0, %v3510
    %v3512 = vpop.f32.mrf.mxu0
    %v3513 = vadd.f32 0.0, %v3512
    %v3514 = vpop.f32.mrf.mxu0
    %v3515 = vpop.f32.mrf.mxu0
    %3516 = vdwg.mxu0
    %3517 = vmatprep.subr.bf16.mxu0 %v2387
    %3518 = vmatpush1.bf16.msra.mxu0 %v2386
    %3519 = vmatprep.subr.bf16.mxu0 %v2379
    %3520 = vmatpush1.bf16.msra.mxu0 %v2378
    %3521 = vmatprep.subr.bf16.mxu0 %v2371
    %3522 = vmatpush1.bf16.msra.mxu0 %v2370
    %3523 = vmatprep.subr.bf16.mxu0 %v2363
    %3524 = vmatpush1.bf16.msra.mxu0 %v2362
    %3525 = vmatprep.subr.bf16.mxu0 %v2355
    %3526 = vmatpush1.bf16.msra.mxu0 %v2354
    %3527 = vmatprep.subr.bf16.mxu0 %v2347
    %3528 = vmatpush1.bf16.msra.mxu0 %v2346
    %3529 = vmatprep.subr.bf16.mxu0 %v2339
    %3530 = vmatpush1.bf16.msra.mxu0 %v2338
    %3531 = vmatprep.subr.bf16.mxu0 %v2331
    %3532 = vmatpush1.bf16.msra.mxu0 %v2330
    %3533 = vmatprep.subr.bf16.mxu0 %v2451
    %3534 = vmatpush2.bf16.msra.mxu0 %v2450
    %3535 = vmatprep.subr.bf16.mxu0 %v2443
    %3536 = vmatpush2.bf16.msra.mxu0 %v2442
    %3537 = vmatprep.subr.bf16.mxu0 %v2435
    %3538 = vmatpush2.bf16.msra.mxu0 %v2434
    %3539 = vmatprep.subr.bf16.mxu0 %v2427
    %3540 = vmatpush2.bf16.msra.mxu0 %v2426
    %3541 = vmatprep.subr.bf16.mxu0 %v2419
    %3542 = vmatpush2.bf16.msra.mxu0 %v2418
    %3543 = vmatprep.subr.bf16.mxu0 %v2411
    %3544 = vmatpush2.bf16.msra.mxu0 %v2410
    %3545 = vmatprep.subr.bf16.mxu0 %v2403
    %3546 = vmatpush2.bf16.msra.mxu0 %v2402
    %3547 = vmatprep.subr.bf16.mxu0 %v2395
    %3548 = vmatpush2.bf16.msra.mxu0 %v2394
    %3549 = vmatprep.mubr.bf16.mxu0 %v624
    %3550 = vmatmul.mubr.bf16.gmra.mxu0 %v623
    %v3551 = vpop.f32.mrf.mxu0
    %v3552 = vadd.f32 %v3511, %v3551
    %v3553 = vpop.f32.mrf.mxu0
    %v3554 = vadd.f32 %v3513, %v3553
    %v3555 = vpop.f32.mrf.mxu0
    %v3556 = vpop.f32.mrf.mxu0
    %3557 = vdwg.mxu0
    %3558 = vmatprep.subr.bf16.mxu0 %v2515
    %3559 = vmatpush1.bf16.msra.mxu0 %v2514
    %3560 = vmatprep.subr.bf16.mxu0 %v2507
    %3561 = vmatpush1.bf16.msra.mxu0 %v2506
    %3562 = vmatprep.subr.bf16.mxu0 %v2499
    %3563 = vmatpush1.bf16.msra.mxu0 %v2498
    %3564 = vmatprep.subr.bf16.mxu0 %v2491
    %3565 = vmatpush1.bf16.msra.mxu0 %v2490
    %3566 = vmatprep.subr.bf16.mxu0 %v2483
    %3567 = vmatpush1.bf16.msra.mxu0 %v2482
    %3568 = vmatprep.subr.bf16.mxu0 %v2475
    %3569 = vmatpush1.bf16.msra.mxu0 %v2474
    %3570 = vmatprep.subr.bf16.mxu0 %v2467
    %3571 = vmatpush1.bf16.msra.mxu0 %v2466
    %3572 = vmatprep.subr.bf16.mxu0 %v2459
    %3573 = vmatpush1.bf16.msra.mxu0 %v2458
    %3574 = vmatprep.subr.bf16.mxu0 %v2579
    %3575 = vmatpush2.bf16.msra.mxu0 %v2578
    %3576 = vmatprep.subr.bf16.mxu0 %v2571
    %3577 = vmatpush2.bf16.msra.mxu0 %v2570
    %3578 = vmatprep.subr.bf16.mxu0 %v2563
    %3579 = vmatpush2.bf16.msra.mxu0 %v2562
    %3580 = vmatprep.subr.bf16.mxu0 %v2555
    %3581 = vmatpush2.bf16.msra.mxu0 %v2554
    %3582 = vmatprep.subr.bf16.mxu0 %v2547
    %3583 = vmatpush2.bf16.msra.mxu0 %v2546
    %3584 = vmatprep.subr.bf16.mxu0 %v2539
    %3585 = vmatpush2.bf16.msra.mxu0 %v2538
    %3586 = vmatprep.subr.bf16.mxu0 %v2531
    %3587 = vmatpush2.bf16.msra.mxu0 %v2530
    %3588 = vmatprep.subr.bf16.mxu0 %v2523
    %3589 = vmatpush2.bf16.msra.mxu0 %v2522
    %3590 = vmatprep.mubr.bf16.mxu0 %v626
    %3591 = vmatmul.mubr.bf16.gmra.mxu0 %v625
    %v3592 = vpop.f32.mrf.mxu0
    %v3593 = vadd.f32 %v3552, %v3592
    %v3594 = vpop.f32.mrf.mxu0
    %v3595 = vadd.f32 %v3554, %v3594
    %v3596 = vpop.f32.mrf.mxu0
    %v3597 = vpop.f32.mrf.mxu0
    %3598 = vdwg.mxu0
    %3599 = vmatprep.subr.bf16.mxu0 0
    %3600 = vmatpush1.bf16.msra.mxu0 0
    %3601 = vmatprep.subr.bf16.mxu0 0
    %3602 = vmatpush1.bf16.msra.mxu0 0
    %3603 = vmatprep.subr.bf16.mxu0 0
    %3604 = vmatpush1.bf16.msra.mxu0 0
    %3605 = vmatprep.subr.bf16.mxu0 0
    %3606 = vmatpush1.bf16.msra.mxu0 0
    %3607 = vmatprep.subr.bf16.mxu0 0
    %3608 = vmatpush1.bf16.msra.mxu0 0
    %3609 = vmatprep.subr.bf16.mxu0 0
    %3610 = vmatpush1.bf16.msra.mxu0 0
    %3611 = vmatprep.subr.bf16.mxu0 0
    %3612 = vmatpush1.bf16.msra.mxu0 0
    %3613 = vmatprep.subr.bf16.mxu0 %v2587
    %3614 = vmatpush1.bf16.msra.mxu0 %v2586
    %3615 = vmatprep.subr.bf16.mxu0 0
    %3616 = vmatpush2.bf16.msra.mxu0 0
    %3617 = vmatprep.subr.bf16.mxu0 0
    %3618 = vmatpush2.bf16.msra.mxu0 0
    %3619 = vmatprep.subr.bf16.mxu0 0
    %3620 = vmatpush2.bf16.msra.mxu0 0
    %3621 = vmatprep.subr.bf16.mxu0 0
    %3622 = vmatpush2.bf16.msra.mxu0 0
    %3623 = vmatprep.subr.bf16.mxu0 0
    %3624 = vmatpush2.bf16.msra.mxu0 0
    %3625 = vmatprep.subr.bf16.mxu0 0
    %3626 = vmatpush2.bf16.msra.mxu0 0
    %3627 = vmatprep.subr.bf16.mxu0 0
    %3628 = vmatpush2.bf16.msra.mxu0 0
    %3629 = vmatprep.subr.bf16.mxu0 0
    %3630 = vmatpush2.bf16.msra.mxu0 0
    %3631 = vmatprep.mubr.bf16.mxu0 0
    %3632 = vmatmul.mubr.bf16.gmra.mxu0 %v2982
    %v3633 = vpop.f32.mrf.mxu0
    %v3634 = vadd.f32 %v3593, %v3633
    %v3635 = vpop.f32.mrf.mxu0
    %v3636 = vadd.f32 %v3595, %v3635
    %v3637 = vpop.f32.mrf.mxu0
    %v3638 = vpop.f32.mrf.mxu0
    %3639 = vdwg.mxu0
    %v4032 = vunpack.c.l.b16 %v135
    %v4033 = vunpack.c.h.b16 %v135
    %v4034 = vunpack.c.l.b16 %v136
    %v4035 = vunpack.c.h.b16 %v136
    %v4036 = vunpack.c.l.b16 %v137
    %v4037 = vunpack.c.h.b16 %v137
    %v4038 = vunpack.c.l.b16 %v138
    %v4039 = vunpack.c.h.b16 %v138
    %v4040 = vunpack.c.l.b16 %v139
    %v4041 = vunpack.c.h.b16 %v139
    %v4042 = vunpack.c.l.b16 %v140
    %v4043 = vunpack.c.h.b16 %v140
    %v4044 = vunpack.c.l.b16 %v141
    %v4045 = vunpack.c.h.b16 %v141
    %v4046 = vunpack.c.l.b16 %v142
    %v4047 = vunpack.c.h.b16 %v142
    %v4048 = vunpack.c.l.b16 %v143
    %v4049 = vunpack.c.h.b16 %v143
    %v4050 = vunpack.c.l.b16 %v144
    %v4051 = vunpack.c.h.b16 %v144
    %v4052 = vunpack.c.l.b16 %v145
    %v4053 = vunpack.c.h.b16 %v145
    %v4054 = vunpack.c.l.b16 %v146
    %v4055 = vunpack.c.h.b16 %v146
    %v4056 = vunpack.c.l.b16 %v147
    %v4057 = vunpack.c.h.b16 %v147
    %v4058 = vunpack.c.l.b16 %v148
    %v4059 = vunpack.c.h.b16 %v148
    %v4060 = vunpack.c.l.b16 %v149
    %v4061 = vunpack.c.h.b16 %v149
    %v4062 = vunpack.c.l.b16 %v150
    %v4063 = vunpack.c.h.b16 %v150
    %v4064 = vunpack.c.l.b16 %v151
    %v4065 = vunpack.c.h.b16 %v151
    %v4066 = vunpack.c.l.b16 %v152
    %v4067 = vunpack.c.h.b16 %v152
    %v4068 = vunpack.c.l.b16 %v153
    %v4069 = vunpack.c.h.b16 %v153
    %v4070 = vunpack.c.l.b16 %v154
    %v4071 = vunpack.c.h.b16 %v154
    %v4072 = vunpack.c.l.b16 %v155
    %v4073 = vunpack.c.h.b16 %v155
    %v4074 = vunpack.c.l.b16 %v156
    %v4075 = vunpack.c.h.b16 %v156
    %v4076 = vunpack.c.l.b16 %v157
    %v4077 = vunpack.c.h.b16 %v157
    %v4078 = vunpack.c.l.b16 %v158
    %v4079 = vunpack.c.h.b16 %v158
    %v4080 = vunpack.c.l.b16 %v159
    %v4081 = vunpack.c.h.b16 %v159
    %v4082 = vunpack.c.l.b16 %v160
    %v4083 = vunpack.c.h.b16 %v160
    %v4084 = vunpack.c.l.b16 %v161
    %v4085 = vunpack.c.h.b16 %v161
    %v4086 = vunpack.c.l.b16 %v162
    %v4087 = vunpack.c.h.b16 %v162
    %v4088 = vunpack.c.l.b16 %v163
    %v4089 = vunpack.c.h.b16 %v163
    %v4090 = vunpack.c.l.b16 %v164
    %v4091 = vunpack.c.h.b16 %v164
    %v4092 = vunpack.c.l.b16 %v165
    %v4093 = vunpack.c.h.b16 %v165
    %v4094 = vunpack.c.l.b16 %v166
    %v4095 = vunpack.c.h.b16 %v166
    %v4096 = vunpack.c.l.b16 %v167
    %v4097 = vunpack.c.h.b16 %v167
    %v4098 = vunpack.c.l.b16 %v168
    %v4099 = vunpack.c.h.b16 %v168
    %v4100 = vunpack.c.l.b16 %v169
    %v4101 = vunpack.c.h.b16 %v169
    %v4102 = vunpack.c.l.b16 %v170
    %v4103 = vunpack.c.h.b16 %v170
    %v4104 = vunpack.c.l.b16 %v171
    %v4105 = vunpack.c.h.b16 %v171
    %v4106 = vunpack.c.l.b16 %v172
    %v4107 = vunpack.c.h.b16 %v172
    %v4108 = vunpack.c.l.b16 %v173
    %v4109 = vunpack.c.h.b16 %v173
    %v4110 = vunpack.c.l.b16 %v174
    %v4111 = vunpack.c.h.b16 %v174
    %v4112 = vunpack.c.l.b16 %v175
    %v4113 = vunpack.c.h.b16 %v175
    %v4114 = vunpack.c.l.b16 %v176
    %v4115 = vunpack.c.h.b16 %v176
    %v4116 = vunpack.c.l.b16 %v177
    %v4117 = vunpack.c.h.b16 %v177
    %v4118 = vunpack.c.l.b16 %v178
    %v4119 = vunpack.c.h.b16 %v178
    %v4120 = vunpack.c.l.b16 %v179
    %v4121 = vunpack.c.h.b16 %v179
    %v4122 = vunpack.c.l.b16 %v180
    %v4123 = vunpack.c.h.b16 %v180
    %v4124 = vunpack.c.l.b16 %v181
    %v4125 = vunpack.c.h.b16 %v181
    %v4126 = vunpack.c.l.b16 %v182
    %v4127 = vunpack.c.h.b16 %v182
    %v4128 = vunpack.c.l.b16 %v183
    %v4129 = vunpack.c.h.b16 %v183
    %v4130 = vunpack.c.l.b16 %v184
    %v4131 = vunpack.c.h.b16 %v184
    %v4132 = vunpack.c.l.b16 %v185
    %v4133 = vunpack.c.h.b16 %v185
    %v4134 = vunpack.c.l.b16 %v186
    %v4135 = vunpack.c.h.b16 %v186
    %v4136 = vunpack.c.l.b16 %v187
    %v4137 = vunpack.c.h.b16 %v187
    %v4138 = vunpack.c.l.b16 %v188
    %v4139 = vunpack.c.h.b16 %v188
    %v4140 = vunpack.c.l.b16 %v189
    %v4141 = vunpack.c.h.b16 %v189
    %v4142 = vunpack.c.l.b16 %v190
    %v4143 = vunpack.c.h.b16 %v190
    %v4144 = vunpack.c.l.b16 %v191
    %v4145 = vunpack.c.h.b16 %v191
    %v4146 = vunpack.c.l.b16 %v192
    %v4147 = vunpack.c.h.b16 %v192
    %v4148 = vunpack.c.l.b16 %v193
    %v4149 = vunpack.c.h.b16 %v193
    %v4150 = vunpack.c.l.b16 %v194
    %v4151 = vunpack.c.h.b16 %v194
    %v4152 = vunpack.c.l.b16 %v195
    %v4153 = vunpack.c.h.b16 %v195
    %v4154 = vunpack.c.l.b16 %v196
    %v4155 = vunpack.c.h.b16 %v196
    %v4156 = vunpack.c.l.b16 %v197
    %v4157 = vunpack.c.h.b16 %v197
    %v4158 = vunpack.c.l.b16 %v198
    %v4159 = vunpack.c.h.b16 %v198
    %v4160 = vunpack.c.l.b16 %v199
    %v4161 = vunpack.c.h.b16 %v199
    %v4162 = vunpack.c.l.b16 %v200
    %v4163 = vunpack.c.h.b16 %v200
    %v4164 = vunpack.c.l.b16 %v201
    %v4165 = vunpack.c.h.b16 %v201
    %v4166 = vunpack.c.l.b16 %v202
    %v4167 = vunpack.c.h.b16 %v202
    %v4168 = vunpack.c.l.b16 %v203
    %v4169 = vunpack.c.h.b16 %v203
    %v4170 = vunpack.c.l.b16 %v204
    %v4171 = vunpack.c.h.b16 %v204
    %v4172 = vunpack.c.l.b16 %v205
    %v4173 = vunpack.c.h.b16 %v205
    %v4174 = vunpack.c.l.b16 %v206
    %v4175 = vunpack.c.h.b16 %v206
    %v4176 = vunpack.c.l.b16 %v207
    %v4177 = vunpack.c.h.b16 %v207
    %v4178 = vunpack.c.l.b16 %v208
    %v4179 = vunpack.c.h.b16 %v208
    %v4180 = vunpack.c.l.b16 %v209
    %v4181 = vunpack.c.h.b16 %v209
    %v4182 = vunpack.c.l.b16 %v210
    %v4183 = vunpack.c.h.b16 %v210
    %v4184 = vunpack.c.l.b16 %v211
    %v4185 = vunpack.c.h.b16 %v211
    %v4186 = vunpack.c.l.b16 %v212
    %v4187 = vunpack.c.h.b16 %v212
    %v4188 = vunpack.c.l.b16 %v213
    %v4189 = vunpack.c.h.b16 %v213
    %v4190 = vunpack.c.l.b16 %v214
    %v4191 = vunpack.c.h.b16 %v214
    %v4192 = vunpack.c.l.b16 %v215
    %v4193 = vunpack.c.h.b16 %v215
    %v4194 = vunpack.c.l.b16 %v216
    %v4195 = vunpack.c.h.b16 %v216
    %v4196 = vunpack.c.l.b16 %v217
    %v4197 = vunpack.c.h.b16 %v217
    %v4198 = vunpack.c.l.b16 %v218
    %v4199 = vunpack.c.h.b16 %v218
    %v4200 = vunpack.c.l.b16 %v219
    %v4201 = vunpack.c.h.b16 %v219
    %v4202 = vunpack.c.l.b16 %v220
    %v4203 = vunpack.c.h.b16 %v220
    %v4204 = vunpack.c.l.b16 %v221
    %v4205 = vunpack.c.h.b16 %v221
    %v4206 = vunpack.c.l.b16 %v222
    %v4207 = vunpack.c.h.b16 %v222
    %v4208 = vunpack.c.l.b16 %v223
    %v4209 = vunpack.c.h.b16 %v223
    %v4210 = vunpack.c.l.b16 %v224
    %v4211 = vunpack.c.h.b16 %v224
    %v4212 = vunpack.c.l.b16 %v225
    %v4213 = vunpack.c.h.b16 %v225
    %v4214 = vunpack.c.l.b16 %v226
    %v4215 = vunpack.c.h.b16 %v226
    %v4216 = vunpack.c.l.b16 %v227
    %v4217 = vunpack.c.h.b16 %v227
    %v4218 = vunpack.c.l.b16 %v228
    %v4219 = vunpack.c.h.b16 %v228
    %v4220 = vunpack.c.l.b16 %v229
    %v4221 = vunpack.c.h.b16 %v229
    %v4222 = vunpack.c.l.b16 %v230
    %v4223 = vunpack.c.h.b16 %v230
    %v4224 = vunpack.c.l.b16 %v231
    %v4225 = vunpack.c.h.b16 %v231
    %v4226 = vunpack.c.l.b16 %v232
    %v4227 = vunpack.c.h.b16 %v232
    %v4228 = vunpack.c.l.b16 %v233
    %v4229 = vunpack.c.h.b16 %v233
    %v4230 = vunpack.c.l.b16 %v234
    %v4231 = vunpack.c.h.b16 %v234
    %v4232 = vunpack.c.l.b16 %v235
    %v4233 = vunpack.c.h.b16 %v235
    %v4234 = vunpack.c.l.b16 %v236
    %v4235 = vunpack.c.h.b16 %v236
    %v4236 = vunpack.c.l.b16 %v237
    %v4237 = vunpack.c.h.b16 %v237
    %v4238 = vunpack.c.l.b16 %v238
    %v4239 = vunpack.c.h.b16 %v238
    %v4240 = vunpack.c.l.b16 %v239
    %v4241 = vunpack.c.h.b16 %v239
    %v4242 = vunpack.c.l.b16 %v240
    %v4243 = vunpack.c.h.b16 %v240
    %v4244 = vunpack.c.l.b16 %v241
    %v4245 = vunpack.c.h.b16 %v241
    %v4246 = vunpack.c.l.b16 %v242
    %v4247 = vunpack.c.h.b16 %v242
    %v4248 = vunpack.c.l.b16 %v243
    %v4249 = vunpack.c.h.b16 %v243
    %v4250 = vunpack.c.l.b16 %v244
    %v4251 = vunpack.c.h.b16 %v244
    %v4252 = vunpack.c.l.b16 %v245
    %v4253 = vunpack.c.h.b16 %v245
    %v4254 = vunpack.c.l.b16 %v246
    %v4255 = vunpack.c.h.b16 %v246
    %v4256 = vunpack.c.l.b16 %v247
    %v4257 = vunpack.c.h.b16 %v247
    %v4258 = vunpack.c.l.b16 %v248
    %v4259 = vunpack.c.h.b16 %v248
    %v4260 = vunpack.c.l.b16 %v249
    %v4261 = vunpack.c.h.b16 %v249
    %v4262 = vunpack.c.l.b16 %v250
    %v4263 = vunpack.c.h.b16 %v250
    %v4264 = vunpack.c.l.b16 %v251
    %v4265 = vunpack.c.h.b16 %v251
    %v4266 = vunpack.c.l.b16 %v252
    %v4267 = vunpack.c.h.b16 %v252
    %v4268 = vunpack.c.l.b16 %v253
    %v4269 = vunpack.c.h.b16 %v253
    %v4270 = vunpack.c.l.b16 %v254
    %v4271 = vunpack.c.h.b16 %v254
    %v4272 = vunpack.c.l.b16 %v255
    %v4273 = vunpack.c.h.b16 %v255
    %v4274 = vunpack.c.l.b16 %v256
    %v4275 = vunpack.c.h.b16 %v256
    %v4276 = vunpack.c.l.b16 %v257
    %v4277 = vunpack.c.h.b16 %v257
    %v4278 = vunpack.c.l.b16 %v258
    %v4279 = vunpack.c.h.b16 %v258
    %v4280 = vunpack.c.l.b16 %v259
    %v4281 = vunpack.c.h.b16 %v259
    %v4282 = vunpack.c.l.b16 %v260
    %v4283 = vunpack.c.h.b16 %v260
    %v4284 = vunpack.c.l.b16 %v261
    %v4285 = vunpack.c.h.b16 %v261
    %v4286 = vunpack.c.l.b16 %v262
    %v4287 = vunpack.c.h.b16 %v262
    %v4288 = vunpack.c.l.b16 %v263
    %v4289 = vunpack.c.h.b16 %v263
    %v4290 = vunpack.c.l.b16 %v264
    %v4291 = vunpack.c.h.b16 %v264
    %v4292 = vunpack.c.l.b16 %v265
    %v4293 = vunpack.c.h.b16 %v265
    %v4294 = vunpack.c.l.b16 %v266
    %v4295 = vunpack.c.h.b16 %v266
    %v4296 = vunpack.c.l.b16 %v267
    %v4297 = vunpack.c.h.b16 %v267
    %v4298 = vunpack.c.l.b16 %v268
    %v4299 = vunpack.c.h.b16 %v268
    %v4300 = vunpack.c.l.b16 %v269
    %v4301 = vunpack.c.h.b16 %v269
    %v4302 = vunpack.c.l.b16 %v270
    %v4303 = vunpack.c.h.b16 %v270
    %v4304 = vunpack.c.l.b16 %v271
    %v4305 = vunpack.c.h.b16 %v271
    %v4306 = vunpack.c.l.b16 %v272
    %v4307 = vunpack.c.h.b16 %v272
    %v4308 = vunpack.c.l.b16 %v273
    %v4309 = vunpack.c.h.b16 %v273
    %v4310 = vunpack.c.l.b16 %v274
    %v4311 = vunpack.c.h.b16 %v274
    %v4312 = vunpack.c.l.b16 %v275
    %v4313 = vunpack.c.h.b16 %v275
    %v4314 = vunpack.c.l.b16 %v276
    %v4315 = vunpack.c.h.b16 %v276
    %v4316 = vunpack.c.l.b16 %v277
    %v4317 = vunpack.c.h.b16 %v277
    %v4318 = vunpack.c.l.b16 %v278
    %v4319 = vunpack.c.h.b16 %v278
    %v4320 = vunpack.c.l.b16 %v279
    %v4321 = vunpack.c.h.b16 %v279
    %v4322 = vunpack.c.l.b16 %v280
    %v4323 = vunpack.c.h.b16 %v280
    %v4324 = vunpack.c.l.b16 %v281
    %v4325 = vunpack.c.h.b16 %v281
    %v4326 = vunpack.c.l.b16 %v282
    %v4327 = vunpack.c.h.b16 %v282
    %v4328 = vunpack.c.l.b16 %v283
    %v4329 = vunpack.c.h.b16 %v283
    %v4330 = vunpack.c.l.b16 %v284
    %v4331 = vunpack.c.h.b16 %v284
    %v4332 = vunpack.c.l.b16 %v285
    %v4333 = vunpack.c.h.b16 %v285
    %v4334 = vunpack.c.l.b16 %v286
    %v4335 = vunpack.c.h.b16 %v286
    %v4336 = vunpack.c.l.b16 %v287
    %v4337 = vunpack.c.h.b16 %v287
    %v4338 = vunpack.c.l.b16 %v288
    %v4339 = vunpack.c.h.b16 %v288
    %v4340 = vunpack.c.l.b16 %v289
    %v4341 = vunpack.c.h.b16 %v289
    %v4342 = vunpack.c.l.b16 %v290
    %v4343 = vunpack.c.h.b16 %v290
    %v4344 = vunpack.c.l.b16 %v291
    %v4345 = vunpack.c.h.b16 %v291
    %v4346 = vunpack.c.l.b16 %v292
    %v4347 = vunpack.c.h.b16 %v292
    %v4348 = vunpack.c.l.b16 %v293
    %v4349 = vunpack.c.h.b16 %v293
    %v4350 = vunpack.c.l.b16 %v294
    %v4351 = vunpack.c.h.b16 %v294
    %v4352 = vunpack.c.l.b16 %v295
    %v4353 = vunpack.c.h.b16 %v295
    %v4354 = vunpack.c.l.b16 %v296
    %v4355 = vunpack.c.h.b16 %v296
    %v4356 = vunpack.c.l.b16 %v297
    %v4357 = vunpack.c.h.b16 %v297
    %v4358 = vunpack.c.l.b16 %v298
    %v4359 = vunpack.c.h.b16 %v298
    %v4360 = vunpack.c.l.b16 %v299
    %v4361 = vunpack.c.h.b16 %v299
    %v4362 = vunpack.c.l.b16 %v300
    %v4363 = vunpack.c.h.b16 %v300
    %v4364 = vunpack.c.l.b16 %v301
    %v4365 = vunpack.c.h.b16 %v301
    %v4366 = vunpack.c.l.b16 %v302
    %v4367 = vunpack.c.h.b16 %v302
    %v4368 = vunpack.c.l.b16 %v303
    %v4369 = vunpack.c.h.b16 %v303
    %v4370 = vunpack.c.l.b16 %v304
    %v4371 = vunpack.c.h.b16 %v304
    %v4372 = vunpack.c.l.b16 %v305
    %v4373 = vunpack.c.h.b16 %v305
    %v4374 = vunpack.c.l.b16 %v306
    %v4375 = vunpack.c.h.b16 %v306
    %v4376 = vunpack.c.l.b16 %v307
    %v4377 = vunpack.c.h.b16 %v307
    %v4378 = vunpack.c.l.b16 %v308
    %v4379 = vunpack.c.h.b16 %v308
    %v4380 = vunpack.c.l.b16 %v309
    %v4381 = vunpack.c.h.b16 %v309
    %v4382 = vunpack.c.l.b16 %v310
    %v4383 = vunpack.c.h.b16 %v310
    %v4384 = vunpack.c.l.b16 %v311
    %v4385 = vunpack.c.h.b16 %v311
    %v4386 = vunpack.c.l.b16 %v312
    %v4387 = vunpack.c.h.b16 %v312
    %v4388 = vunpack.c.l.b16 %v313
    %v4389 = vunpack.c.h.b16 %v313
    %v4390 = vunpack.c.l.b16 %v314
    %v4391 = vunpack.c.h.b16 %v314
    %v4392 = vunpack.c.l.b16 %v315
    %v4393 = vunpack.c.h.b16 %v315
    %v4394 = vunpack.c.l.b16 %v316
    %v4395 = vunpack.c.h.b16 %v316
    %v4396 = vunpack.c.l.b16 %v317
    %v4397 = vunpack.c.h.b16 %v317
    %v4398 = vunpack.c.l.b16 %v318
    %v4399 = vunpack.c.h.b16 %v318
    %v4400 = vunpack.c.l.b16 %v319
    %v4401 = vunpack.c.h.b16 %v319
    %v4402 = vunpack.c.l.b16 %v320
    %v4403 = vunpack.c.h.b16 %v320
    %v4404 = vunpack.c.l.b16 %v321
    %v4405 = vunpack.c.h.b16 %v321
    %v4406 = vunpack.c.l.b16 %v322
    %v4407 = vunpack.c.h.b16 %v322
    %v4408 = vunpack.c.l.b16 %v323
    %v4409 = vunpack.c.h.b16 %v323
    %v4410 = vunpack.c.l.b16 %v324
    %v4411 = vunpack.c.h.b16 %v324
    %v4412 = vunpack.c.l.b16 %v325
    %v4413 = vunpack.c.h.b16 %v325
    %v4414 = vunpack.c.l.b16 %v326
    %v4415 = vunpack.c.h.b16 %v326
    %v4416 = vunpack.c.l.b16 %v327
    %v4417 = vunpack.c.h.b16 %v327
    %v4418 = vunpack.c.l.b16 %v328
    %v4419 = vunpack.c.h.b16 %v328
    %v4420 = vunpack.c.l.b16 %v329
    %v4421 = vunpack.c.h.b16 %v329
    %v4422 = vunpack.c.l.b16 %v330
    %v4423 = vunpack.c.h.b16 %v330
    %v4424 = vunpack.c.l.b16 %v331
    %v4425 = vunpack.c.h.b16 %v331
    %v4426 = vunpack.c.l.b16 %v332
    %v4427 = vunpack.c.h.b16 %v332
    %v4428 = vunpack.c.l.b16 %v333
    %v4429 = vunpack.c.h.b16 %v333
    %v4430 = vunpack.c.l.b16 %v334
    %v4431 = vunpack.c.h.b16 %v334
    %v4432 = vunpack.c.l.b16 %v335
    %v4433 = vunpack.c.h.b16 %v335
    %v4434 = vunpack.c.l.b16 %v336
    %v4435 = vunpack.c.h.b16 %v336
    %v4436 = vunpack.c.l.b16 %v337
    %v4437 = vunpack.c.h.b16 %v337
    %v4438 = vunpack.c.l.b16 %v338
    %v4439 = vunpack.c.h.b16 %v338
    %v4440 = vunpack.c.l.b16 %v339
    %v4441 = vunpack.c.h.b16 %v339
    %v4442 = vunpack.c.l.b16 %v340
    %v4443 = vunpack.c.h.b16 %v340
    %v4444 = vunpack.c.l.b16 %v341
    %v4445 = vunpack.c.h.b16 %v341
    %v4446 = vunpack.c.l.b16 %v342
    %v4447 = vunpack.c.h.b16 %v342
    %v4448 = vunpack.c.l.b16 %v343
    %v4449 = vunpack.c.h.b16 %v343
    %v4450 = vunpack.c.l.b16 %v344
    %v4451 = vunpack.c.h.b16 %v344
    %v4452 = vunpack.c.l.b16 %v345
    %v4453 = vunpack.c.h.b16 %v345
    %v4454 = vunpack.c.l.b16 %v346
    %v4455 = vunpack.c.h.b16 %v346
    %v4456 = vunpack.c.l.b16 %v347
    %v4457 = vunpack.c.h.b16 %v347
    %v4458 = vunpack.c.l.b16 %v348
    %v4459 = vunpack.c.h.b16 %v348
    %v4460 = vunpack.c.l.b16 %v349
    %v4461 = vunpack.c.h.b16 %v349
    %v4462 = vunpack.c.l.b16 %v350
    %v4463 = vunpack.c.h.b16 %v350
    %v4464 = vunpack.c.l.b16 %v351
    %v4465 = vunpack.c.h.b16 %v351
    %v4466 = vunpack.c.l.b16 %v352
    %v4467 = vunpack.c.h.b16 %v352
    %v4468 = vunpack.c.l.b16 %v353
    %v4469 = vunpack.c.h.b16 %v353
    %v4470 = vunpack.c.l.b16 %v354
    %v4471 = vunpack.c.h.b16 %v354
    %v4472 = vunpack.c.l.b16 %v355
    %v4473 = vunpack.c.h.b16 %v355
    %v4474 = vunpack.c.l.b16 %v356
    %v4475 = vunpack.c.h.b16 %v356
    %v4476 = vunpack.c.l.b16 %v357
    %v4477 = vunpack.c.h.b16 %v357
    %v4478 = vunpack.c.l.b16 %v358
    %v4479 = vunpack.c.h.b16 %v358
    %v4480 = vunpack.c.l.b16 %v359
    %v4481 = vunpack.c.h.b16 %v359
    %v4482 = vunpack.c.l.b16 %v360
    %v4483 = vunpack.c.h.b16 %v360
    %v4484 = vunpack.c.l.b16 %v361
    %v4485 = vunpack.c.h.b16 %v361
    %v4486 = vunpack.c.l.b16 %v362
    %v4487 = vunpack.c.h.b16 %v362
    %v4488 = vunpack.c.l.b16 %v363
    %v4489 = vunpack.c.h.b16 %v363
    %v4490 = vunpack.c.l.b16 %v364
    %v4491 = vunpack.c.h.b16 %v364
    %v4492 = vunpack.c.l.b16 %v365
    %v4493 = vunpack.c.h.b16 %v365
    %v4494 = vunpack.c.l.b16 %v366
    %v4495 = vunpack.c.h.b16 %v366
    %v4496 = vunpack.c.l.b16 %v367
    %v4497 = vunpack.c.h.b16 %v367
    %v4498 = vunpack.c.l.b16 %v368
    %v4499 = vunpack.c.h.b16 %v368
    %v4500 = vunpack.c.l.b16 %v369
    %v4501 = vunpack.c.h.b16 %v369
    %v4502 = vunpack.c.l.b16 %v370
    %v4503 = vunpack.c.h.b16 %v370
    %v4504 = vunpack.c.l.b16 %v371
    %v4505 = vunpack.c.h.b16 %v371
    %v4506 = vunpack.c.l.b16 %v372
    %v4507 = vunpack.c.h.b16 %v372
    %v4508 = vunpack.c.l.b16 %v373
    %v4509 = vunpack.c.h.b16 %v373
    %v4510 = vunpack.c.l.b16 %v374
    %v4511 = vunpack.c.h.b16 %v374
    %v4512 = vunpack.c.l.b16 %v375
    %v4513 = vunpack.c.h.b16 %v375
    %v4514 = vunpack.c.l.b16 %v376
    %v4515 = vunpack.c.h.b16 %v376
    %v4516 = vunpack.c.l.b16 %v377
    %v4517 = vunpack.c.h.b16 %v377
    %v4518 = vunpack.c.l.b16 %v378
    %v4519 = vunpack.c.h.b16 %v378
    %v4520 = vunpack.c.l.b16 %v379
    %v4521 = vunpack.c.h.b16 %v379
    %v4522 = vunpack.c.l.b16 %v380
    %v4523 = vunpack.c.h.b16 %v380
    %v4524 = vunpack.c.l.b16 %v381
    %v4525 = vunpack.c.h.b16 %v381
    %v4526 = vunpack.c.l.b16 %v382
    %v4527 = vunpack.c.h.b16 %v382
    %v4528 = vunpack.c.l.b16 %v383
    %v4529 = vunpack.c.h.b16 %v383
    %v4530 = vunpack.c.l.b16 %v384
    %v4531 = vunpack.c.h.b16 %v384
    %v4532 = vunpack.c.l.b16 %v385
    %v4533 = vunpack.c.h.b16 %v385
    %v4534 = vunpack.c.l.b16 %v386
    %v4535 = vunpack.c.h.b16 %v386
    %v4536 = vunpack.c.l.b16 %v387
    %v4537 = vunpack.c.h.b16 %v387
    %v4538 = vunpack.c.l.b16 %v388
    %v4539 = vunpack.c.h.b16 %v388
    %v4540 = vunpack.c.l.b16 %v389
    %v4541 = vunpack.c.h.b16 %v389
    %v4542 = vunpack.c.l.b16 %v390
    %v4543 = vunpack.c.h.b16 %v390
    %v4544 = vunpack.c.l.b16 %v391
    %v4545 = vunpack.c.h.b16 %v391
    %v4546 = vunpack.c.l.b16 %v392
    %v4547 = vunpack.c.h.b16 %v392
    %v4548 = vunpack.c.l.b16 %v393
    %v4549 = vunpack.c.h.b16 %v393
    %v4550 = vunpack.c.l.b16 %v394
    %v4551 = vunpack.c.h.b16 %v394
    %v4552 = vunpack.c.l.b16 %v395
    %v4553 = vunpack.c.h.b16 %v395
    %v4554 = vunpack.c.l.b16 %v396
    %v4555 = vunpack.c.h.b16 %v396
    %v4556 = vunpack.c.l.b16 %v397
    %v4557 = vunpack.c.h.b16 %v397
    %v4558 = vunpack.c.l.b16 %v398
    %v4559 = vunpack.c.h.b16 %v398
    %v4560 = vunpack.c.l.b16 %v399
    %v4561 = vunpack.c.h.b16 %v399
    %v4562 = vunpack.c.l.b16 %v400
    %v4563 = vunpack.c.h.b16 %v400
    %v4564 = vunpack.c.l.b16 %v401
    %v4565 = vunpack.c.h.b16 %v401
    %v4566 = vunpack.c.l.b16 %v402
    %v4567 = vunpack.c.h.b16 %v402
    %v4568 = vunpack.c.l.b16 %v403
    %v4569 = vunpack.c.h.b16 %v403
    %v4570 = vunpack.c.l.b16 %v404
    %v4571 = vunpack.c.h.b16 %v404
    %v4572 = vunpack.c.l.b16 %v405
    %v4573 = vunpack.c.h.b16 %v405
    %v4574 = vunpack.c.l.b16 %v406
    %v4575 = vunpack.c.h.b16 %v406
    %v4576 = vunpack.c.l.b16 %v407
    %v4577 = vunpack.c.h.b16 %v407
    %v4578 = vunpack.c.l.b16 %v408
    %v4579 = vunpack.c.h.b16 %v408
    %v4580 = vunpack.c.l.b16 %v409
    %v4581 = vunpack.c.h.b16 %v409
    %v4582 = vunpack.c.l.b16 %v410
    %v4583 = vunpack.c.h.b16 %v410
    %v4584 = vunpack.c.l.b16 %v411
    %v4585 = vunpack.c.h.b16 %v411
    %v4586 = vunpack.c.l.b16 %v412
    %v4587 = vunpack.c.h.b16 %v412
    %v4588 = vunpack.c.l.b16 %v413
    %v4589 = vunpack.c.h.b16 %v413
    %v4590 = vunpack.c.l.b16 %v414
    %v4591 = vunpack.c.h.b16 %v414
    %v4592 = vunpack.c.l.b16 %v415
    %v4593 = vunpack.c.h.b16 %v415
    %v4594 = vunpack.c.l.b16 %v416
    %v4595 = vunpack.c.h.b16 %v416
    %v4596 = vunpack.c.l.b16 %v417
    %v4597 = vunpack.c.h.b16 %v417
    %v4598 = vunpack.c.l.b16 %v418
    %v4599 = vunpack.c.h.b16 %v418
    %v4600 = vunpack.c.l.b16 %v419
    %v4601 = vunpack.c.h.b16 %v419
    %v4602 = vunpack.c.l.b16 %v420
    %v4603 = vunpack.c.h.b16 %v420
    %v4604 = vunpack.c.l.b16 %v421
    %v4605 = vunpack.c.h.b16 %v421
    %v4606 = vunpack.c.l.b16 %v422
    %v4607 = vunpack.c.h.b16 %v422
    %v4608 = vunpack.c.l.b16 %v423
    %v4609 = vunpack.c.h.b16 %v423
    %v4610 = vunpack.c.l.b16 %v424
    %v4611 = vunpack.c.h.b16 %v424
    %v4612 = vunpack.c.l.b16 %v425
    %v4613 = vunpack.c.h.b16 %v425
    %v4614 = vunpack.c.l.b16 %v426
    %v4615 = vunpack.c.h.b16 %v426
    %v4616 = vunpack.c.l.b16 %v427
    %v4617 = vunpack.c.h.b16 %v427
    %v4618 = vunpack.c.l.b16 %v428
    %v4619 = vunpack.c.h.b16 %v428
    %v4620 = vunpack.c.l.b16 %v429
    %v4621 = vunpack.c.h.b16 %v429
    %v4622 = vunpack.c.l.b16 %v430
    %v4623 = vunpack.c.h.b16 %v430
    %v4624 = vunpack.c.l.b16 %v431
    %v4625 = vunpack.c.h.b16 %v431
    %v4626 = vunpack.c.l.b16 %v432
    %v4627 = vunpack.c.h.b16 %v432
    %v4628 = vunpack.c.l.b16 %v433
    %v4629 = vunpack.c.h.b16 %v433
    %v4630 = vunpack.c.l.b16 %v434
    %v4631 = vunpack.c.h.b16 %v434
    %v4632 = vunpack.c.l.b16 %v435
    %v4633 = vunpack.c.h.b16 %v435
    %v4634 = vunpack.c.l.b16 %v436
    %v4635 = vunpack.c.h.b16 %v436
    %v4636 = vunpack.c.l.b16 %v437
    %v4637 = vunpack.c.h.b16 %v437
    %v4638 = vunpack.c.l.b16 %v438
    %v4639 = vunpack.c.h.b16 %v438
    %v4640 = vunpack.c.l.b16 %v439
    %v4641 = vunpack.c.h.b16 %v439
    %v4642 = vunpack.c.l.b16 %v440
    %v4643 = vunpack.c.h.b16 %v440
    %v4644 = vunpack.c.l.b16 %v441
    %v4645 = vunpack.c.h.b16 %v441
    %v4646 = vunpack.c.l.b16 %v442
    %v4647 = vunpack.c.h.b16 %v442
    %v4648 = vunpack.c.l.b16 %v443
    %v4649 = vunpack.c.h.b16 %v443
    %v4650 = vunpack.c.l.b16 %v444
    %v4651 = vunpack.c.h.b16 %v444
    %v4652 = vunpack.c.l.b16 %v445
    %v4653 = vunpack.c.h.b16 %v445
    %v4654 = vunpack.c.l.b16 %v446
    %v4655 = vunpack.c.h.b16 %v446
    %v4656 = vunpack.c.l.b16 %v447
    %v4657 = vunpack.c.h.b16 %v447
    %v4658 = vunpack.c.l.b16 %v448
    %v4659 = vunpack.c.h.b16 %v448
    %v4660 = vunpack.c.l.b16 %v449
    %v4661 = vunpack.c.h.b16 %v449
    %v4662 = vunpack.c.l.b16 %v450
    %v4663 = vunpack.c.h.b16 %v450
    %v4664 = vunpack.c.l.b16 %v451
    %v4665 = vunpack.c.h.b16 %v451
    %v4666 = vunpack.c.l.b16 %v452
    %v4667 = vunpack.c.h.b16 %v452
    %v4668 = vunpack.c.l.b16 %v453
    %v4669 = vunpack.c.h.b16 %v453
    %v4670 = vunpack.c.l.b16 %v454
    %v4671 = vunpack.c.h.b16 %v454
    %v4672 = vunpack.c.l.b16 %v455
    %v4673 = vunpack.c.h.b16 %v455
    %v4674 = vunpack.c.l.b16 %v456
    %v4675 = vunpack.c.h.b16 %v456
    %v4676 = vunpack.c.l.b16 %v457
    %v4677 = vunpack.c.h.b16 %v457
    %v4678 = vunpack.c.l.b16 %v458
    %v4679 = vunpack.c.h.b16 %v458
    %v4680 = vunpack.c.l.b16 %v459
    %v4681 = vunpack.c.h.b16 %v459
    %v4682 = vunpack.c.l.b16 %v460
    %v4683 = vunpack.c.h.b16 %v460
    %v4684 = vunpack.c.l.b16 %v461
    %v4685 = vunpack.c.h.b16 %v461
    %v4686 = vunpack.c.l.b16 %v462
    %v4687 = vunpack.c.h.b16 %v462
    %v4688 = vunpack.c.l.b16 %v463
    %v4689 = vunpack.c.h.b16 %v463
    %v4690 = vunpack.c.l.b16 %v464
    %v4691 = vunpack.c.h.b16 %v464
    %v4692 = vunpack.c.l.b16 %v465
    %v4693 = vunpack.c.h.b16 %v465
    %v4694 = vunpack.c.l.b16 %v466
    %v4695 = vunpack.c.h.b16 %v466
    %v4696 = vunpack.c.l.b16 %v467
    %v4697 = vunpack.c.h.b16 %v467
    %v4698 = vunpack.c.l.b16 %v468
    %v4699 = vunpack.c.h.b16 %v468
    %v4700 = vunpack.c.l.b16 %v469
    %v4701 = vunpack.c.h.b16 %v469
    %v4702 = vunpack.c.l.b16 %v470
    %v4703 = vunpack.c.h.b16 %v470
    %v4704 = vunpack.c.l.b16 %v471
    %v4705 = vunpack.c.h.b16 %v471
    %v4706 = vunpack.c.l.b16 %v472
    %v4707 = vunpack.c.h.b16 %v472
    %v4708 = vunpack.c.l.b16 %v473
    %v4709 = vunpack.c.h.b16 %v473
    %v4710 = vunpack.c.l.b16 %v474
    %v4711 = vunpack.c.h.b16 %v474
    %v4712 = vunpack.c.l.b16 %v475
    %v4713 = vunpack.c.h.b16 %v475
    %v4714 = vunpack.c.l.b16 %v476
    %v4715 = vunpack.c.h.b16 %v476
    %v4716 = vunpack.c.l.b16 %v477
    %v4717 = vunpack.c.h.b16 %v477
    %v4718 = vunpack.c.l.b16 %v478
    %v4719 = vunpack.c.h.b16 %v478
    %v4720 = vunpack.c.l.b16 %v479
    %v4721 = vunpack.c.h.b16 %v479
    %v4722 = vunpack.c.l.b16 %v480
    %v4723 = vunpack.c.h.b16 %v480
    %v4724 = vunpack.c.l.b16 %v481
    %v4725 = vunpack.c.h.b16 %v481
    %v4726 = vunpack.c.l.b16 %v482
    %v4727 = vunpack.c.h.b16 %v482
    %v4728 = vunpack.c.l.b16 %v483
    %v4729 = vunpack.c.h.b16 %v483
    %v4730 = vunpack.c.l.b16 %v484
    %v4731 = vunpack.c.h.b16 %v484
    %v4732 = vunpack.c.l.b16 %v485
    %v4733 = vunpack.c.h.b16 %v485
    %v4734 = vunpack.c.l.b16 %v486
    %v4735 = vunpack.c.h.b16 %v486
    %v4736 = vunpack.c.l.b16 %v487
    %v4737 = vunpack.c.h.b16 %v487
    %v4738 = vunpack.c.l.b16 %v488
    %v4739 = vunpack.c.h.b16 %v488
    %v4740 = vunpack.c.l.b16 %v489
    %v4741 = vunpack.c.h.b16 %v489
    %v4742 = vunpack.c.l.b16 %v490
    %v4743 = vunpack.c.h.b16 %v490
    %v4744 = vunpack.c.l.b16 %v491
    %v4745 = vunpack.c.h.b16 %v491
    %v4746 = vunpack.c.l.b16 %v492
    %v4747 = vunpack.c.h.b16 %v492
    %v4748 = vunpack.c.l.b16 %v493
    %v4749 = vunpack.c.h.b16 %v493
    %v4750 = vunpack.c.l.b16 %v494
    %v4751 = vunpack.c.h.b16 %v494
    %v4752 = vunpack.c.l.b16 %v495
    %v4753 = vunpack.c.h.b16 %v495
    %v4754 = vunpack.c.l.b16 %v496
    %v4755 = vunpack.c.h.b16 %v496
    %v4756 = vunpack.c.l.b16 %v497
    %v4757 = vunpack.c.h.b16 %v497
    %v4758 = vunpack.c.l.b16 %v498
    %v4759 = vunpack.c.h.b16 %v498
    %v4760 = vunpack.c.l.b16 %v499
    %v4761 = vunpack.c.h.b16 %v499
    %v4762 = vunpack.c.l.b16 %v500
    %v4763 = vunpack.c.h.b16 %v500
    %v4764 = vunpack.c.l.b16 %v501
    %v4765 = vunpack.c.h.b16 %v501
    %v4766 = vunpack.c.l.b16 %v502
    %v4767 = vunpack.c.h.b16 %v502
    %v4768 = vunpack.c.l.b16 %v503
    %v4769 = vunpack.c.h.b16 %v503
    %v4770 = vunpack.c.l.b16 %v504
    %v4771 = vunpack.c.h.b16 %v504
    %v4772 = vunpack.c.l.b16 %v505
    %v4773 = vunpack.c.h.b16 %v505
    %v4774 = vunpack.c.l.b16 %v506
    %v4775 = vunpack.c.h.b16 %v506
    %v4776 = vunpack.c.l.b16 %v507
    %v4777 = vunpack.c.h.b16 %v507
    %v4778 = vunpack.c.l.b16 %v508
    %v4779 = vunpack.c.h.b16 %v508
    %v4780 = vunpack.c.l.b16 %v509
    %v4781 = vunpack.c.h.b16 %v509
    %v4782 = vunpack.c.l.b16 %v510
    %v4783 = vunpack.c.h.b16 %v510
    %v4784 = vunpack.c.l.b16 %v511
    %v4785 = vunpack.c.h.b16 %v511
    %v4786 = vunpack.c.l.b16 %v512
    %v4787 = vunpack.c.h.b16 %v512
    %v4788 = vunpack.c.l.b16 %v513
    %v4789 = vunpack.c.h.b16 %v513
    %v4790 = vunpack.c.l.b16 %v514
    %v4791 = vunpack.c.h.b16 %v514
    %v4792 = vunpack.c.l.b16 %v515
    %v4793 = vunpack.c.h.b16 %v515
    %v4794 = vunpack.c.l.b16 %v516
    %v4795 = vunpack.c.h.b16 %v516
    %v4796 = vunpack.c.l.b16 %v517
    %v4797 = vunpack.c.h.b16 %v517
    %v4798 = vunpack.c.l.b16 %v518
    %v4799 = vunpack.c.h.b16 %v518
    %v4800 = vunpack.c.l.b16 %v519
    %v4801 = vunpack.c.h.b16 %v519
    %v4802 = vunpack.c.l.b16 %v520
    %v4803 = vunpack.c.h.b16 %v520
    %v4804 = vunpack.c.l.b16 %v521
    %v4805 = vunpack.c.h.b16 %v521
    %v4806 = vunpack.c.l.b16 %v522
    %v4807 = vunpack.c.h.b16 %v522
    %v4808 = vunpack.c.l.b16 %v523
    %v4809 = vunpack.c.h.b16 %v523
    %v4810 = vunpack.c.l.b16 %v524
    %v4811 = vunpack.c.h.b16 %v524
    %v4812 = vunpack.c.l.b16 %v525
    %v4813 = vunpack.c.h.b16 %v525
    %v4814 = vunpack.c.l.b16 %v526
    %v4815 = vunpack.c.h.b16 %v526
    %v4816 = vpack.c.b16 %v4040, %v4032
    %v4817 = vpack.c.b16 %v4041, %v4033
    %v4818 = vpack.c.b16 %v4042, %v4034
    %v4819 = vpack.c.b16 %v4043, %v4035
    %v4820 = vpack.c.b16 %v4044, %v4036
    %v4821 = vpack.c.b16 %v4045, %v4037
    %v4822 = vpack.c.b16 %v4046, %v4038
    %v4823 = vpack.c.b16 %v4047, %v4039
    %v4824 = vpack.c.b16 %v4056, %v4048
    %v4825 = vpack.c.b16 %v4057, %v4049
    %v4826 = vpack.c.b16 %v4058, %v4050
    %v4827 = vpack.c.b16 %v4059, %v4051
    %v4828 = vpack.c.b16 %v4060, %v4052
    %v4829 = vpack.c.b16 %v4061, %v4053
    %v4830 = vpack.c.b16 %v4062, %v4054
    %v4831 = vpack.c.b16 %v4063, %v4055
    %v4832 = vpack.c.b16 %v4072, %v4064
    %v4833 = vpack.c.b16 %v4073, %v4065
    %v4834 = vpack.c.b16 %v4074, %v4066
    %v4835 = vpack.c.b16 %v4075, %v4067
    %v4836 = vpack.c.b16 %v4076, %v4068
    %v4837 = vpack.c.b16 %v4077, %v4069
    %v4838 = vpack.c.b16 %v4078, %v4070
    %v4839 = vpack.c.b16 %v4079, %v4071
    %v4840 = vpack.c.b16 %v4088, %v4080
    %v4841 = vpack.c.b16 %v4089, %v4081
    %v4842 = vpack.c.b16 %v4090, %v4082
    %v4843 = vpack.c.b16 %v4091, %v4083
    %v4844 = vpack.c.b16 %v4092, %v4084
    %v4845 = vpack.c.b16 %v4093, %v4085
    %v4846 = vpack.c.b16 %v4094, %v4086
    %v4847 = vpack.c.b16 %v4095, %v4087
    %v4848 = vpack.c.b16 %v4104, %v4096
    %v4849 = vpack.c.b16 %v4105, %v4097
    %v4850 = vpack.c.b16 %v4106, %v4098
    %v4851 = vpack.c.b16 %v4107, %v4099
    %v4852 = vpack.c.b16 %v4108, %v4100
    %v4853 = vpack.c.b16 %v4109, %v4101
    %v4854 = vpack.c.b16 %v4110, %v4102
    %v4855 = vpack.c.b16 %v4111, %v4103
    %v4856 = vpack.c.b16 %v4120, %v4112
    %v4857 = vpack.c.b16 %v4121, %v4113
    %v4858 = vpack.c.b16 %v4122, %v4114
    %v4859 = vpack.c.b16 %v4123, %v4115
    %v4860 = vpack.c.b16 %v4124, %v4116
    %v4861 = vpack.c.b16 %v4125, %v4117
    %v4862 = vpack.c.b16 %v4126, %v4118
    %v4863 = vpack.c.b16 %v4127, %v4119
    %v4864 = vpack.c.b16 %v4136, %v4128
    %v4865 = vpack.c.b16 %v4137, %v4129
    %v4866 = vpack.c.b16 %v4138, %v4130
    %v4867 = vpack.c.b16 %v4139, %v4131
    %v4868 = vpack.c.b16 %v4140, %v4132
    %v4869 = vpack.c.b16 %v4141, %v4133
    %v4870 = vpack.c.b16 %v4142, %v4134
    %v4871 = vpack.c.b16 %v4143, %v4135
    %v4872 = vpack.c.b16 %v4152, %v4144
    %v4873 = vpack.c.b16 %v4153, %v4145
    %v4874 = vpack.c.b16 %v4154, %v4146
    %v4875 = vpack.c.b16 %v4155, %v4147
    %v4876 = vpack.c.b16 %v4156, %v4148
    %v4877 = vpack.c.b16 %v4157, %v4149
    %v4878 = vpack.c.b16 %v4158, %v4150
    %v4879 = vpack.c.b16 %v4159, %v4151
    %v4880 = vpack.c.b16 %v4168, %v4160
    %v4881 = vpack.c.b16 %v4169, %v4161
    %v4882 = vpack.c.b16 %v4170, %v4162
    %v4883 = vpack.c.b16 %v4171, %v4163
    %v4884 = vpack.c.b16 %v4172, %v4164
    %v4885 = vpack.c.b16 %v4173, %v4165
    %v4886 = vpack.c.b16 %v4174, %v4166
    %v4887 = vpack.c.b16 %v4175, %v4167
    %v4888 = vpack.c.b16 %v4184, %v4176
    %v4889 = vpack.c.b16 %v4185, %v4177
    %v4890 = vpack.c.b16 %v4186, %v4178
    %v4891 = vpack.c.b16 %v4187, %v4179
    %v4892 = vpack.c.b16 %v4188, %v4180
    %v4893 = vpack.c.b16 %v4189, %v4181
    %v4894 = vpack.c.b16 %v4190, %v4182
    %v4895 = vpack.c.b16 %v4191, %v4183
    %v4896 = vpack.c.b16 %v4200, %v4192
    %v4897 = vpack.c.b16 %v4201, %v4193
    %v4898 = vpack.c.b16 %v4202, %v4194
    %v4899 = vpack.c.b16 %v4203, %v4195
    %v4900 = vpack.c.b16 %v4204, %v4196
    %v4901 = vpack.c.b16 %v4205, %v4197
    %v4902 = vpack.c.b16 %v4206, %v4198
    %v4903 = vpack.c.b16 %v4207, %v4199
    %v4904 = vpack.c.b16 %v4216, %v4208
    %v4905 = vpack.c.b16 %v4217, %v4209
    %v4906 = vpack.c.b16 %v4218, %v4210
    %v4907 = vpack.c.b16 %v4219, %v4211
    %v4908 = vpack.c.b16 %v4220, %v4212
    %v4909 = vpack.c.b16 %v4221, %v4213
    %v4910 = vpack.c.b16 %v4222, %v4214
    %v4911 = vpack.c.b16 %v4223, %v4215
    %v4912 = vpack.c.b16 %v4232, %v4224
    %v4913 = vpack.c.b16 %v4233, %v4225
    %v4914 = vpack.c.b16 %v4234, %v4226
    %v4915 = vpack.c.b16 %v4235, %v4227
    %v4916 = vpack.c.b16 %v4236, %v4228
    %v4917 = vpack.c.b16 %v4237, %v4229
    %v4918 = vpack.c.b16 %v4238, %v4230
    %v4919 = vpack.c.b16 %v4239, %v4231
    %v4920 = vpack.c.b16 %v4248, %v4240
    %v4921 = vpack.c.b16 %v4249, %v4241
    %v4922 = vpack.c.b16 %v4250, %v4242
    %v4923 = vpack.c.b16 %v4251, %v4243
    %v4924 = vpack.c.b16 %v4252, %v4244
    %v4925 = vpack.c.b16 %v4253, %v4245
    %v4926 = vpack.c.b16 %v4254, %v4246
    %v4927 = vpack.c.b16 %v4255, %v4247
    %v4928 = vpack.c.b16 %v4264, %v4256
    %v4929 = vpack.c.b16 %v4265, %v4257
    %v4930 = vpack.c.b16 %v4266, %v4258
    %v4931 = vpack.c.b16 %v4267, %v4259
    %v4932 = vpack.c.b16 %v4268, %v4260
    %v4933 = vpack.c.b16 %v4269, %v4261
    %v4934 = vpack.c.b16 %v4270, %v4262
    %v4935 = vpack.c.b16 %v4271, %v4263
    %v4936 = vpack.c.b16 %v4280, %v4272
    %v4937 = vpack.c.b16 %v4281, %v4273
    %v4938 = vpack.c.b16 %v4282, %v4274
    %v4939 = vpack.c.b16 %v4283, %v4275
    %v4940 = vpack.c.b16 %v4284, %v4276
    %v4941 = vpack.c.b16 %v4285, %v4277
    %v4942 = vpack.c.b16 %v4286, %v4278
    %v4943 = vpack.c.b16 %v4287, %v4279
    %v4944 = vpack.c.b16 %v4296, %v4288
    %v4945 = vpack.c.b16 %v4297, %v4289
    %v4946 = vpack.c.b16 %v4298, %v4290
    %v4947 = vpack.c.b16 %v4299, %v4291
    %v4948 = vpack.c.b16 %v4300, %v4292
    %v4949 = vpack.c.b16 %v4301, %v4293
    %v4950 = vpack.c.b16 %v4302, %v4294
    %v4951 = vpack.c.b16 %v4303, %v4295
    %v4952 = vpack.c.b16 %v4312, %v4304
    %v4953 = vpack.c.b16 %v4313, %v4305
    %v4954 = vpack.c.b16 %v4314, %v4306
    %v4955 = vpack.c.b16 %v4315, %v4307
    %v4956 = vpack.c.b16 %v4316, %v4308
    %v4957 = vpack.c.b16 %v4317, %v4309
    %v4958 = vpack.c.b16 %v4318, %v4310
    %v4959 = vpack.c.b16 %v4319, %v4311
    %v4960 = vpack.c.b16 %v4328, %v4320
    %v4961 = vpack.c.b16 %v4329, %v4321
    %v4962 = vpack.c.b16 %v4330, %v4322
    %v4963 = vpack.c.b16 %v4331, %v4323
    %v4964 = vpack.c.b16 %v4332, %v4324
    %v4965 = vpack.c.b16 %v4333, %v4325
    %v4966 = vpack.c.b16 %v4334, %v4326
    %v4967 = vpack.c.b16 %v4335, %v4327
    %v4968 = vpack.c.b16 %v4344, %v4336
    %v4969 = vpack.c.b16 %v4345, %v4337
    %v4970 = vpack.c.b16 %v4346, %v4338
    %v4971 = vpack.c.b16 %v4347, %v4339
    %v4972 = vpack.c.b16 %v4348, %v4340
    %v4973 = vpack.c.b16 %v4349, %v4341
    %v4974 = vpack.c.b16 %v4350, %v4342
    %v4975 = vpack.c.b16 %v4351, %v4343
    %v4976 = vpack.c.b16 %v4360, %v4352
    %v4977 = vpack.c.b16 %v4361, %v4353
    %v4978 = vpack.c.b16 %v4362, %v4354
    %v4979 = vpack.c.b16 %v4363, %v4355
    %v4980 = vpack.c.b16 %v4364, %v4356
    %v4981 = vpack.c.b16 %v4365, %v4357
    %v4982 = vpack.c.b16 %v4366, %v4358
    %v4983 = vpack.c.b16 %v4367, %v4359
    %v4984 = vpack.c.b16 %v4376, %v4368
    %v4985 = vpack.c.b16 %v4377, %v4369
    %v4986 = vpack.c.b16 %v4378, %v4370
    %v4987 = vpack.c.b16 %v4379, %v4371
    %v4988 = vpack.c.b16 %v4380, %v4372
    %v4989 = vpack.c.b16 %v4381, %v4373
    %v4990 = vpack.c.b16 %v4382, %v4374
    %v4991 = vpack.c.b16 %v4383, %v4375
    %v4992 = vpack.c.b16 %v4392, %v4384
    %v4993 = vpack.c.b16 %v4393, %v4385
    %v4994 = vpack.c.b16 %v4394, %v4386
    %v4995 = vpack.c.b16 %v4395, %v4387
    %v4996 = vpack.c.b16 %v4396, %v4388
    %v4997 = vpack.c.b16 %v4397, %v4389
    %v4998 = vpack.c.b16 %v4398, %v4390
    %v4999 = vpack.c.b16 %v4399, %v4391
    %v5000 = vpack.c.b16 %v4408, %v4400
    %v5001 = vpack.c.b16 %v4409, %v4401
    %v5002 = vpack.c.b16 %v4410, %v4402
    %v5003 = vpack.c.b16 %v4411, %v4403
    %v5004 = vpack.c.b16 %v4412, %v4404
    %v5005 = vpack.c.b16 %v4413, %v4405
    %v5006 = vpack.c.b16 %v4414, %v4406
    %v5007 = vpack.c.b16 %v4415, %v4407
    %v5008 = vpack.c.b16 %v4424, %v4416
    %v5009 = vpack.c.b16 %v4425, %v4417
    %v5010 = vpack.c.b16 %v4426, %v4418
    %v5011 = vpack.c.b16 %v4427, %v4419
    %v5012 = vpack.c.b16 %v4428, %v4420
    %v5013 = vpack.c.b16 %v4429, %v4421
    %v5014 = vpack.c.b16 %v4430, %v4422
    %v5015 = vpack.c.b16 %v4431, %v4423
    %v5016 = vpack.c.b16 %v4440, %v4432
    %v5017 = vpack.c.b16 %v4441, %v4433
    %v5018 = vpack.c.b16 %v4442, %v4434
    %v5019 = vpack.c.b16 %v4443, %v4435
    %v5020 = vpack.c.b16 %v4444, %v4436
    %v5021 = vpack.c.b16 %v4445, %v4437
    %v5022 = vpack.c.b16 %v4446, %v4438
    %v5023 = vpack.c.b16 %v4447, %v4439
    %v5024 = vpack.c.b16 %v4456, %v4448
    %v5025 = vpack.c.b16 %v4457, %v4449
    %v5026 = vpack.c.b16 %v4458, %v4450
    %v5027 = vpack.c.b16 %v4459, %v4451
    %v5028 = vpack.c.b16 %v4460, %v4452
    %v5029 = vpack.c.b16 %v4461, %v4453
    %v5030 = vpack.c.b16 %v4462, %v4454
    %v5031 = vpack.c.b16 %v4463, %v4455
    %v5032 = vpack.c.b16 %v4472, %v4464
    %v5033 = vpack.c.b16 %v4473, %v4465
    %v5034 = vpack.c.b16 %v4474, %v4466
    %v5035 = vpack.c.b16 %v4475, %v4467
    %v5036 = vpack.c.b16 %v4476, %v4468
    %v5037 = vpack.c.b16 %v4477, %v4469
    %v5038 = vpack.c.b16 %v4478, %v4470
    %v5039 = vpack.c.b16 %v4479, %v4471
    %v5040 = vpack.c.b16 %v4488, %v4480
    %v5041 = vpack.c.b16 %v4489, %v4481
    %v5042 = vpack.c.b16 %v4490, %v4482
    %v5043 = vpack.c.b16 %v4491, %v4483
    %v5044 = vpack.c.b16 %v4492, %v4484
    %v5045 = vpack.c.b16 %v4493, %v4485
    %v5046 = vpack.c.b16 %v4494, %v4486
    %v5047 = vpack.c.b16 %v4495, %v4487
    %v5048 = vpack.c.b16 %v4504, %v4496
    %v5049 = vpack.c.b16 %v4505, %v4497
    %v5050 = vpack.c.b16 %v4506, %v4498
    %v5051 = vpack.c.b16 %v4507, %v4499
    %v5052 = vpack.c.b16 %v4508, %v4500
    %v5053 = vpack.c.b16 %v4509, %v4501
    %v5054 = vpack.c.b16 %v4510, %v4502
    %v5055 = vpack.c.b16 %v4511, %v4503
    %v5056 = vpack.c.b16 %v4520, %v4512
    %v5057 = vpack.c.b16 %v4521, %v4513
    %v5058 = vpack.c.b16 %v4522, %v4514
    %v5059 = vpack.c.b16 %v4523, %v4515
    %v5060 = vpack.c.b16 %v4524, %v4516
    %v5061 = vpack.c.b16 %v4525, %v4517
    %v5062 = vpack.c.b16 %v4526, %v4518
    %v5063 = vpack.c.b16 %v4527, %v4519
    %v5064 = vpack.c.b16 %v4536, %v4528
    %v5065 = vpack.c.b16 %v4537, %v4529
    %v5066 = vpack.c.b16 %v4538, %v4530
    %v5067 = vpack.c.b16 %v4539, %v4531
    %v5068 = vpack.c.b16 %v4540, %v4532
    %v5069 = vpack.c.b16 %v4541, %v4533
    %v5070 = vpack.c.b16 %v4542, %v4534
    %v5071 = vpack.c.b16 %v4543, %v4535
    %v5072 = vpack.c.b16 %v4552, %v4544
    %v5073 = vpack.c.b16 %v4553, %v4545
    %v5074 = vpack.c.b16 %v4554, %v4546
    %v5075 = vpack.c.b16 %v4555, %v4547
    %v5076 = vpack.c.b16 %v4556, %v4548
    %v5077 = vpack.c.b16 %v4557, %v4549
    %v5078 = vpack.c.b16 %v4558, %v4550
    %v5079 = vpack.c.b16 %v4559, %v4551
    %v5080 = vpack.c.b16 %v4568, %v4560
    %v5081 = vpack.c.b16 %v4569, %v4561
    %v5082 = vpack.c.b16 %v4570, %v4562
    %v5083 = vpack.c.b16 %v4571, %v4563
    %v5084 = vpack.c.b16 %v4572, %v4564
    %v5085 = vpack.c.b16 %v4573, %v4565
    %v5086 = vpack.c.b16 %v4574, %v4566
    %v5087 = vpack.c.b16 %v4575, %v4567
    %v5088 = vpack.c.b16 %v4584, %v4576
    %v5089 = vpack.c.b16 %v4585, %v4577
    %v5090 = vpack.c.b16 %v4586, %v4578
    %v5091 = vpack.c.b16 %v4587, %v4579
    %v5092 = vpack.c.b16 %v4588, %v4580
    %v5093 = vpack.c.b16 %v4589, %v4581
    %v5094 = vpack.c.b16 %v4590, %v4582
    %v5095 = vpack.c.b16 %v4591, %v4583
    %v5096 = vpack.c.b16 %v4600, %v4592
    %v5097 = vpack.c.b16 %v4601, %v4593
    %v5098 = vpack.c.b16 %v4602, %v4594
    %v5099 = vpack.c.b16 %v4603, %v4595
    %v5100 = vpack.c.b16 %v4604, %v4596
    %v5101 = vpack.c.b16 %v4605, %v4597
    %v5102 = vpack.c.b16 %v4606, %v4598
    %v5103 = vpack.c.b16 %v4607, %v4599
    %v5104 = vpack.c.b16 %v4616, %v4608
    %v5105 = vpack.c.b16 %v4617, %v4609
    %v5106 = vpack.c.b16 %v4618, %v4610
    %v5107 = vpack.c.b16 %v4619, %v4611
    %v5108 = vpack.c.b16 %v4620, %v4612
    %v5109 = vpack.c.b16 %v4621, %v4613
    %v5110 = vpack.c.b16 %v4622, %v4614
    %v5111 = vpack.c.b16 %v4623, %v4615
    %v5112 = vpack.c.b16 %v4632, %v4624
    %v5113 = vpack.c.b16 %v4633, %v4625
    %v5114 = vpack.c.b16 %v4634, %v4626
    %v5115 = vpack.c.b16 %v4635, %v4627
    %v5116 = vpack.c.b16 %v4636, %v4628
    %v5117 = vpack.c.b16 %v4637, %v4629
    %v5118 = vpack.c.b16 %v4638, %v4630
    %v5119 = vpack.c.b16 %v4639, %v4631
    %v5120 = vpack.c.b16 %v4648, %v4640
    %v5121 = vpack.c.b16 %v4649, %v4641
    %v5122 = vpack.c.b16 %v4650, %v4642
    %v5123 = vpack.c.b16 %v4651, %v4643
    %v5124 = vpack.c.b16 %v4652, %v4644
    %v5125 = vpack.c.b16 %v4653, %v4645
    %v5126 = vpack.c.b16 %v4654, %v4646
    %v5127 = vpack.c.b16 %v4655, %v4647
    %v5128 = vpack.c.b16 %v4664, %v4656
    %v5129 = vpack.c.b16 %v4665, %v4657
    %v5130 = vpack.c.b16 %v4666, %v4658
    %v5131 = vpack.c.b16 %v4667, %v4659
    %v5132 = vpack.c.b16 %v4668, %v4660
    %v5133 = vpack.c.b16 %v4669, %v4661
    %v5134 = vpack.c.b16 %v4670, %v4662
    %v5135 = vpack.c.b16 %v4671, %v4663
    %v5136 = vpack.c.b16 %v4680, %v4672
    %v5137 = vpack.c.b16 %v4681, %v4673
    %v5138 = vpack.c.b16 %v4682, %v4674
    %v5139 = vpack.c.b16 %v4683, %v4675
    %v5140 = vpack.c.b16 %v4684, %v4676
    %v5141 = vpack.c.b16 %v4685, %v4677
    %v5142 = vpack.c.b16 %v4686, %v4678
    %v5143 = vpack.c.b16 %v4687, %v4679
    %v5144 = vpack.c.b16 %v4696, %v4688
    %v5145 = vpack.c.b16 %v4697, %v4689
    %v5146 = vpack.c.b16 %v4698, %v4690
    %v5147 = vpack.c.b16 %v4699, %v4691
    %v5148 = vpack.c.b16 %v4700, %v4692
    %v5149 = vpack.c.b16 %v4701, %v4693
    %v5150 = vpack.c.b16 %v4702, %v4694
    %v5151 = vpack.c.b16 %v4703, %v4695
    %v5152 = vpack.c.b16 %v4712, %v4704
    %v5153 = vpack.c.b16 %v4713, %v4705
    %v5154 = vpack.c.b16 %v4714, %v4706
    %v5155 = vpack.c.b16 %v4715, %v4707
    %v5156 = vpack.c.b16 %v4716, %v4708
    %v5157 = vpack.c.b16 %v4717, %v4709
    %v5158 = vpack.c.b16 %v4718, %v4710
    %v5159 = vpack.c.b16 %v4719, %v4711
    %v5160 = vpack.c.b16 %v4728, %v4720
    %v5161 = vpack.c.b16 %v4729, %v4721
    %v5162 = vpack.c.b16 %v4730, %v4722
    %v5163 = vpack.c.b16 %v4731, %v4723
    %v5164 = vpack.c.b16 %v4732, %v4724
    %v5165 = vpack.c.b16 %v4733, %v4725
    %v5166 = vpack.c.b16 %v4734, %v4726
    %v5167 = vpack.c.b16 %v4735, %v4727
    %v5168 = vpack.c.b16 %v4744, %v4736
    %v5169 = vpack.c.b16 %v4745, %v4737
    %v5170 = vpack.c.b16 %v4746, %v4738
    %v5171 = vpack.c.b16 %v4747, %v4739
    %v5172 = vpack.c.b16 %v4748, %v4740
    %v5173 = vpack.c.b16 %v4749, %v4741
    %v5174 = vpack.c.b16 %v4750, %v4742
    %v5175 = vpack.c.b16 %v4751, %v4743
    %v5176 = vpack.c.b16 %v4760, %v4752
    %v5177 = vpack.c.b16 %v4761, %v4753
    %v5178 = vpack.c.b16 %v4762, %v4754
    %v5179 = vpack.c.b16 %v4763, %v4755
    %v5180 = vpack.c.b16 %v4764, %v4756
    %v5181 = vpack.c.b16 %v4765, %v4757
    %v5182 = vpack.c.b16 %v4766, %v4758
    %v5183 = vpack.c.b16 %v4767, %v4759
    %v5184 = vpack.c.b16 %v4776, %v4768
    %v5185 = vpack.c.b16 %v4777, %v4769
    %v5186 = vpack.c.b16 %v4778, %v4770
    %v5187 = vpack.c.b16 %v4779, %v4771
    %v5188 = vpack.c.b16 %v4780, %v4772
    %v5189 = vpack.c.b16 %v4781, %v4773
    %v5190 = vpack.c.b16 %v4782, %v4774
    %v5191 = vpack.c.b16 %v4783, %v4775
    %v5192 = vpack.c.b16 %v4792, %v4784
    %v5193 = vpack.c.b16 %v4793, %v4785
    %v5194 = vpack.c.b16 %v4794, %v4786
    %v5195 = vpack.c.b16 %v4795, %v4787
    %v5196 = vpack.c.b16 %v4796, %v4788
    %v5197 = vpack.c.b16 %v4797, %v4789
    %v5198 = vpack.c.b16 %v4798, %v4790
    %v5199 = vpack.c.b16 %v4799, %v4791
    %v5200 = vpack.c.b16 %v4808, %v4800
    %v5201 = vpack.c.b16 %v4809, %v4801
    %v5202 = vpack.c.b16 %v4810, %v4802
    %v5203 = vpack.c.b16 %v4811, %v4803
    %v5204 = vpack.c.b16 %v4812, %v4804
    %v5205 = vpack.c.b16 %v4813, %v4805
    %v5206 = vpack.c.b16 %v4814, %v4806
    %v5207 = vpack.c.b16 %v4815, %v4807
    %v5601 = vsel %vm2980, %v134, 0
    %5603 = vmatprep.subr.bf16.mxu0 %v4873
    %5604 = vmatpush1.bf16.msra.mxu0 %v4872
    %5605 = vmatprep.subr.bf16.mxu0 %v4865
    %5606 = vmatpush1.bf16.msra.mxu0 %v4864
    %5607 = vmatprep.subr.bf16.mxu0 %v4857
    %5608 = vmatpush1.bf16.msra.mxu0 %v4856
    %5609 = vmatprep.subr.bf16.mxu0 %v4849
    %5610 = vmatpush1.bf16.msra.mxu0 %v4848
    %5611 = vmatprep.subr.bf16.mxu0 %v4841
    %5612 = vmatpush1.bf16.msra.mxu0 %v4840
    %5613 = vmatprep.subr.bf16.mxu0 %v4833
    %5614 = vmatpush1.bf16.msra.mxu0 %v4832
    %5615 = vmatprep.subr.bf16.mxu0 %v4825
    %5616 = vmatpush1.bf16.msra.mxu0 %v4824
    %5617 = vmatprep.subr.bf16.mxu0 %v4817
    %5618 = vmatpush1.bf16.msra.mxu0 %v4816
    %5619 = vmatprep.subr.bf16.mxu0 %v4937
    %5620 = vmatpush2.bf16.msra.mxu0 %v4936
    %5621 = vmatprep.subr.bf16.mxu0 %v4929
    %5622 = vmatpush2.bf16.msra.mxu0 %v4928
    %5623 = vmatprep.subr.bf16.mxu0 %v4921
    %5624 = vmatpush2.bf16.msra.mxu0 %v4920
    %5625 = vmatprep.subr.bf16.mxu0 %v4913
    %5626 = vmatpush2.bf16.msra.mxu0 %v4912
    %5627 = vmatprep.subr.bf16.mxu0 %v4905
    %5628 = vmatpush2.bf16.msra.mxu0 %v4904
    %5629 = vmatprep.subr.bf16.mxu0 %v4897
    %5630 = vmatpush2.bf16.msra.mxu0 %v4896
    %5631 = vmatprep.subr.bf16.mxu0 %v4889
    %5632 = vmatpush2.bf16.msra.mxu0 %v4888
    %5633 = vmatprep.subr.bf16.mxu0 %v4881
    %5634 = vmatpush2.bf16.msra.mxu0 %v4880
    %5635 = vmatprep.mubr.bf16.mxu0 %v129
    %5636 = vmatmul.mubr.bf16.gmra.mxu0 %v128
    %v5637 = vpop.f32.mrf.mxu0
    %v5638 = vadd.f32 %v3142, %v5637
    %v5639 = vpop.f32.mrf.mxu0
    %v5640 = vadd.f32 %v3144, %v5639
    %v5641 = vpop.f32.mrf.mxu0
    %v5642 = vpop.f32.mrf.mxu0
    %5643 = vdwg.mxu0
    %5644 = vmatprep.subr.bf16.mxu0 %v5001
    %5645 = vmatpush1.bf16.msra.mxu0 %v5000
    %5646 = vmatprep.subr.bf16.mxu0 %v4993
    %5647 = vmatpush1.bf16.msra.mxu0 %v4992
    %5648 = vmatprep.subr.bf16.mxu0 %v4985
    %5649 = vmatpush1.bf16.msra.mxu0 %v4984
    %5650 = vmatprep.subr.bf16.mxu0 %v4977
    %5651 = vmatpush1.bf16.msra.mxu0 %v4976
    %5652 = vmatprep.subr.bf16.mxu0 %v4969
    %5653 = vmatpush1.bf16.msra.mxu0 %v4968
    %5654 = vmatprep.subr.bf16.mxu0 %v4961
    %5655 = vmatpush1.bf16.msra.mxu0 %v4960
    %5656 = vmatprep.subr.bf16.mxu0 %v4953
    %5657 = vmatpush1.bf16.msra.mxu0 %v4952
    %5658 = vmatprep.subr.bf16.mxu0 %v4945
    %5659 = vmatpush1.bf16.msra.mxu0 %v4944
    %5660 = vmatprep.subr.bf16.mxu0 %v5065
    %5661 = vmatpush2.bf16.msra.mxu0 %v5064
    %5662 = vmatprep.subr.bf16.mxu0 %v5057
    %5663 = vmatpush2.bf16.msra.mxu0 %v5056
    %5664 = vmatprep.subr.bf16.mxu0 %v5049
    %5665 = vmatpush2.bf16.msra.mxu0 %v5048
    %5666 = vmatprep.subr.bf16.mxu0 %v5041
    %5667 = vmatpush2.bf16.msra.mxu0 %v5040
    %5668 = vmatprep.subr.bf16.mxu0 %v5033
    %5669 = vmatpush2.bf16.msra.mxu0 %v5032
    %5670 = vmatprep.subr.bf16.mxu0 %v5025
    %5671 = vmatpush2.bf16.msra.mxu0 %v5024
    %5672 = vmatprep.subr.bf16.mxu0 %v5017
    %5673 = vmatpush2.bf16.msra.mxu0 %v5016
    %5674 = vmatprep.subr.bf16.mxu0 %v5009
    %5675 = vmatpush2.bf16.msra.mxu0 %v5008
    %5676 = vmatprep.mubr.bf16.mxu0 %v131
    %5677 = vmatmul.mubr.bf16.gmra.mxu0 %v130
    %v5678 = vpop.f32.mrf.mxu0
    %v5679 = vadd.f32 %v5638, %v5678
    %v5680 = vpop.f32.mrf.mxu0
    %v5681 = vadd.f32 %v5640, %v5680
    %v5682 = vpop.f32.mrf.mxu0
    %v5683 = vpop.f32.mrf.mxu0
    %5684 = vdwg.mxu0
    %5685 = vmatprep.subr.bf16.mxu0 %v5129
    %5686 = vmatpush1.bf16.msra.mxu0 %v5128
    %5687 = vmatprep.subr.bf16.mxu0 %v5121
    %5688 = vmatpush1.bf16.msra.mxu0 %v5120
    %5689 = vmatprep.subr.bf16.mxu0 %v5113
    %5690 = vmatpush1.bf16.msra.mxu0 %v5112
    %5691 = vmatprep.subr.bf16.mxu0 %v5105
    %5692 = vmatpush1.bf16.msra.mxu0 %v5104
    %5693 = vmatprep.subr.bf16.mxu0 %v5097
    %5694 = vmatpush1.bf16.msra.mxu0 %v5096
    %5695 = vmatprep.subr.bf16.mxu0 %v5089
    %5696 = vmatpush1.bf16.msra.mxu0 %v5088
    %5697 = vmatprep.subr.bf16.mxu0 %v5081
    %5698 = vmatpush1.bf16.msra.mxu0 %v5080
    %5699 = vmatprep.subr.bf16.mxu0 %v5073
    %5700 = vmatpush1.bf16.msra.mxu0 %v5072
    %5701 = vmatprep.subr.bf16.mxu0 %v5193
    %5702 = vmatpush2.bf16.msra.mxu0 %v5192
    %5703 = vmatprep.subr.bf16.mxu0 %v5185
    %5704 = vmatpush2.bf16.msra.mxu0 %v5184
    %5705 = vmatprep.subr.bf16.mxu0 %v5177
    %5706 = vmatpush2.bf16.msra.mxu0 %v5176
    %5707 = vmatprep.subr.bf16.mxu0 %v5169
    %5708 = vmatpush2.bf16.msra.mxu0 %v5168
    %5709 = vmatprep.subr.bf16.mxu0 %v5161
    %5710 = vmatpush2.bf16.msra.mxu0 %v5160
    %5711 = vmatprep.subr.bf16.mxu0 %v5153
    %5712 = vmatpush2.bf16.msra.mxu0 %v5152
    %5713 = vmatprep.subr.bf16.mxu0 %v5145
    %5714 = vmatpush2.bf16.msra.mxu0 %v5144
    %5715 = vmatprep.subr.bf16.mxu0 %v5137
    %5716 = vmatpush2.bf16.msra.mxu0 %v5136
    %5717 = vmatprep.mubr.bf16.mxu0 %v133
    %5718 = vmatmul.mubr.bf16.gmra.mxu0 %v132
    %v5719 = vpop.f32.mrf.mxu0
    %v5720 = vadd.f32 %v5679, %v5719
    %v5721 = vpop.f32.mrf.mxu0
    %v5722 = vadd.f32 %v5681, %v5721
    %v5723 = vpop.f32.mrf.mxu0
    %v5724 = vpop.f32.mrf.mxu0
    %5725 = vdwg.mxu0
    %5726 = vmatprep.subr.bf16.mxu0 0
    %5727 = vmatpush1.bf16.msra.mxu0 0
    %5728 = vmatprep.subr.bf16.mxu0 0
    %5729 = vmatpush1.bf16.msra.mxu0 0
    %5730 = vmatprep.subr.bf16.mxu0 0
    %5731 = vmatpush1.bf16.msra.mxu0 0
    %5732 = vmatprep.subr.bf16.mxu0 0
    %5733 = vmatpush1.bf16.msra.mxu0 0
    %5734 = vmatprep.subr.bf16.mxu0 0
    %5735 = vmatpush1.bf16.msra.mxu0 0
    %5736 = vmatprep.subr.bf16.mxu0 0
    %5737 = vmatpush1.bf16.msra.mxu0 0
    %5738 = vmatprep.subr.bf16.mxu0 0
    %5739 = vmatpush1.bf16.msra.mxu0 0
    %5740 = vmatprep.subr.bf16.mxu0 %v5201
    %5741 = vmatpush1.bf16.msra.mxu0 %v5200
    %5742 = vmatprep.subr.bf16.mxu0 0
    %5743 = vmatpush2.bf16.msra.mxu0 0
    %5744 = vmatprep.subr.bf16.mxu0 0
    %5745 = vmatpush2.bf16.msra.mxu0 0
    %5746 = vmatprep.subr.bf16.mxu0 0
    %5747 = vmatpush2.bf16.msra.mxu0 0
    %5748 = vmatprep.subr.bf16.mxu0 0
    %5749 = vmatpush2.bf16.msra.mxu0 0
    %5750 = vmatprep.subr.bf16.mxu0 0
    %5751 = vmatpush2.bf16.msra.mxu0 0
    %5752 = vmatprep.subr.bf16.mxu0 0
    %5753 = vmatpush2.bf16.msra.mxu0 0
    %5754 = vmatprep.subr.bf16.mxu0 0
    %5755 = vmatpush2.bf16.msra.mxu0 0
    %5756 = vmatprep.subr.bf16.mxu0 0
    %5757 = vmatpush2.bf16.msra.mxu0 0
    %5758 = vmatprep.mubr.bf16.mxu0 0
    %5759 = vmatmul.mubr.bf16.gmra.mxu0 %v5601
    %v5760 = vpop.f32.mrf.mxu0
    %v5761 = vadd.f32 %v5720, %v5760
    %v5762 = vpop.f32.mrf.mxu0
    %v5763 = vadd.f32 %v5722, %v5762
    %v5764 = vpop.f32.mrf.mxu0
    %v5765 = vpop.f32.mrf.mxu0
    %5766 = vdwg.mxu0
    %5767 = vmatprep.subr.bf16.mxu0 %v4875
    %5768 = vmatpush1.bf16.msra.mxu0 %v4874
    %5769 = vmatprep.subr.bf16.mxu0 %v4867
    %5770 = vmatpush1.bf16.msra.mxu0 %v4866
    %5771 = vmatprep.subr.bf16.mxu0 %v4859
    %5772 = vmatpush1.bf16.msra.mxu0 %v4858
    %5773 = vmatprep.subr.bf16.mxu0 %v4851
    %5774 = vmatpush1.bf16.msra.mxu0 %v4850
    %5775 = vmatprep.subr.bf16.mxu0 %v4843
    %5776 = vmatpush1.bf16.msra.mxu0 %v4842
    %5777 = vmatprep.subr.bf16.mxu0 %v4835
    %5778 = vmatpush1.bf16.msra.mxu0 %v4834
    %5779 = vmatprep.subr.bf16.mxu0 %v4827
    %5780 = vmatpush1.bf16.msra.mxu0 %v4826
    %5781 = vmatprep.subr.bf16.mxu0 %v4819
    %5782 = vmatpush1.bf16.msra.mxu0 %v4818
    %5783 = vmatprep.subr.bf16.mxu0 %v4939
    %5784 = vmatpush2.bf16.msra.mxu0 %v4938
    %5785 = vmatprep.subr.bf16.mxu0 %v4931
    %5786 = vmatpush2.bf16.msra.mxu0 %v4930
    %5787 = vmatprep.subr.bf16.mxu0 %v4923
    %5788 = vmatpush2.bf16.msra.mxu0 %v4922
    %5789 = vmatprep.subr.bf16.mxu0 %v4915
    %5790 = vmatpush2.bf16.msra.mxu0 %v4914
    %5791 = vmatprep.subr.bf16.mxu0 %v4907
    %5792 = vmatpush2.bf16.msra.mxu0 %v4906
    %5793 = vmatprep.subr.bf16.mxu0 %v4899
    %5794 = vmatpush2.bf16.msra.mxu0 %v4898
    %5795 = vmatprep.subr.bf16.mxu0 %v4891
    %5796 = vmatpush2.bf16.msra.mxu0 %v4890
    %5797 = vmatprep.subr.bf16.mxu0 %v4883
    %5798 = vmatpush2.bf16.msra.mxu0 %v4882
    %5799 = vmatprep.mubr.bf16.mxu0 %v129
    %5800 = vmatmul.mubr.bf16.gmra.mxu0 %v128
    %v5801 = vpop.f32.mrf.mxu0
    %v5802 = vadd.f32 %v3306, %v5801
    %v5803 = vpop.f32.mrf.mxu0
    %v5804 = vadd.f32 %v3308, %v5803
    %v5805 = vpop.f32.mrf.mxu0
    %v5806 = vpop.f32.mrf.mxu0
    %5807 = vdwg.mxu0
    %5808 = vmatprep.subr.bf16.mxu0 %v5003
    %5809 = vmatpush1.bf16.msra.mxu0 %v5002
    %5810 = vmatprep.subr.bf16.mxu0 %v4995
    %5811 = vmatpush1.bf16.msra.mxu0 %v4994
    %5812 = vmatprep.subr.bf16.mxu0 %v4987
    %5813 = vmatpush1.bf16.msra.mxu0 %v4986
    %5814 = vmatprep.subr.bf16.mxu0 %v4979
    %5815 = vmatpush1.bf16.msra.mxu0 %v4978
    %5816 = vmatprep.subr.bf16.mxu0 %v4971
    %5817 = vmatpush1.bf16.msra.mxu0 %v4970
    %5818 = vmatprep.subr.bf16.mxu0 %v4963
    %5819 = vmatpush1.bf16.msra.mxu0 %v4962
    %5820 = vmatprep.subr.bf16.mxu0 %v4955
    %5821 = vmatpush1.bf16.msra.mxu0 %v4954
    %5822 = vmatprep.subr.bf16.mxu0 %v4947
    %5823 = vmatpush1.bf16.msra.mxu0 %v4946
    %5824 = vmatprep.subr.bf16.mxu0 %v5067
    %5825 = vmatpush2.bf16.msra.mxu0 %v5066
    %5826 = vmatprep.subr.bf16.mxu0 %v5059
    %5827 = vmatpush2.bf16.msra.mxu0 %v5058
    %5828 = vmatprep.subr.bf16.mxu0 %v5051
    %5829 = vmatpush2.bf16.msra.mxu0 %v5050
    %5830 = vmatprep.subr.bf16.mxu0 %v5043
    %5831 = vmatpush2.bf16.msra.mxu0 %v5042
    %5832 = vmatprep.subr.bf16.mxu0 %v5035
    %5833 = vmatpush2.bf16.msra.mxu0 %v5034
    %5834 = vmatprep.subr.bf16.mxu0 %v5027
    %5835 = vmatpush2.bf16.msra.mxu0 %v5026
    %5836 = vmatprep.subr.bf16.mxu0 %v5019
    %5837 = vmatpush2.bf16.msra.mxu0 %v5018
    %5838 = vmatprep.subr.bf16.mxu0 %v5011
    %5839 = vmatpush2.bf16.msra.mxu0 %v5010
    %5840 = vmatprep.mubr.bf16.mxu0 %v131
    %5841 = vmatmul.mubr.bf16.gmra.mxu0 %v130
    %v5842 = vpop.f32.mrf.mxu0
    %v5843 = vadd.f32 %v5802, %v5842
    %v5844 = vpop.f32.mrf.mxu0
    %v5845 = vadd.f32 %v5804, %v5844
    %v5846 = vpop.f32.mrf.mxu0
    %v5847 = vpop.f32.mrf.mxu0
    %5848 = vdwg.mxu0
    %5849 = vmatprep.subr.bf16.mxu0 %v5131
    %5850 = vmatpush1.bf16.msra.mxu0 %v5130
    %5851 = vmatprep.subr.bf16.mxu0 %v5123
    %5852 = vmatpush1.bf16.msra.mxu0 %v5122
    %5853 = vmatprep.subr.bf16.mxu0 %v5115
    %5854 = vmatpush1.bf16.msra.mxu0 %v5114
    %5855 = vmatprep.subr.bf16.mxu0 %v5107
    %5856 = vmatpush1.bf16.msra.mxu0 %v5106
    %5857 = vmatprep.subr.bf16.mxu0 %v5099
    %5858 = vmatpush1.bf16.msra.mxu0 %v5098
    %5859 = vmatprep.subr.bf16.mxu0 %v5091
    %5860 = vmatpush1.bf16.msra.mxu0 %v5090
    %5861 = vmatprep.subr.bf16.mxu0 %v5083
    %5862 = vmatpush1.bf16.msra.mxu0 %v5082
    %5863 = vmatprep.subr.bf16.mxu0 %v5075
    %5864 = vmatpush1.bf16.msra.mxu0 %v5074
    %5865 = vmatprep.subr.bf16.mxu0 %v5195
    %5866 = vmatpush2.bf16.msra.mxu0 %v5194
    %5867 = vmatprep.subr.bf16.mxu0 %v5187
    %5868 = vmatpush2.bf16.msra.mxu0 %v5186
    %5869 = vmatprep.subr.bf16.mxu0 %v5179
    %5870 = vmatpush2.bf16.msra.mxu0 %v5178
    %5871 = vmatprep.subr.bf16.mxu0 %v5171
    %5872 = vmatpush2.bf16.msra.mxu0 %v5170
    %5873 = vmatprep.subr.bf16.mxu0 %v5163
    %5874 = vmatpush2.bf16.msra.mxu0 %v5162
    %5875 = vmatprep.subr.bf16.mxu0 %v5155
    %5876 = vmatpush2.bf16.msra.mxu0 %v5154
    %5877 = vmatprep.subr.bf16.mxu0 %v5147
    %5878 = vmatpush2.bf16.msra.mxu0 %v5146
    %5879 = vmatprep.subr.bf16.mxu0 %v5139
    %5880 = vmatpush2.bf16.msra.mxu0 %v5138
    %5881 = vmatprep.mubr.bf16.mxu0 %v133
    %5882 = vmatmul.mubr.bf16.gmra.mxu0 %v132
    %v5883 = vpop.f32.mrf.mxu0
    %v5884 = vadd.f32 %v5843, %v5883
    %v5885 = vpop.f32.mrf.mxu0
    %v5886 = vadd.f32 %v5845, %v5885
    %v5887 = vpop.f32.mrf.mxu0
    %v5888 = vpop.f32.mrf.mxu0
    %5889 = vdwg.mxu0
    %5890 = vmatprep.subr.bf16.mxu0 0
    %5891 = vmatpush1.bf16.msra.mxu0 0
    %5892 = vmatprep.subr.bf16.mxu0 0
    %5893 = vmatpush1.bf16.msra.mxu0 0
    %5894 = vmatprep.subr.bf16.mxu0 0
    %5895 = vmatpush1.bf16.msra.mxu0 0
    %5896 = vmatprep.subr.bf16.mxu0 0
    %5897 = vmatpush1.bf16.msra.mxu0 0
    %5898 = vmatprep.subr.bf16.mxu0 0
    %5899 = vmatpush1.bf16.msra.mxu0 0
    %5900 = vmatprep.subr.bf16.mxu0 0
    %5901 = vmatpush1.bf16.msra.mxu0 0
    %5902 = vmatprep.subr.bf16.mxu0 0
    %5903 = vmatpush1.bf16.msra.mxu0 0
    %5904 = vmatprep.subr.bf16.mxu0 %v5203
    %5905 = vmatpush1.bf16.msra.mxu0 %v5202
    %5906 = vmatprep.subr.bf16.mxu0 0
    %5907 = vmatpush2.bf16.msra.mxu0 0
    %5908 = vmatprep.subr.bf16.mxu0 0
    %5909 = vmatpush2.bf16.msra.mxu0 0
    %5910 = vmatprep.subr.bf16.mxu0 0
    %5911 = vmatpush2.bf16.msra.mxu0 0
    %5912 = vmatprep.subr.bf16.mxu0 0
    %5913 = vmatpush2.bf16.msra.mxu0 0
    %5914 = vmatprep.subr.bf16.mxu0 0
    %5915 = vmatpush2.bf16.msra.mxu0 0
    %5916 = vmatprep.subr.bf16.mxu0 0
    %5917 = vmatpush2.bf16.msra.mxu0 0
    %5918 = vmatprep.subr.bf16.mxu0 0
    %5919 = vmatpush2.bf16.msra.mxu0 0
    %5920 = vmatprep.subr.bf16.mxu0 0
    %5921 = vmatpush2.bf16.msra.mxu0 0
    %5922 = vmatprep.mubr.bf16.mxu0 0
    %5923 = vmatmul.mubr.bf16.gmra.mxu0 %v5601
    %v5924 = vpop.f32.mrf.mxu0
    %v5925 = vadd.f32 %v5884, %v5924
    %v5926 = vpop.f32.mrf.mxu0
    %v5927 = vadd.f32 %v5886, %v5926
    %v5928 = vpop.f32.mrf.mxu0
    %v5929 = vpop.f32.mrf.mxu0
    %5930 = vdwg.mxu0
    %5931 = vmatprep.subr.bf16.mxu0 %v4877
    %5932 = vmatpush1.bf16.msra.mxu0 %v4876
    %5933 = vmatprep.subr.bf16.mxu0 %v4869
    %5934 = vmatpush1.bf16.msra.mxu0 %v4868
    %5935 = vmatprep.subr.bf16.mxu0 %v4861
    %5936 = vmatpush1.bf16.msra.mxu0 %v4860
    %5937 = vmatprep.subr.bf16.mxu0 %v4853
    %5938 = vmatpush1.bf16.msra.mxu0 %v4852
    %5939 = vmatprep.subr.bf16.mxu0 %v4845
    %5940 = vmatpush1.bf16.msra.mxu0 %v4844
    %5941 = vmatprep.subr.bf16.mxu0 %v4837
    %5942 = vmatpush1.bf16.msra.mxu0 %v4836
    %5943 = vmatprep.subr.bf16.mxu0 %v4829
    %5944 = vmatpush1.bf16.msra.mxu0 %v4828
    %5945 = vmatprep.subr.bf16.mxu0 %v4821
    %5946 = vmatpush1.bf16.msra.mxu0 %v4820
    %5947 = vmatprep.subr.bf16.mxu0 %v4941
    %5948 = vmatpush2.bf16.msra.mxu0 %v4940
    %5949 = vmatprep.subr.bf16.mxu0 %v4933
    %5950 = vmatpush2.bf16.msra.mxu0 %v4932
    %5951 = vmatprep.subr.bf16.mxu0 %v4925
    %5952 = vmatpush2.bf16.msra.mxu0 %v4924
    %5953 = vmatprep.subr.bf16.mxu0 %v4917
    %5954 = vmatpush2.bf16.msra.mxu0 %v4916
    %5955 = vmatprep.subr.bf16.mxu0 %v4909
    %5956 = vmatpush2.bf16.msra.mxu0 %v4908
    %5957 = vmatprep.subr.bf16.mxu0 %v4901
    %5958 = vmatpush2.bf16.msra.mxu0 %v4900
    %5959 = vmatprep.subr.bf16.mxu0 %v4893
    %5960 = vmatpush2.bf16.msra.mxu0 %v4892
    %5961 = vmatprep.subr.bf16.mxu0 %v4885
    %5962 = vmatpush2.bf16.msra.mxu0 %v4884
    %5963 = vmatprep.mubr.bf16.mxu0 %v129
    %5964 = vmatmul.mubr.bf16.gmra.mxu0 %v128
    %v5965 = vpop.f32.mrf.mxu0
    %v5966 = vadd.f32 %v3470, %v5965
    %v5967 = vpop.f32.mrf.mxu0
    %v5968 = vadd.f32 %v3472, %v5967
    %v5969 = vpop.f32.mrf.mxu0
    %v5970 = vpop.f32.mrf.mxu0
    %5971 = vdwg.mxu0
    %5972 = vmatprep.subr.bf16.mxu0 %v5005
    %5973 = vmatpush1.bf16.msra.mxu0 %v5004
    %5974 = vmatprep.subr.bf16.mxu0 %v4997
    %5975 = vmatpush1.bf16.msra.mxu0 %v4996
    %5976 = vmatprep.subr.bf16.mxu0 %v4989
    %5977 = vmatpush1.bf16.msra.mxu0 %v4988
    %5978 = vmatprep.subr.bf16.mxu0 %v4981
    %5979 = vmatpush1.bf16.msra.mxu0 %v4980
    %5980 = vmatprep.subr.bf16.mxu0 %v4973
    %5981 = vmatpush1.bf16.msra.mxu0 %v4972
    %5982 = vmatprep.subr.bf16.mxu0 %v4965
    %5983 = vmatpush1.bf16.msra.mxu0 %v4964
    %5984 = vmatprep.subr.bf16.mxu0 %v4957
    %5985 = vmatpush1.bf16.msra.mxu0 %v4956
    %5986 = vmatprep.subr.bf16.mxu0 %v4949
    %5987 = vmatpush1.bf16.msra.mxu0 %v4948
    %5988 = vmatprep.subr.bf16.mxu0 %v5069
    %5989 = vmatpush2.bf16.msra.mxu0 %v5068
    %5990 = vmatprep.subr.bf16.mxu0 %v5061
    %5991 = vmatpush2.bf16.msra.mxu0 %v5060
    %5992 = vmatprep.subr.bf16.mxu0 %v5053
    %5993 = vmatpush2.bf16.msra.mxu0 %v5052
    %5994 = vmatprep.subr.bf16.mxu0 %v5045
    %5995 = vmatpush2.bf16.msra.mxu0 %v5044
    %5996 = vmatprep.subr.bf16.mxu0 %v5037
    %5997 = vmatpush2.bf16.msra.mxu0 %v5036
    %5998 = vmatprep.subr.bf16.mxu0 %v5029
    %5999 = vmatpush2.bf16.msra.mxu0 %v5028
    %6000 = vmatprep.subr.bf16.mxu0 %v5021
    %6001 = vmatpush2.bf16.msra.mxu0 %v5020
    %6002 = vmatprep.subr.bf16.mxu0 %v5013
    %6003 = vmatpush2.bf16.msra.mxu0 %v5012
    %6004 = vmatprep.mubr.bf16.mxu0 %v131
    %6005 = vmatmul.mubr.bf16.gmra.mxu0 %v130
    %v6006 = vpop.f32.mrf.mxu0
    %v6007 = vadd.f32 %v5966, %v6006
    %v6008 = vpop.f32.mrf.mxu0
    %v6009 = vadd.f32 %v5968, %v6008
    %v6010 = vpop.f32.mrf.mxu0
    %v6011 = vpop.f32.mrf.mxu0
    %6012 = vdwg.mxu0
    %6013 = vmatprep.subr.bf16.mxu0 %v5133
    %6014 = vmatpush1.bf16.msra.mxu0 %v5132
    %6015 = vmatprep.subr.bf16.mxu0 %v5125
    %6016 = vmatpush1.bf16.msra.mxu0 %v5124
    %6017 = vmatprep.subr.bf16.mxu0 %v5117
    %6018 = vmatpush1.bf16.msra.mxu0 %v5116
    %6019 = vmatprep.subr.bf16.mxu0 %v5109
    %6020 = vmatpush1.bf16.msra.mxu0 %v5108
    %6021 = vmatprep.subr.bf16.mxu0 %v5101
    %6022 = vmatpush1.bf16.msra.mxu0 %v5100
    %6023 = vmatprep.subr.bf16.mxu0 %v5093
    %6024 = vmatpush1.bf16.msra.mxu0 %v5092
    %6025 = vmatprep.subr.bf16.mxu0 %v5085
    %6026 = vmatpush1.bf16.msra.mxu0 %v5084
    %6027 = vmatprep.subr.bf16.mxu0 %v5077
    %6028 = vmatpush1.bf16.msra.mxu0 %v5076
    %6029 = vmatprep.subr.bf16.mxu0 %v5197
    %6030 = vmatpush2.bf16.msra.mxu0 %v5196
    %6031 = vmatprep.subr.bf16.mxu0 %v5189
    %6032 = vmatpush2.bf16.msra.mxu0 %v5188
    %6033 = vmatprep.subr.bf16.mxu0 %v5181
    %6034 = vmatpush2.bf16.msra.mxu0 %v5180
    %6035 = vmatprep.subr.bf16.mxu0 %v5173
    %6036 = vmatpush2.bf16.msra.mxu0 %v5172
    %6037 = vmatprep.subr.bf16.mxu0 %v5165
    %6038 = vmatpush2.bf16.msra.mxu0 %v5164
    %6039 = vmatprep.subr.bf16.mxu0 %v5157
    %6040 = vmatpush2.bf16.msra.mxu0 %v5156
    %6041 = vmatprep.subr.bf16.mxu0 %v5149
    %6042 = vmatpush2.bf16.msra.mxu0 %v5148
    %6043 = vmatprep.subr.bf16.mxu0 %v5141
    %6044 = vmatpush2.bf16.msra.mxu0 %v5140
    %6045 = vmatprep.mubr.bf16.mxu0 %v133
    %6046 = vmatmul.mubr.bf16.gmra.mxu0 %v132
    %v6047 = vpop.f32.mrf.mxu0
    %v6048 = vadd.f32 %v6007, %v6047
    %v6049 = vpop.f32.mrf.mxu0
    %v6050 = vadd.f32 %v6009, %v6049
    %v6051 = vpop.f32.mrf.mxu0
    %v6052 = vpop.f32.mrf.mxu0
    %6053 = vdwg.mxu0
    %6054 = vmatprep.subr.bf16.mxu0 0
    %6055 = vmatpush1.bf16.msra.mxu0 0
    %6056 = vmatprep.subr.bf16.mxu0 0
    %6057 = vmatpush1.bf16.msra.mxu0 0
    %6058 = vmatprep.subr.bf16.mxu0 0
    %6059 = vmatpush1.bf16.msra.mxu0 0
    %6060 = vmatprep.subr.bf16.mxu0 0
    %6061 = vmatpush1.bf16.msra.mxu0 0
    %6062 = vmatprep.subr.bf16.mxu0 0
    %6063 = vmatpush1.bf16.msra.mxu0 0
    %6064 = vmatprep.subr.bf16.mxu0 0
    %6065 = vmatpush1.bf16.msra.mxu0 0
    %6066 = vmatprep.subr.bf16.mxu0 0
    %6067 = vmatpush1.bf16.msra.mxu0 0
    %6068 = vmatprep.subr.bf16.mxu0 %v5205
    %6069 = vmatpush1.bf16.msra.mxu0 %v5204
    %6070 = vmatprep.subr.bf16.mxu0 0
    %6071 = vmatpush2.bf16.msra.mxu0 0
    %6072 = vmatprep.subr.bf16.mxu0 0
    %6073 = vmatpush2.bf16.msra.mxu0 0
    %6074 = vmatprep.subr.bf16.mxu0 0
    %6075 = vmatpush2.bf16.msra.mxu0 0
    %6076 = vmatprep.subr.bf16.mxu0 0
    %6077 = vmatpush2.bf16.msra.mxu0 0
    %6078 = vmatprep.subr.bf16.mxu0 0
    %6079 = vmatpush2.bf16.msra.mxu0 0
    %6080 = vmatprep.subr.bf16.mxu0 0
    %6081 = vmatpush2.bf16.msra.mxu0 0
    %6082 = vmatprep.subr.bf16.mxu0 0
    %6083 = vmatpush2.bf16.msra.mxu0 0
    %6084 = vmatprep.subr.bf16.mxu0 0
    %6085 = vmatpush2.bf16.msra.mxu0 0
    %6086 = vmatprep.mubr.bf16.mxu0 0
    %6087 = vmatmul.mubr.bf16.gmra.mxu0 %v5601
    %v6088 = vpop.f32.mrf.mxu0
    %v6089 = vadd.f32 %v6048, %v6088
    %v6090 = vpop.f32.mrf.mxu0
    %v6091 = vadd.f32 %v6050, %v6090
    %v6092 = vpop.f32.mrf.mxu0
    %v6093 = vpop.f32.mrf.mxu0
    %6094 = vdwg.mxu0
    %6095 = vmatprep.subr.bf16.mxu0 %v4879
    %6096 = vmatpush1.bf16.msra.mxu0 %v4878
    %6097 = vmatprep.subr.bf16.mxu0 %v4871
    %6098 = vmatpush1.bf16.msra.mxu0 %v4870
    %6099 = vmatprep.subr.bf16.mxu0 %v4863
    %6100 = vmatpush1.bf16.msra.mxu0 %v4862
    %6101 = vmatprep.subr.bf16.mxu0 %v4855
    %6102 = vmatpush1.bf16.msra.mxu0 %v4854
    %6103 = vmatprep.subr.bf16.mxu0 %v4847
    %6104 = vmatpush1.bf16.msra.mxu0 %v4846
    %6105 = vmatprep.subr.bf16.mxu0 %v4839
    %6106 = vmatpush1.bf16.msra.mxu0 %v4838
    %6107 = vmatprep.subr.bf16.mxu0 %v4831
    %6108 = vmatpush1.bf16.msra.mxu0 %v4830
    %6109 = vmatprep.subr.bf16.mxu0 %v4823
    %6110 = vmatpush1.bf16.msra.mxu0 %v4822
    %6111 = vmatprep.subr.bf16.mxu0 %v4943
    %6112 = vmatpush2.bf16.msra.mxu0 %v4942
    %6113 = vmatprep.subr.bf16.mxu0 %v4935
    %6114 = vmatpush2.bf16.msra.mxu0 %v4934
    %6115 = vmatprep.subr.bf16.mxu0 %v4927
    %6116 = vmatpush2.bf16.msra.mxu0 %v4926
    %6117 = vmatprep.subr.bf16.mxu0 %v4919
    %6118 = vmatpush2.bf16.msra.mxu0 %v4918
    %6119 = vmatprep.subr.bf16.mxu0 %v4911
    %6120 = vmatpush2.bf16.msra.mxu0 %v4910
    %6121 = vmatprep.subr.bf16.mxu0 %v4903
    %6122 = vmatpush2.bf16.msra.mxu0 %v4902
    %6123 = vmatprep.subr.bf16.mxu0 %v4895
    %6124 = vmatpush2.bf16.msra.mxu0 %v4894
    %6125 = vmatprep.subr.bf16.mxu0 %v4887
    %6126 = vmatpush2.bf16.msra.mxu0 %v4886
    %6127 = vmatprep.mubr.bf16.mxu0 %v129
    %6128 = vmatmul.mubr.bf16.gmra.mxu0 %v128
    %v6129 = vpop.f32.mrf.mxu0
    %v6130 = vadd.f32 %v3634, %v6129
    %v6131 = vpop.f32.mrf.mxu0
    %v6132 = vadd.f32 %v3636, %v6131
    %v6133 = vpop.f32.mrf.mxu0
    %v6134 = vpop.f32.mrf.mxu0
    %6135 = vdwg.mxu0
    %6136 = vmatprep.subr.bf16.mxu0 %v5007
    %6137 = vmatpush1.bf16.msra.mxu0 %v5006
    %6138 = vmatprep.subr.bf16.mxu0 %v4999
    %6139 = vmatpush1.bf16.msra.mxu0 %v4998
    %6140 = vmatprep.subr.bf16.mxu0 %v4991
    %6141 = vmatpush1.bf16.msra.mxu0 %v4990
    %6142 = vmatprep.subr.bf16.mxu0 %v4983
    %6143 = vmatpush1.bf16.msra.mxu0 %v4982
    %6144 = vmatprep.subr.bf16.mxu0 %v4975
    %6145 = vmatpush1.bf16.msra.mxu0 %v4974
    %6146 = vmatprep.subr.bf16.mxu0 %v4967
    %6147 = vmatpush1.bf16.msra.mxu0 %v4966
    %6148 = vmatprep.subr.bf16.mxu0 %v4959
    %6149 = vmatpush1.bf16.msra.mxu0 %v4958
    %6150 = vmatprep.subr.bf16.mxu0 %v4951
    %6151 = vmatpush1.bf16.msra.mxu0 %v4950
    %6152 = vmatprep.subr.bf16.mxu0 %v5071
    %6153 = vmatpush2.bf16.msra.mxu0 %v5070
    %6154 = vmatprep.subr.bf16.mxu0 %v5063
    %6155 = vmatpush2.bf16.msra.mxu0 %v5062
    %6156 = vmatprep.subr.bf16.mxu0 %v5055
    %6157 = vmatpush2.bf16.msra.mxu0 %v5054
    %6158 = vmatprep.subr.bf16.mxu0 %v5047
    %6159 = vmatpush2.bf16.msra.mxu0 %v5046
    %6160 = vmatprep.subr.bf16.mxu0 %v5039
    %6161 = vmatpush2.bf16.msra.mxu0 %v5038
    %6162 = vmatprep.subr.bf16.mxu0 %v5031
    %6163 = vmatpush2.bf16.msra.mxu0 %v5030
    %6164 = vmatprep.subr.bf16.mxu0 %v5023
    %6165 = vmatpush2.bf16.msra.mxu0 %v5022
    %6166 = vmatprep.subr.bf16.mxu0 %v5015
    %6167 = vmatpush2.bf16.msra.mxu0 %v5014
    %6168 = vmatprep.mubr.bf16.mxu0 %v131
    %6169 = vmatmul.mubr.bf16.gmra.mxu0 %v130
    %v6170 = vpop.f32.mrf.mxu0
    %v6171 = vadd.f32 %v6130, %v6170
    %v6172 = vpop.f32.mrf.mxu0
    %v6173 = vadd.f32 %v6132, %v6172
    %v6174 = vpop.f32.mrf.mxu0
    %v6175 = vpop.f32.mrf.mxu0
    %6176 = vdwg.mxu0
    %6177 = vmatprep.subr.bf16.mxu0 %v5135
    %6178 = vmatpush1.bf16.msra.mxu0 %v5134
    %6179 = vmatprep.subr.bf16.mxu0 %v5127
    %6180 = vmatpush1.bf16.msra.mxu0 %v5126
    %6181 = vmatprep.subr.bf16.mxu0 %v5119
    %6182 = vmatpush1.bf16.msra.mxu0 %v5118
    %6183 = vmatprep.subr.bf16.mxu0 %v5111
    %6184 = vmatpush1.bf16.msra.mxu0 %v5110
    %6185 = vmatprep.subr.bf16.mxu0 %v5103
    %6186 = vmatpush1.bf16.msra.mxu0 %v5102
    %6187 = vmatprep.subr.bf16.mxu0 %v5095
    %6188 = vmatpush1.bf16.msra.mxu0 %v5094
    %6189 = vmatprep.subr.bf16.mxu0 %v5087
    %6190 = vmatpush1.bf16.msra.mxu0 %v5086
    %6191 = vmatprep.subr.bf16.mxu0 %v5079
    %6192 = vmatpush1.bf16.msra.mxu0 %v5078
    %6193 = vmatprep.subr.bf16.mxu0 %v5199
    %6194 = vmatpush2.bf16.msra.mxu0 %v5198
    %6195 = vmatprep.subr.bf16.mxu0 %v5191
    %6196 = vmatpush2.bf16.msra.mxu0 %v5190
    %6197 = vmatprep.subr.bf16.mxu0 %v5183
    %6198 = vmatpush2.bf16.msra.mxu0 %v5182
    %6199 = vmatprep.subr.bf16.mxu0 %v5175
    %6200 = vmatpush2.bf16.msra.mxu0 %v5174
    %6201 = vmatprep.subr.bf16.mxu0 %v5167
    %6202 = vmatpush2.bf16.msra.mxu0 %v5166
    %6203 = vmatprep.subr.bf16.mxu0 %v5159
    %6204 = vmatpush2.bf16.msra.mxu0 %v5158
    %6205 = vmatprep.subr.bf16.mxu0 %v5151
    %6206 = vmatpush2.bf16.msra.mxu0 %v5150
    %6207 = vmatprep.subr.bf16.mxu0 %v5143
    %6208 = vmatpush2.bf16.msra.mxu0 %v5142
    %6209 = vmatprep.mubr.bf16.mxu0 %v133
    %6210 = vmatmul.mubr.bf16.gmra.mxu0 %v132
    %v6211 = vpop.f32.mrf.mxu0
    %v6212 = vadd.f32 %v6171, %v6211
    %v6213 = vpop.f32.mrf.mxu0
    %v6214 = vadd.f32 %v6173, %v6213
    %v6215 = vpop.f32.mrf.mxu0
    %v6216 = vpop.f32.mrf.mxu0
    %6217 = vdwg.mxu0
    %6218 = vmatprep.subr.bf16.mxu0 0
    %6219 = vmatpush1.bf16.msra.mxu0 0
    %6220 = vmatprep.subr.bf16.mxu0 0
    %6221 = vmatpush1.bf16.msra.mxu0 0
    %6222 = vmatprep.subr.bf16.mxu0 0
    %6223 = vmatpush1.bf16.msra.mxu0 0
    %6224 = vmatprep.subr.bf16.mxu0 0
    %6225 = vmatpush1.bf16.msra.mxu0 0
    %6226 = vmatprep.subr.bf16.mxu0 0
    %6227 = vmatpush1.bf16.msra.mxu0 0
    %6228 = vmatprep.subr.bf16.mxu0 0
    %6229 = vmatpush1.bf16.msra.mxu0 0
    %6230 = vmatprep.subr.bf16.mxu0 0
    %6231 = vmatpush1.bf16.msra.mxu0 0
    %6232 = vmatprep.subr.bf16.mxu0 %v5207
    %6233 = vmatpush1.bf16.msra.mxu0 %v5206
    %6234 = vmatprep.subr.bf16.mxu0 0
    %6235 = vmatpush2.bf16.msra.mxu0 0
    %6236 = vmatprep.subr.bf16.mxu0 0
    %6237 = vmatpush2.bf16.msra.mxu0 0
    %6238 = vmatprep.subr.bf16.mxu0 0
    %6239 = vmatpush2.bf16.msra.mxu0 0
    %6240 = vmatprep.subr.bf16.mxu0 0
    %6241 = vmatpush2.bf16.msra.mxu0 0
    %6242 = vmatprep.subr.bf16.mxu0 0
    %6243 = vmatpush2.bf16.msra.mxu0 0
    %6244 = vmatprep.subr.bf16.mxu0 0
    %6245 = vmatpush2.bf16.msra.mxu0 0
    %6246 = vmatprep.subr.bf16.mxu0 0
    %6247 = vmatpush2.bf16.msra.mxu0 0
    %6248 = vmatprep.subr.bf16.mxu0 0
    %6249 = vmatpush2.bf16.msra.mxu0 0
    %6250 = vmatprep.mubr.bf16.mxu0 0
    %6251 = vmatmul.mubr.bf16.gmra.mxu0 %v5601
    %v6252 = vpop.f32.mrf.mxu0
    %v6253 = vadd.f32 %v6212, %v6252
    %v6254 = vpop.f32.mrf.mxu0
    %v6255 = vadd.f32 %v6214, %v6254
    %v6256 = vpop.f32.mrf.mxu0
    %v6257 = vpop.f32.mrf.mxu0
    %6258 = vdwg.mxu0
    %v6259 = vld [vmem:[%s4] sm:$0xff]
    %v6261 = vlaneseq
    %v6262 = vshrl.u32 %v6261, 7
    %v6263 = vsub.s32 0, %v6262
    %v6264 = vrot.slane %v6259, %v6263
    %v6265 = vlaneseq
    %v6266 = vshrl.u32 %v6265, 7
    %v6267 = vsub.s32 1, %v6266
    %v6268 = vrot.slane %v6259, %v6267
    %v6269 = vlaneseq
    %v6270 = vshrl.u32 %v6269, 7
    %v6271 = vsub.s32 2, %v6270
    %v6272 = vrot.slane %v6259, %v6271
    %v6273 = vlaneseq
    %v6274 = vshrl.u32 %v6273, 7
    %v6275 = vsub.s32 3, %v6274
    %v6276 = vrot.slane %v6259, %v6275
    %v6277 = vlaneseq
    %v6278 = vshrl.u32 %v6277, 7
    %v6279 = vsub.s32 4, %v6278
    %v6280 = vrot.slane %v6259, %v6279
    %v6281 = vlaneseq
    %v6282 = vshrl.u32 %v6281, 7
    %v6283 = vsub.s32 5, %v6282
    %v6284 = vrot.slane %v6259, %v6283
    %v6285 = vlaneseq
    %v6286 = vshrl.u32 %v6285, 7
    %v6287 = vsub.s32 6, %v6286
    %v6288 = vrot.slane %v6259, %v6287
    %v6289 = vlaneseq
    %v6290 = vshrl.u32 %v6289, 7
    %v6291 = vsub.s32 7, %v6290
    %v6292 = vrot.slane %v6259, %v6291
    %v6301 = vadd.f32 %v5761, %v6264
    %v6302 = vadd.f32 %v5763, %v6268
    %v6303 = vadd.f32 %v5925, %v6272
    %v6304 = vadd.f32 %v5927, %v6276
    %v6305 = vadd.f32 %v6089, %v6280
    %v6306 = vadd.f32 %v6091, %v6284
    %v6307 = vadd.f32 %v6253, %v6288
    %v6308 = vadd.f32 %v6255, %v6292
    %v6309 = vmax.f32 %v6301, 0.0
    %v6310 = vmax.f32 %v6302, 0.0
    %v6311 = vmax.f32 %v6303, 0.0
    %v6312 = vmax.f32 %v6304, 0.0
    %v6313 = vmax.f32 %v6305, 0.0
    %v6314 = vmax.f32 %v6306, 0.0
    %v6315 = vmax.f32 %v6307, 0.0
    %v6316 = vmax.f32 %v6308, 0.0
    %v6317 = vpack.c.bf16 %v6309, %v6309
    %v6318 = vpack.c.bf16 %v6310, %v6310
    %v6319 = vpack.c.bf16 %v6311, %v6311
    %v6320 = vpack.c.bf16 %v6312, %v6312
    %v6321 = vpack.c.bf16 %v6313, %v6313
    %v6322 = vpack.c.bf16 %v6314, %v6314
    %v6323 = vpack.c.bf16 %v6315, %v6315
    %v6324 = vpack.c.bf16 %v6316, %v6316
    %v6325 = vld [vmem:[%s5] sm:$0xff]
    %v6326 = vld [vmem:[%s5 + $0x8] sm:$0xff]
    %v6327 = vld [vmem:[%s5 + $0x10] sm:$0xff]
    %v6328 = vld [vmem:[%s5 + $0x18] sm:$0xff]
    %v6329 = vld [vmem:[%s5 + $0x20] sm:$0xff]
    %v6330 = vld [vmem:[%s5 + $0x28] sm:$0xff]
    %v6331 = vld [vmem:[%s5 + $0x30] sm:$0xff]
    %v6332 = vld [vmem:[%s5 + $0x38] sm:$0xff]
    %v6333 = vld [vmem:[%s5 + $0x40] sm:$0xff]
    %v6334 = vld [vmem:[%s5 + $0x48] sm:$0xff]
    %v6335 = vld [vmem:[%s5 + $0x50] sm:$0xff]
    %v6336 = vld [vmem:[%s5 + $0x58] sm:$0xff]
    %v6337 = vld [vmem:[%s5 + $0x60] sm:$0xff]
    %v6338 = vld [vmem:[%s5 + $0x68] sm:$0xff]
    %v6339 = vld [vmem:[%s5 + $0x70] sm:$0xff]
    %v6340 = vld [vmem:[%s5 + $0x78] sm:$0xff]
    %v6341 = vld [vmem:[%s5 + $0x80] sm:$0xff]
    %v6342 = vld [vmem:[%s5 + $0x88] sm:$0xff]
    %v6343 = vld [vmem:[%s5 + $0x90] sm:$0xff]
    %v6344 = vld [vmem:[%s5 + $0x98] sm:$0xff]
    %v6345 = vld [vmem:[%s5 + $0xa0] sm:$0xff]
    %v6346 = vld [vmem:[%s5 + $0xa8] sm:$0xff]
    %v6347 = vld [vmem:[%s5 + $0xb0] sm:$0xff]
    %v6348 = vld [vmem:[%s5 + $0xb8] sm:$0xff]
    %v6349 = vld [vmem:[%s5 + $0xc0] sm:$0xff]
    %v6350 = vld [vmem:[%s5 + $0xc8] sm:$0xff]
    %v6351 = vld [vmem:[%s5 + $0xd0] sm:$0xff]
    %v6352 = vld [vmem:[%s5 + $0xd8] sm:$0xff]
    %v6353 = vld [vmem:[%s5 + $0xe0] sm:$0xff]
    %v6354 = vld [vmem:[%s5 + $0xe8] sm:$0xff]
    %v6355 = vld [vmem:[%s5 + $0xf0] sm:$0xff]
    %v6356 = vld [vmem:[%s5 + $0xf8] sm:$0xff]
    %v6357 = vld [vmem:[%s5 + $0x100] sm:$0xff]
    %v6358 = vld [vmem:[%s5 + $0x108] sm:$0xff]
    %v6359 = vld [vmem:[%s5 + $0x110] sm:$0xff]
    %v6360 = vld [vmem:[%s5 + $0x118] sm:$0xff]
    %v6361 = vld [vmem:[%s5 + $0x120] sm:$0xff]
    %v6362 = vld [vmem:[%s5 + $0x128] sm:$0xff]
    %v6363 = vld [vmem:[%s5 + $0x130] sm:$0xff]
    %v6364 = vld [vmem:[%s5 + $0x138] sm:$0xff]
    %v6365 = vld [vmem:[%s5 + $0x140] sm:$0xff]
    %v6366 = vld [vmem:[%s5 + $0x148] sm:$0xff]
    %v6367 = vld [vmem:[%s5 + $0x150] sm:$0xff]
    %v6368 = vld [vmem:[%s5 + $0x158] sm:$0xff]
    %v6369 = vld [vmem:[%s5 + $0x160] sm:$0xff]
    %v6370 = vld [vmem:[%s5 + $0x168] sm:$0xff]
    %v6371 = vld [vmem:[%s5 + $0x170] sm:$0xff]
    %v6372 = vld [vmem:[%s5 + $0x178] sm:$0xff]
    %v6373 = vld [vmem:[%s5 + $0x180] sm:$0xff]
    %v6374 = vld [vmem:[%s5 + $0x188] sm:$0xff]
    %v6375 = vld [vmem:[%s5 + $0x190] sm:$0xff]
    %v6376 = vld [vmem:[%s5 + $0x198] sm:$0xff]
    %v6377 = vld [vmem:[%s5 + $0x1a0] sm:$0xff]
    %v6378 = vld [vmem:[%s5 + $0x1a8] sm:$0xff]
    %v6379 = vld [vmem:[%s5 + $0x1b0] sm:$0xff]
    %v6380 = vld [vmem:[%s5 + $0x1b8] sm:$0xff]
    %v6381 = vld [vmem:[%s5 + $0x1c0] sm:$0xff]
    %v6382 = vld [vmem:[%s5 + $0x1c8] sm:$0xff]
    %v6383 = vld [vmem:[%s5 + $0x1d0] sm:$0xff]
    %v6384 = vld [vmem:[%s5 + $0x1d8] sm:$0xff]
    %v6385 = vld [vmem:[%s5 + $0x1e0] sm:$0xff]
    %v6386 = vld [vmem:[%s5 + $0x1e8] sm:$0xff]
    %v6387 = vld [vmem:[%s5 + $0x1f0] sm:$0xff]
    %v6388 = vld [vmem:[%s5 + $0x1f8] sm:$0xff]
    %v6389 = vld [vmem:[%s5 + $0x200] sm:$0xff]
    %v6390 = vld [vmem:[%s5 + $0x208] sm:$0xff]
    %v6391 = vld [vmem:[%s5 + $0x210] sm:$0xff]
    %v6392 = vld [vmem:[%s5 + $0x218] sm:$0xff]
    %v6393 = vld [vmem:[%s5 + $0x220] sm:$0xff]
    %v6394 = vld [vmem:[%s5 + $0x228] sm:$0xff]
    %v6395 = vld [vmem:[%s5 + $0x230] sm:$0xff]
    %v6396 = vld [vmem:[%s5 + $0x238] sm:$0xff]
    %v6397 = vld [vmem:[%s5 + $0x240] sm:$0xff]
    %v6398 = vld [vmem:[%s5 + $0x248] sm:$0xff]
    %v6399 = vld [vmem:[%s5 + $0x250] sm:$0xff]
    %v6400 = vld [vmem:[%s5 + $0x258] sm:$0xff]
    %v6401 = vld [vmem:[%s5 + $0x260] sm:$0xff]
    %v6402 = vld [vmem:[%s5 + $0x268] sm:$0xff]
    %v6403 = vld [vmem:[%s5 + $0x270] sm:$0xff]
    %v6404 = vld [vmem:[%s5 + $0x278] sm:$0xff]
    %v6405 = vld [vmem:[%s5 + $0x280] sm:$0xff]
    %v6406 = vld [vmem:[%s5 + $0x288] sm:$0xff]
    %v6407 = vld [vmem:[%s5 + $0x290] sm:$0xff]
    %v6408 = vld [vmem:[%s5 + $0x298] sm:$0xff]
    %v6409 = vld [vmem:[%s5 + $0x2a0] sm:$0xff]
    %v6410 = vld [vmem:[%s5 + $0x2a8] sm:$0xff]
    %v6411 = vld [vmem:[%s5 + $0x2b0] sm:$0xff]
    %v6412 = vld [vmem:[%s5 + $0x2b8] sm:$0xff]
    %v6413 = vld [vmem:[%s5 + $0x2c0] sm:$0xff]
    %v6414 = vld [vmem:[%s5 + $0x2c8] sm:$0xff]
    %v6415 = vld [vmem:[%s5 + $0x2d0] sm:$0xff]
    %v6416 = vld [vmem:[%s5 + $0x2d8] sm:$0xff]
    %v6417 = vld [vmem:[%s5 + $0x2e0] sm:$0xff]
    %v6418 = vld [vmem:[%s5 + $0x2e8] sm:$0xff]
    %v6419 = vld [vmem:[%s5 + $0x2f0] sm:$0xff]
    %v6420 = vld [vmem:[%s5 + $0x2f8] sm:$0xff]
    %v6421 = vld [vmem:[%s5 + $0x300] sm:$0xff]
    %v6422 = vld [vmem:[%s5 + $0x308] sm:$0xff]
    %v6423 = vld [vmem:[%s5 + $0x310] sm:$0xff]
    %v6424 = vld [vmem:[%s5 + $0x318] sm:$0xff]
    %v6425 = vld [vmem:[%s5 + $0x320] sm:$0xff]
    %v6426 = vld [vmem:[%s5 + $0x328] sm:$0xff]
    %v6427 = vld [vmem:[%s5 + $0x330] sm:$0xff]
    %v6428 = vld [vmem:[%s5 + $0x338] sm:$0xff]
    %v6429 = vld [vmem:[%s5 + $0x340] sm:$0xff]
    %v6430 = vld [vmem:[%s5 + $0x348] sm:$0xff]
    %v6431 = vld [vmem:[%s5 + $0x350] sm:$0xff]
    %v6432 = vld [vmem:[%s5 + $0x358] sm:$0xff]
    %v6433 = vld [vmem:[%s5 + $0x360] sm:$0xff]
    %v6434 = vld [vmem:[%s5 + $0x368] sm:$0xff]
    %v6435 = vld [vmem:[%s5 + $0x370] sm:$0xff]
    %v6436 = vld [vmem:[%s5 + $0x378] sm:$0xff]
    %v6437 = vld [vmem:[%s5 + $0x380] sm:$0xff]
    %v6438 = vld [vmem:[%s5 + $0x388] sm:$0xff]
    %v6439 = vld [vmem:[%s5 + $0x390] sm:$0xff]
    %v6440 = vld [vmem:[%s5 + $0x398] sm:$0xff]
    %v6441 = vld [vmem:[%s5 + $0x3a0] sm:$0xff]
    %v6442 = vld [vmem:[%s5 + $0x3a8] sm:$0xff]
    %v6443 = vld [vmem:[%s5 + $0x3b0] sm:$0xff]
    %v6444 = vld [vmem:[%s5 + $0x3b8] sm:$0xff]
    %v6445 = vld [vmem:[%s5 + $0x3c0] sm:$0xff]
    %v6446 = vld [vmem:[%s5 + $0x3c8] sm:$0xff]
    %v6447 = vld [vmem:[%s5 + $0x3d0] sm:$0xff]
    %v6448 = vld [vmem:[%s5 + $0x3d8] sm:$0xff]
    %v6449 = vld [vmem:[%s5 + $0x3e0] sm:$0xff]
    %v6450 = vld [vmem:[%s5 + $0x3e8] sm:$0xff]
    %v6451 = vld [vmem:[%s5 + $0x3f0] sm:$0xff]
    %v6452 = vld [vmem:[%s5 + $0x3f8] sm:$0xff]
    %v6453 = vld [vmem:[%s5 + $0x400] sm:$0xff]
    %v6454 = vld [vmem:[%s5 + $0x408] sm:$0xff]
    %v6455 = vld [vmem:[%s5 + $0x410] sm:$0xff]
    %v6456 = vld [vmem:[%s5 + $0x418] sm:$0xff]
    %v6457 = vld [vmem:[%s5 + $0x420] sm:$0xff]
    %v6458 = vld [vmem:[%s5 + $0x428] sm:$0xff]
    %v6459 = vld [vmem:[%s5 + $0x430] sm:$0xff]
    %v6460 = vld [vmem:[%s5 + $0x438] sm:$0xff]
    %v6461 = vld [vmem:[%s5 + $0x440] sm:$0xff]
    %v6462 = vld [vmem:[%s5 + $0x448] sm:$0xff]
    %v6463 = vld [vmem:[%s5 + $0x450] sm:$0xff]
    %v6464 = vld [vmem:[%s5 + $0x458] sm:$0xff]
    %v6465 = vld [vmem:[%s5 + $0x460] sm:$0xff]
    %v6466 = vld [vmem:[%s5 + $0x468] sm:$0xff]
    %v6467 = vld [vmem:[%s5 + $0x470] sm:$0xff]
    %v6468 = vld [vmem:[%s5 + $0x478] sm:$0xff]
    %v6469 = vld [vmem:[%s5 + $0x480] sm:$0xff]
    %v6470 = vld [vmem:[%s5 + $0x488] sm:$0xff]
    %v6471 = vld [vmem:[%s5 + $0x490] sm:$0xff]
    %v6472 = vld [vmem:[%s5 + $0x498] sm:$0xff]
    %v6473 = vld [vmem:[%s5 + $0x4a0] sm:$0xff]
    %v6474 = vld [vmem:[%s5 + $0x4a8] sm:$0xff]
    %v6475 = vld [vmem:[%s5 + $0x4b0] sm:$0xff]
    %v6476 = vld [vmem:[%s5 + $0x4b8] sm:$0xff]
    %v6477 = vld [vmem:[%s5 + $0x4c0] sm:$0xff]
    %v6478 = vld [vmem:[%s5 + $0x4c8] sm:$0xff]
    %v6479 = vld [vmem:[%s5 + $0x4d0] sm:$0xff]
    %v6480 = vld [vmem:[%s5 + $0x4d8] sm:$0xff]
    %v6481 = vld [vmem:[%s5 + $0x4e0] sm:$0xff]
    %v6482 = vld [vmem:[%s5 + $0x4e8] sm:$0xff]
    %v6483 = vld [vmem:[%s5 + $0x4f0] sm:$0xff]
    %v6484 = vld [vmem:[%s5 + $0x4f8] sm:$0xff]
    %v6485 = vld [vmem:[%s5 + $0x500] sm:$0xff]
    %v6486 = vld [vmem:[%s5 + $0x508] sm:$0xff]
    %v6487 = vld [vmem:[%s5 + $0x510] sm:$0xff]
    %v6488 = vld [vmem:[%s5 + $0x518] sm:$0xff]
    %v6489 = vld [vmem:[%s5 + $0x520] sm:$0xff]
    %v6490 = vld [vmem:[%s5 + $0x528] sm:$0xff]
    %v6491 = vld [vmem:[%s5 + $0x530] sm:$0xff]
    %v6492 = vld [vmem:[%s5 + $0x538] sm:$0xff]
    %v6493 = vld [vmem:[%s5 + $0x540] sm:$0xff]
    %v6494 = vld [vmem:[%s5 + $0x548] sm:$0xff]
    %v6495 = vld [vmem:[%s5 + $0x550] sm:$0xff]
    %v6496 = vld [vmem:[%s5 + $0x558] sm:$0xff]
    %v6497 = vld [vmem:[%s5 + $0x560] sm:$0xff]
    %v6498 = vld [vmem:[%s5 + $0x568] sm:$0xff]
    %v6499 = vld [vmem:[%s5 + $0x570] sm:$0xff]
    %v6500 = vld [vmem:[%s5 + $0x578] sm:$0xff]
    %v6501 = vld [vmem:[%s5 + $0x580] sm:$0xff]
    %v6502 = vld [vmem:[%s5 + $0x588] sm:$0xff]
    %v6503 = vld [vmem:[%s5 + $0x590] sm:$0xff]
    %v6504 = vld [vmem:[%s5 + $0x598] sm:$0xff]
    %v6505 = vld [vmem:[%s5 + $0x5a0] sm:$0xff]
    %v6506 = vld [vmem:[%s5 + $0x5a8] sm:$0xff]
    %v6507 = vld [vmem:[%s5 + $0x5b0] sm:$0xff]
    %v6508 = vld [vmem:[%s5 + $0x5b8] sm:$0xff]
    %v6509 = vld [vmem:[%s5 + $0x5c0] sm:$0xff]
    %v6510 = vld [vmem:[%s5 + $0x5c8] sm:$0xff]
    %v6511 = vld [vmem:[%s5 + $0x5d0] sm:$0xff]
    %v6512 = vld [vmem:[%s5 + $0x5d8] sm:$0xff]
    %v6513 = vld [vmem:[%s5 + $0x5e0] sm:$0xff]
    %v6514 = vld [vmem:[%s5 + $0x5e8] sm:$0xff]
    %v6515 = vld [vmem:[%s5 + $0x5f0] sm:$0xff]
    %v6516 = vld [vmem:[%s5 + $0x5f8] sm:$0xff]
    %v6517 = vld [vmem:[%s5 + $0x600] sm:$0xff]
    %v6518 = vld [vmem:[%s5 + $0x608] sm:$0xff]
    %v6519 = vld [vmem:[%s5 + $0x610] sm:$0xff]
    %v6520 = vld [vmem:[%s5 + $0x618] sm:$0xff]
    %v6521 = vld [vmem:[%s5 + $0x620] sm:$0xff]
    %v6522 = vld [vmem:[%s5 + $0x628] sm:$0xff]
    %v6523 = vld [vmem:[%s5 + $0x630] sm:$0xff]
    %v6524 = vld [vmem:[%s5 + $0x638] sm:$0xff]
    %v6525 = vld [vmem:[%s5 + $0x640] sm:$0xff]
    %v6526 = vld [vmem:[%s5 + $0x648] sm:$0xff]
    %v6527 = vld [vmem:[%s5 + $0x650] sm:$0xff]
    %v6528 = vld [vmem:[%s5 + $0x658] sm:$0xff]
    %v6529 = vld [vmem:[%s5 + $0x660] sm:$0xff]
    %v6530 = vld [vmem:[%s5 + $0x668] sm:$0xff]
    %v6531 = vld [vmem:[%s5 + $0x670] sm:$0xff]
    %v6532 = vld [vmem:[%s5 + $0x678] sm:$0xff]
    %v6533 = vld [vmem:[%s5 + $0x680] sm:$0xff]
    %v6534 = vld [vmem:[%s5 + $0x688] sm:$0xff]
    %v6535 = vld [vmem:[%s5 + $0x690] sm:$0xff]
    %v6536 = vld [vmem:[%s5 + $0x698] sm:$0xff]
    %v6537 = vld [vmem:[%s5 + $0x6a0] sm:$0xff]
    %v6538 = vld [vmem:[%s5 + $0x6a8] sm:$0xff]
    %v6539 = vld [vmem:[%s5 + $0x6b0] sm:$0xff]
    %v6540 = vld [vmem:[%s5 + $0x6b8] sm:$0xff]
    %v6541 = vld [vmem:[%s5 + $0x6c0] sm:$0xff]
    %v6542 = vld [vmem:[%s5 + $0x6c8] sm:$0xff]
    %v6543 = vld [vmem:[%s5 + $0x6d0] sm:$0xff]
    %v6544 = vld [vmem:[%s5 + $0x6d8] sm:$0xff]
    %v6545 = vld [vmem:[%s5 + $0x6e0] sm:$0xff]
    %v6546 = vld [vmem:[%s5 + $0x6e8] sm:$0xff]
    %v6547 = vld [vmem:[%s5 + $0x6f0] sm:$0xff]
    %v6548 = vld [vmem:[%s5 + $0x6f8] sm:$0xff]
    %v6549 = vld [vmem:[%s5 + $0x700] sm:$0xff]
    %v6550 = vld [vmem:[%s5 + $0x708] sm:$0xff]
    %v6551 = vld [vmem:[%s5 + $0x710] sm:$0xff]
    %v6552 = vld [vmem:[%s5 + $0x718] sm:$0xff]
    %v6553 = vld [vmem:[%s5 + $0x720] sm:$0xff]
    %v6554 = vld [vmem:[%s5 + $0x728] sm:$0xff]
    %v6555 = vld [vmem:[%s5 + $0x730] sm:$0xff]
    %v6556 = vld [vmem:[%s5 + $0x738] sm:$0xff]
    %v6557 = vld [vmem:[%s5 + $0x740] sm:$0xff]
    %v6558 = vld [vmem:[%s5 + $0x748] sm:$0xff]
    %v6559 = vld [vmem:[%s5 + $0x750] sm:$0xff]
    %v6560 = vld [vmem:[%s5 + $0x758] sm:$0xff]
    %v6561 = vld [vmem:[%s5 + $0x760] sm:$0xff]
    %v6562 = vld [vmem:[%s5 + $0x768] sm:$0xff]
    %v6563 = vld [vmem:[%s5 + $0x770] sm:$0xff]
    %v6564 = vld [vmem:[%s5 + $0x778] sm:$0xff]
    %v6565 = vld [vmem:[%s5 + $0x780] sm:$0xff]
    %v6566 = vld [vmem:[%s5 + $0x788] sm:$0xff]
    %v6567 = vld [vmem:[%s5 + $0x790] sm:$0xff]
    %v6568 = vld [vmem:[%s5 + $0x798] sm:$0xff]
    %v6569 = vld [vmem:[%s5 + $0x7a0] sm:$0xff]
    %v6570 = vld [vmem:[%s5 + $0x7a8] sm:$0xff]
    %v6571 = vld [vmem:[%s5 + $0x7b0] sm:$0xff]
    %v6572 = vld [vmem:[%s5 + $0x7b8] sm:$0xff]
    %v6573 = vld [vmem:[%s5 + $0x7c0] sm:$0xff]
    %v6574 = vld [vmem:[%s5 + $0x7c8] sm:$0xff]
    %v6575 = vld [vmem:[%s5 + $0x7d0] sm:$0xff]
    %v6576 = vld [vmem:[%s5 + $0x7d8] sm:$0xff]
    %v6577 = vld [vmem:[%s5 + $0x7e0] sm:$0xff]
    %v6578 = vld [vmem:[%s5 + $0x7e8] sm:$0xff]
    %v6579 = vld [vmem:[%s5 + $0x7f0] sm:$0xff]
    %v6580 = vld [vmem:[%s5 + $0x7f8] sm:$0xff]
    %v6581 = vld [vmem:[%s6] sm:$0xf]
    %v6583 = vlaneseq
    %v6584 = vshrl.u32 %v6583, 7
    %v6585 = vsub.s32 0, %v6584
    %v6586 = vrot.slane %v6581, %v6585
    %v6587 = vlaneseq
    %v6588 = vshrl.u32 %v6587, 7
    %v6589 = vsub.s32 1, %v6588
    %v6590 = vrot.slane %v6581, %v6589
    %v6591 = vlaneseq
    %v6592 = vshrl.u32 %v6591, 7
    %v6593 = vsub.s32 2, %v6592
    %v6594 = vrot.slane %v6581, %v6593
    %v6595 = vlaneseq
    %v6596 = vshrl.u32 %v6595, 7
    %v6597 = vsub.s32 3, %v6596
    %v6598 = vrot.slane %v6581, %v6597
    %v6859 = vunpack.c.l.b16 %v6325
    %v6860 = vunpack.c.h.b16 %v6325
    %v6861 = vunpack.c.l.b16 %v6326
    %v6862 = vunpack.c.h.b16 %v6326
    %v6863 = vunpack.c.l.b16 %v6327
    %v6864 = vunpack.c.h.b16 %v6327
    %v6865 = vunpack.c.l.b16 %v6328
    %v6866 = vunpack.c.h.b16 %v6328
    %v6867 = vunpack.c.l.b16 %v6329
    %v6868 = vunpack.c.h.b16 %v6329
    %v6869 = vunpack.c.l.b16 %v6330
    %v6870 = vunpack.c.h.b16 %v6330
    %v6871 = vunpack.c.l.b16 %v6331
    %v6872 = vunpack.c.h.b16 %v6331
    %v6873 = vunpack.c.l.b16 %v6332
    %v6874 = vunpack.c.h.b16 %v6332
    %v6875 = vunpack.c.l.b16 %v6333
    %v6876 = vunpack.c.h.b16 %v6333
    %v6877 = vunpack.c.l.b16 %v6334
    %v6878 = vunpack.c.h.b16 %v6334
    %v6879 = vunpack.c.l.b16 %v6335
    %v6880 = vunpack.c.h.b16 %v6335
    %v6881 = vunpack.c.l.b16 %v6336
    %v6882 = vunpack.c.h.b16 %v6336
    %v6883 = vunpack.c.l.b16 %v6337
    %v6884 = vunpack.c.h.b16 %v6337
    %v6885 = vunpack.c.l.b16 %v6338
    %v6886 = vunpack.c.h.b16 %v6338
    %v6887 = vunpack.c.l.b16 %v6339
    %v6888 = vunpack.c.h.b16 %v6339
    %v6889 = vunpack.c.l.b16 %v6340
    %v6890 = vunpack.c.h.b16 %v6340
    %v6891 = vunpack.c.l.b16 %v6341
    %v6892 = vunpack.c.h.b16 %v6341
    %v6893 = vunpack.c.l.b16 %v6342
    %v6894 = vunpack.c.h.b16 %v6342
    %v6895 = vunpack.c.l.b16 %v6343
    %v6896 = vunpack.c.h.b16 %v6343
    %v6897 = vunpack.c.l.b16 %v6344
    %v6898 = vunpack.c.h.b16 %v6344
    %v6899 = vunpack.c.l.b16 %v6345
    %v6900 = vunpack.c.h.b16 %v6345
    %v6901 = vunpack.c.l.b16 %v6346
    %v6902 = vunpack.c.h.b16 %v6346
    %v6903 = vunpack.c.l.b16 %v6347
    %v6904 = vunpack.c.h.b16 %v6347
    %v6905 = vunpack.c.l.b16 %v6348
    %v6906 = vunpack.c.h.b16 %v6348
    %v6907 = vunpack.c.l.b16 %v6349
    %v6908 = vunpack.c.h.b16 %v6349
    %v6909 = vunpack.c.l.b16 %v6350
    %v6910 = vunpack.c.h.b16 %v6350
    %v6911 = vunpack.c.l.b16 %v6351
    %v6912 = vunpack.c.h.b16 %v6351
    %v6913 = vunpack.c.l.b16 %v6352
    %v6914 = vunpack.c.h.b16 %v6352
    %v6915 = vunpack.c.l.b16 %v6353
    %v6916 = vunpack.c.h.b16 %v6353
    %v6917 = vunpack.c.l.b16 %v6354
    %v6918 = vunpack.c.h.b16 %v6354
    %v6919 = vunpack.c.l.b16 %v6355
    %v6920 = vunpack.c.h.b16 %v6355
    %v6921 = vunpack.c.l.b16 %v6356
    %v6922 = vunpack.c.h.b16 %v6356
    %v6923 = vunpack.c.l.b16 %v6357
    %v6924 = vunpack.c.h.b16 %v6357
    %v6925 = vunpack.c.l.b16 %v6358
    %v6926 = vunpack.c.h.b16 %v6358
    %v6927 = vunpack.c.l.b16 %v6359
    %v6928 = vunpack.c.h.b16 %v6359
    %v6929 = vunpack.c.l.b16 %v6360
    %v6930 = vunpack.c.h.b16 %v6360
    %v6931 = vunpack.c.l.b16 %v6361
    %v6932 = vunpack.c.h.b16 %v6361
    %v6933 = vunpack.c.l.b16 %v6362
    %v6934 = vunpack.c.h.b16 %v6362
    %v6935 = vunpack.c.l.b16 %v6363
    %v6936 = vunpack.c.h.b16 %v6363
    %v6937 = vunpack.c.l.b16 %v6364
    %v6938 = vunpack.c.h.b16 %v6364
    %v6939 = vunpack.c.l.b16 %v6365
    %v6940 = vunpack.c.h.b16 %v6365
    %v6941 = vunpack.c.l.b16 %v6366
    %v6942 = vunpack.c.h.b16 %v6366
    %v6943 = vunpack.c.l.b16 %v6367
    %v6944 = vunpack.c.h.b16 %v6367
    %v6945 = vunpack.c.l.b16 %v6368
    %v6946 = vunpack.c.h.b16 %v6368
    %v6947 = vunpack.c.l.b16 %v6369
    %v6948 = vunpack.c.h.b16 %v6369
    %v6949 = vunpack.c.l.b16 %v6370
    %v6950 = vunpack.c.h.b16 %v6370
    %v6951 = vunpack.c.l.b16 %v6371
    %v6952 = vunpack.c.h.b16 %v6371
    %v6953 = vunpack.c.l.b16 %v6372
    %v6954 = vunpack.c.h.b16 %v6372
    %v6955 = vunpack.c.l.b16 %v6373
    %v6956 = vunpack.c.h.b16 %v6373
    %v6957 = vunpack.c.l.b16 %v6374
    %v6958 = vunpack.c.h.b16 %v6374
    %v6959 = vunpack.c.l.b16 %v6375
    %v6960 = vunpack.c.h.b16 %v6375
    %v6961 = vunpack.c.l.b16 %v6376
    %v6962 = vunpack.c.h.b16 %v6376
    %v6963 = vunpack.c.l.b16 %v6377
    %v6964 = vunpack.c.h.b16 %v6377
    %v6965 = vunpack.c.l.b16 %v6378
    %v6966 = vunpack.c.h.b16 %v6378
    %v6967 = vunpack.c.l.b16 %v6379
    %v6968 = vunpack.c.h.b16 %v6379
    %v6969 = vunpack.c.l.b16 %v6380
    %v6970 = vunpack.c.h.b16 %v6380
    %v6971 = vunpack.c.l.b16 %v6381
    %v6972 = vunpack.c.h.b16 %v6381
    %v6973 = vunpack.c.l.b16 %v6382
    %v6974 = vunpack.c.h.b16 %v6382
    %v6975 = vunpack.c.l.b16 %v6383
    %v6976 = vunpack.c.h.b16 %v6383
    %v6977 = vunpack.c.l.b16 %v6384
    %v6978 = vunpack.c.h.b16 %v6384
    %v6979 = vunpack.c.l.b16 %v6385
    %v6980 = vunpack.c.h.b16 %v6385
    %v6981 = vunpack.c.l.b16 %v6386
    %v6982 = vunpack.c.h.b16 %v6386
    %v6983 = vunpack.c.l.b16 %v6387
    %v6984 = vunpack.c.h.b16 %v6387
    %v6985 = vunpack.c.l.b16 %v6388
    %v6986 = vunpack.c.h.b16 %v6388
    %v6987 = vunpack.c.l.b16 %v6389
    %v6988 = vunpack.c.h.b16 %v6389
    %v6989 = vunpack.c.l.b16 %v6390
    %v6990 = vunpack.c.h.b16 %v6390
    %v6991 = vunpack.c.l.b16 %v6391
    %v6992 = vunpack.c.h.b16 %v6391
    %v6993 = vunpack.c.l.b16 %v6392
    %v6994 = vunpack.c.h.b16 %v6392
    %v6995 = vunpack.c.l.b16 %v6393
    %v6996 = vunpack.c.h.b16 %v6393
    %v6997 = vunpack.c.l.b16 %v6394
    %v6998 = vunpack.c.h.b16 %v6394
    %v6999 = vunpack.c.l.b16 %v6395
    %v7000 = vunpack.c.h.b16 %v6395
    %v7001 = vunpack.c.l.b16 %v6396
    %v7002 = vunpack.c.h.b16 %v6396
    %v7003 = vunpack.c.l.b16 %v6397
    %v7004 = vunpack.c.h.b16 %v6397
    %v7005 = vunpack.c.l.b16 %v6398
    %v7006 = vunpack.c.h.b16 %v6398
    %v7007 = vunpack.c.l.b16 %v6399
    %v7008 = vunpack.c.h.b16 %v6399
    %v7009 = vunpack.c.l.b16 %v6400
    %v7010 = vunpack.c.h.b16 %v6400
    %v7011 = vunpack.c.l.b16 %v6401
    %v7012 = vunpack.c.h.b16 %v6401
    %v7013 = vunpack.c.l.b16 %v6402
    %v7014 = vunpack.c.h.b16 %v6402
    %v7015 = vunpack.c.l.b16 %v6403
    %v7016 = vunpack.c.h.b16 %v6403
    %v7017 = vunpack.c.l.b16 %v6404
    %v7018 = vunpack.c.h.b16 %v6404
    %v7019 = vunpack.c.l.b16 %v6405
    %v7020 = vunpack.c.h.b16 %v6405
    %v7021 = vunpack.c.l.b16 %v6406
    %v7022 = vunpack.c.h.b16 %v6406
    %v7023 = vunpack.c.l.b16 %v6407
    %v7024 = vunpack.c.h.b16 %v6407
    %v7025 = vunpack.c.l.b16 %v6408
    %v7026 = vunpack.c.h.b16 %v6408
    %v7027 = vunpack.c.l.b16 %v6409
    %v7028 = vunpack.c.h.b16 %v6409
    %v7029 = vunpack.c.l.b16 %v6410
    %v7030 = vunpack.c.h.b16 %v6410
    %v7031 = vunpack.c.l.b16 %v6411
    %v7032 = vunpack.c.h.b16 %v6411
    %v7033 = vunpack.c.l.b16 %v6412
    %v7034 = vunpack.c.h.b16 %v6412
    %v7035 = vunpack.c.l.b16 %v6413
    %v7036 = vunpack.c.h.b16 %v6413
    %v7037 = vunpack.c.l.b16 %v6414
    %v7038 = vunpack.c.h.b16 %v6414
    %v7039 = vunpack.c.l.b16 %v6415
    %v7040 = vunpack.c.h.b16 %v6415
    %v7041 = vunpack.c.l.b16 %v6416
    %v7042 = vunpack.c.h.b16 %v6416
    %v7043 = vunpack.c.l.b16 %v6417
    %v7044 = vunpack.c.h.b16 %v6417
    %v7045 = vunpack.c.l.b16 %v6418
    %v7046 = vunpack.c.h.b16 %v6418
    %v7047 = vunpack.c.l.b16 %v6419
    %v7048 = vunpack.c.h.b16 %v6419
    %v7049 = vunpack.c.l.b16 %v6420
    %v7050 = vunpack.c.h.b16 %v6420
    %v7051 = vunpack.c.l.b16 %v6421
    %v7052 = vunpack.c.h.b16 %v6421
    %v7053 = vunpack.c.l.b16 %v6422
    %v7054 = vunpack.c.h.b16 %v6422
    %v7055 = vunpack.c.l.b16 %v6423
    %v7056 = vunpack.c.h.b16 %v6423
    %v7057 = vunpack.c.l.b16 %v6424
    %v7058 = vunpack.c.h.b16 %v6424
    %v7059 = vunpack.c.l.b16 %v6425
    %v7060 = vunpack.c.h.b16 %v6425
    %v7061 = vunpack.c.l.b16 %v6426
    %v7062 = vunpack.c.h.b16 %v6426
    %v7063 = vunpack.c.l.b16 %v6427
    %v7064 = vunpack.c.h.b16 %v6427
    %v7065 = vunpack.c.l.b16 %v6428
    %v7066 = vunpack.c.h.b16 %v6428
    %v7067 = vunpack.c.l.b16 %v6429
    %v7068 = vunpack.c.h.b16 %v6429
    %v7069 = vunpack.c.l.b16 %v6430
    %v7070 = vunpack.c.h.b16 %v6430
    %v7071 = vunpack.c.l.b16 %v6431
    %v7072 = vunpack.c.h.b16 %v6431
    %v7073 = vunpack.c.l.b16 %v6432
    %v7074 = vunpack.c.h.b16 %v6432
    %v7075 = vunpack.c.l.b16 %v6433
    %v7076 = vunpack.c.h.b16 %v6433
    %v7077 = vunpack.c.l.b16 %v6434
    %v7078 = vunpack.c.h.b16 %v6434
    %v7079 = vunpack.c.l.b16 %v6435
    %v7080 = vunpack.c.h.b16 %v6435
    %v7081 = vunpack.c.l.b16 %v6436
    %v7082 = vunpack.c.h.b16 %v6436
    %v7083 = vunpack.c.l.b16 %v6437
    %v7084 = vunpack.c.h.b16 %v6437
    %v7085 = vunpack.c.l.b16 %v6438
    %v7086 = vunpack.c.h.b16 %v6438
    %v7087 = vunpack.c.l.b16 %v6439
    %v7088 = vunpack.c.h.b16 %v6439
    %v7089 = vunpack.c.l.b16 %v6440
    %v7090 = vunpack.c.h.b16 %v6440
    %v7091 = vunpack.c.l.b16 %v6441
    %v7092 = vunpack.c.h.b16 %v6441
    %v7093 = vunpack.c.l.b16 %v6442
    %v7094 = vunpack.c.h.b16 %v6442
    %v7095 = vunpack.c.l.b16 %v6443
    %v7096 = vunpack.c.h.b16 %v6443
    %v7097 = vunpack.c.l.b16 %v6444
    %v7098 = vunpack.c.h.b16 %v6444
    %v7099 = vunpack.c.l.b16 %v6445
    %v7100 = vunpack.c.h.b16 %v6445
    %v7101 = vunpack.c.l.b16 %v6446
    %v7102 = vunpack.c.h.b16 %v6446
    %v7103 = vunpack.c.l.b16 %v6447
    %v7104 = vunpack.c.h.b16 %v6447
    %v7105 = vunpack.c.l.b16 %v6448
    %v7106 = vunpack.c.h.b16 %v6448
    %v7107 = vunpack.c.l.b16 %v6449
    %v7108 = vunpack.c.h.b16 %v6449
    %v7109 = vunpack.c.l.b16 %v6450
    %v7110 = vunpack.c.h.b16 %v6450
    %v7111 = vunpack.c.l.b16 %v6451
    %v7112 = vunpack.c.h.b16 %v6451
    %v7113 = vunpack.c.l.b16 %v6452
    %v7114 = vunpack.c.h.b16 %v6452
    %v7115 = vunpack.c.l.b16 %v6453
    %v7116 = vunpack.c.h.b16 %v6453
    %v7117 = vunpack.c.l.b16 %v6454
    %v7118 = vunpack.c.h.b16 %v6454
    %v7119 = vunpack.c.l.b16 %v6455
    %v7120 = vunpack.c.h.b16 %v6455
    %v7121 = vunpack.c.l.b16 %v6456
    %v7122 = vunpack.c.h.b16 %v6456
    %v7123 = vunpack.c.l.b16 %v6457
    %v7124 = vunpack.c.h.b16 %v6457
    %v7125 = vunpack.c.l.b16 %v6458
    %v7126 = vunpack.c.h.b16 %v6458
    %v7127 = vunpack.c.l.b16 %v6459
    %v7128 = vunpack.c.h.b16 %v6459
    %v7129 = vunpack.c.l.b16 %v6460
    %v7130 = vunpack.c.h.b16 %v6460
    %v7131 = vunpack.c.l.b16 %v6461
    %v7132 = vunpack.c.h.b16 %v6461
    %v7133 = vunpack.c.l.b16 %v6462
    %v7134 = vunpack.c.h.b16 %v6462
    %v7135 = vunpack.c.l.b16 %v6463
    %v7136 = vunpack.c.h.b16 %v6463
    %v7137 = vunpack.c.l.b16 %v6464
    %v7138 = vunpack.c.h.b16 %v6464
    %v7139 = vunpack.c.l.b16 %v6465
    %v7140 = vunpack.c.h.b16 %v6465
    %v7141 = vunpack.c.l.b16 %v6466
    %v7142 = vunpack.c.h.b16 %v6466
    %v7143 = vunpack.c.l.b16 %v6467
    %v7144 = vunpack.c.h.b16 %v6467
    %v7145 = vunpack.c.l.b16 %v6468
    %v7146 = vunpack.c.h.b16 %v6468
    %v7147 = vunpack.c.l.b16 %v6469
    %v7148 = vunpack.c.h.b16 %v6469
    %v7149 = vunpack.c.l.b16 %v6470
    %v7150 = vunpack.c.h.b16 %v6470
    %v7151 = vunpack.c.l.b16 %v6471
    %v7152 = vunpack.c.h.b16 %v6471
    %v7153 = vunpack.c.l.b16 %v6472
    %v7154 = vunpack.c.h.b16 %v6472
    %v7155 = vunpack.c.l.b16 %v6473
    %v7156 = vunpack.c.h.b16 %v6473
    %v7157 = vunpack.c.l.b16 %v6474
    %v7158 = vunpack.c.h.b16 %v6474
    %v7159 = vunpack.c.l.b16 %v6475
    %v7160 = vunpack.c.h.b16 %v6475
    %v7161 = vunpack.c.l.b16 %v6476
    %v7162 = vunpack.c.h.b16 %v6476
    %v7163 = vunpack.c.l.b16 %v6477
    %v7164 = vunpack.c.h.b16 %v6477
    %v7165 = vunpack.c.l.b16 %v6478
    %v7166 = vunpack.c.h.b16 %v6478
    %v7167 = vunpack.c.l.b16 %v6479
    %v7168 = vunpack.c.h.b16 %v6479
    %v7169 = vunpack.c.l.b16 %v6480
    %v7170 = vunpack.c.h.b16 %v6480
    %v7171 = vunpack.c.l.b16 %v6481
    %v7172 = vunpack.c.h.b16 %v6481
    %v7173 = vunpack.c.l.b16 %v6482
    %v7174 = vunpack.c.h.b16 %v6482
    %v7175 = vunpack.c.l.b16 %v6483
    %v7176 = vunpack.c.h.b16 %v6483
    %v7177 = vunpack.c.l.b16 %v6484
    %v7178 = vunpack.c.h.b16 %v6484
    %v7179 = vunpack.c.l.b16 %v6485
    %v7180 = vunpack.c.h.b16 %v6485
    %v7181 = vunpack.c.l.b16 %v6486
    %v7182 = vunpack.c.h.b16 %v6486
    %v7183 = vunpack.c.l.b16 %v6487
    %v7184 = vunpack.c.h.b16 %v6487
    %v7185 = vunpack.c.l.b16 %v6488
    %v7186 = vunpack.c.h.b16 %v6488
    %v7187 = vunpack.c.l.b16 %v6489
    %v7188 = vunpack.c.h.b16 %v6489
    %v7189 = vunpack.c.l.b16 %v6490
    %v7190 = vunpack.c.h.b16 %v6490
    %v7191 = vunpack.c.l.b16 %v6491
    %v7192 = vunpack.c.h.b16 %v6491
    %v7193 = vunpack.c.l.b16 %v6492
    %v7194 = vunpack.c.h.b16 %v6492
    %v7195 = vunpack.c.l.b16 %v6493
    %v7196 = vunpack.c.h.b16 %v6493
    %v7197 = vunpack.c.l.b16 %v6494
    %v7198 = vunpack.c.h.b16 %v6494
    %v7199 = vunpack.c.l.b16 %v6495
    %v7200 = vunpack.c.h.b16 %v6495
    %v7201 = vunpack.c.l.b16 %v6496
    %v7202 = vunpack.c.h.b16 %v6496
    %v7203 = vunpack.c.l.b16 %v6497
    %v7204 = vunpack.c.h.b16 %v6497
    %v7205 = vunpack.c.l.b16 %v6498
    %v7206 = vunpack.c.h.b16 %v6498
    %v7207 = vunpack.c.l.b16 %v6499
    %v7208 = vunpack.c.h.b16 %v6499
    %v7209 = vunpack.c.l.b16 %v6500
    %v7210 = vunpack.c.h.b16 %v6500
    %v7211 = vunpack.c.l.b16 %v6501
    %v7212 = vunpack.c.h.b16 %v6501
    %v7213 = vunpack.c.l.b16 %v6502
    %v7214 = vunpack.c.h.b16 %v6502
    %v7215 = vunpack.c.l.b16 %v6503
    %v7216 = vunpack.c.h.b16 %v6503
    %v7217 = vunpack.c.l.b16 %v6504
    %v7218 = vunpack.c.h.b16 %v6504
    %v7219 = vunpack.c.l.b16 %v6505
    %v7220 = vunpack.c.h.b16 %v6505
    %v7221 = vunpack.c.l.b16 %v6506
    %v7222 = vunpack.c.h.b16 %v6506
    %v7223 = vunpack.c.l.b16 %v6507
    %v7224 = vunpack.c.h.b16 %v6507
    %v7225 = vunpack.c.l.b16 %v6508
    %v7226 = vunpack.c.h.b16 %v6508
    %v7227 = vunpack.c.l.b16 %v6509
    %v7228 = vunpack.c.h.b16 %v6509
    %v7229 = vunpack.c.l.b16 %v6510
    %v7230 = vunpack.c.h.b16 %v6510
    %v7231 = vunpack.c.l.b16 %v6511
    %v7232 = vunpack.c.h.b16 %v6511
    %v7233 = vunpack.c.l.b16 %v6512
    %v7234 = vunpack.c.h.b16 %v6512
    %v7235 = vunpack.c.l.b16 %v6513
    %v7236 = vunpack.c.h.b16 %v6513
    %v7237 = vunpack.c.l.b16 %v6514
    %v7238 = vunpack.c.h.b16 %v6514
    %v7239 = vunpack.c.l.b16 %v6515
    %v7240 = vunpack.c.h.b16 %v6515
    %v7241 = vunpack.c.l.b16 %v6516
    %v7242 = vunpack.c.h.b16 %v6516
    %v7243 = vunpack.c.l.b16 %v6517
    %v7244 = vunpack.c.h.b16 %v6517
    %v7245 = vunpack.c.l.b16 %v6518
    %v7246 = vunpack.c.h.b16 %v6518
    %v7247 = vunpack.c.l.b16 %v6519
    %v7248 = vunpack.c.h.b16 %v6519
    %v7249 = vunpack.c.l.b16 %v6520
    %v7250 = vunpack.c.h.b16 %v6520
    %v7251 = vunpack.c.l.b16 %v6521
    %v7252 = vunpack.c.h.b16 %v6521
    %v7253 = vunpack.c.l.b16 %v6522
    %v7254 = vunpack.c.h.b16 %v6522
    %v7255 = vunpack.c.l.b16 %v6523
    %v7256 = vunpack.c.h.b16 %v6523
    %v7257 = vunpack.c.l.b16 %v6524
    %v7258 = vunpack.c.h.b16 %v6524
    %v7259 = vunpack.c.l.b16 %v6525
    %v7260 = vunpack.c.h.b16 %v6525
    %v7261 = vunpack.c.l.b16 %v6526
    %v7262 = vunpack.c.h.b16 %v6526
    %v7263 = vunpack.c.l.b16 %v6527
    %v7264 = vunpack.c.h.b16 %v6527
    %v7265 = vunpack.c.l.b16 %v6528
    %v7266 = vunpack.c.h.b16 %v6528
    %v7267 = vunpack.c.l.b16 %v6529
    %v7268 = vunpack.c.h.b16 %v6529
    %v7269 = vunpack.c.l.b16 %v6530
    %v7270 = vunpack.c.h.b16 %v6530
    %v7271 = vunpack.c.l.b16 %v6531
    %v7272 = vunpack.c.h.b16 %v6531
    %v7273 = vunpack.c.l.b16 %v6532
    %v7274 = vunpack.c.h.b16 %v6532
    %v7275 = vunpack.c.l.b16 %v6533
    %v7276 = vunpack.c.h.b16 %v6533
    %v7277 = vunpack.c.l.b16 %v6534
    %v7278 = vunpack.c.h.b16 %v6534
    %v7279 = vunpack.c.l.b16 %v6535
    %v7280 = vunpack.c.h.b16 %v6535
    %v7281 = vunpack.c.l.b16 %v6536
    %v7282 = vunpack.c.h.b16 %v6536
    %v7283 = vunpack.c.l.b16 %v6537
    %v7284 = vunpack.c.h.b16 %v6537
    %v7285 = vunpack.c.l.b16 %v6538
    %v7286 = vunpack.c.h.b16 %v6538
    %v7287 = vunpack.c.l.b16 %v6539
    %v7288 = vunpack.c.h.b16 %v6539
    %v7289 = vunpack.c.l.b16 %v6540
    %v7290 = vunpack.c.h.b16 %v6540
    %v7291 = vunpack.c.l.b16 %v6541
    %v7292 = vunpack.c.h.b16 %v6541
    %v7293 = vunpack.c.l.b16 %v6542
    %v7294 = vunpack.c.h.b16 %v6542
    %v7295 = vunpack.c.l.b16 %v6543
    %v7296 = vunpack.c.h.b16 %v6543
    %v7297 = vunpack.c.l.b16 %v6544
    %v7298 = vunpack.c.h.b16 %v6544
    %v7299 = vunpack.c.l.b16 %v6545
    %v7300 = vunpack.c.h.b16 %v6545
    %v7301 = vunpack.c.l.b16 %v6546
    %v7302 = vunpack.c.h.b16 %v6546
    %v7303 = vunpack.c.l.b16 %v6547
    %v7304 = vunpack.c.h.b16 %v6547
    %v7305 = vunpack.c.l.b16 %v6548
    %v7306 = vunpack.c.h.b16 %v6548
    %v7307 = vunpack.c.l.b16 %v6549
    %v7308 = vunpack.c.h.b16 %v6549
    %v7309 = vunpack.c.l.b16 %v6550
    %v7310 = vunpack.c.h.b16 %v6550
    %v7311 = vunpack.c.l.b16 %v6551
    %v7312 = vunpack.c.h.b16 %v6551
    %v7313 = vunpack.c.l.b16 %v6552
    %v7314 = vunpack.c.h.b16 %v6552
    %v7315 = vunpack.c.l.b16 %v6553
    %v7316 = vunpack.c.h.b16 %v6553
    %v7317 = vunpack.c.l.b16 %v6554
    %v7318 = vunpack.c.h.b16 %v6554
    %v7319 = vunpack.c.l.b16 %v6555
    %v7320 = vunpack.c.h.b16 %v6555
    %v7321 = vunpack.c.l.b16 %v6556
    %v7322 = vunpack.c.h.b16 %v6556
    %v7323 = vunpack.c.l.b16 %v6557
    %v7324 = vunpack.c.h.b16 %v6557
    %v7325 = vunpack.c.l.b16 %v6558
    %v7326 = vunpack.c.h.b16 %v6558
    %v7327 = vunpack.c.l.b16 %v6559
    %v7328 = vunpack.c.h.b16 %v6559
    %v7329 = vunpack.c.l.b16 %v6560
    %v7330 = vunpack.c.h.b16 %v6560
    %v7331 = vunpack.c.l.b16 %v6561
    %v7332 = vunpack.c.h.b16 %v6561
    %v7333 = vunpack.c.l.b16 %v6562
    %v7334 = vunpack.c.h.b16 %v6562
    %v7335 = vunpack.c.l.b16 %v6563
    %v7336 = vunpack.c.h.b16 %v6563
    %v7337 = vunpack.c.l.b16 %v6564
    %v7338 = vunpack.c.h.b16 %v6564
    %v7339 = vunpack.c.l.b16 %v6565
    %v7340 = vunpack.c.h.b16 %v6565
    %v7341 = vunpack.c.l.b16 %v6566
    %v7342 = vunpack.c.h.b16 %v6566
    %v7343 = vunpack.c.l.b16 %v6567
    %v7344 = vunpack.c.h.b16 %v6567
    %v7345 = vunpack.c.l.b16 %v6568
    %v7346 = vunpack.c.h.b16 %v6568
    %v7347 = vunpack.c.l.b16 %v6569
    %v7348 = vunpack.c.h.b16 %v6569
    %v7349 = vunpack.c.l.b16 %v6570
    %v7350 = vunpack.c.h.b16 %v6570
    %v7351 = vunpack.c.l.b16 %v6571
    %v7352 = vunpack.c.h.b16 %v6571
    %v7353 = vunpack.c.l.b16 %v6572
    %v7354 = vunpack.c.h.b16 %v6572
    %v7355 = vunpack.c.l.b16 %v6573
    %v7356 = vunpack.c.h.b16 %v6573
    %v7357 = vunpack.c.l.b16 %v6574
    %v7358 = vunpack.c.h.b16 %v6574
    %v7359 = vunpack.c.l.b16 %v6575
    %v7360 = vunpack.c.h.b16 %v6575
    %v7361 = vunpack.c.l.b16 %v6576
    %v7362 = vunpack.c.h.b16 %v6576
    %v7363 = vunpack.c.l.b16 %v6577
    %v7364 = vunpack.c.h.b16 %v6577
    %v7365 = vunpack.c.l.b16 %v6578
    %v7366 = vunpack.c.h.b16 %v6578
    %v7367 = vunpack.c.l.b16 %v6579
    %v7368 = vunpack.c.h.b16 %v6579
    %v7369 = vunpack.c.l.b16 %v6580
    %v7370 = vunpack.c.h.b16 %v6580
    %v7371 = vpack.c.b16 %v6863, %v6859
    %v7372 = vpack.c.b16 %v6864, %v6860
    %v7373 = vpack.c.b16 %v6865, %v6861
    %v7374 = vpack.c.b16 %v6866, %v6862
    %v7375 = vpack.c.b16 %v6871, %v6867
    %v7376 = vpack.c.b16 %v6872, %v6868
    %v7377 = vpack.c.b16 %v6873, %v6869
    %v7378 = vpack.c.b16 %v6874, %v6870
    %v7379 = vpack.c.b16 %v6879, %v6875
    %v7380 = vpack.c.b16 %v6880, %v6876
    %v7381 = vpack.c.b16 %v6881, %v6877
    %v7382 = vpack.c.b16 %v6882, %v6878
    %v7383 = vpack.c.b16 %v6887, %v6883
    %v7384 = vpack.c.b16 %v6888, %v6884
    %v7385 = vpack.c.b16 %v6889, %v6885
    %v7386 = vpack.c.b16 %v6890, %v6886
    %v7387 = vpack.c.b16 %v6895, %v6891
    %v7388 = vpack.c.b16 %v6896, %v6892
    %v7389 = vpack.c.b16 %v6897, %v6893
    %v7390 = vpack.c.b16 %v6898, %v6894
    %v7391 = vpack.c.b16 %v6903, %v6899
    %v7392 = vpack.c.b16 %v6904, %v6900
    %v7393 = vpack.c.b16 %v6905, %v6901
    %v7394 = vpack.c.b16 %v6906, %v6902
    %v7395 = vpack.c.b16 %v6911, %v6907
    %v7396 = vpack.c.b16 %v6912, %v6908
    %v7397 = vpack.c.b16 %v6913, %v6909
    %v7398 = vpack.c.b16 %v6914, %v6910
    %v7399 = vpack.c.b16 %v6919, %v6915
    %v7400 = vpack.c.b16 %v6920, %v6916
    %v7401 = vpack.c.b16 %v6921, %v6917
    %v7402 = vpack.c.b16 %v6922, %v6918
    %v7403 = vpack.c.b16 %v6927, %v6923
    %v7404 = vpack.c.b16 %v6928, %v6924
    %v7405 = vpack.c.b16 %v6929, %v6925
    %v7406 = vpack.c.b16 %v6930, %v6926
    %v7407 = vpack.c.b16 %v6935, %v6931
    %v7408 = vpack.c.b16 %v6936, %v6932
    %v7409 = vpack.c.b16 %v6937, %v6933
    %v7410 = vpack.c.b16 %v6938, %v6934
    %v7411 = vpack.c.b16 %v6943, %v6939
    %v7412 = vpack.c.b16 %v6944, %v6940
    %v7413 = vpack.c.b16 %v6945, %v6941
    %v7414 = vpack.c.b16 %v6946, %v6942
    %v7415 = vpack.c.b16 %v6951, %v6947
    %v7416 = vpack.c.b16 %v6952, %v6948
    %v7417 = vpack.c.b16 %v6953, %v6949
    %v7418 = vpack.c.b16 %v6954, %v6950
    %v7419 = vpack.c.b16 %v6959, %v6955
    %v7420 = vpack.c.b16 %v6960, %v6956
    %v7421 = vpack.c.b16 %v6961, %v6957
    %v7422 = vpack.c.b16 %v6962, %v6958
    %v7423 = vpack.c.b16 %v6967, %v6963
    %v7424 = vpack.c.b16 %v6968, %v6964
    %v7425 = vpack.c.b16 %v6969, %v6965
    %v7426 = vpack.c.b16 %v6970, %v6966
    %v7427 = vpack.c.b16 %v6975, %v6971
    %v7428 = vpack.c.b16 %v6976, %v6972
    %v7429 = vpack.c.b16 %v6977, %v6973
    %v7430 = vpack.c.b16 %v6978, %v6974
    %v7431 = vpack.c.b16 %v6983, %v6979
    %v7432 = vpack.c.b16 %v6984, %v6980
    %v7433 = vpack.c.b16 %v6985, %v6981
    %v7434 = vpack.c.b16 %v6986, %v6982
    %v7435 = vpack.c.b16 %v6991, %v6987
    %v7436 = vpack.c.b16 %v6992, %v6988
    %v7437 = vpack.c.b16 %v6993, %v6989
    %v7438 = vpack.c.b16 %v6994, %v6990
    %v7439 = vpack.c.b16 %v6999, %v6995
    %v7440 = vpack.c.b16 %v7000, %v6996
    %v7441 = vpack.c.b16 %v7001, %v6997
    %v7442 = vpack.c.b16 %v7002, %v6998
    %v7443 = vpack.c.b16 %v7007, %v7003
    %v7444 = vpack.c.b16 %v7008, %v7004
    %v7445 = vpack.c.b16 %v7009, %v7005
    %v7446 = vpack.c.b16 %v7010, %v7006
    %v7447 = vpack.c.b16 %v7015, %v7011
    %v7448 = vpack.c.b16 %v7016, %v7012
    %v7449 = vpack.c.b16 %v7017, %v7013
    %v7450 = vpack.c.b16 %v7018, %v7014
    %v7451 = vpack.c.b16 %v7023, %v7019
    %v7452 = vpack.c.b16 %v7024, %v7020
    %v7453 = vpack.c.b16 %v7025, %v7021
    %v7454 = vpack.c.b16 %v7026, %v7022
    %v7455 = vpack.c.b16 %v7031, %v7027
    %v7456 = vpack.c.b16 %v7032, %v7028
    %v7457 = vpack.c.b16 %v7033, %v7029
    %v7458 = vpack.c.b16 %v7034, %v7030
    %v7459 = vpack.c.b16 %v7039, %v7035
    %v7460 = vpack.c.b16 %v7040, %v7036
    %v7461 = vpack.c.b16 %v7041, %v7037
    %v7462 = vpack.c.b16 %v7042, %v7038
    %v7463 = vpack.c.b16 %v7047, %v7043
    %v7464 = vpack.c.b16 %v7048, %v7044
    %v7465 = vpack.c.b16 %v7049, %v7045
    %v7466 = vpack.c.b16 %v7050, %v7046
    %v7467 = vpack.c.b16 %v7055, %v7051
    %v7468 = vpack.c.b16 %v7056, %v7052
    %v7469 = vpack.c.b16 %v7057, %v7053
    %v7470 = vpack.c.b16 %v7058, %v7054
    %v7471 = vpack.c.b16 %v7063, %v7059
    %v7472 = vpack.c.b16 %v7064, %v7060
    %v7473 = vpack.c.b16 %v7065, %v7061
    %v7474 = vpack.c.b16 %v7066, %v7062
    %v7475 = vpack.c.b16 %v7071, %v7067
    %v7476 = vpack.c.b16 %v7072, %v7068
    %v7477 = vpack.c.b16 %v7073, %v7069
    %v7478 = vpack.c.b16 %v7074, %v7070
    %v7479 = vpack.c.b16 %v7079, %v7075
    %v7480 = vpack.c.b16 %v7080, %v7076
    %v7481 = vpack.c.b16 %v7081, %v7077
    %v7482 = vpack.c.b16 %v7082, %v7078
    %v7483 = vpack.c.b16 %v7087, %v7083
    %v7484 = vpack.c.b16 %v7088, %v7084
    %v7485 = vpack.c.b16 %v7089, %v7085
    %v7486 = vpack.c.b16 %v7090, %v7086
    %v7487 = vpack.c.b16 %v7095, %v7091
    %v7488 = vpack.c.b16 %v7096, %v7092
    %v7489 = vpack.c.b16 %v7097, %v7093
    %v7490 = vpack.c.b16 %v7098, %v7094
    %v7491 = vpack.c.b16 %v7103, %v7099
    %v7492 = vpack.c.b16 %v7104, %v7100
    %v7493 = vpack.c.b16 %v7105, %v7101
    %v7494 = vpack.c.b16 %v7106, %v7102
    %v7495 = vpack.c.b16 %v7111, %v7107
    %v7496 = vpack.c.b16 %v7112, %v7108
    %v7497 = vpack.c.b16 %v7113, %v7109
    %v7498 = vpack.c.b16 %v7114, %v7110
    %v7499 = vpack.c.b16 %v7119, %v7115
    %v7500 = vpack.c.b16 %v7120, %v7116
    %v7501 = vpack.c.b16 %v7121, %v7117
    %v7502 = vpack.c.b16 %v7122, %v7118
    %v7503 = vpack.c.b16 %v7127, %v7123
    %v7504 = vpack.c.b16 %v7128, %v7124
    %v7505 = vpack.c.b16 %v7129, %v7125
    %v7506 = vpack.c.b16 %v7130, %v7126
    %v7507 = vpack.c.b16 %v7135, %v7131
    %v7508 = vpack.c.b16 %v7136, %v7132
    %v7509 = vpack.c.b16 %v7137, %v7133
    %v7510 = vpack.c.b16 %v7138, %v7134
    %v7511 = vpack.c.b16 %v7143, %v7139
    %v7512 = vpack.c.b16 %v7144, %v7140
    %v7513 = vpack.c.b16 %v7145, %v7141
    %v7514 = vpack.c.b16 %v7146, %v7142
    %v7515 = vpack.c.b16 %v7151, %v7147
    %v7516 = vpack.c.b16 %v7152, %v7148
    %v7517 = vpack.c.b16 %v7153, %v7149
    %v7518 = vpack.c.b16 %v7154, %v7150
    %v7519 = vpack.c.b16 %v7159, %v7155
    %v7520 = vpack.c.b16 %v7160, %v7156
    %v7521 = vpack.c.b16 %v7161, %v7157
    %v7522 = vpack.c.b16 %v7162, %v7158
    %v7523 = vpack.c.b16 %v7167, %v7163
    %v7524 = vpack.c.b16 %v7168, %v7164
    %v7525 = vpack.c.b16 %v7169, %v7165
    %v7526 = vpack.c.b16 %v7170, %v7166
    %v7527 = vpack.c.b16 %v7175, %v7171
    %v7528 = vpack.c.b16 %v7176, %v7172
    %v7529 = vpack.c.b16 %v7177, %v7173
    %v7530 = vpack.c.b16 %v7178, %v7174
    %v7531 = vpack.c.b16 %v7183, %v7179
    %v7532 = vpack.c.b16 %v7184, %v7180
    %v7533 = vpack.c.b16 %v7185, %v7181
    %v7534 = vpack.c.b16 %v7186, %v7182
    %v7535 = vpack.c.b16 %v7191, %v7187
    %v7536 = vpack.c.b16 %v7192, %v7188
    %v7537 = vpack.c.b16 %v7193, %v7189
    %v7538 = vpack.c.b16 %v7194, %v7190
    %v7539 = vpack.c.b16 %v7199, %v7195
    %v7540 = vpack.c.b16 %v7200, %v7196
    %v7541 = vpack.c.b16 %v7201, %v7197
    %v7542 = vpack.c.b16 %v7202, %v7198
    %v7543 = vpack.c.b16 %v7207, %v7203
    %v7544 = vpack.c.b16 %v7208, %v7204
    %v7545 = vpack.c.b16 %v7209, %v7205
    %v7546 = vpack.c.b16 %v7210, %v7206
    %v7547 = vpack.c.b16 %v7215, %v7211
    %v7548 = vpack.c.b16 %v7216, %v7212
    %v7549 = vpack.c.b16 %v7217, %v7213
    %v7550 = vpack.c.b16 %v7218, %v7214
    %v7551 = vpack.c.b16 %v7223, %v7219
    %v7552 = vpack.c.b16 %v7224, %v7220
    %v7553 = vpack.c.b16 %v7225, %v7221
    %v7554 = vpack.c.b16 %v7226, %v7222
    %v7555 = vpack.c.b16 %v7231, %v7227
    %v7556 = vpack.c.b16 %v7232, %v7228
    %v7557 = vpack.c.b16 %v7233, %v7229
    %v7558 = vpack.c.b16 %v7234, %v7230
    %v7559 = vpack.c.b16 %v7239, %v7235
    %v7560 = vpack.c.b16 %v7240, %v7236
    %v7561 = vpack.c.b16 %v7241, %v7237
    %v7562 = vpack.c.b16 %v7242, %v7238
    %v7563 = vpack.c.b16 %v7247, %v7243
    %v7564 = vpack.c.b16 %v7248, %v7244
    %v7565 = vpack.c.b16 %v7249, %v7245
    %v7566 = vpack.c.b16 %v7250, %v7246
    %v7567 = vpack.c.b16 %v7255, %v7251
    %v7568 = vpack.c.b16 %v7256, %v7252
    %v7569 = vpack.c.b16 %v7257, %v7253
    %v7570 = vpack.c.b16 %v7258, %v7254
    %v7571 = vpack.c.b16 %v7263, %v7259
    %v7572 = vpack.c.b16 %v7264, %v7260
    %v7573 = vpack.c.b16 %v7265, %v7261
    %v7574 = vpack.c.b16 %v7266, %v7262
    %v7575 = vpack.c.b16 %v7271, %v7267
    %v7576 = vpack.c.b16 %v7272, %v7268
    %v7577 = vpack.c.b16 %v7273, %v7269
    %v7578 = vpack.c.b16 %v7274, %v7270
    %v7579 = vpack.c.b16 %v7279, %v7275
    %v7580 = vpack.c.b16 %v7280, %v7276
    %v7581 = vpack.c.b16 %v7281, %v7277
    %v7582 = vpack.c.b16 %v7282, %v7278
    %v7583 = vpack.c.b16 %v7287, %v7283
    %v7584 = vpack.c.b16 %v7288, %v7284
    %v7585 = vpack.c.b16 %v7289, %v7285
    %v7586 = vpack.c.b16 %v7290, %v7286
    %v7587 = vpack.c.b16 %v7295, %v7291
    %v7588 = vpack.c.b16 %v7296, %v7292
    %v7589 = vpack.c.b16 %v7297, %v7293
    %v7590 = vpack.c.b16 %v7298, %v7294
    %v7591 = vpack.c.b16 %v7303, %v7299
    %v7592 = vpack.c.b16 %v7304, %v7300
    %v7593 = vpack.c.b16 %v7305, %v7301
    %v7594 = vpack.c.b16 %v7306, %v7302
    %v7595 = vpack.c.b16 %v7311, %v7307
    %v7596 = vpack.c.b16 %v7312, %v7308
    %v7597 = vpack.c.b16 %v7313, %v7309
    %v7598 = vpack.c.b16 %v7314, %v7310
    %v7599 = vpack.c.b16 %v7319, %v7315
    %v7600 = vpack.c.b16 %v7320, %v7316
    %v7601 = vpack.c.b16 %v7321, %v7317
    %v7602 = vpack.c.b16 %v7322, %v7318
    %v7603 = vpack.c.b16 %v7327, %v7323
    %v7604 = vpack.c.b16 %v7328, %v7324
    %v7605 = vpack.c.b16 %v7329, %v7325
    %v7606 = vpack.c.b16 %v7330, %v7326
    %v7607 = vpack.c.b16 %v7335, %v7331
    %v7608 = vpack.c.b16 %v7336, %v7332
    %v7609 = vpack.c.b16 %v7337, %v7333
    %v7610 = vpack.c.b16 %v7338, %v7334
    %v7611 = vpack.c.b16 %v7343, %v7339
    %v7612 = vpack.c.b16 %v7344, %v7340
    %v7613 = vpack.c.b16 %v7345, %v7341
    %v7614 = vpack.c.b16 %v7346, %v7342
    %v7615 = vpack.c.b16 %v7351, %v7347
    %v7616 = vpack.c.b16 %v7352, %v7348
    %v7617 = vpack.c.b16 %v7353, %v7349
    %v7618 = vpack.c.b16 %v7354, %v7350
    %v7619 = vpack.c.b16 %v7359, %v7355
    %v7620 = vpack.c.b16 %v7360, %v7356
    %v7621 = vpack.c.b16 %v7361, %v7357
    %v7622 = vpack.c.b16 %v7362, %v7358
    %v7623 = vpack.c.b16 %v7367, %v7363
    %v7624 = vpack.c.b16 %v7368, %v7364
    %v7625 = vpack.c.b16 %v7369, %v7365
    %v7626 = vpack.c.b16 %v7370, %v7366
    %7883 = vmatprep.subr.bf16.mxu0 %v7400
    %7884 = vmatpush1.bf16.msra.mxu0 %v7399
    %7885 = vmatprep.subr.bf16.mxu0 %v7396
    %7886 = vmatpush1.bf16.msra.mxu0 %v7395
    %7887 = vmatprep.subr.bf16.mxu0 %v7392
    %7888 = vmatpush1.bf16.msra.mxu0 %v7391
    %7889 = vmatprep.subr.bf16.mxu0 %v7388
    %7890 = vmatpush1.bf16.msra.mxu0 %v7387
    %7891 = vmatprep.subr.bf16.mxu0 %v7384
    %7892 = vmatpush1.bf16.msra.mxu0 %v7383
    %7893 = vmatprep.subr.bf16.mxu0 %v7380
    %7894 = vmatpush1.bf16.msra.mxu0 %v7379
    %7895 = vmatprep.subr.bf16.mxu0 %v7376
    %7896 = vmatpush1.bf16.msra.mxu0 %v7375
    %7897 = vmatprep.subr.bf16.mxu0 %v7372
    %7898 = vmatpush1.bf16.msra.mxu0 %v7371
    %7899 = vmatprep.subr.bf16.mxu0 %v7432
    %7900 = vmatpush2.bf16.msra.mxu0 %v7431
    %7901 = vmatprep.subr.bf16.mxu0 %v7428
    %7902 = vmatpush2.bf16.msra.mxu0 %v7427
    %7903 = vmatprep.subr.bf16.mxu0 %v7424
    %7904 = vmatpush2.bf16.msra.mxu0 %v7423
    %7905 = vmatprep.subr.bf16.mxu0 %v7420
    %7906 = vmatpush2.bf16.msra.mxu0 %v7419
    %7907 = vmatprep.subr.bf16.mxu0 %v7416
    %7908 = vmatpush2.bf16.msra.mxu0 %v7415
    %7909 = vmatprep.subr.bf16.mxu0 %v7412
    %7910 = vmatpush2.bf16.msra.mxu0 %v7411
    %7911 = vmatprep.subr.bf16.mxu0 %v7408
    %7912 = vmatpush2.bf16.msra.mxu0 %v7407
    %7913 = vmatprep.subr.bf16.mxu0 %v7404
    %7914 = vmatpush2.bf16.msra.mxu0 %v7403
    %7915 = vmatprep.mubr.bf16.mxu0 %v6318
    %7916 = vmatmul.mubr.bf16.gmra.mxu0 %v6317
    %v7917 = vpop.f32.mrf.mxu0
    %v7918 = vadd.f32 %v6586, %v7917
    %v7919 = vpop.f32.mrf.mxu0
    %v7920 = vadd.f32 %v6590, %v7919
    %v7921 = vpop.f32.mrf.mxu0
    %v7922 = vpop.f32.mrf.mxu0
    %7923 = vdwg.mxu0
    %7924 = vmatprep.subr.bf16.mxu0 %v7464
    %7925 = vmatpush1.bf16.msra.mxu0 %v7463
    %7926 = vmatprep.subr.bf16.mxu0 %v7460
    %7927 = vmatpush1.bf16.msra.mxu0 %v7459
    %7928 = vmatprep.subr.bf16.mxu0 %v7456
    %7929 = vmatpush1.bf16.msra.mxu0 %v7455
    %7930 = vmatprep.subr.bf16.mxu0 %v7452
    %7931 = vmatpush1.bf16.msra.mxu0 %v7451
    %7932 = vmatprep.subr.bf16.mxu0 %v7448
    %7933 = vmatpush1.bf16.msra.mxu0 %v7447
    %7934 = vmatprep.subr.bf16.mxu0 %v7444
    %7935 = vmatpush1.bf16.msra.mxu0 %v7443
    %7936 = vmatprep.subr.bf16.mxu0 %v7440
    %7937 = vmatpush1.bf16.msra.mxu0 %v7439
    %7938 = vmatprep.subr.bf16.mxu0 %v7436
    %7939 = vmatpush1.bf16.msra.mxu0 %v7435
    %7940 = vmatprep.subr.bf16.mxu0 %v7496
    %7941 = vmatpush2.bf16.msra.mxu0 %v7495
    %7942 = vmatprep.subr.bf16.mxu0 %v7492
    %7943 = vmatpush2.bf16.msra.mxu0 %v7491
    %7944 = vmatprep.subr.bf16.mxu0 %v7488
    %7945 = vmatpush2.bf16.msra.mxu0 %v7487
    %7946 = vmatprep.subr.bf16.mxu0 %v7484
    %7947 = vmatpush2.bf16.msra.mxu0 %v7483
    %7948 = vmatprep.subr.bf16.mxu0 %v7480
    %7949 = vmatpush2.bf16.msra.mxu0 %v7479
    %7950 = vmatprep.subr.bf16.mxu0 %v7476
    %7951 = vmatpush2.bf16.msra.mxu0 %v7475
    %7952 = vmatprep.subr.bf16.mxu0 %v7472
    %7953 = vmatpush2.bf16.msra.mxu0 %v7471
    %7954 = vmatprep.subr.bf16.mxu0 %v7468
    %7955 = vmatpush2.bf16.msra.mxu0 %v7467
    %7956 = vmatprep.mubr.bf16.mxu0 %v6320
    %7957 = vmatmul.mubr.bf16.gmra.mxu0 %v6319
    %v7958 = vpop.f32.mrf.mxu0
    %v7959 = vadd.f32 %v7918, %v7958
    %v7960 = vpop.f32.mrf.mxu0
    %v7961 = vadd.f32 %v7920, %v7960
    %v7962 = vpop.f32.mrf.mxu0
    %v7963 = vpop.f32.mrf.mxu0
    %7964 = vdwg.mxu0
    %7965 = vmatprep.subr.bf16.mxu0 %v7528
    %7966 = vmatpush1.bf16.msra.mxu0 %v7527
    %7967 = vmatprep.subr.bf16.mxu0 %v7524
    %7968 = vmatpush1.bf16.msra.mxu0 %v7523
    %7969 = vmatprep.subr.bf16.mxu0 %v7520
    %7970 = vmatpush1.bf16.msra.mxu0 %v7519
    %7971 = vmatprep.subr.bf16.mxu0 %v7516
    %7972 = vmatpush1.bf16.msra.mxu0 %v7515
    %7973 = vmatprep.subr.bf16.mxu0 %v7512
    %7974 = vmatpush1.bf16.msra.mxu0 %v7511
    %7975 = vmatprep.subr.bf16.mxu0 %v7508
    %7976 = vmatpush1.bf16.msra.mxu0 %v7507
    %7977 = vmatprep.subr.bf16.mxu0 %v7504
    %7978 = vmatpush1.bf16.msra.mxu0 %v7503
    %7979 = vmatprep.subr.bf16.mxu0 %v7500
    %7980 = vmatpush1.bf16.msra.mxu0 %v7499
    %7981 = vmatprep.subr.bf16.mxu0 %v7560
    %7982 = vmatpush2.bf16.msra.mxu0 %v7559
    %7983 = vmatprep.subr.bf16.mxu0 %v7556
    %7984 = vmatpush2.bf16.msra.mxu0 %v7555
    %7985 = vmatprep.subr.bf16.mxu0 %v7552
    %7986 = vmatpush2.bf16.msra.mxu0 %v7551
    %7987 = vmatprep.subr.bf16.mxu0 %v7548
    %7988 = vmatpush2.bf16.msra.mxu0 %v7547
    %7989 = vmatprep.subr.bf16.mxu0 %v7544
    %7990 = vmatpush2.bf16.msra.mxu0 %v7543
    %7991 = vmatprep.subr.bf16.mxu0 %v7540
    %7992 = vmatpush2.bf16.msra.mxu0 %v7539
    %7993 = vmatprep.subr.bf16.mxu0 %v7536
    %7994 = vmatpush2.bf16.msra.mxu0 %v7535
    %7995 = vmatprep.subr.bf16.mxu0 %v7532
    %7996 = vmatpush2.bf16.msra.mxu0 %v7531
    %7997 = vmatprep.mubr.bf16.mxu0 %v6322
    %7998 = vmatmul.mubr.bf16.gmra.mxu0 %v6321
    %v7999 = vpop.f32.mrf.mxu0
    %v8000 = vadd.f32 %v7959, %v7999
    %v8001 = vpop.f32.mrf.mxu0
    %v8002 = vadd.f32 %v7961, %v8001
    %v8003 = vpop.f32.mrf.mxu0
    %v8004 = vpop.f32.mrf.mxu0
    %8005 = vdwg.mxu0
    %8006 = vmatprep.subr.bf16.mxu0 %v7592
    %8007 = vmatpush1.bf16.msra.mxu0 %v7591
    %8008 = vmatprep.subr.bf16.mxu0 %v7588
    %8009 = vmatpush1.bf16.msra.mxu0 %v7587
    %8010 = vmatprep.subr.bf16.mxu0 %v7584
    %8011 = vmatpush1.bf16.msra.mxu0 %v7583
    %8012 = vmatprep.subr.bf16.mxu0 %v7580
    %8013 = vmatpush1.bf16.msra.mxu0 %v7579
    %8014 = vmatprep.subr.bf16.mxu0 %v7576
    %8015 = vmatpush1.bf16.msra.mxu0 %v7575
    %8016 = vmatprep.subr.bf16.mxu0 %v7572
    %8017 = vmatpush1.bf16.msra.mxu0 %v7571
    %8018 = vmatprep.subr.bf16.mxu0 %v7568
    %8019 = vmatpush1.bf16.msra.mxu0 %v7567
    %8020 = vmatprep.subr.bf16.mxu0 %v7564
    %8021 = vmatpush1.bf16.msra.mxu0 %v7563
    %8022 = vmatprep.subr.bf16.mxu0 %v7624
    %8023 = vmatpush2.bf16.msra.mxu0 %v7623
    %8024 = vmatprep.subr.bf16.mxu0 %v7620
    %8025 = vmatpush2.bf16.msra.mxu0 %v7619
    %8026 = vmatprep.subr.bf16.mxu0 %v7616
    %8027 = vmatpush2.bf16.msra.mxu0 %v7615
    %8028 = vmatprep.subr.bf16.mxu0 %v7612
    %8029 = vmatpush2.bf16.msra.mxu0 %v7611
    %8030 = vmatprep.subr.bf16.mxu0 %v7608
    %8031 = vmatpush2.bf16.msra.mxu0 %v7607
    %8032 = vmatprep.subr.bf16.mxu0 %v7604
    %8033 = vmatpush2.bf16.msra.mxu0 %v7603
    %8034 = vmatprep.subr.bf16.mxu0 %v7600
    %8035 = vmatpush2.bf16.msra.mxu0 %v7599
    %8036 = vmatprep.subr.bf16.mxu0 %v7596
    %8037 = vmatpush2.bf16.msra.mxu0 %v7595
    %8038 = vmatprep.mubr.bf16.mxu0 %v6324
    %8039 = vmatmul.mubr.bf16.gmra.mxu0 %v6323
    %v8040 = vpop.f32.mrf.mxu0
    %v8041 = vadd.f32 %v8000, %v8040
    %v8042 = vpop.f32.mrf.mxu0
    %v8043 = vadd.f32 %v8002, %v8042
    %v8044 = vpop.f32.mrf.mxu0
    %v8045 = vpop.f32.mrf.mxu0
    %8046 = vdwg.mxu0
    %8047 = vmatprep.subr.bf16.mxu0 %v7402
    %8048 = vmatpush1.bf16.msra.mxu0 %v7401
    %8049 = vmatprep.subr.bf16.mxu0 %v7398
    %8050 = vmatpush1.bf16.msra.mxu0 %v7397
    %8051 = vmatprep.subr.bf16.mxu0 %v7394
    %8052 = vmatpush1.bf16.msra.mxu0 %v7393
    %8053 = vmatprep.subr.bf16.mxu0 %v7390
    %8054 = vmatpush1.bf16.msra.mxu0 %v7389
    %8055 = vmatprep.subr.bf16.mxu0 %v7386
    %8056 = vmatpush1.bf16.msra.mxu0 %v7385
    %8057 = vmatprep.subr.bf16.mxu0 %v7382
    %8058 = vmatpush1.bf16.msra.mxu0 %v7381
    %8059 = vmatprep.subr.bf16.mxu0 %v7378
    %8060 = vmatpush1.bf16.msra.mxu0 %v7377
    %8061 = vmatprep.subr.bf16.mxu0 %v7374
    %8062 = vmatpush1.bf16.msra.mxu0 %v7373
    %8063 = vmatprep.subr.bf16.mxu0 %v7434
    %8064 = vmatpush2.bf16.msra.mxu0 %v7433
    %8065 = vmatprep.subr.bf16.mxu0 %v7430
    %8066 = vmatpush2.bf16.msra.mxu0 %v7429
    %8067 = vmatprep.subr.bf16.mxu0 %v7426
    %8068 = vmatpush2.bf16.msra.mxu0 %v7425
    %8069 = vmatprep.subr.bf16.mxu0 %v7422
    %8070 = vmatpush2.bf16.msra.mxu0 %v7421
    %8071 = vmatprep.subr.bf16.mxu0 %v7418
    %8072 = vmatpush2.bf16.msra.mxu0 %v7417
    %8073 = vmatprep.subr.bf16.mxu0 %v7414
    %8074 = vmatpush2.bf16.msra.mxu0 %v7413
    %8075 = vmatprep.subr.bf16.mxu0 %v7410
    %8076 = vmatpush2.bf16.msra.mxu0 %v7409
    %8077 = vmatprep.subr.bf16.mxu0 %v7406
    %8078 = vmatpush2.bf16.msra.mxu0 %v7405
    %8079 = vmatprep.mubr.bf16.mxu0 %v6318
    %8080 = vmatmul.mubr.bf16.gmra.mxu0 %v6317
    %v8081 = vpop.f32.mrf.mxu0
    %v8082 = vadd.f32 %v6594, %v8081
    %v8083 = vpop.f32.mrf.mxu0
    %v8084 = vadd.f32 %v6598, %v8083
    %v8085 = vpop.f32.mrf.mxu0
    %v8086 = vpop.f32.mrf.mxu0
    %8087 = vdwg.mxu0
    %8088 = vmatprep.subr.bf16.mxu0 %v7466
    %8089 = vmatpush1.bf16.msra.mxu0 %v7465
    %8090 = vmatprep.subr.bf16.mxu0 %v7462
    %8091 = vmatpush1.bf16.msra.mxu0 %v7461
    %8092 = vmatprep.subr.bf16.mxu0 %v7458
    %8093 = vmatpush1.bf16.msra.mxu0 %v7457
    %8094 = vmatprep.subr.bf16.mxu0 %v7454
    %8095 = vmatpush1.bf16.msra.mxu0 %v7453
    %8096 = vmatprep.subr.bf16.mxu0 %v7450
    %8097 = vmatpush1.bf16.msra.mxu0 %v7449
    %8098 = vmatprep.subr.bf16.mxu0 %v7446
    %8099 = vmatpush1.bf16.msra.mxu0 %v7445
    %8100 = vmatprep.subr.bf16.mxu0 %v7442
    %8101 = vmatpush1.bf16.msra.mxu0 %v7441
    %8102 = vmatprep.subr.bf16.mxu0 %v7438
    %8103 = vmatpush1.bf16.msra.mxu0 %v7437
    %8104 = vmatprep.subr.bf16.mxu0 %v7498
    %8105 = vmatpush2.bf16.msra.mxu0 %v7497
    %8106 = vmatprep.subr.bf16.mxu0 %v7494
    %8107 = vmatpush2.bf16.msra.mxu0 %v7493
    %8108 = vmatprep.subr.bf16.mxu0 %v7490
    %8109 = vmatpush2.bf16.msra.mxu0 %v7489
    %8110 = vmatprep.subr.bf16.mxu0 %v7486
    %8111 = vmatpush2.bf16.msra.mxu0 %v7485
    %8112 = vmatprep.subr.bf16.mxu0 %v7482
    %8113 = vmatpush2.bf16.msra.mxu0 %v7481
    %8114 = vmatprep.subr.bf16.mxu0 %v7478
    %8115 = vmatpush2.bf16.msra.mxu0 %v7477
    %8116 = vmatprep.subr.bf16.mxu0 %v7474
    %8117 = vmatpush2.bf16.msra.mxu0 %v7473
    %8118 = vmatprep.subr.bf16.mxu0 %v7470
    %8119 = vmatpush2.bf16.msra.mxu0 %v7469
    %8120 = vmatprep.mubr.bf16.mxu0 %v6320
    %8121 = vmatmul.mubr.bf16.gmra.mxu0 %v6319
    %v8122 = vpop.f32.mrf.mxu0
    %v8123 = vadd.f32 %v8082, %v8122
    %v8124 = vpop.f32.mrf.mxu0
    %v8125 = vadd.f32 %v8084, %v8124
    %v8126 = vpop.f32.mrf.mxu0
    %v8127 = vpop.f32.mrf.mxu0
    %8128 = vdwg.mxu0
    %8129 = vmatprep.subr.bf16.mxu0 %v7530
    %8130 = vmatpush1.bf16.msra.mxu0 %v7529
    %8131 = vmatprep.subr.bf16.mxu0 %v7526
    %8132 = vmatpush1.bf16.msra.mxu0 %v7525
    %8133 = vmatprep.subr.bf16.mxu0 %v7522
    %8134 = vmatpush1.bf16.msra.mxu0 %v7521
    %8135 = vmatprep.subr.bf16.mxu0 %v7518
    %8136 = vmatpush1.bf16.msra.mxu0 %v7517
    %8137 = vmatprep.subr.bf16.mxu0 %v7514
    %8138 = vmatpush1.bf16.msra.mxu0 %v7513
    %8139 = vmatprep.subr.bf16.mxu0 %v7510
    %8140 = vmatpush1.bf16.msra.mxu0 %v7509
    %8141 = vmatprep.subr.bf16.mxu0 %v7506
    %8142 = vmatpush1.bf16.msra.mxu0 %v7505
    %8143 = vmatprep.subr.bf16.mxu0 %v7502
    %8144 = vmatpush1.bf16.msra.mxu0 %v7501
    %8145 = vmatprep.subr.bf16.mxu0 %v7562
    %8146 = vmatpush2.bf16.msra.mxu0 %v7561
    %8147 = vmatprep.subr.bf16.mxu0 %v7558
    %8148 = vmatpush2.bf16.msra.mxu0 %v7557
    %8149 = vmatprep.subr.bf16.mxu0 %v7554
    %8150 = vmatpush2.bf16.msra.mxu0 %v7553
    %8151 = vmatprep.subr.bf16.mxu0 %v7550
    %8152 = vmatpush2.bf16.msra.mxu0 %v7549
    %8153 = vmatprep.subr.bf16.mxu0 %v7546
    %8154 = vmatpush2.bf16.msra.mxu0 %v7545
    %8155 = vmatprep.subr.bf16.mxu0 %v7542
    %8156 = vmatpush2.bf16.msra.mxu0 %v7541
    %8157 = vmatprep.subr.bf16.mxu0 %v7538
    %8158 = vmatpush2.bf16.msra.mxu0 %v7537
    %8159 = vmatprep.subr.bf16.mxu0 %v7534
    %8160 = vmatpush2.bf16.msra.mxu0 %v7533
    %8161 = vmatprep.mubr.bf16.mxu0 %v6322
    %8162 = vmatmul.mubr.bf16.gmra.mxu0 %v6321
    %v8163 = vpop.f32.mrf.mxu0
    %v8164 = vadd.f32 %v8123, %v8163
    %v8165 = vpop.f32.mrf.mxu0
    %v8166 = vadd.f32 %v8125, %v8165
    %v8167 = vpop.f32.mrf.mxu0
    %v8168 = vpop.f32.mrf.mxu0
    %8169 = vdwg.mxu0
    %8170 = vmatprep.subr.bf16.mxu0 %v7594
    %8171 = vmatpush1.bf16.msra.mxu0 %v7593
    %8172 = vmatprep.subr.bf16.mxu0 %v7590
    %8173 = vmatpush1.bf16.msra.mxu0 %v7589
    %8174 = vmatprep.subr.bf16.mxu0 %v7586
    %8175 = vmatpush1.bf16.msra.mxu0 %v7585
    %8176 = vmatprep.subr.bf16.mxu0 %v7582
    %8177 = vmatpush1.bf16.msra.mxu0 %v7581
    %8178 = vmatprep.subr.bf16.mxu0 %v7578
    %8179 = vmatpush1.bf16.msra.mxu0 %v7577
    %8180 = vmatprep.subr.bf16.mxu0 %v7574
    %8181 = vmatpush1.bf16.msra.mxu0 %v7573
    %8182 = vmatprep.subr.bf16.mxu0 %v7570
    %8183 = vmatpush1.bf16.msra.mxu0 %v7569
    %8184 = vmatprep.subr.bf16.mxu0 %v7566
    %8185 = vmatpush1.bf16.msra.mxu0 %v7565
    %8186 = vmatprep.subr.bf16.mxu0 %v7626
    %8187 = vmatpush2.bf16.msra.mxu0 %v7625
    %8188 = vmatprep.subr.bf16.mxu0 %v7622
    %8189 = vmatpush2.bf16.msra.mxu0 %v7621
    %8190 = vmatprep.subr.bf16.mxu0 %v7618
    %8191 = vmatpush2.bf16.msra.mxu0 %v7617
    %8192 = vmatprep.subr.bf16.mxu0 %v7614
    %8193 = vmatpush2.bf16.msra.mxu0 %v7613
    %8194 = vmatprep.subr.bf16.mxu0 %v7610
    %8195 = vmatpush2.bf16.msra.mxu0 %v7609
    %8196 = vmatprep.subr.bf16.mxu0 %v7606
    %8197 = vmatpush2.bf16.msra.mxu0 %v7605
    %8198 = vmatprep.subr.bf16.mxu0 %v7602
    %8199 = vmatpush2.bf16.msra.mxu0 %v7601
    %8200 = vmatprep.subr.bf16.mxu0 %v7598
    %8201 = vmatpush2.bf16.msra.mxu0 %v7597
    %8202 = vmatprep.mubr.bf16.mxu0 %v6324
    %8203 = vmatmul.mubr.bf16.gmra.mxu0 %v6323
    %v8204 = vpop.f32.mrf.mxu0
    %v8205 = vadd.f32 %v8164, %v8204
    %v8206 = vpop.f32.mrf.mxu0
    %v8207 = vadd.f32 %v8166, %v8206
    %v8208 = vpop.f32.mrf.mxu0
    %v8209 = vpop.f32.mrf.mxu0
    %8210 = vdwg.mxu0
    %v8211 = vmax.f32 %v8041, 0.0
    %v8212 = vmax.f32 %v8043, 0.0
    %v8213 = vmax.f32 %v8205, 0.0
    %v8214 = vmax.f32 %v8207, 0.0
    %v8215 = vpack.c.bf16 %v8211, %v8211
    %v8216 = vpack.c.bf16 %v8212, %v8212
    %v8217 = vpack.c.bf16 %v8213, %v8213
    %v8218 = vpack.c.bf16 %v8214, %v8214
    %v8219 = vld [vmem:[%s7] sm:$0xff]
    %v8220 = vld [vmem:[%s7 + $0x8] sm:$0xff]
    %v8221 = vld [vmem:[%s7 + $0x10] sm:$0xff]
    %v8222 = vld [vmem:[%s7 + $0x18] sm:$0xff]
    %v8223 = vld [vmem:[%s7 + $0x20] sm:$0xff]
    %v8224 = vld [vmem:[%s7 + $0x28] sm:$0xff]
    %v8225 = vld [vmem:[%s7 + $0x30] sm:$0xff]
    %v8226 = vld [vmem:[%s7 + $0x38] sm:$0xff]
    %v8227 = vld [vmem:[%s7 + $0x40] sm:$0xff]
    %v8228 = vld [vmem:[%s7 + $0x48] sm:$0xff]
    %v8229 = vld [vmem:[%s7 + $0x50] sm:$0xff]
    %v8230 = vld [vmem:[%s7 + $0x58] sm:$0xff]
    %v8231 = vld [vmem:[%s7 + $0x60] sm:$0xff]
    %v8232 = vld [vmem:[%s7 + $0x68] sm:$0xff]
    %v8233 = vld [vmem:[%s7 + $0x70] sm:$0xff]
    %v8234 = vld [vmem:[%s7 + $0x78] sm:$0xff]
    %v8235 = vld [vmem:[%s7 + $0x80] sm:$0xff]
    %v8236 = vld [vmem:[%s7 + $0x88] sm:$0xff]
    %v8237 = vld [vmem:[%s7 + $0x90] sm:$0xff]
    %v8238 = vld [vmem:[%s7 + $0x98] sm:$0xff]
    %v8239 = vld [vmem:[%s7 + $0xa0] sm:$0xff]
    %v8240 = vld [vmem:[%s7 + $0xa8] sm:$0xff]
    %v8241 = vld [vmem:[%s7 + $0xb0] sm:$0xff]
    %v8242 = vld [vmem:[%s7 + $0xb8] sm:$0xff]
    %v8243 = vld [vmem:[%s7 + $0xc0] sm:$0xff]
    %v8244 = vld [vmem:[%s7 + $0xc8] sm:$0xff]
    %v8245 = vld [vmem:[%s7 + $0xd0] sm:$0xff]
    %v8246 = vld [vmem:[%s7 + $0xd8] sm:$0xff]
    %v8247 = vld [vmem:[%s7 + $0xe0] sm:$0xff]
    %v8248 = vld [vmem:[%s7 + $0xe8] sm:$0xff]
    %v8249 = vld [vmem:[%s7 + $0xf0] sm:$0xff]
    %v8250 = vld [vmem:[%s7 + $0xf8] sm:$0xff]
    %v8251 = vld [vmem:[%s7 + $0x100] sm:$0xff]
    %v8252 = vld [vmem:[%s7 + $0x108] sm:$0xff]
    %v8253 = vld [vmem:[%s7 + $0x110] sm:$0xff]
    %v8254 = vld [vmem:[%s7 + $0x118] sm:$0xff]
    %v8255 = vld [vmem:[%s7 + $0x120] sm:$0xff]
    %v8256 = vld [vmem:[%s7 + $0x128] sm:$0xff]
    %v8257 = vld [vmem:[%s7 + $0x130] sm:$0xff]
    %v8258 = vld [vmem:[%s7 + $0x138] sm:$0xff]
    %v8259 = vld [vmem:[%s7 + $0x140] sm:$0xff]
    %v8260 = vld [vmem:[%s7 + $0x148] sm:$0xff]
    %v8261 = vld [vmem:[%s7 + $0x150] sm:$0xff]
    %v8262 = vld [vmem:[%s7 + $0x158] sm:$0xff]
    %v8263 = vld [vmem:[%s7 + $0x160] sm:$0xff]
    %v8264 = vld [vmem:[%s7 + $0x168] sm:$0xff]
    %v8265 = vld [vmem:[%s7 + $0x170] sm:$0xff]
    %v8266 = vld [vmem:[%s7 + $0x178] sm:$0xff]
    %v8267 = vld [vmem:[%s7 + $0x180] sm:$0xff]
    %v8268 = vld [vmem:[%s7 + $0x188] sm:$0xff]
    %v8269 = vld [vmem:[%s7 + $0x190] sm:$0xff]
    %v8270 = vld [vmem:[%s7 + $0x198] sm:$0xff]
    %v8271 = vld [vmem:[%s7 + $0x1a0] sm:$0xff]
    %v8272 = vld [vmem:[%s7 + $0x1a8] sm:$0xff]
    %v8273 = vld [vmem:[%s7 + $0x1b0] sm:$0xff]
    %v8274 = vld [vmem:[%s7 + $0x1b8] sm:$0xff]
    %v8275 = vld [vmem:[%s7 + $0x1c0] sm:$0xff]
    %v8276 = vld [vmem:[%s7 + $0x1c8] sm:$0xff]
    %v8277 = vld [vmem:[%s7 + $0x1d0] sm:$0xff]
    %v8278 = vld [vmem:[%s7 + $0x1d8] sm:$0xff]
    %v8279 = vld [vmem:[%s7 + $0x1e0] sm:$0xff]
    %v8280 = vld [vmem:[%s7 + $0x1e8] sm:$0xff]
    %v8281 = vld [vmem:[%s7 + $0x1f0] sm:$0xff]
    %v8282 = vld [vmem:[%s7 + $0x1f8] sm:$0xff]
    %v8283 = vld [vmem:[%s8] sm:$0x3]
    %v8285 = vlaneseq
    %v8286 = vshrl.u32 %v8285, 7
    %v8287 = vsub.s32 0, %v8286
    %v8288 = vrot.slane %v8283, %v8287
    %v8289 = vlaneseq
    %v8290 = vshrl.u32 %v8289, 7
    %v8291 = vsub.s32 1, %v8290
    %v8292 = vrot.slane %v8283, %v8291
    %v8359 = vunpack.c.l.b16 %v8219
    %v8360 = vunpack.c.h.b16 %v8219
    %v8361 = vunpack.c.l.b16 %v8220
    %v8362 = vunpack.c.h.b16 %v8220
    %v8363 = vunpack.c.l.b16 %v8221
    %v8364 = vunpack.c.h.b16 %v8221
    %v8365 = vunpack.c.l.b16 %v8222
    %v8366 = vunpack.c.h.b16 %v8222
    %v8367 = vunpack.c.l.b16 %v8223
    %v8368 = vunpack.c.h.b16 %v8223
    %v8369 = vunpack.c.l.b16 %v8224
    %v8370 = vunpack.c.h.b16 %v8224
    %v8371 = vunpack.c.l.b16 %v8225
    %v8372 = vunpack.c.h.b16 %v8225
    %v8373 = vunpack.c.l.b16 %v8226
    %v8374 = vunpack.c.h.b16 %v8226
    %v8375 = vunpack.c.l.b16 %v8227
    %v8376 = vunpack.c.h.b16 %v8227
    %v8377 = vunpack.c.l.b16 %v8228
    %v8378 = vunpack.c.h.b16 %v8228
    %v8379 = vunpack.c.l.b16 %v8229
    %v8380 = vunpack.c.h.b16 %v8229
    %v8381 = vunpack.c.l.b16 %v8230
    %v8382 = vunpack.c.h.b16 %v8230
    %v8383 = vunpack.c.l.b16 %v8231
    %v8384 = vunpack.c.h.b16 %v8231
    %v8385 = vunpack.c.l.b16 %v8232
    %v8386 = vunpack.c.h.b16 %v8232
    %v8387 = vunpack.c.l.b16 %v8233
    %v8388 = vunpack.c.h.b16 %v8233
    %v8389 = vunpack.c.l.b16 %v8234
    %v8390 = vunpack.c.h.b16 %v8234
    %v8391 = vunpack.c.l.b16 %v8235
    %v8392 = vunpack.c.h.b16 %v8235
    %v8393 = vunpack.c.l.b16 %v8236
    %v8394 = vunpack.c.h.b16 %v8236
    %v8395 = vunpack.c.l.b16 %v8237
    %v8396 = vunpack.c.h.b16 %v8237
    %v8397 = vunpack.c.l.b16 %v8238
    %v8398 = vunpack.c.h.b16 %v8238
    %v8399 = vunpack.c.l.b16 %v8239
    %v8400 = vunpack.c.h.b16 %v8239
    %v8401 = vunpack.c.l.b16 %v8240
    %v8402 = vunpack.c.h.b16 %v8240
    %v8403 = vunpack.c.l.b16 %v8241
    %v8404 = vunpack.c.h.b16 %v8241
    %v8405 = vunpack.c.l.b16 %v8242
    %v8406 = vunpack.c.h.b16 %v8242
    %v8407 = vunpack.c.l.b16 %v8243
    %v8408 = vunpack.c.h.b16 %v8243
    %v8409 = vunpack.c.l.b16 %v8244
    %v8410 = vunpack.c.h.b16 %v8244
    %v8411 = vunpack.c.l.b16 %v8245
    %v8412 = vunpack.c.h.b16 %v8245
    %v8413 = vunpack.c.l.b16 %v8246
    %v8414 = vunpack.c.h.b16 %v8246
    %v8415 = vunpack.c.l.b16 %v8247
    %v8416 = vunpack.c.h.b16 %v8247
    %v8417 = vunpack.c.l.b16 %v8248
    %v8418 = vunpack.c.h.b16 %v8248
    %v8419 = vunpack.c.l.b16 %v8249
    %v8420 = vunpack.c.h.b16 %v8249
    %v8421 = vunpack.c.l.b16 %v8250
    %v8422 = vunpack.c.h.b16 %v8250
    %v8423 = vunpack.c.l.b16 %v8251
    %v8424 = vunpack.c.h.b16 %v8251
    %v8425 = vunpack.c.l.b16 %v8252
    %v8426 = vunpack.c.h.b16 %v8252
    %v8427 = vunpack.c.l.b16 %v8253
    %v8428 = vunpack.c.h.b16 %v8253
    %v8429 = vunpack.c.l.b16 %v8254
    %v8430 = vunpack.c.h.b16 %v8254
    %v8431 = vunpack.c.l.b16 %v8255
    %v8432 = vunpack.c.h.b16 %v8255
    %v8433 = vunpack.c.l.b16 %v8256
    %v8434 = vunpack.c.h.b16 %v8256
    %v8435 = vunpack.c.l.b16 %v8257
    %v8436 = vunpack.c.h.b16 %v8257
    %v8437 = vunpack.c.l.b16 %v8258
    %v8438 = vunpack.c.h.b16 %v8258
    %v8439 = vunpack.c.l.b16 %v8259
    %v8440 = vunpack.c.h.b16 %v8259
    %v8441 = vunpack.c.l.b16 %v8260
    %v8442 = vunpack.c.h.b16 %v8260
    %v8443 = vunpack.c.l.b16 %v8261
    %v8444 = vunpack.c.h.b16 %v8261
    %v8445 = vunpack.c.l.b16 %v8262
    %v8446 = vunpack.c.h.b16 %v8262
    %v8447 = vunpack.c.l.b16 %v8263
    %v8448 = vunpack.c.h.b16 %v8263
    %v8449 = vunpack.c.l.b16 %v8264
    %v8450 = vunpack.c.h.b16 %v8264
    %v8451 = vunpack.c.l.b16 %v8265
    %v8452 = vunpack.c.h.b16 %v8265
    %v8453 = vunpack.c.l.b16 %v8266
    %v8454 = vunpack.c.h.b16 %v8266
    %v8455 = vunpack.c.l.b16 %v8267
    %v8456 = vunpack.c.h.b16 %v8267
    %v8457 = vunpack.c.l.b16 %v8268
    %v8458 = vunpack.c.h.b16 %v8268
    %v8459 = vunpack.c.l.b16 %v8269
    %v8460 = vunpack.c.h.b16 %v8269
    %v8461 = vunpack.c.l.b16 %v8270
    %v8462 = vunpack.c.h.b16 %v8270
    %v8463 = vunpack.c.l.b16 %v8271
    %v8464 = vunpack.c.h.b16 %v8271
    %v8465 = vunpack.c.l.b16 %v8272
    %v8466 = vunpack.c.h.b16 %v8272
    %v8467 = vunpack.c.l.b16 %v8273
    %v8468 = vunpack.c.h.b16 %v8273
    %v8469 = vunpack.c.l.b16 %v8274
    %v8470 = vunpack.c.h.b16 %v8274
    %v8471 = vunpack.c.l.b16 %v8275
    %v8472 = vunpack.c.h.b16 %v8275
    %v8473 = vunpack.c.l.b16 %v8276
    %v8474 = vunpack.c.h.b16 %v8276
    %v8475 = vunpack.c.l.b16 %v8277
    %v8476 = vunpack.c.h.b16 %v8277
    %v8477 = vunpack.c.l.b16 %v8278
    %v8478 = vunpack.c.h.b16 %v8278
    %v8479 = vunpack.c.l.b16 %v8279
    %v8480 = vunpack.c.h.b16 %v8279
    %v8481 = vunpack.c.l.b16 %v8280
    %v8482 = vunpack.c.h.b16 %v8280
    %v8483 = vunpack.c.l.b16 %v8281
    %v8484 = vunpack.c.h.b16 %v8281
    %v8485 = vunpack.c.l.b16 %v8282
    %v8486 = vunpack.c.h.b16 %v8282
    %v8487 = vpack.c.b16 %v8361, %v8359
    %v8488 = vpack.c.b16 %v8362, %v8360
    %v8489 = vpack.c.b16 %v8365, %v8363
    %v8490 = vpack.c.b16 %v8366, %v8364
    %v8491 = vpack.c.b16 %v8369, %v8367
    %v8492 = vpack.c.b16 %v8370, %v8368
    %v8493 = vpack.c.b16 %v8373, %v8371
    %v8494 = vpack.c.b16 %v8374, %v8372
    %v8495 = vpack.c.b16 %v8377, %v8375
    %v8496 = vpack.c.b16 %v8378, %v8376
    %v8497 = vpack.c.b16 %v8381, %v8379
    %v8498 = vpack.c.b16 %v8382, %v8380
    %v8499 = vpack.c.b16 %v8385, %v8383
    %v8500 = vpack.c.b16 %v8386, %v8384
    %v8501 = vpack.c.b16 %v8389, %v8387
    %v8502 = vpack.c.b16 %v8390, %v8388
    %v8503 = vpack.c.b16 %v8393, %v8391
    %v8504 = vpack.c.b16 %v8394, %v8392
    %v8505 = vpack.c.b16 %v8397, %v8395
    %v8506 = vpack.c.b16 %v8398, %v8396
    %v8507 = vpack.c.b16 %v8401, %v8399
    %v8508 = vpack.c.b16 %v8402, %v8400
    %v8509 = vpack.c.b16 %v8405, %v8403
    %v8510 = vpack.c.b16 %v8406, %v8404
    %v8511 = vpack.c.b16 %v8409, %v8407
    %v8512 = vpack.c.b16 %v8410, %v8408
    %v8513 = vpack.c.b16 %v8413, %v8411
    %v8514 = vpack.c.b16 %v8414, %v8412
    %v8515 = vpack.c.b16 %v8417, %v8415
    %v8516 = vpack.c.b16 %v8418, %v8416
    %v8517 = vpack.c.b16 %v8421, %v8419
    %v8518 = vpack.c.b16 %v8422, %v8420
    %v8519 = vpack.c.b16 %v8425, %v8423
    %v8520 = vpack.c.b16 %v8426, %v8424
    %v8521 = vpack.c.b16 %v8429, %v8427
    %v8522 = vpack.c.b16 %v8430, %v8428
    %v8523 = vpack.c.b16 %v8433, %v8431
    %v8524 = vpack.c.b16 %v8434, %v8432
    %v8525 = vpack.c.b16 %v8437, %v8435
    %v8526 = vpack.c.b16 %v8438, %v8436
    %v8527 = vpack.c.b16 %v8441, %v8439
    %v8528 = vpack.c.b16 %v8442, %v8440
    %v8529 = vpack.c.b16 %v8445, %v8443
    %v8530 = vpack.c.b16 %v8446, %v8444
    %v8531 = vpack.c.b16 %v8449, %v8447
    %v8532 = vpack.c.b16 %v8450, %v8448
    %v8533 = vpack.c.b16 %v8453, %v8451
    %v8534 = vpack.c.b16 %v8454, %v8452
    %v8535 = vpack.c.b16 %v8457, %v8455
    %v8536 = vpack.c.b16 %v8458, %v8456
    %v8537 = vpack.c.b16 %v8461, %v8459
    %v8538 = vpack.c.b16 %v8462, %v8460
    %v8539 = vpack.c.b16 %v8465, %v8463
    %v8540 = vpack.c.b16 %v8466, %v8464
    %v8541 = vpack.c.b16 %v8469, %v8467
    %v8542 = vpack.c.b16 %v8470, %v8468
    %v8543 = vpack.c.b16 %v8473, %v8471
    %v8544 = vpack.c.b16 %v8474, %v8472
    %v8545 = vpack.c.b16 %v8477, %v8475
    %v8546 = vpack.c.b16 %v8478, %v8476
    %v8547 = vpack.c.b16 %v8481, %v8479
    %v8548 = vpack.c.b16 %v8482, %v8480
    %v8549 = vpack.c.b16 %v8485, %v8483
    %v8550 = vpack.c.b16 %v8486, %v8484
    %8615 = vmatprep.subr.bf16.mxu0 %v8502
    %8616 = vmatpush1.bf16.msra.mxu0 %v8501
    %8617 = vmatprep.subr.bf16.mxu0 %v8500
    %8618 = vmatpush1.bf16.msra.mxu0 %v8499
    %8619 = vmatprep.subr.bf16.mxu0 %v8498
    %8620 = vmatpush1.bf16.msra.mxu0 %v8497
    %8621 = vmatprep.subr.bf16.mxu0 %v8496
    %8622 = vmatpush1.bf16.msra.mxu0 %v8495
    %8623 = vmatprep.subr.bf16.mxu0 %v8494
    %8624 = vmatpush1.bf16.msra.mxu0 %v8493
    %8625 = vmatprep.subr.bf16.mxu0 %v8492
    %8626 = vmatpush1.bf16.msra.mxu0 %v8491
    %8627 = vmatprep.subr.bf16.mxu0 %v8490
    %8628 = vmatpush1.bf16.msra.mxu0 %v8489
    %8629 = vmatprep.subr.bf16.mxu0 %v8488
    %8630 = vmatpush1.bf16.msra.mxu0 %v8487
    %8631 = vmatprep.subr.bf16.mxu0 %v8518
    %8632 = vmatpush2.bf16.msra.mxu0 %v8517
    %8633 = vmatprep.subr.bf16.mxu0 %v8516
    %8634 = vmatpush2.bf16.msra.mxu0 %v8515
    %8635 = vmatprep.subr.bf16.mxu0 %v8514
    %8636 = vmatpush2.bf16.msra.mxu0 %v8513
    %8637 = vmatprep.subr.bf16.mxu0 %v8512
    %8638 = vmatpush2.bf16.msra.mxu0 %v8511
    %8639 = vmatprep.subr.bf16.mxu0 %v8510
    %8640 = vmatpush2.bf16.msra.mxu0 %v8509
    %8641 = vmatprep.subr.bf16.mxu0 %v8508
    %8642 = vmatpush2.bf16.msra.mxu0 %v8507
    %8643 = vmatprep.subr.bf16.mxu0 %v8506
    %8644 = vmatpush2.bf16.msra.mxu0 %v8505
    %8645 = vmatprep.subr.bf16.mxu0 %v8504
    %8646 = vmatpush2.bf16.msra.mxu0 %v8503
    %8647 = vmatprep.mubr.bf16.mxu0 %v8216
    %8648 = vmatmul.mubr.bf16.gmra.mxu0 %v8215
    %v8649 = vpop.f32.mrf.mxu0
    %v8650 = vadd.f32 %v8288, %v8649
    %v8651 = vpop.f32.mrf.mxu0
    %v8652 = vadd.f32 %v8292, %v8651
    %v8653 = vpop.f32.mrf.mxu0
    %v8654 = vpop.f32.mrf.mxu0
    %8655 = vdwg.mxu0
    %8656 = vmatprep.subr.bf16.mxu0 %v8534
    %8657 = vmatpush1.bf16.msra.mxu0 %v8533
    %8658 = vmatprep.subr.bf16.mxu0 %v8532
    %8659 = vmatpush1.bf16.msra.mxu0 %v8531
    %8660 = vmatprep.subr.bf16.mxu0 %v8530
    %8661 = vmatpush1.bf16.msra.mxu0 %v8529
    %8662 = vmatprep.subr.bf16.mxu0 %v8528
    %8663 = vmatpush1.bf16.msra.mxu0 %v8527
    %8664 = vmatprep.subr.bf16.mxu0 %v8526
    %8665 = vmatpush1.bf16.msra.mxu0 %v8525
    %8666 = vmatprep.subr.bf16.mxu0 %v8524
    %8667 = vmatpush1.bf16.msra.mxu0 %v8523
    %8668 = vmatprep.subr.bf16.mxu0 %v8522
    %8669 = vmatpush1.bf16.msra.mxu0 %v8521
    %8670 = vmatprep.subr.bf16.mxu0 %v8520
    %8671 = vmatpush1.bf16.msra.mxu0 %v8519
    %8672 = vmatprep.subr.bf16.mxu0 %v8550
    %8673 = vmatpush2.bf16.msra.mxu0 %v8549
    %8674 = vmatprep.subr.bf16.mxu0 %v8548
    %8675 = vmatpush2.bf16.msra.mxu0 %v8547
    %8676 = vmatprep.subr.bf16.mxu0 %v8546
    %8677 = vmatpush2.bf16.msra.mxu0 %v8545
    %8678 = vmatprep.subr.bf16.mxu0 %v8544
    %8679 = vmatpush2.bf16.msra.mxu0 %v8543
    %8680 = vmatprep.subr.bf16.mxu0 %v8542
    %8681 = vmatpush2.bf16.msra.mxu0 %v8541
    %8682 = vmatprep.subr.bf16.mxu0 %v8540
    %8683 = vmatpush2.bf16.msra.mxu0 %v8539
    %8684 = vmatprep.subr.bf16.mxu0 %v8538
    %8685 = vmatpush2.bf16.msra.mxu0 %v8537
    %8686 = vmatprep.subr.bf16.mxu0 %v8536
    %8687 = vmatpush2.bf16.msra.mxu0 %v8535
    %8688 = vmatprep.mubr.bf16.mxu0 %v8218
    %8689 = vmatmul.mubr.bf16.gmra.mxu0 %v8217
    %v8690 = vpop.f32.mrf.mxu0
    %v8691 = vadd.f32 %v8650, %v8690
    %v8692 = vpop.f32.mrf.mxu0
    %v8693 = vadd.f32 %v8652, %v8692
    %v8694 = vpop.f32.mrf.mxu0
    %v8695 = vpop.f32.mrf.mxu0
    %8696 = vdwg.mxu0
    %v8697 = vmax.f32 %v8691, 0.0
    %v8698 = vmax.f32 %v8693, 0.0
    %v8701 = vcombine.low %v8697, %v8698
    %v8702 = vcombine.high %v8697, %v8698
    %v8704 = vunpack.c.l.s4 1983009808
    %v8705 = vunpack.c.0.s8 %v8704
    %v8706 = vlaneseq
    %v8707 = vshrl.u32 %v8706, 7
    %v8708 = vsub.s32 %v8705, %v8707
    %v8709 = vrot.slane %v8701, %v8708
    %v8711 = vunpack.c.l.s4 1983009808
    %v8712 = vunpack.c.0.s8 %v8711
    %v8713 = vlaneseq
    %v8714 = vshrl.u32 %v8713, 7
    %v8715 = vsub.s32 %v8712, %v8714
    %v8716 = vrot.slane %v8702, %v8715
    %v8717 = vcombine.high %v8709, %v8709
    %v8718 = vcombine.high %v8716, %v8716
    %8723 = vst [vmem:[#allocation2] sm:$0xf] %v8709
    %8724 = vst [vmem:[#allocation2 + $0x4] sm:$0xf] %v8717
    %8725 = vst [vmem:[#allocation2 + $0x8] sm:$0xf] %v8716
    %8726 = vst [vmem:[#allocation2 + $0xc] sm:$0xf] %v8718
    // Predicated region
    $region38: #{_fused_mlp.1} parent=1 // pred_check
      _
    $region39: #{_fused_mlp.1} parent=1 // pred_check_branch
      %8728 = sbr.rel (0) target = $region41
    $region40: #{_fused_mlp.1} parent=1 // pred_region
      %s8730 = ssub.s32 256, 64
      %8731 = vsyncadd [#allocation3], %s8730
      %s8732 = sshll.u32 [#allocation2], 4
      %s8733 = int_to_ptr.vmem [resolvable:$true] %s8732
      %8738 = dma.vmem_to_hbm [thread:$0]  %s8733, 64, %s9, [#allocation3], 64, 64, 4
    $region41: #{_fused_mlp.1} parent=1 // pred_fallthru
      _
    // Predicated region
    $region42: #{_fused_mlp.1} parent=1 // pred_check
      _
    $region43: #{_fused_mlp.1} parent=1 // pred_check_branch
      %8740 = sbr.rel (0) target = $region45
    $region44: #{_fused_mlp.1} parent=1 // pred_region
      %8741 = dma.done [#allocation3], 256
    $region45: #{_fused_mlp.1} parent=1 // pred_fallthru
      _
    %8742 = vsyncpa [#allocation3], 1

</llo_original>
